<compile_context>
chip_gen: v6e
topology: v6e:2x2x1
jax: 0.10.0
libtpu: 0.0.40
codegen_flags: <defaults>
</compile_context>

<pallas_src>
import functools
import random

import jax
import jax.numpy as jnp
from jax import lax
from jax.experimental import pallas as pl
from jax.experimental.pallas import tpu as pltpu


# ----------------------------- padded tile sizes -----------------------------
LANE = 128          # TPU lane width
SUB = 8             # TPU sublane width

HP = LANE           # hidden dim padded to a full lane group
VP = LANE           # target vocab padded (lane-dense logits, unmasked stores)
BP = SUB            # batch padded to a full sublane group
G = 4 * HP          # fused gate width: r_sum | z_sum | i_n | h_n
NEG = -1.0e30       # logit value for padded vocab columns (never wins argmax)


# ------------------------------- Pallas kernel --------------------------------

def _seq2seq_kernel(tf_ref,          # SMEM [T]          int32  teacher-forcing flags
                    src_xg_ref,      # VMEM [S, BP, G]   f32    precomputed enc input gates
                    tgt_xg_ref,      # VMEM [T, BP, G]   f32    precomputed dec TF input gates
                    dec_emb_wx_ref,  # VMEM [VP, G]      f32    dec (emb @ W_ih) table (greedy path)
                    enc_wh_ref,      # VMEM [HP, G]      f32    encoder W_hh (gate-packed)
                    enc_b_ref,       # VMEM [1, G]       f32
                    dec_wh_ref,      # VMEM [HP, G]      f32    decoder W_hh (gate-packed)
                    dec_b_ref,       # VMEM [1, G]       f32
                    fc_w_ref,        # VMEM [HP, VP]     f32
                    fc_b_ref,        # VMEM [1, VP]      f32
                    out_ref):        # VMEM [T, BP, VP]  f32    logits per step
    S = src_xg_ref.shape[0]
    T = tgt_xg_ref.shape[0]

    # Hoist bias broadcasts out of the loops (JAX does not CSE broadcast_in_dim).
    enc_b = jnp.broadcast_to(enc_b_ref[...], (BP, G))
    dec_b = jnp.broadcast_to(dec_b_ref[...], (BP, G))
    fc_b = jnp.broadcast_to(fc_b_ref[...], (BP, VP))

    def gru_step(xg, h, wh_ref, b):
        # One MXU matmul per recurrent step; gate blocks are 128-lane aligned.
        g = xg + jnp.dot(h, wh_ref[...],
                         preferred_element_type=jnp.float32) + b        # [BP, G]
        r = jax.nn.sigmoid(g[:, 0:HP])                                  # i_r + h_r + b_r
        z = jax.nn.sigmoid(g[:, HP:2 * HP])                             # i_z + h_z + b_z
        n = jnp.tanh(g[:, 2 * HP:3 * HP] + r * g[:, 3 * HP:4 * HP])     # i_n+b_in + r*(h_n+b_hn)
        return (1.0 - z) * n + z * h

    # ---------------------------- encoder -----------------------------------
    def enc_body(t, h):
        return gru_step(src_xg_ref[t], h, enc_wh_ref, enc_b)

    h = lax.fori_loop(0, S, enc_body,
                      jnp.zeros((BP, HP), jnp.float32), unroll=True)

    # ----------------------- decoder + fc_out -------------------------------
    out_ref[0] = jnp.zeros((BP, VP), jnp.float32)   # outputs[:, 0] stays zero

    iota = lax.broadcasted_iota(jnp.int32, (BP, VP), 1)

    def dec_body(t, carry):
        xg, hh = carry
        hh = gru_step(xg, hh, dec_wh_ref, dec_b)
        logits = jnp.dot(hh, fc_w_ref[...],
                         preferred_element_type=jnp.float32) + fc_b     # [BP, VP]
        out_ref[t] = logits

        # Greedy next-token input gates: first-occurrence argmax -> one-hot ->
        # one matmul against the precomputed (embedding @ W_ih) table.
        mx = jnp.max(logits, axis=1, keepdims=True)
        first = jnp.min(jnp.where(logits == mx, iota, VP),
                        axis=1, keepdims=True)
        onehot = (iota == first).astype(jnp.float32)                    # [BP, VP]
        greedy_xg = jnp.dot(onehot, dec_emb_wx_ref[...],
                            preferred_element_type=jnp.float32)         # [BP, G]

        # Teacher-forcing blend (flag read from SMEM; branch-free select).
        w_tf = (tf_ref[t] != 0).astype(jnp.float32)
        nxt = w_tf * tgt_xg_ref[t] + (1.0 - w_tf) * greedy_xg
        return (nxt, hh)

    lax.fori_loop(1, T, dec_body, (tgt_xg_ref[0], h), unroll=True)


# ------------------------------ Parameter init --------------------------------

def _uniform(key, shape, scale):
    return jax.random.uniform(key, shape, jnp.float32, minval=-scale, maxval=scale)


def init_params(key, src_vocab, tgt_vocab, emb_dim, hidden_dim):
    """Canonical (PyTorch-shaped) parameters: weights stored [in, 3H], gates r|z|n."""
    ks = jax.random.split(key, 12)
    s_h = 1.0 / jnp.sqrt(hidden_dim)
    return {
        # encoder
        "enc_emb": _uniform(ks[0], (src_vocab, emb_dim), 1.0),
        "enc_w_ih": _uniform(ks[1], (emb_dim, 3 * hidden_dim), s_h),
        "enc_w_hh": _uniform(ks[2], (hidden_dim, 3 * hidden_dim), s_h),
        "enc_b_ih": _uniform(ks[3], (1, 3 * hidden_dim), s_h),
        "enc_b_hh": _uniform(ks[4], (1, 3 * hidden_dim), s_h),
        # decoder
        "dec_emb": _uniform(ks[5], (tgt_vocab, emb_dim), 1.0),
        "dec_w_ih": _uniform(ks[6], (emb_dim, 3 * hidden_dim), s_h),
        "dec_w_hh": _uniform(ks[7], (hidden_dim, 3 * hidden_dim), s_h),
        "dec_b_ih": _uniform(ks[8], (1, 3 * hidden_dim), s_h),
        "dec_b_hh": _uniform(ks[9], (1, 3 * hidden_dim), s_h),
        "fc_w": _uniform(ks[10], (hidden_dim, tgt_vocab), s_h),
        "fc_b": _uniform(ks[11], (1, tgt_vocab), s_h),
    }


def pack_params(params, hidden_dim, tgt_vocab):
    """Pack into the padded / fused layout the kernel expects (done once).

    The embedding lookup followed by the input-to-hidden projection (x @ W_ih)
    is folded into per-token gate tables: table[tok] == emb[tok] @ W_ih placed
    in the 128-lane-aligned gate blocks r | z | i_n | (h_n stays zero).
    """
    H, V = hidden_dim, tgt_vocab
    assert H <= HP and V <= VP

    def emb_gate_table(emb, w_ih, n_rows):
        tbl = jnp.zeros((n_rows, G), jnp.float32)
        tbl = tbl.at[0:emb.shape[0], 0:H].set(emb @ w_ih[:, 0:H])                    # r (input)
        tbl = tbl.at[0:emb.shape[0], HP:HP + H].set(emb @ w_ih[:, H:2 * H])          # z (input)
        tbl = tbl.at[0:emb.shape[0], 2 * HP:2 * HP + H].set(emb @ w_ih[:, 2 * H:])   # i_n
        return tbl

    def pack_wh(w_hh):
        W = jnp.zeros((HP, G), jnp.float32)
        W = W.at[0:H, 0:H].set(w_hh[:, 0:H])                        # r (hidden)
        W = W.at[0:H, HP:HP + H].set(w_hh[:, H:2 * H])              # z (hidden)
        W = W.at[0:H, 3 * HP:3 * HP + H].set(w_hh[:, 2 * H:3 * H])  # h_n
        return W

    def pack_bias(b_ih, b_hh):
        b = jnp.zeros((1, G), jnp.float32)
        b = b.at[:, 0:H].set(b_ih[:, 0:H] + b_hh[:, 0:H])                  # b_r pre-summed
        b = b.at[:, HP:HP + H].set(b_ih[:, H:2 * H] + b_hh[:, H:2 * H])    # b_z pre-summed
        b = b.at[:, 2 * HP:2 * HP + H].set(b_ih[:, 2 * H:3 * H])           # b_in
        b = b.at[:, 3 * HP:3 * HP + H].set(b_hh[:, 2 * H:3 * H])           # b_hn (kept separate)
        return b

    src_vocab = params["enc_emb"].shape[0]
    enc_emb_wx = emb_gate_table(params["enc_emb"], params["enc_w_ih"], src_vocab)
    dec_emb_wx = emb_gate_table(params["dec_emb"], params["dec_w_ih"], VP)

    fc_w = jnp.zeros((HP, VP), jnp.float32)
    fc_w = fc_w.at[0:H, 0:V].set(params["fc_w"])
    fc_b = jnp.full((1, VP), NEG, jnp.float32)          # pad columns never win argmax
    fc_b = fc_b.at[:, 0:V].set(params["fc_b"])

    return {
        "enc_emb_wx": enc_emb_wx,                        # [src_vocab, G]
        "dec_emb_wx": dec_emb_wx,                        # [VP, G]
        "enc_wh": pack_wh(params["enc_w_hh"]),
        "enc_b": pack_bias(params["enc_b_ih"], params["enc_b_hh"]),
        "dec_wh": pack_wh(params["dec_w_hh"]),
        "dec_b": pack_bias(params["dec_b_ih"], params["dec_b_hh"]),
        "fc_w": fc_w,
        "fc_b": fc_b,
    }


# ------------------------------- Seq2Seq forward -------------------------------

@functools.partial(jax.jit, static_argnames=("tgt_vocab",))
def _seq2seq_forward_device(packed, src, tgt, tf_flags, *, tgt_vocab):
    B, S = src.shape
    _, T = tgt.shape
    assert B <= BP

    # Per-token input-gate gathers (tiny tables, one XLA gather each per call).
    src_xg = jnp.take(packed["enc_emb_wx"], src, axis=0)   # [B, S, G]
    tgt_xg = jnp.take(packed["dec_emb_wx"], tgt, axis=0)   # [B, T, G]

    # [time, batch(padded to 8 sublanes), lanes] layout for the kernel.
    pad_b = ((0, 0), (0, BP - B), (0, 0))
    src_xg = jnp.pad(jnp.transpose(src_xg, (1, 0, 2)), pad_b)   # [S, BP, G]
    tgt_xg = jnp.pad(jnp.transpose(tgt_xg, (1, 0, 2)), pad_b)   # [T, BP, G]

    vmem = pl.BlockSpec(memory_space=pltpu.MemorySpace.VMEM)
    smem = pl.BlockSpec(memory_space=pltpu.MemorySpace.SMEM)

    out = pl.pallas_call(
        _seq2seq_kernel,
        out_shape=jax.ShapeDtypeStruct((T, BP, VP), jnp.float32),
        in_specs=[smem] + [vmem] * 9,
        out_specs=vmem,
        compiler_params=pltpu.CompilerParams(vmem_limit_bytes=32 * 1024 * 1024),
    )(tf_flags.astype(jnp.int32),
      src_xg, tgt_xg, packed["dec_emb_wx"],
      packed["enc_wh"], packed["enc_b"],
      packed["dec_wh"], packed["dec_b"],
      packed["fc_w"], packed["fc_b"])

    # [T, BP, VP] -> [B, T, V]
    return jnp.transpose(out, (1, 0, 2))[:B, :, :tgt_vocab]


def seq2seq_forward(packed, src, tgt, tgt_vocab,
                    epoch=None, tf_ratio=None,
                    decay_rate=0.95, min_tf=0.1, start_tf=1.0):
    if tf_ratio is None:
        tf_ratio = start_tf * decay_rate ** (epoch - 1) if epoch else start_tf
    tf_ratio = max(tf_ratio, min_tf)

    T = int(tgt.shape[1])
    # Per-call host-side random draws (same count/order as the reference loop);
    # passed into the jitted device graph so decisions are NOT frozen at trace time.
    flags = [1] + [1 if random.random() < tf_ratio else 0 for _ in range(1, T)]
    tf_flags = jnp.asarray(flags, dtype=jnp.int32)
    return _seq2seq_forward_device(packed, src, tgt, tf_flags, tgt_vocab=tgt_vocab)


# --------------------------- pure-JAX reference (check) ------------------------

def _gru_cell_ref(x, h, w_ih, w_hh, b_ih, b_hh):
    H = h.shape[-1]
    gi = x @ w_ih + b_ih
    gh = h @ w_hh + b_hh
    r = jax.nn.sigmoid(gi[:, :H] + gh[:, :H])
    z = jax.nn.sigmoid(gi[:, H:2 * H] + gh[:, H:2 * H])
    n = jnp.tanh(gi[:, 2 * H:] + r * gh[:, 2 * H:])
    return (1.0 - z) * n + z * h


def _reference_forward(params, src, tgt, tf_flags, hidden_dim, tgt_vocab):
    B, S = src.shape
    _, T = tgt.shape
    h = jnp.zeros((B, hidden_dim), jnp.float32)
    src_e = jnp.take(params["enc_emb"], src, axis=0)
    for t in range(S):
        h = _gru_cell_ref(src_e[:, t], h, params["enc_w_ih"], params["enc_w_hh"],
                          params["enc_b_ih"], params["enc_b_hh"])
    outs = [jnp.zeros((B, tgt_vocab), jnp.float32)]
    inp = tgt[:, 0]
    for t in range(1, T):
        x = jnp.take(params["dec_emb"], inp, axis=0)
        h = _gru_cell_ref(x, h, params["dec_w_ih"], params["dec_w_hh"],
                          params["dec_b_ih"], params["dec_b_hh"])
        logits = h @ params["fc_w"] + params["fc_b"]
        outs.append(logits)
        inp = jnp.where(tf_flags[t] != 0, tgt[:, t],
                        jnp.argmax(logits, axis=1).astype(tgt.dtype))
    return jnp.stack(outs, axis=1)


# ----------------------------------- Main --------------------------------------

if __name__ == "__main__":
    random.seed(0)  # deterministic teacher-forcing draws (tf_ratio=1.0 anyway)

    SRC_VOCAB = 11
    TGT_VOCAB = 13
    EMB_DIM = 16
    HIDDEN = 32
    B = 2
    SRC_LEN = 8
    TGT_LEN = 8

    key = jax.random.PRNGKey(0)
    kp, ks, kt = jax.random.split(key, 3)
    params = init_params(kp, SRC_VOCAB, TGT_VOCAB, EMB_DIM, HIDDEN)
    packed = pack_params(params, HIDDEN, TGT_VOCAB)

    src = jax.random.randint(ks, (B, SRC_LEN), 0, SRC_VOCAB, dtype=jnp.int32)
    tgt = jax.random.randint(kt, (B, TGT_LEN), 0, TGT_VOCAB, dtype=jnp.int32)

    out = seq2seq_forward(packed, src, tgt, TGT_VOCAB)
    out = jax.block_until_ready(out)

    assert out.shape == (B, TGT_LEN, TGT_VOCAB)
    assert bool(jnp.all(out[:, 0, :] == 0.0))  # step 0 never written, stays zero

    # Validate against a pure-JAX reference with identical TF decisions
    # (default tf_ratio=1.0 -> always teacher-forced).
    tf_all = jnp.ones((TGT_LEN,), jnp.int32)
    ref = _reference_forward(params, src, tgt, tf_all, HIDDEN, TGT_VOCAB)
    assert jnp.allclose(out, ref, atol=1e-2, rtol=1e-2), \
        float(jnp.max(jnp.abs(out - ref)))

    print("KERNEL_OK")
</pallas_src>

<mosaic_0001>
module attributes {stable_mosaic.version = 11 : i64} {
  func.func @_seq2seq_kernel(%arg0: memref<8xi32, #tpu.memory_space<smem>>, %arg1: memref<8x8x512xf32, #tpu.memory_space<vmem>>, %arg2: memref<8x8x512xf32, #tpu.memory_space<vmem>>, %arg3: memref<128x512xf32, #tpu.memory_space<vmem>>, %arg4: memref<128x512xf32, #tpu.memory_space<vmem>>, %arg5: memref<1x512xf32, #tpu.memory_space<vmem>>, %arg6: memref<128x512xf32, #tpu.memory_space<vmem>>, %arg7: memref<1x512xf32, #tpu.memory_space<vmem>>, %arg8: memref<128x128xf32, #tpu.memory_space<vmem>>, %arg9: memref<1x128xf32, #tpu.memory_space<vmem>>, %arg10: memref<8x8x128xf32, #tpu.memory_space<vmem>>) attributes {dimension_semantics = [], scalar_prefetch = 0 : i64, scratch_operands = 0 : i64, tpu.core_type = #tpu.core_type<tc>} {
    %c0 = arith.constant 0 : index
    %c0_0 = arith.constant 0 : index
    %0 = vector.load %arg5[%c0, %c0_0] : memref<1x512xf32, #tpu.memory_space<vmem>>, vector<1x512xf32>
    %1 = vector.shape_cast %0 : vector<1x512xf32> to vector<1x512xf32>
    %2 = vector.broadcast %1 : vector<1x512xf32> to vector<8x512xf32>
    %c0_1 = arith.constant 0 : index
    %c0_2 = arith.constant 0 : index
    %3 = vector.load %arg7[%c0_1, %c0_2] : memref<1x512xf32, #tpu.memory_space<vmem>>, vector<1x512xf32>
    %4 = vector.shape_cast %3 : vector<1x512xf32> to vector<1x512xf32>
    %5 = vector.broadcast %4 : vector<1x512xf32> to vector<8x512xf32>
    %c0_3 = arith.constant 0 : index
    %c0_4 = arith.constant 0 : index
    %6 = vector.load %arg9[%c0_3, %c0_4] : memref<1x128xf32, #tpu.memory_space<vmem>>, vector<1x128xf32>
    %7 = vector.shape_cast %6 : vector<1x128xf32> to vector<1x128xf32>
    %8 = vector.broadcast %7 : vector<1x128xf32> to vector<8x128xf32>
    %cst = arith.constant 0.000000e+00 : f32
    %9 = vector.broadcast %cst : f32 to vector<8x128xf32>
    %c0_i32 = arith.constant 0 : i32
    %10 = arith.index_cast %c0_i32 : i32 to index
    %c0_5 = arith.constant 0 : index
    %c0_6 = arith.constant 0 : index
    %11 = vector.load %arg1[%10, %c0_5, %c0_6] : memref<8x8x512xf32, #tpu.memory_space<vmem>>, vector<1x8x512xf32>
    %12 = vector.shape_cast %11 : vector<1x8x512xf32> to vector<8x512xf32>
    %c0_7 = arith.constant 0 : index
    %c0_8 = arith.constant 0 : index
    %13 = vector.load %arg4[%c0_7, %c0_8] : memref<128x512xf32, #tpu.memory_space<vmem>>, vector<128x512xf32>
    %cst_9 = arith.constant dense<0.000000e+00> : vector<8x512xf32>
    %14 = tpu.matmul %9, %13, %cst_9 {dimension_numbers = #tpu.dot_dimension_numbers<[1], [0], [0], [1], [0, 0, 1, 1], [], []>} : vector<8x128xf32>, vector<128x512xf32>, vector<8x512xf32> -> vector<8x512xf32>
    %15 = arith.addf %12, %14 : vector<8x512xf32>
    %16 = arith.addf %15, %2 : vector<8x512xf32>
    %17 = vector.extract_strided_slice %16 {offsets = [0, 0], sizes = [8, 128], strides = [1, 1]} : vector<8x512xf32> to vector<8x128xf32>
    %18 = arith.negf %17 : vector<8x128xf32>
    %19 = math.exp %18 : vector<8x128xf32>
    %cst_10 = arith.constant 1.000000e+00 : f32
    %20 = vector.broadcast %cst_10 : f32 to vector<8x128xf32>
    %21 = arith.addf %20, %19 : vector<8x128xf32>
    %22 = arith.divf %20, %21 : vector<8x128xf32>
    %23 = vector.extract_strided_slice %16 {offsets = [0, 128], sizes = [8, 128], strides = [1, 1]} : vector<8x512xf32> to vector<8x128xf32>
    %24 = arith.negf %23 : vector<8x128xf32>
    %25 = math.exp %24 : vector<8x128xf32>
    %cst_11 = arith.constant 1.000000e+00 : f32
    %26 = vector.broadcast %cst_11 : f32 to vector<8x128xf32>
    %27 = arith.addf %26, %25 : vector<8x128xf32>
    %28 = arith.divf %26, %27 : vector<8x128xf32>
    %29 = vector.extract_strided_slice %16 {offsets = [0, 256], sizes = [8, 128], strides = [1, 1]} : vector<8x512xf32> to vector<8x128xf32>
    %30 = vector.extract_strided_slice %16 {offsets = [0, 384], sizes = [8, 128], strides = [1, 1]} : vector<8x512xf32> to vector<8x128xf32>
    %31 = arith.mulf %22, %30 : vector<8x128xf32>
    %32 = arith.addf %29, %31 : vector<8x128xf32>
    %33 = math.tanh %32 : vector<8x128xf32>
    %cst_12 = arith.constant 1.000000e+00 : f32
    %34 = vector.broadcast %cst_12 : f32 to vector<8x128xf32>
    %35 = arith.subf %34, %28 : vector<8x128xf32>
    %36 = arith.mulf %35, %33 : vector<8x128xf32>
    %37 = arith.mulf %28, %9 : vector<8x128xf32>
    %38 = arith.addf %36, %37 : vector<8x128xf32>
    %c1_i32 = arith.constant 1 : i32
    %39 = arith.index_cast %c1_i32 : i32 to index
    %c0_13 = arith.constant 0 : index
    %c0_14 = arith.constant 0 : index
    %40 = vector.load %arg1[%39, %c0_13, %c0_14] : memref<8x8x512xf32, #tpu.memory_space<vmem>>, vector<1x8x512xf32>
    %41 = vector.shape_cast %40 : vector<1x8x512xf32> to vector<8x512xf32>
    %c0_15 = arith.constant 0 : index
    %c0_16 = arith.constant 0 : index
    %42 = vector.load %arg4[%c0_15, %c0_16] : memref<128x512xf32, #tpu.memory_space<vmem>>, vector<128x512xf32>
    %cst_17 = arith.constant dense<0.000000e+00> : vector<8x512xf32>
    %43 = tpu.matmul %38, %42, %cst_17 {dimension_numbers = #tpu.dot_dimension_numbers<[1], [0], [0], [1], [0, 0, 1, 1], [], []>} : vector<8x128xf32>, vector<128x512xf32>, vector<8x512xf32> -> vector<8x512xf32>
    %44 = arith.addf %41, %43 : vector<8x512xf32>
    %45 = arith.addf %44, %2 : vector<8x512xf32>
    %46 = vector.extract_strided_slice %45 {offsets = [0, 0], sizes = [8, 128], strides = [1, 1]} : vector<8x512xf32> to vector<8x128xf32>
    %47 = arith.negf %46 : vector<8x128xf32>
    %48 = math.exp %47 : vector<8x128xf32>
    %cst_18 = arith.constant 1.000000e+00 : f32
    %49 = vector.broadcast %cst_18 : f32 to vector<8x128xf32>
    %50 = arith.addf %49, %48 : vector<8x128xf32>
    %51 = arith.divf %49, %50 : vector<8x128xf32>
    %52 = vector.extract_strided_slice %45 {offsets = [0, 128], sizes = [8, 128], strides = [1, 1]} : vector<8x512xf32> to vector<8x128xf32>
    %53 = arith.negf %52 : vector<8x128xf32>
    %54 = math.exp %53 : vector<8x128xf32>
    %cst_19 = arith.constant 1.000000e+00 : f32
    %55 = vector.broadcast %cst_19 : f32 to vector<8x128xf32>
    %56 = arith.addf %55, %54 : vector<8x128xf32>
    %57 = arith.divf %55, %56 : vector<8x128xf32>
    %58 = vector.extract_strided_slice %45 {offsets = [0, 256], sizes = [8, 128], strides = [1, 1]} : vector<8x512xf32> to vector<8x128xf32>
    %59 = vector.extract_strided_slice %45 {offsets = [0, 384], sizes = [8, 128], strides = [1, 1]} : vector<8x512xf32> to vector<8x128xf32>
    %60 = arith.mulf %51, %59 : vector<8x128xf32>
    %61 = arith.addf %58, %60 : vector<8x128xf32>
    %62 = math.tanh %61 : vector<8x128xf32>
    %cst_20 = arith.constant 1.000000e+00 : f32
    %63 = vector.broadcast %cst_20 : f32 to vector<8x128xf32>
    %64 = arith.subf %63, %57 : vector<8x128xf32>
    %65 = arith.mulf %64, %62 : vector<8x128xf32>
    %66 = arith.mulf %57, %38 : vector<8x128xf32>
    %67 = arith.addf %65, %66 : vector<8x128xf32>
    %c2_i32 = arith.constant 2 : i32
    %68 = arith.index_cast %c2_i32 : i32 to index
    %c0_21 = arith.constant 0 : index
    %c0_22 = arith.constant 0 : index
    %69 = vector.load %arg1[%68, %c0_21, %c0_22] : memref<8x8x512xf32, #tpu.memory_space<vmem>>, vector<1x8x512xf32>
    %70 = vector.shape_cast %69 : vector<1x8x512xf32> to vector<8x512xf32>
    %c0_23 = arith.constant 0 : index
    %c0_24 = arith.constant 0 : index
    %71 = vector.load %arg4[%c0_23, %c0_24] : memref<128x512xf32, #tpu.memory_space<vmem>>, vector<128x512xf32>
    %cst_25 = arith.constant dense<0.000000e+00> : vector<8x512xf32>
    %72 = tpu.matmul %67, %71, %cst_25 {dimension_numbers = #tpu.dot_dimension_numbers<[1], [0], [0], [1], [0, 0, 1, 1], [], []>} : vector<8x128xf32>, vector<128x512xf32>, vector<8x512xf32> -> vector<8x512xf32>
    %73 = arith.addf %70, %72 : vector<8x512xf32>
    %74 = arith.addf %73, %2 : vector<8x512xf32>
    %75 = vector.extract_strided_slice %74 {offsets = [0, 0], sizes = [8, 128], strides = [1, 1]} : vector<8x512xf32> to vector<8x128xf32>
    %76 = arith.negf %75 : vector<8x128xf32>
    %77 = math.exp %76 : vector<8x128xf32>
    %cst_26 = arith.constant 1.000000e+00 : f32
    %78 = vector.broadcast %cst_26 : f32 to vector<8x128xf32>
    %79 = arith.addf %78, %77 : vector<8x128xf32>
    %80 = arith.divf %78, %79 : vector<8x128xf32>
    %81 = vector.extract_strided_slice %74 {offsets = [0, 128], sizes = [8, 128], strides = [1, 1]} : vector<8x512xf32> to vector<8x128xf32>
    %82 = arith.negf %81 : vector<8x128xf32>
    %83 = math.exp %82 : vector<8x128xf32>
    %cst_27 = arith.constant 1.000000e+00 : f32
    %84 = vector.broadcast %cst_27 : f32 to vector<8x128xf32>
    %85 = arith.addf %84, %83 : vector<8x128xf32>
    %86 = arith.divf %84, %85 : vector<8x128xf32>
    %87 = vector.extract_strided_slice %74 {offsets = [0, 256], sizes = [8, 128], strides = [1, 1]} : vector<8x512xf32> to vector<8x128xf32>
    %88 = vector.extract_strided_slice %74 {offsets = [0, 384], sizes = [8, 128], strides = [1, 1]} : vector<8x512xf32> to vector<8x128xf32>
    %89 = arith.mulf %80, %88 : vector<8x128xf32>
    %90 = arith.addf %87, %89 : vector<8x128xf32>
    %91 = math.tanh %90 : vector<8x128xf32>
    %cst_28 = arith.constant 1.000000e+00 : f32
    %92 = vector.broadcast %cst_28 : f32 to vector<8x128xf32>
    %93 = arith.subf %92, %86 : vector<8x128xf32>
    %94 = arith.mulf %93, %91 : vector<8x128xf32>
    %95 = arith.mulf %86, %67 : vector<8x128xf32>
    %96 = arith.addf %94, %95 : vector<8x128xf32>
    %c3_i32 = arith.constant 3 : i32
    %97 = arith.index_cast %c3_i32 : i32 to index
    %c0_29 = arith.constant 0 : index
    %c0_30 = arith.constant 0 : index
    %98 = vector.load %arg1[%97, %c0_29, %c0_30] : memref<8x8x512xf32, #tpu.memory_space<vmem>>, vector<1x8x512xf32>
    %99 = vector.shape_cast %98 : vector<1x8x512xf32> to vector<8x512xf32>
    %c0_31 = arith.constant 0 : index
    %c0_32 = arith.constant 0 : index
    %100 = vector.load %arg4[%c0_31, %c0_32] : memref<128x512xf32, #tpu.memory_space<vmem>>, vector<128x512xf32>
    %cst_33 = arith.constant dense<0.000000e+00> : vector<8x512xf32>
    %101 = tpu.matmul %96, %100, %cst_33 {dimension_numbers = #tpu.dot_dimension_numbers<[1], [0], [0], [1], [0, 0, 1, 1], [], []>} : vector<8x128xf32>, vector<128x512xf32>, vector<8x512xf32> -> vector<8x512xf32>
    %102 = arith.addf %99, %101 : vector<8x512xf32>
    %103 = arith.addf %102, %2 : vector<8x512xf32>
    %104 = vector.extract_strided_slice %103 {offsets = [0, 0], sizes = [8, 128], strides = [1, 1]} : vector<8x512xf32> to vector<8x128xf32>
    %105 = arith.negf %104 : vector<8x128xf32>
    %106 = math.exp %105 : vector<8x128xf32>
    %cst_34 = arith.constant 1.000000e+00 : f32
    %107 = vector.broadcast %cst_34 : f32 to vector<8x128xf32>
    %108 = arith.addf %107, %106 : vector<8x128xf32>
    %109 = arith.divf %107, %108 : vector<8x128xf32>
    %110 = vector.extract_strided_slice %103 {offsets = [0, 128], sizes = [8, 128], strides = [1, 1]} : vector<8x512xf32> to vector<8x128xf32>
    %111 = arith.negf %110 : vector<8x128xf32>
    %112 = math.exp %111 : vector<8x128xf32>
    %cst_35 = arith.constant 1.000000e+00 : f32
    %113 = vector.broadcast %cst_35 : f32 to vector<8x128xf32>
    %114 = arith.addf %113, %112 : vector<8x128xf32>
    %115 = arith.divf %113, %114 : vector<8x128xf32>
    %116 = vector.extract_strided_slice %103 {offsets = [0, 256], sizes = [8, 128], strides = [1, 1]} : vector<8x512xf32> to vector<8x128xf32>
    %117 = vector.extract_strided_slice %103 {offsets = [0, 384], sizes = [8, 128], strides = [1, 1]} : vector<8x512xf32> to vector<8x128xf32>
    %118 = arith.mulf %109, %117 : vector<8x128xf32>
    %119 = arith.addf %116, %118 : vector<8x128xf32>
    %120 = math.tanh %119 : vector<8x128xf32>
    %cst_36 = arith.constant 1.000000e+00 : f32
    %121 = vector.broadcast %cst_36 : f32 to vector<8x128xf32>
    %122 = arith.subf %121, %115 : vector<8x128xf32>
    %123 = arith.mulf %122, %120 : vector<8x128xf32>
    %124 = arith.mulf %115, %96 : vector<8x128xf32>
    %125 = arith.addf %123, %124 : vector<8x128xf32>
    %c4_i32 = arith.constant 4 : i32
    %126 = arith.index_cast %c4_i32 : i32 to index
    %c0_37 = arith.constant 0 : index
    %c0_38 = arith.constant 0 : index
    %127 = vector.load %arg1[%126, %c0_37, %c0_38] : memref<8x8x512xf32, #tpu.memory_space<vmem>>, vector<1x8x512xf32>
    %128 = vector.shape_cast %127 : vector<1x8x512xf32> to vector<8x512xf32>
    %c0_39 = arith.constant 0 : index
    %c0_40 = arith.constant 0 : index
    %129 = vector.load %arg4[%c0_39, %c0_40] : memref<128x512xf32, #tpu.memory_space<vmem>>, vector<128x512xf32>
    %cst_41 = arith.constant dense<0.000000e+00> : vector<8x512xf32>
    %130 = tpu.matmul %125, %129, %cst_41 {dimension_numbers = #tpu.dot_dimension_numbers<[1], [0], [0], [1], [0, 0, 1, 1], [], []>} : vector<8x128xf32>, vector<128x512xf32>, vector<8x512xf32> -> vector<8x512xf32>
    %131 = arith.addf %128, %130 : vector<8x512xf32>
    %132 = arith.addf %131, %2 : vector<8x512xf32>
    %133 = vector.extract_strided_slice %132 {offsets = [0, 0], sizes = [8, 128], strides = [1, 1]} : vector<8x512xf32> to vector<8x128xf32>
    %134 = arith.negf %133 : vector<8x128xf32>
    %135 = math.exp %134 : vector<8x128xf32>
    %cst_42 = arith.constant 1.000000e+00 : f32
    %136 = vector.broadcast %cst_42 : f32 to vector<8x128xf32>
    %137 = arith.addf %136, %135 : vector<8x128xf32>
    %138 = arith.divf %136, %137 : vector<8x128xf32>
    %139 = vector.extract_strided_slice %132 {offsets = [0, 128], sizes = [8, 128], strides = [1, 1]} : vector<8x512xf32> to vector<8x128xf32>
    %140 = arith.negf %139 : vector<8x128xf32>
    %141 = math.exp %140 : vector<8x128xf32>
    %cst_43 = arith.constant 1.000000e+00 : f32
    %142 = vector.broadcast %cst_43 : f32 to vector<8x128xf32>
    %143 = arith.addf %142, %141 : vector<8x128xf32>
    %144 = arith.divf %142, %143 : vector<8x128xf32>
    %145 = vector.extract_strided_slice %132 {offsets = [0, 256], sizes = [8, 128], strides = [1, 1]} : vector<8x512xf32> to vector<8x128xf32>
    %146 = vector.extract_strided_slice %132 {offsets = [0, 384], sizes = [8, 128], strides = [1, 1]} : vector<8x512xf32> to vector<8x128xf32>
    %147 = arith.mulf %138, %146 : vector<8x128xf32>
    %148 = arith.addf %145, %147 : vector<8x128xf32>
    %149 = math.tanh %148 : vector<8x128xf32>
    %cst_44 = arith.constant 1.000000e+00 : f32
    %150 = vector.broadcast %cst_44 : f32 to vector<8x128xf32>
    %151 = arith.subf %150, %144 : vector<8x128xf32>
    %152 = arith.mulf %151, %149 : vector<8x128xf32>
    %153 = arith.mulf %144, %125 : vector<8x128xf32>
    %154 = arith.addf %152, %153 : vector<8x128xf32>
    %c5_i32 = arith.constant 5 : i32
    %155 = arith.index_cast %c5_i32 : i32 to index
    %c0_45 = arith.constant 0 : index
    %c0_46 = arith.constant 0 : index
    %156 = vector.load %arg1[%155, %c0_45, %c0_46] : memref<8x8x512xf32, #tpu.memory_space<vmem>>, vector<1x8x512xf32>
    %157 = vector.shape_cast %156 : vector<1x8x512xf32> to vector<8x512xf32>
    %c0_47 = arith.constant 0 : index
    %c0_48 = arith.constant 0 : index
    %158 = vector.load %arg4[%c0_47, %c0_48] : memref<128x512xf32, #tpu.memory_space<vmem>>, vector<128x512xf32>
    %cst_49 = arith.constant dense<0.000000e+00> : vector<8x512xf32>
    %159 = tpu.matmul %154, %158, %cst_49 {dimension_numbers = #tpu.dot_dimension_numbers<[1], [0], [0], [1], [0, 0, 1, 1], [], []>} : vector<8x128xf32>, vector<128x512xf32>, vector<8x512xf32> -> vector<8x512xf32>
    %160 = arith.addf %157, %159 : vector<8x512xf32>
    %161 = arith.addf %160, %2 : vector<8x512xf32>
    %162 = vector.extract_strided_slice %161 {offsets = [0, 0], sizes = [8, 128], strides = [1, 1]} : vector<8x512xf32> to vector<8x128xf32>
    %163 = arith.negf %162 : vector<8x128xf32>
    %164 = math.exp %163 : vector<8x128xf32>
    %cst_50 = arith.constant 1.000000e+00 : f32
    %165 = vector.broadcast %cst_50 : f32 to vector<8x128xf32>
    %166 = arith.addf %165, %164 : vector<8x128xf32>
    %167 = arith.divf %165, %166 : vector<8x128xf32>
    %168 = vector.extract_strided_slice %161 {offsets = [0, 128], sizes = [8, 128], strides = [1, 1]} : vector<8x512xf32> to vector<8x128xf32>
    %169 = arith.negf %168 : vector<8x128xf32>
    %170 = math.exp %169 : vector<8x128xf32>
    %cst_51 = arith.constant 1.000000e+00 : f32
    %171 = vector.broadcast %cst_51 : f32 to vector<8x128xf32>
    %172 = arith.addf %171, %170 : vector<8x128xf32>
    %173 = arith.divf %171, %172 : vector<8x128xf32>
    %174 = vector.extract_strided_slice %161 {offsets = [0, 256], sizes = [8, 128], strides = [1, 1]} : vector<8x512xf32> to vector<8x128xf32>
    %175 = vector.extract_strided_slice %161 {offsets = [0, 384], sizes = [8, 128], strides = [1, 1]} : vector<8x512xf32> to vector<8x128xf32>
    %176 = arith.mulf %167, %175 : vector<8x128xf32>
    %177 = arith.addf %174, %176 : vector<8x128xf32>
    %178 = math.tanh %177 : vector<8x128xf32>
    %cst_52 = arith.constant 1.000000e+00 : f32
    %179 = vector.broadcast %cst_52 : f32 to vector<8x128xf32>
    %180 = arith.subf %179, %173 : vector<8x128xf32>
    %181 = arith.mulf %180, %178 : vector<8x128xf32>
    %182 = arith.mulf %173, %154 : vector<8x128xf32>
    %183 = arith.addf %181, %182 : vector<8x128xf32>
    %c6_i32 = arith.constant 6 : i32
    %184 = arith.index_cast %c6_i32 : i32 to index
    %c0_53 = arith.constant 0 : index
    %c0_54 = arith.constant 0 : index
    %185 = vector.load %arg1[%184, %c0_53, %c0_54] : memref<8x8x512xf32, #tpu.memory_space<vmem>>, vector<1x8x512xf32>
    %186 = vector.shape_cast %185 : vector<1x8x512xf32> to vector<8x512xf32>
    %c0_55 = arith.constant 0 : index
    %c0_56 = arith.constant 0 : index
    %187 = vector.load %arg4[%c0_55, %c0_56] : memref<128x512xf32, #tpu.memory_space<vmem>>, vector<128x512xf32>
    %cst_57 = arith.constant dense<0.000000e+00> : vector<8x512xf32>
    %188 = tpu.matmul %183, %187, %cst_57 {dimension_numbers = #tpu.dot_dimension_numbers<[1], [0], [0], [1], [0, 0, 1, 1], [], []>} : vector<8x128xf32>, vector<128x512xf32>, vector<8x512xf32> -> vector<8x512xf32>
    %189 = arith.addf %186, %188 : vector<8x512xf32>
    %190 = arith.addf %189, %2 : vector<8x512xf32>
    %191 = vector.extract_strided_slice %190 {offsets = [0, 0], sizes = [8, 128], strides = [1, 1]} : vector<8x512xf32> to vector<8x128xf32>
    %192 = arith.negf %191 : vector<8x128xf32>
    %193 = math.exp %192 : vector<8x128xf32>
    %cst_58 = arith.constant 1.000000e+00 : f32
    %194 = vector.broadcast %cst_58 : f32 to vector<8x128xf32>
    %195 = arith.addf %194, %193 : vector<8x128xf32>
    %196 = arith.divf %194, %195 : vector<8x128xf32>
    %197 = vector.extract_strided_slice %190 {offsets = [0, 128], sizes = [8, 128], strides = [1, 1]} : vector<8x512xf32> to vector<8x128xf32>
    %198 = arith.negf %197 : vector<8x128xf32>
    %199 = math.exp %198 : vector<8x128xf32>
    %cst_59 = arith.constant 1.000000e+00 : f32
    %200 = vector.broadcast %cst_59 : f32 to vector<8x128xf32>
    %201 = arith.addf %200, %199 : vector<8x128xf32>
    %202 = arith.divf %200, %201 : vector<8x128xf32>
    %203 = vector.extract_strided_slice %190 {offsets = [0, 256], sizes = [8, 128], strides = [1, 1]} : vector<8x512xf32> to vector<8x128xf32>
    %204 = vector.extract_strided_slice %190 {offsets = [0, 384], sizes = [8, 128], strides = [1, 1]} : vector<8x512xf32> to vector<8x128xf32>
    %205 = arith.mulf %196, %204 : vector<8x128xf32>
    %206 = arith.addf %203, %205 : vector<8x128xf32>
    %207 = math.tanh %206 : vector<8x128xf32>
    %cst_60 = arith.constant 1.000000e+00 : f32
    %208 = vector.broadcast %cst_60 : f32 to vector<8x128xf32>
    %209 = arith.subf %208, %202 : vector<8x128xf32>
    %210 = arith.mulf %209, %207 : vector<8x128xf32>
    %211 = arith.mulf %202, %183 : vector<8x128xf32>
    %212 = arith.addf %210, %211 : vector<8x128xf32>
    %c7_i32 = arith.constant 7 : i32
    %213 = arith.index_cast %c7_i32 : i32 to index
    %c0_61 = arith.constant 0 : index
    %c0_62 = arith.constant 0 : index
    %214 = vector.load %arg1[%213, %c0_61, %c0_62] : memref<8x8x512xf32, #tpu.memory_space<vmem>>, vector<1x8x512xf32>
    %215 = vector.shape_cast %214 : vector<1x8x512xf32> to vector<8x512xf32>
    %c0_63 = arith.constant 0 : index
    %c0_64 = arith.constant 0 : index
    %216 = vector.load %arg4[%c0_63, %c0_64] : memref<128x512xf32, #tpu.memory_space<vmem>>, vector<128x512xf32>
    %cst_65 = arith.constant dense<0.000000e+00> : vector<8x512xf32>
    %217 = tpu.matmul %212, %216, %cst_65 {dimension_numbers = #tpu.dot_dimension_numbers<[1], [0], [0], [1], [0, 0, 1, 1], [], []>} : vector<8x128xf32>, vector<128x512xf32>, vector<8x512xf32> -> vector<8x512xf32>
    %218 = arith.addf %215, %217 : vector<8x512xf32>
    %219 = arith.addf %218, %2 : vector<8x512xf32>
    %220 = vector.extract_strided_slice %219 {offsets = [0, 0], sizes = [8, 128], strides = [1, 1]} : vector<8x512xf32> to vector<8x128xf32>
    %221 = arith.negf %220 : vector<8x128xf32>
    %222 = math.exp %221 : vector<8x128xf32>
    %cst_66 = arith.constant 1.000000e+00 : f32
    %223 = vector.broadcast %cst_66 : f32 to vector<8x128xf32>
    %224 = arith.addf %223, %222 : vector<8x128xf32>
    %225 = arith.divf %223, %224 : vector<8x128xf32>
    %226 = vector.extract_strided_slice %219 {offsets = [0, 128], sizes = [8, 128], strides = [1, 1]} : vector<8x512xf32> to vector<8x128xf32>
    %227 = arith.negf %226 : vector<8x128xf32>
    %228 = math.exp %227 : vector<8x128xf32>
    %cst_67 = arith.constant 1.000000e+00 : f32
    %229 = vector.broadcast %cst_67 : f32 to vector<8x128xf32>
    %230 = arith.addf %229, %228 : vector<8x128xf32>
    %231 = arith.divf %229, %230 : vector<8x128xf32>
    %232 = vector.extract_strided_slice %219 {offsets = [0, 256], sizes = [8, 128], strides = [1, 1]} : vector<8x512xf32> to vector<8x128xf32>
    %233 = vector.extract_strided_slice %219 {offsets = [0, 384], sizes = [8, 128], strides = [1, 1]} : vector<8x512xf32> to vector<8x128xf32>
    %234 = arith.mulf %225, %233 : vector<8x128xf32>
    %235 = arith.addf %232, %234 : vector<8x128xf32>
    %236 = math.tanh %235 : vector<8x128xf32>
    %cst_68 = arith.constant 1.000000e+00 : f32
    %237 = vector.broadcast %cst_68 : f32 to vector<8x128xf32>
    %238 = arith.subf %237, %231 : vector<8x128xf32>
    %239 = arith.mulf %238, %236 : vector<8x128xf32>
    %240 = arith.mulf %231, %212 : vector<8x128xf32>
    %241 = arith.addf %239, %240 : vector<8x128xf32>
    %c8_i32 = arith.constant 8 : i32
    %cst_69 = arith.constant 0.000000e+00 : f32
    %242 = vector.broadcast %cst_69 : f32 to vector<8x128xf32>
    %c0_70 = arith.constant 0 : index
    %c0_71 = arith.constant 0 : index
    %c0_72 = arith.constant 0 : index
    %243 = vector.load %arg10[%c0_70, %c0_71, %c0_72] : memref<8x8x128xf32, #tpu.memory_space<vmem>>, vector<1x8x128xf32>
    %244 = vector.shape_cast %243 : vector<1x8x128xf32> to vector<8x128xf32>
    %245 = vector.shape_cast %242 : vector<8x128xf32> to vector<1x8x128xf32>
    tpu.vector_store %arg10[%c0_70, %c0_71, %c0_72], %245 {strides = array<i32>} : memref<8x8x128xf32, #tpu.memory_space<vmem>>, vector<1x8x128xf32>,
    %246 = tpu.iota {dimensions = array<i32: 1>} : vector<8x128xi32>
    %c0_73 = arith.constant 0 : index
    %c0_74 = arith.constant 0 : index
    %c0_75 = arith.constant 0 : index
    %247 = vector.load %arg2[%c0_73, %c0_74, %c0_75] : memref<8x8x512xf32, #tpu.memory_space<vmem>>, vector<1x8x512xf32>
    %248 = vector.shape_cast %247 : vector<1x8x512xf32> to vector<8x512xf32>
    %c1_i32_76 = arith.constant 1 : i32
    %c0_77 = arith.constant 0 : index
    %c0_78 = arith.constant 0 : index
    %249 = vector.load %arg6[%c0_77, %c0_78] : memref<128x512xf32, #tpu.memory_space<vmem>>, vector<128x512xf32>
    %cst_79 = arith.constant dense<0.000000e+00> : vector<8x512xf32>
    %250 = tpu.matmul %241, %249, %cst_79 {dimension_numbers = #tpu.dot_dimension_numbers<[1], [0], [0], [1], [0, 0, 1, 1], [], []>} : vector<8x128xf32>, vector<128x512xf32>, vector<8x512xf32> -> vector<8x512xf32>
    %251 = arith.addf %248, %250 : vector<8x512xf32>
    %252 = arith.addf %251, %5 : vector<8x512xf32>
    %253 = vector.extract_strided_slice %252 {offsets = [0, 0], sizes = [8, 128], strides = [1, 1]} : vector<8x512xf32> to vector<8x128xf32>
    %254 = arith.negf %253 : vector<8x128xf32>
    %255 = math.exp %254 : vector<8x128xf32>
    %cst_80 = arith.constant 1.000000e+00 : f32
    %256 = vector.broadcast %cst_80 : f32 to vector<8x128xf32>
    %257 = arith.addf %256, %255 : vector<8x128xf32>
    %258 = arith.divf %256, %257 : vector<8x128xf32>
    %259 = vector.extract_strided_slice %252 {offsets = [0, 128], sizes = [8, 128], strides = [1, 1]} : vector<8x512xf32> to vector<8x128xf32>
    %260 = arith.negf %259 : vector<8x128xf32>
    %261 = math.exp %260 : vector<8x128xf32>
    %cst_81 = arith.constant 1.000000e+00 : f32
    %262 = vector.broadcast %cst_81 : f32 to vector<8x128xf32>
    %263 = arith.addf %262, %261 : vector<8x128xf32>
    %264 = arith.divf %262, %263 : vector<8x128xf32>
    %265 = vector.extract_strided_slice %252 {offsets = [0, 256], sizes = [8, 128], strides = [1, 1]} : vector<8x512xf32> to vector<8x128xf32>
    %266 = vector.extract_strided_slice %252 {offsets = [0, 384], sizes = [8, 128], strides = [1, 1]} : vector<8x512xf32> to vector<8x128xf32>
    %267 = arith.mulf %258, %266 : vector<8x128xf32>
    %268 = arith.addf %265, %267 : vector<8x128xf32>
    %269 = math.tanh %268 : vector<8x128xf32>
    %cst_82 = arith.constant 1.000000e+00 : f32
    %270 = vector.broadcast %cst_82 : f32 to vector<8x128xf32>
    %271 = arith.subf %270, %264 : vector<8x128xf32>
    %272 = arith.mulf %271, %269 : vector<8x128xf32>
    %273 = arith.mulf %264, %241 : vector<8x128xf32>
    %274 = arith.addf %272, %273 : vector<8x128xf32>
    %c0_83 = arith.constant 0 : index
    %c0_84 = arith.constant 0 : index
    %275 = vector.load %arg8[%c0_83, %c0_84] : memref<128x128xf32, #tpu.memory_space<vmem>>, vector<128x128xf32>
    %cst_85 = arith.constant dense<0.000000e+00> : vector<8x128xf32>
    %276 = tpu.matmul %274, %275, %cst_85 {dimension_numbers = #tpu.dot_dimension_numbers<[1], [0], [0], [1], [0, 0, 1, 1], [], []>} : vector<8x128xf32>, vector<128x128xf32>, vector<8x128xf32> -> vector<8x128xf32>
    %277 = arith.addf %276, %8 : vector<8x128xf32>
    %278 = arith.index_cast %c1_i32_76 : i32 to index
    %c0_86 = arith.constant 0 : index
    %c0_87 = arith.constant 0 : index
    %279 = vector.load %arg10[%278, %c0_86, %c0_87] : memref<8x8x128xf32, #tpu.memory_space<vmem>>, vector<1x8x128xf32>
    %280 = vector.shape_cast %279 : vector<1x8x128xf32> to vector<8x128xf32>
    %281 = vector.shape_cast %277 : vector<8x128xf32> to vector<1x8x128xf32>
    tpu.vector_store %arg10[%278, %c0_86, %c0_87], %281 {strides = array<i32>} : memref<8x8x128xf32, #tpu.memory_space<vmem>>, vector<1x8x128xf32>,
    %cst_88 = arith.constant dense<0xFF800000> : vector<8xf32>
    %282 = vector.multi_reduction <maximumf>, %277, %cst_88 [1] : vector<8x128xf32> to vector<8xf32>
    %283 = vector.shape_cast %282 : vector<8xf32> to vector<8x1xf32>
    %284 = vector.broadcast %283 : vector<8x1xf32> to vector<8x128xf32>
    %285 = arith.cmpf oeq, %277, %284 : vector<8x128xf32>
    %c128_i32 = arith.constant 128 : i32
    %286 = vector.broadcast %c128_i32 : i32 to vector<8x128xi32>
    %287 = arith.select %285, %246, %286 : vector<8x128xi1>, vector<8x128xi32>
    %cst_89 = arith.constant dense<2147483647> : vector<8xi32>
    %288 = vector.multi_reduction <minsi>, %287, %cst_89 [1] : vector<8x128xi32> to vector<8xi32>
    %289 = vector.shape_cast %288 : vector<8xi32> to vector<8x1xi32>
    %290 = vector.broadcast %289 : vector<8x1xi32> to vector<8x128xi32>
    %291 = arith.cmpi eq, %246, %290 : vector<8x128xi32>
    %292 = arith.extui %291 : vector<8x128xi1> to vector<8x128xi32>
    %293 = arith.sitofp %292 : vector<8x128xi32> to vector<8x128xf32>
    %c0_90 = arith.constant 0 : index
    %c0_91 = arith.constant 0 : index
    %294 = vector.load %arg3[%c0_90, %c0_91] : memref<128x512xf32, #tpu.memory_space<vmem>>, vector<128x512xf32>
    %cst_92 = arith.constant dense<0.000000e+00> : vector<8x512xf32>
    %295 = tpu.matmul %293, %294, %cst_92 {dimension_numbers = #tpu.dot_dimension_numbers<[1], [0], [0], [1], [0, 0, 1, 1], [], []>} : vector<8x128xf32>, vector<128x512xf32>, vector<8x512xf32> -> vector<8x512xf32>
    %296 = arith.index_cast %c1_i32_76 : i32 to index
    %297 = memref.load %arg0[%296] : memref<8xi32, #tpu.memory_space<smem>>
    %c0_i32_93 = arith.constant 0 : i32
    %298 = arith.cmpi ne, %297, %c0_i32_93 : i32
    %299 = arith.extui %298 : i1 to i32
    %300 = arith.sitofp %299 : i32 to f32
    %301 = arith.index_cast %c1_i32_76 : i32 to index
    %c0_94 = arith.constant 0 : index
    %c0_95 = arith.constant 0 : index
    %302 = vector.load %arg2[%301, %c0_94, %c0_95] : memref<8x8x512xf32, #tpu.memory_space<vmem>>, vector<1x8x512xf32>
    %303 = vector.shape_cast %302 : vector<1x8x512xf32> to vector<8x512xf32>
    %304 = vector.broadcast %300 : f32 to vector<8x512xf32>
    %305 = arith.mulf %304, %303 : vector<8x512xf32>
    %cst_96 = arith.constant 1.000000e+00 : f32
    %306 = arith.subf %cst_96, %300 : f32
    %307 = vector.broadcast %306 : f32 to vector<8x512xf32>
    %308 = arith.mulf %307, %295 : vector<8x512xf32>
    %309 = arith.addf %305, %308 : vector<8x512xf32>
    %c2_i32_97 = arith.constant 2 : i32
    %c0_98 = arith.constant 0 : index
    %c0_99 = arith.constant 0 : index
    %310 = vector.load %arg6[%c0_98, %c0_99] : memref<128x512xf32, #tpu.memory_space<vmem>>, vector<128x512xf32>
    %cst_100 = arith.constant dense<0.000000e+00> : vector<8x512xf32>
    %311 = tpu.matmul %274, %310, %cst_100 {dimension_numbers = #tpu.dot_dimension_numbers<[1], [0], [0], [1], [0, 0, 1, 1], [], []>} : vector<8x128xf32>, vector<128x512xf32>, vector<8x512xf32> -> vector<8x512xf32>
    %312 = arith.addf %309, %311 : vector<8x512xf32>
    %313 = arith.addf %312, %5 : vector<8x512xf32>
    %314 = vector.extract_strided_slice %313 {offsets = [0, 0], sizes = [8, 128], strides = [1, 1]} : vector<8x512xf32> to vector<8x128xf32>
    %315 = arith.negf %314 : vector<8x128xf32>
    %316 = math.exp %315 : vector<8x128xf32>
    %cst_101 = arith.constant 1.000000e+00 : f32
    %317 = vector.broadcast %cst_101 : f32 to vector<8x128xf32>
    %318 = arith.addf %317, %316 : vector<8x128xf32>
    %319 = arith.divf %317, %318 : vector<8x128xf32>
    %320 = vector.extract_strided_slice %313 {offsets = [0, 128], sizes = [8, 128], strides = [1, 1]} : vector<8x512xf32> to vector<8x128xf32>
    %321 = arith.negf %320 : vector<8x128xf32>
    %322 = math.exp %321 : vector<8x128xf32>
    %cst_102 = arith.constant 1.000000e+00 : f32
    %323 = vector.broadcast %cst_102 : f32 to vector<8x128xf32>
    %324 = arith.addf %323, %322 : vector<8x128xf32>
    %325 = arith.divf %323, %324 : vector<8x128xf32>
    %326 = vector.extract_strided_slice %313 {offsets = [0, 256], sizes = [8, 128], strides = [1, 1]} : vector<8x512xf32> to vector<8x128xf32>
    %327 = vector.extract_strided_slice %313 {offsets = [0, 384], sizes = [8, 128], strides = [1, 1]} : vector<8x512xf32> to vector<8x128xf32>
    %328 = arith.mulf %319, %327 : vector<8x128xf32>
    %329 = arith.addf %326, %328 : vector<8x128xf32>
    %330 = math.tanh %329 : vector<8x128xf32>
    %cst_103 = arith.constant 1.000000e+00 : f32
    %331 = vector.broadcast %cst_103 : f32 to vector<8x128xf32>
    %332 = arith.subf %331, %325 : vector<8x128xf32>
    %333 = arith.mulf %332, %330 : vector<8x128xf32>
    %334 = arith.mulf %325, %274 : vector<8x128xf32>
    %335 = arith.addf %333, %334 : vector<8x128xf32>
    %c0_104 = arith.constant 0 : index
    %c0_105 = arith.constant 0 : index
    %336 = vector.load %arg8[%c0_104, %c0_105] : memref<128x128xf32, #tpu.memory_space<vmem>>, vector<128x128xf32>
    %cst_106 = arith.constant dense<0.000000e+00> : vector<8x128xf32>
    %337 = tpu.matmul %335, %336, %cst_106 {dimension_numbers = #tpu.dot_dimension_numbers<[1], [0], [0], [1], [0, 0, 1, 1], [], []>} : vector<8x128xf32>, vector<128x128xf32>, vector<8x128xf32> -> vector<8x128xf32>
    %338 = arith.addf %337, %8 : vector<8x128xf32>
    %339 = arith.index_cast %c2_i32_97 : i32 to index
    %c0_107 = arith.constant 0 : index
    %c0_108 = arith.constant 0 : index
    %340 = vector.load %arg10[%339, %c0_107, %c0_108] : memref<8x8x128xf32, #tpu.memory_space<vmem>>, vector<1x8x128xf32>
    %341 = vector.shape_cast %340 : vector<1x8x128xf32> to vector<8x128xf32>
    %342 = vector.shape_cast %338 : vector<8x128xf32> to vector<1x8x128xf32>
    tpu.vector_store %arg10[%339, %c0_107, %c0_108], %342 {strides = array<i32>} : memref<8x8x128xf32, #tpu.memory_space<vmem>>, vector<1x8x128xf32>,
    %cst_109 = arith.constant dense<0xFF800000> : vector<8xf32>
    %343 = vector.multi_reduction <maximumf>, %338, %cst_109 [1] : vector<8x128xf32> to vector<8xf32>
    %344 = vector.shape_cast %343 : vector<8xf32> to vector<8x1xf32>
    %345 = vector.broadcast %344 : vector<8x1xf32> to vector<8x128xf32>
    %346 = arith.cmpf oeq, %338, %345 : vector<8x128xf32>
    %c128_i32_110 = arith.constant 128 : i32
    %347 = vector.broadcast %c128_i32_110 : i32 to vector<8x128xi32>
    %348 = arith.select %346, %246, %347 : vector<8x128xi1>, vector<8x128xi32>
    %cst_111 = arith.constant dense<2147483647> : vector<8xi32>
    %349 = vector.multi_reduction <minsi>, %348, %cst_111 [1] : vector<8x128xi32> to vector<8xi32>
    %350 = vector.shape_cast %349 : vector<8xi32> to vector<8x1xi32>
    %351 = vector.broadcast %350 : vector<8x1xi32> to vector<8x128xi32>
    %352 = arith.cmpi eq, %246, %351 : vector<8x128xi32>
    %353 = arith.extui %352 : vector<8x128xi1> to vector<8x128xi32>
    %354 = arith.sitofp %353 : vector<8x128xi32> to vector<8x128xf32>
    %c0_112 = arith.constant 0 : index
    %c0_113 = arith.constant 0 : index
    %355 = vector.load %arg3[%c0_112, %c0_113] : memref<128x512xf32, #tpu.memory_space<vmem>>, vector<128x512xf32>
    %cst_114 = arith.constant dense<0.000000e+00> : vector<8x512xf32>
    %356 = tpu.matmul %354, %355, %cst_114 {dimension_numbers = #tpu.dot_dimension_numbers<[1], [0], [0], [1], [0, 0, 1, 1], [], []>} : vector<8x128xf32>, vector<128x512xf32>, vector<8x512xf32> -> vector<8x512xf32>
    %357 = arith.index_cast %c2_i32_97 : i32 to index
    %358 = memref.load %arg0[%357] : memref<8xi32, #tpu.memory_space<smem>>
    %c0_i32_115 = arith.constant 0 : i32
    %359 = arith.cmpi ne, %358, %c0_i32_115 : i32
    %360 = arith.extui %359 : i1 to i32
    %361 = arith.sitofp %360 : i32 to f32
    %362 = arith.index_cast %c2_i32_97 : i32 to index
    %c0_116 = arith.constant 0 : index
    %c0_117 = arith.constant 0 : index
    %363 = vector.load %arg2[%362, %c0_116, %c0_117] : memref<8x8x512xf32, #tpu.memory_space<vmem>>, vector<1x8x512xf32>
    %364 = vector.shape_cast %363 : vector<1x8x512xf32> to vector<8x512xf32>
    %365 = vector.broadcast %361 : f32 to vector<8x512xf32>
    %366 = arith.mulf %365, %364 : vector<8x512xf32>
    %cst_118 = arith.constant 1.000000e+00 : f32
    %367 = arith.subf %cst_118, %361 : f32
    %368 = vector.broadcast %367 : f32 to vector<8x512xf32>
    %369 = arith.mulf %368, %356 : vector<8x512xf32>
    %370 = arith.addf %366, %369 : vector<8x512xf32>
    %c3_i32_119 = arith.constant 3 : i32
    %c0_120 = arith.constant 0 : index
    %c0_121 = arith.constant 0 : index
    %371 = vector.load %arg6[%c0_120, %c0_121] : memref<128x512xf32, #tpu.memory_space<vmem>>, vector<128x512xf32>
    %cst_122 = arith.constant dense<0.000000e+00> : vector<8x512xf32>
    %372 = tpu.matmul %335, %371, %cst_122 {dimension_numbers = #tpu.dot_dimension_numbers<[1], [0], [0], [1], [0, 0, 1, 1], [], []>} : vector<8x128xf32>, vector<128x512xf32>, vector<8x512xf32> -> vector<8x512xf32>
    %373 = arith.addf %370, %372 : vector<8x512xf32>
    %374 = arith.addf %373, %5 : vector<8x512xf32>
    %375 = vector.extract_strided_slice %374 {offsets = [0, 0], sizes = [8, 128], strides = [1, 1]} : vector<8x512xf32> to vector<8x128xf32>
    %376 = arith.negf %375 : vector<8x128xf32>
    %377 = math.exp %376 : vector<8x128xf32>
    %cst_123 = arith.constant 1.000000e+00 : f32
    %378 = vector.broadcast %cst_123 : f32 to vector<8x128xf32>
    %379 = arith.addf %378, %377 : vector<8x128xf32>
    %380 = arith.divf %378, %379 : vector<8x128xf32>
    %381 = vector.extract_strided_slice %374 {offsets = [0, 128], sizes = [8, 128], strides = [1, 1]} : vector<8x512xf32> to vector<8x128xf32>
    %382 = arith.negf %381 : vector<8x128xf32>
    %383 = math.exp %382 : vector<8x128xf32>
    %cst_124 = arith.constant 1.000000e+00 : f32
    %384 = vector.broadcast %cst_124 : f32 to vector<8x128xf32>
    %385 = arith.addf %384, %383 : vector<8x128xf32>
    %386 = arith.divf %384, %385 : vector<8x128xf32>
    %387 = vector.extract_strided_slice %374 {offsets = [0, 256], sizes = [8, 128], strides = [1, 1]} : vector<8x512xf32> to vector<8x128xf32>
    %388 = vector.extract_strided_slice %374 {offsets = [0, 384], sizes = [8, 128], strides = [1, 1]} : vector<8x512xf32> to vector<8x128xf32>
    %389 = arith.mulf %380, %388 : vector<8x128xf32>
    %390 = arith.addf %387, %389 : vector<8x128xf32>
    %391 = math.tanh %390 : vector<8x128xf32>
    %cst_125 = arith.constant 1.000000e+00 : f32
    %392 = vector.broadcast %cst_125 : f32 to vector<8x128xf32>
    %393 = arith.subf %392, %386 : vector<8x128xf32>
    %394 = arith.mulf %393, %391 : vector<8x128xf32>
    %395 = arith.mulf %386, %335 : vector<8x128xf32>
    %396 = arith.addf %394, %395 : vector<8x128xf32>
    %c0_126 = arith.constant 0 : index
    %c0_127 = arith.constant 0 : index
    %397 = vector.load %arg8[%c0_126, %c0_127] : memref<128x128xf32, #tpu.memory_space<vmem>>, vector<128x128xf32>
    %cst_128 = arith.constant dense<0.000000e+00> : vector<8x128xf32>
    %398 = tpu.matmul %396, %397, %cst_128 {dimension_numbers = #tpu.dot_dimension_numbers<[1], [0], [0], [1], [0, 0, 1, 1], [], []>} : vector<8x128xf32>, vector<128x128xf32>, vector<8x128xf32> -> vector<8x128xf32>
    %399 = arith.addf %398, %8 : vector<8x128xf32>
    %400 = arith.index_cast %c3_i32_119 : i32 to index
    %c0_129 = arith.constant 0 : index
    %c0_130 = arith.constant 0 : index
    %401 = vector.load %arg10[%400, %c0_129, %c0_130] : memref<8x8x128xf32, #tpu.memory_space<vmem>>, vector<1x8x128xf32>
    %402 = vector.shape_cast %401 : vector<1x8x128xf32> to vector<8x128xf32>
    %403 = vector.shape_cast %399 : vector<8x128xf32> to vector<1x8x128xf32>
    tpu.vector_store %arg10[%400, %c0_129, %c0_130], %403 {strides = array<i32>} : memref<8x8x128xf32, #tpu.memory_space<vmem>>, vector<1x8x128xf32>,
    %cst_131 = arith.constant dense<0xFF800000> : vector<8xf32>
    %404 = vector.multi_reduction <maximumf>, %399, %cst_131 [1] : vector<8x128xf32> to vector<8xf32>
    %405 = vector.shape_cast %404 : vector<8xf32> to vector<8x1xf32>
    %406 = vector.broadcast %405 : vector<8x1xf32> to vector<8x128xf32>
    %407 = arith.cmpf oeq, %399, %406 : vector<8x128xf32>
    %c128_i32_132 = arith.constant 128 : i32
    %408 = vector.broadcast %c128_i32_132 : i32 to vector<8x128xi32>
    %409 = arith.select %407, %246, %408 : vector<8x128xi1>, vector<8x128xi32>
    %cst_133 = arith.constant dense<2147483647> : vector<8xi32>
    %410 = vector.multi_reduction <minsi>, %409, %cst_133 [1] : vector<8x128xi32> to vector<8xi32>
    %411 = vector.shape_cast %410 : vector<8xi32> to vector<8x1xi32>
    %412 = vector.broadcast %411 : vector<8x1xi32> to vector<8x128xi32>
    %413 = arith.cmpi eq, %246, %412 : vector<8x128xi32>
    %414 = arith.extui %413 : vector<8x128xi1> to vector<8x128xi32>
    %415 = arith.sitofp %414 : vector<8x128xi32> to vector<8x128xf32>
    %c0_134 = arith.constant 0 : index
    %c0_135 = arith.constant 0 : index
    %416 = vector.load %arg3[%c0_134, %c0_135] : memref<128x512xf32, #tpu.memory_space<vmem>>, vector<128x512xf32>
    %cst_136 = arith.constant dense<0.000000e+00> : vector<8x512xf32>
    %417 = tpu.matmul %415, %416, %cst_136 {dimension_numbers = #tpu.dot_dimension_numbers<[1], [0], [0], [1], [0, 0, 1, 1], [], []>} : vector<8x128xf32>, vector<128x512xf32>, vector<8x512xf32> -> vector<8x512xf32>
    %418 = arith.index_cast %c3_i32_119 : i32 to index
    %419 = memref.load %arg0[%418] : memref<8xi32, #tpu.memory_space<smem>>
    %c0_i32_137 = arith.constant 0 : i32
    %420 = arith.cmpi ne, %419, %c0_i32_137 : i32
    %421 = arith.extui %420 : i1 to i32
    %422 = arith.sitofp %421 : i32 to f32
    %423 = arith.index_cast %c3_i32_119 : i32 to index
    %c0_138 = arith.constant 0 : index
    %c0_139 = arith.constant 0 : index
    %424 = vector.load %arg2[%423, %c0_138, %c0_139] : memref<8x8x512xf32, #tpu.memory_space<vmem>>, vector<1x8x512xf32>
    %425 = vector.shape_cast %424 : vector<1x8x512xf32> to vector<8x512xf32>
    %426 = vector.broadcast %422 : f32 to vector<8x512xf32>
    %427 = arith.mulf %426, %425 : vector<8x512xf32>
    %cst_140 = arith.constant 1.000000e+00 : f32
    %428 = arith.subf %cst_140, %422 : f32
    %429 = vector.broadcast %428 : f32 to vector<8x512xf32>
    %430 = arith.mulf %429, %417 : vector<8x512xf32>
    %431 = arith.addf %427, %430 : vector<8x512xf32>
    %c4_i32_141 = arith.constant 4 : i32
    %c0_142 = arith.constant 0 : index
    %c0_143 = arith.constant 0 : index
    %432 = vector.load %arg6[%c0_142, %c0_143] : memref<128x512xf32, #tpu.memory_space<vmem>>, vector<128x512xf32>
    %cst_144 = arith.constant dense<0.000000e+00> : vector<8x512xf32>
    %433 = tpu.matmul %396, %432, %cst_144 {dimension_numbers = #tpu.dot_dimension_numbers<[1], [0], [0], [1], [0, 0, 1, 1], [], []>} : vector<8x128xf32>, vector<128x512xf32>, vector<8x512xf32> -> vector<8x512xf32>
    %434 = arith.addf %431, %433 : vector<8x512xf32>
    %435 = arith.addf %434, %5 : vector<8x512xf32>
    %436 = vector.extract_strided_slice %435 {offsets = [0, 0], sizes = [8, 128], strides = [1, 1]} : vector<8x512xf32> to vector<8x128xf32>
    %437 = arith.negf %436 : vector<8x128xf32>
    %438 = math.exp %437 : vector<8x128xf32>
    %cst_145 = arith.constant 1.000000e+00 : f32
    %439 = vector.broadcast %cst_145 : f32 to vector<8x128xf32>
    %440 = arith.addf %439, %438 : vector<8x128xf32>
    %441 = arith.divf %439, %440 : vector<8x128xf32>
    %442 = vector.extract_strided_slice %435 {offsets = [0, 128], sizes = [8, 128], strides = [1, 1]} : vector<8x512xf32> to vector<8x128xf32>
    %443 = arith.negf %442 : vector<8x128xf32>
    %444 = math.exp %443 : vector<8x128xf32>
    %cst_146 = arith.constant 1.000000e+00 : f32
    %445 = vector.broadcast %cst_146 : f32 to vector<8x128xf32>
    %446 = arith.addf %445, %444 : vector<8x128xf32>
    %447 = arith.divf %445, %446 : vector<8x128xf32>
    %448 = vector.extract_strided_slice %435 {offsets = [0, 256], sizes = [8, 128], strides = [1, 1]} : vector<8x512xf32> to vector<8x128xf32>
    %449 = vector.extract_strided_slice %435 {offsets = [0, 384], sizes = [8, 128], strides = [1, 1]} : vector<8x512xf32> to vector<8x128xf32>
    %450 = arith.mulf %441, %449 : vector<8x128xf32>
    %451 = arith.addf %448, %450 : vector<8x128xf32>
    %452 = math.tanh %451 : vector<8x128xf32>
    %cst_147 = arith.constant 1.000000e+00 : f32
    %453 = vector.broadcast %cst_147 : f32 to vector<8x128xf32>
    %454 = arith.subf %453, %447 : vector<8x128xf32>
    %455 = arith.mulf %454, %452 : vector<8x128xf32>
    %456 = arith.mulf %447, %396 : vector<8x128xf32>
    %457 = arith.addf %455, %456 : vector<8x128xf32>
    %c0_148 = arith.constant 0 : index
    %c0_149 = arith.constant 0 : index
    %458 = vector.load %arg8[%c0_148, %c0_149] : memref<128x128xf32, #tpu.memory_space<vmem>>, vector<128x128xf32>
    %cst_150 = arith.constant dense<0.000000e+00> : vector<8x128xf32>
    %459 = tpu.matmul %457, %458, %cst_150 {dimension_numbers = #tpu.dot_dimension_numbers<[1], [0], [0], [1], [0, 0, 1, 1], [], []>} : vector<8x128xf32>, vector<128x128xf32>, vector<8x128xf32> -> vector<8x128xf32>
    %460 = arith.addf %459, %8 : vector<8x128xf32>
    %461 = arith.index_cast %c4_i32_141 : i32 to index
    %c0_151 = arith.constant 0 : index
    %c0_152 = arith.constant 0 : index
    %462 = vector.load %arg10[%461, %c0_151, %c0_152] : memref<8x8x128xf32, #tpu.memory_space<vmem>>, vector<1x8x128xf32>
    %463 = vector.shape_cast %462 : vector<1x8x128xf32> to vector<8x128xf32>
    %464 = vector.shape_cast %460 : vector<8x128xf32> to vector<1x8x128xf32>
    tpu.vector_store %arg10[%461, %c0_151, %c0_152], %464 {strides = array<i32>} : memref<8x8x128xf32, #tpu.memory_space<vmem>>, vector<1x8x128xf32>,
    %cst_153 = arith.constant dense<0xFF800000> : vector<8xf32>
    %465 = vector.multi_reduction <maximumf>, %460, %cst_153 [1] : vector<8x128xf32> to vector<8xf32>
    %466 = vector.shape_cast %465 : vector<8xf32> to vector<8x1xf32>
    %467 = vector.broadcast %466 : vector<8x1xf32> to vector<8x128xf32>
    %468 = arith.cmpf oeq, %460, %467 : vector<8x128xf32>
    %c128_i32_154 = arith.constant 128 : i32
    %469 = vector.broadcast %c128_i32_154 : i32 to vector<8x128xi32>
    %470 = arith.select %468, %246, %469 : vector<8x128xi1>, vector<8x128xi32>
    %cst_155 = arith.constant dense<2147483647> : vector<8xi32>
    %471 = vector.multi_reduction <minsi>, %470, %cst_155 [1] : vector<8x128xi32> to vector<8xi32>
    %472 = vector.shape_cast %471 : vector<8xi32> to vector<8x1xi32>
    %473 = vector.broadcast %472 : vector<8x1xi32> to vector<8x128xi32>
    %474 = arith.cmpi eq, %246, %473 : vector<8x128xi32>
    %475 = arith.extui %474 : vector<8x128xi1> to vector<8x128xi32>
    %476 = arith.sitofp %475 : vector<8x128xi32> to vector<8x128xf32>
    %c0_156 = arith.constant 0 : index
    %c0_157 = arith.constant 0 : index
    %477 = vector.load %arg3[%c0_156, %c0_157] : memref<128x512xf32, #tpu.memory_space<vmem>>, vector<128x512xf32>
    %cst_158 = arith.constant dense<0.000000e+00> : vector<8x512xf32>
    %478 = tpu.matmul %476, %477, %cst_158 {dimension_numbers = #tpu.dot_dimension_numbers<[1], [0], [0], [1], [0, 0, 1, 1], [], []>} : vector<8x128xf32>, vector<128x512xf32>, vector<8x512xf32> -> vector<8x512xf32>
    %479 = arith.index_cast %c4_i32_141 : i32 to index
    %480 = memref.load %arg0[%479] : memref<8xi32, #tpu.memory_space<smem>>
    %c0_i32_159 = arith.constant 0 : i32
    %481 = arith.cmpi ne, %480, %c0_i32_159 : i32
    %482 = arith.extui %481 : i1 to i32
    %483 = arith.sitofp %482 : i32 to f32
    %484 = arith.index_cast %c4_i32_141 : i32 to index
    %c0_160 = arith.constant 0 : index
    %c0_161 = arith.constant 0 : index
    %485 = vector.load %arg2[%484, %c0_160, %c0_161] : memref<8x8x512xf32, #tpu.memory_space<vmem>>, vector<1x8x512xf32>
    %486 = vector.shape_cast %485 : vector<1x8x512xf32> to vector<8x512xf32>
    %487 = vector.broadcast %483 : f32 to vector<8x512xf32>
    %488 = arith.mulf %487, %486 : vector<8x512xf32>
    %cst_162 = arith.constant 1.000000e+00 : f32
    %489 = arith.subf %cst_162, %483 : f32
    %490 = vector.broadcast %489 : f32 to vector<8x512xf32>
    %491 = arith.mulf %490, %478 : vector<8x512xf32>
    %492 = arith.addf %488, %491 : vector<8x512xf32>
    %c5_i32_163 = arith.constant 5 : i32
    %c0_164 = arith.constant 0 : index
    %c0_165 = arith.constant 0 : index
    %493 = vector.load %arg6[%c0_164, %c0_165] : memref<128x512xf32, #tpu.memory_space<vmem>>, vector<128x512xf32>
    %cst_166 = arith.constant dense<0.000000e+00> : vector<8x512xf32>
    %494 = tpu.matmul %457, %493, %cst_166 {dimension_numbers = #tpu.dot_dimension_numbers<[1], [0], [0], [1], [0, 0, 1, 1], [], []>} : vector<8x128xf32>, vector<128x512xf32>, vector<8x512xf32> -> vector<8x512xf32>
    %495 = arith.addf %492, %494 : vector<8x512xf32>
    %496 = arith.addf %495, %5 : vector<8x512xf32>
    %497 = vector.extract_strided_slice %496 {offsets = [0, 0], sizes = [8, 128], strides = [1, 1]} : vector<8x512xf32> to vector<8x128xf32>
    %498 = arith.negf %497 : vector<8x128xf32>
    %499 = math.exp %498 : vector<8x128xf32>
    %cst_167 = arith.constant 1.000000e+00 : f32
    %500 = vector.broadcast %cst_167 : f32 to vector<8x128xf32>
    %501 = arith.addf %500, %499 : vector<8x128xf32>
    %502 = arith.divf %500, %501 : vector<8x128xf32>
    %503 = vector.extract_strided_slice %496 {offsets = [0, 128], sizes = [8, 128], strides = [1, 1]} : vector<8x512xf32> to vector<8x128xf32>
    %504 = arith.negf %503 : vector<8x128xf32>
    %505 = math.exp %504 : vector<8x128xf32>
    %cst_168 = arith.constant 1.000000e+00 : f32
    %506 = vector.broadcast %cst_168 : f32 to vector<8x128xf32>
    %507 = arith.addf %506, %505 : vector<8x128xf32>
    %508 = arith.divf %506, %507 : vector<8x128xf32>
    %509 = vector.extract_strided_slice %496 {offsets = [0, 256], sizes = [8, 128], strides = [1, 1]} : vector<8x512xf32> to vector<8x128xf32>
    %510 = vector.extract_strided_slice %496 {offsets = [0, 384], sizes = [8, 128], strides = [1, 1]} : vector<8x512xf32> to vector<8x128xf32>
    %511 = arith.mulf %502, %510 : vector<8x128xf32>
    %512 = arith.addf %509, %511 : vector<8x128xf32>
    %513 = math.tanh %512 : vector<8x128xf32>
    %cst_169 = arith.constant 1.000000e+00 : f32
    %514 = vector.broadcast %cst_169 : f32 to vector<8x128xf32>
    %515 = arith.subf %514, %508 : vector<8x128xf32>
    %516 = arith.mulf %515, %513 : vector<8x128xf32>
    %517 = arith.mulf %508, %457 : vector<8x128xf32>
    %518 = arith.addf %516, %517 : vector<8x128xf32>
    %c0_170 = arith.constant 0 : index
    %c0_171 = arith.constant 0 : index
    %519 = vector.load %arg8[%c0_170, %c0_171] : memref<128x128xf32, #tpu.memory_space<vmem>>, vector<128x128xf32>
    %cst_172 = arith.constant dense<0.000000e+00> : vector<8x128xf32>
    %520 = tpu.matmul %518, %519, %cst_172 {dimension_numbers = #tpu.dot_dimension_numbers<[1], [0], [0], [1], [0, 0, 1, 1], [], []>} : vector<8x128xf32>, vector<128x128xf32>, vector<8x128xf32> -> vector<8x128xf32>
    %521 = arith.addf %520, %8 : vector<8x128xf32>
    %522 = arith.index_cast %c5_i32_163 : i32 to index
    %c0_173 = arith.constant 0 : index
    %c0_174 = arith.constant 0 : index
    %523 = vector.load %arg10[%522, %c0_173, %c0_174] : memref<8x8x128xf32, #tpu.memory_space<vmem>>, vector<1x8x128xf32>
    %524 = vector.shape_cast %523 : vector<1x8x128xf32> to vector<8x128xf32>
    %525 = vector.shape_cast %521 : vector<8x128xf32> to vector<1x8x128xf32>
    tpu.vector_store %arg10[%522, %c0_173, %c0_174], %525 {strides = array<i32>} : memref<8x8x128xf32, #tpu.memory_space<vmem>>, vector<1x8x128xf32>,
    %cst_175 = arith.constant dense<0xFF800000> : vector<8xf32>
    %526 = vector.multi_reduction <maximumf>, %521, %cst_175 [1] : vector<8x128xf32> to vector<8xf32>
    %527 = vector.shape_cast %526 : vector<8xf32> to vector<8x1xf32>
    %528 = vector.broadcast %527 : vector<8x1xf32> to vector<8x128xf32>
    %529 = arith.cmpf oeq, %521, %528 : vector<8x128xf32>
    %c128_i32_176 = arith.constant 128 : i32
    %530 = vector.broadcast %c128_i32_176 : i32 to vector<8x128xi32>
    %531 = arith.select %529, %246, %530 : vector<8x128xi1>, vector<8x128xi32>
    %cst_177 = arith.constant dense<2147483647> : vector<8xi32>
    %532 = vector.multi_reduction <minsi>, %531, %cst_177 [1] : vector<8x128xi32> to vector<8xi32>
    %533 = vector.shape_cast %532 : vector<8xi32> to vector<8x1xi32>
    %534 = vector.broadcast %533 : vector<8x1xi32> to vector<8x128xi32>
    %535 = arith.cmpi eq, %246, %534 : vector<8x128xi32>
    %536 = arith.extui %535 : vector<8x128xi1> to vector<8x128xi32>
    %537 = arith.sitofp %536 : vector<8x128xi32> to vector<8x128xf32>
    %c0_178 = arith.constant 0 : index
    %c0_179 = arith.constant 0 : index
    %538 = vector.load %arg3[%c0_178, %c0_179] : memref<128x512xf32, #tpu.memory_space<vmem>>, vector<128x512xf32>
    %cst_180 = arith.constant dense<0.000000e+00> : vector<8x512xf32>
    %539 = tpu.matmul %537, %538, %cst_180 {dimension_numbers = #tpu.dot_dimension_numbers<[1], [0], [0], [1], [0, 0, 1, 1], [], []>} : vector<8x128xf32>, vector<128x512xf32>, vector<8x512xf32> -> vector<8x512xf32>
    %540 = arith.index_cast %c5_i32_163 : i32 to index
    %541 = memref.load %arg0[%540] : memref<8xi32, #tpu.memory_space<smem>>
    %c0_i32_181 = arith.constant 0 : i32
    %542 = arith.cmpi ne, %541, %c0_i32_181 : i32
    %543 = arith.extui %542 : i1 to i32
    %544 = arith.sitofp %543 : i32 to f32
    %545 = arith.index_cast %c5_i32_163 : i32 to index
    %c0_182 = arith.constant 0 : index
    %c0_183 = arith.constant 0 : index
    %546 = vector.load %arg2[%545, %c0_182, %c0_183] : memref<8x8x512xf32, #tpu.memory_space<vmem>>, vector<1x8x512xf32>
    %547 = vector.shape_cast %546 : vector<1x8x512xf32> to vector<8x512xf32>
    %548 = vector.broadcast %544 : f32 to vector<8x512xf32>
    %549 = arith.mulf %548, %547 : vector<8x512xf32>
    %cst_184 = arith.constant 1.000000e+00 : f32
    %550 = arith.subf %cst_184, %544 : f32
    %551 = vector.broadcast %550 : f32 to vector<8x512xf32>
    %552 = arith.mulf %551, %539 : vector<8x512xf32>
    %553 = arith.addf %549, %552 : vector<8x512xf32>
    %c6_i32_185 = arith.constant 6 : i32
    %c0_186 = arith.constant 0 : index
    %c0_187 = arith.constant 0 : index
    %554 = vector.load %arg6[%c0_186, %c0_187] : memref<128x512xf32, #tpu.memory_space<vmem>>, vector<128x512xf32>
    %cst_188 = arith.constant dense<0.000000e+00> : vector<8x512xf32>
    %555 = tpu.matmul %518, %554, %cst_188 {dimension_numbers = #tpu.dot_dimension_numbers<[1], [0], [0], [1], [0, 0, 1, 1], [], []>} : vector<8x128xf32>, vector<128x512xf32>, vector<8x512xf32> -> vector<8x512xf32>
    %556 = arith.addf %553, %555 : vector<8x512xf32>
    %557 = arith.addf %556, %5 : vector<8x512xf32>
    %558 = vector.extract_strided_slice %557 {offsets = [0, 0], sizes = [8, 128], strides = [1, 1]} : vector<8x512xf32> to vector<8x128xf32>
    %559 = arith.negf %558 : vector<8x128xf32>
    %560 = math.exp %559 : vector<8x128xf32>
    %cst_189 = arith.constant 1.000000e+00 : f32
    %561 = vector.broadcast %cst_189 : f32 to vector<8x128xf32>
    %562 = arith.addf %561, %560 : vector<8x128xf32>
    %563 = arith.divf %561, %562 : vector<8x128xf32>
    %564 = vector.extract_strided_slice %557 {offsets = [0, 128], sizes = [8, 128], strides = [1, 1]} : vector<8x512xf32> to vector<8x128xf32>
    %565 = arith.negf %564 : vector<8x128xf32>
    %566 = math.exp %565 : vector<8x128xf32>
    %cst_190 = arith.constant 1.000000e+00 : f32
    %567 = vector.broadcast %cst_190 : f32 to vector<8x128xf32>
    %568 = arith.addf %567, %566 : vector<8x128xf32>
    %569 = arith.divf %567, %568 : vector<8x128xf32>
    %570 = vector.extract_strided_slice %557 {offsets = [0, 256], sizes = [8, 128], strides = [1, 1]} : vector<8x512xf32> to vector<8x128xf32>
    %571 = vector.extract_strided_slice %557 {offsets = [0, 384], sizes = [8, 128], strides = [1, 1]} : vector<8x512xf32> to vector<8x128xf32>
    %572 = arith.mulf %563, %571 : vector<8x128xf32>
    %573 = arith.addf %570, %572 : vector<8x128xf32>
    %574 = math.tanh %573 : vector<8x128xf32>
    %cst_191 = arith.constant 1.000000e+00 : f32
    %575 = vector.broadcast %cst_191 : f32 to vector<8x128xf32>
    %576 = arith.subf %575, %569 : vector<8x128xf32>
    %577 = arith.mulf %576, %574 : vector<8x128xf32>
    %578 = arith.mulf %569, %518 : vector<8x128xf32>
    %579 = arith.addf %577, %578 : vector<8x128xf32>
    %c0_192 = arith.constant 0 : index
    %c0_193 = arith.constant 0 : index
    %580 = vector.load %arg8[%c0_192, %c0_193] : memref<128x128xf32, #tpu.memory_space<vmem>>, vector<128x128xf32>
    %cst_194 = arith.constant dense<0.000000e+00> : vector<8x128xf32>
    %581 = tpu.matmul %579, %580, %cst_194 {dimension_numbers = #tpu.dot_dimension_numbers<[1], [0], [0], [1], [0, 0, 1, 1], [], []>} : vector<8x128xf32>, vector<128x128xf32>, vector<8x128xf32> -> vector<8x128xf32>
    %582 = arith.addf %581, %8 : vector<8x128xf32>
    %583 = arith.index_cast %c6_i32_185 : i32 to index
    %c0_195 = arith.constant 0 : index
    %c0_196 = arith.constant 0 : index
    %584 = vector.load %arg10[%583, %c0_195, %c0_196] : memref<8x8x128xf32, #tpu.memory_space<vmem>>, vector<1x8x128xf32>
    %585 = vector.shape_cast %584 : vector<1x8x128xf32> to vector<8x128xf32>
    %586 = vector.shape_cast %582 : vector<8x128xf32> to vector<1x8x128xf32>
    tpu.vector_store %arg10[%583, %c0_195, %c0_196], %586 {strides = array<i32>} : memref<8x8x128xf32, #tpu.memory_space<vmem>>, vector<1x8x128xf32>,
    %cst_197 = arith.constant dense<0xFF800000> : vector<8xf32>
    %587 = vector.multi_reduction <maximumf>, %582, %cst_197 [1] : vector<8x128xf32> to vector<8xf32>
    %588 = vector.shape_cast %587 : vector<8xf32> to vector<8x1xf32>
    %589 = vector.broadcast %588 : vector<8x1xf32> to vector<8x128xf32>
    %590 = arith.cmpf oeq, %582, %589 : vector<8x128xf32>
    %c128_i32_198 = arith.constant 128 : i32
    %591 = vector.broadcast %c128_i32_198 : i32 to vector<8x128xi32>
    %592 = arith.select %590, %246, %591 : vector<8x128xi1>, vector<8x128xi32>
    %cst_199 = arith.constant dense<2147483647> : vector<8xi32>
    %593 = vector.multi_reduction <minsi>, %592, %cst_199 [1] : vector<8x128xi32> to vector<8xi32>
    %594 = vector.shape_cast %593 : vector<8xi32> to vector<8x1xi32>
    %595 = vector.broadcast %594 : vector<8x1xi32> to vector<8x128xi32>
    %596 = arith.cmpi eq, %246, %595 : vector<8x128xi32>
    %597 = arith.extui %596 : vector<8x128xi1> to vector<8x128xi32>
    %598 = arith.sitofp %597 : vector<8x128xi32> to vector<8x128xf32>
    %c0_200 = arith.constant 0 : index
    %c0_201 = arith.constant 0 : index
    %599 = vector.load %arg3[%c0_200, %c0_201] : memref<128x512xf32, #tpu.memory_space<vmem>>, vector<128x512xf32>
    %cst_202 = arith.constant dense<0.000000e+00> : vector<8x512xf32>
    %600 = tpu.matmul %598, %599, %cst_202 {dimension_numbers = #tpu.dot_dimension_numbers<[1], [0], [0], [1], [0, 0, 1, 1], [], []>} : vector<8x128xf32>, vector<128x512xf32>, vector<8x512xf32> -> vector<8x512xf32>
    %601 = arith.index_cast %c6_i32_185 : i32 to index
    %602 = memref.load %arg0[%601] : memref<8xi32, #tpu.memory_space<smem>>
    %c0_i32_203 = arith.constant 0 : i32
    %603 = arith.cmpi ne, %602, %c0_i32_203 : i32
    %604 = arith.extui %603 : i1 to i32
    %605 = arith.sitofp %604 : i32 to f32
    %606 = arith.index_cast %c6_i32_185 : i32 to index
    %c0_204 = arith.constant 0 : index
    %c0_205 = arith.constant 0 : index
    %607 = vector.load %arg2[%606, %c0_204, %c0_205] : memref<8x8x512xf32, #tpu.memory_space<vmem>>, vector<1x8x512xf32>
    %608 = vector.shape_cast %607 : vector<1x8x512xf32> to vector<8x512xf32>
    %609 = vector.broadcast %605 : f32 to vector<8x512xf32>
    %610 = arith.mulf %609, %608 : vector<8x512xf32>
    %cst_206 = arith.constant 1.000000e+00 : f32
    %611 = arith.subf %cst_206, %605 : f32
    %612 = vector.broadcast %611 : f32 to vector<8x512xf32>
    %613 = arith.mulf %612, %600 : vector<8x512xf32>
    %614 = arith.addf %610, %613 : vector<8x512xf32>
    %c7_i32_207 = arith.constant 7 : i32
    %c0_208 = arith.constant 0 : index
    %c0_209 = arith.constant 0 : index
    %615 = vector.load %arg6[%c0_208, %c0_209] : memref<128x512xf32, #tpu.memory_space<vmem>>, vector<128x512xf32>
    %cst_210 = arith.constant dense<0.000000e+00> : vector<8x512xf32>
    %616 = tpu.matmul %579, %615, %cst_210 {dimension_numbers = #tpu.dot_dimension_numbers<[1], [0], [0], [1], [0, 0, 1, 1], [], []>} : vector<8x128xf32>, vector<128x512xf32>, vector<8x512xf32> -> vector<8x512xf32>
    %617 = arith.addf %614, %616 : vector<8x512xf32>
    %618 = arith.addf %617, %5 : vector<8x512xf32>
    %619 = vector.extract_strided_slice %618 {offsets = [0, 0], sizes = [8, 128], strides = [1, 1]} : vector<8x512xf32> to vector<8x128xf32>
    %620 = arith.negf %619 : vector<8x128xf32>
    %621 = math.exp %620 : vector<8x128xf32>
    %cst_211 = arith.constant 1.000000e+00 : f32
    %622 = vector.broadcast %cst_211 : f32 to vector<8x128xf32>
    %623 = arith.addf %622, %621 : vector<8x128xf32>
    %624 = arith.divf %622, %623 : vector<8x128xf32>
    %625 = vector.extract_strided_slice %618 {offsets = [0, 128], sizes = [8, 128], strides = [1, 1]} : vector<8x512xf32> to vector<8x128xf32>
    %626 = arith.negf %625 : vector<8x128xf32>
    %627 = math.exp %626 : vector<8x128xf32>
    %cst_212 = arith.constant 1.000000e+00 : f32
    %628 = vector.broadcast %cst_212 : f32 to vector<8x128xf32>
    %629 = arith.addf %628, %627 : vector<8x128xf32>
    %630 = arith.divf %628, %629 : vector<8x128xf32>
    %631 = vector.extract_strided_slice %618 {offsets = [0, 256], sizes = [8, 128], strides = [1, 1]} : vector<8x512xf32> to vector<8x128xf32>
    %632 = vector.extract_strided_slice %618 {offsets = [0, 384], sizes = [8, 128], strides = [1, 1]} : vector<8x512xf32> to vector<8x128xf32>
    %633 = arith.mulf %624, %632 : vector<8x128xf32>
    %634 = arith.addf %631, %633 : vector<8x128xf32>
    %635 = math.tanh %634 : vector<8x128xf32>
    %cst_213 = arith.constant 1.000000e+00 : f32
    %636 = vector.broadcast %cst_213 : f32 to vector<8x128xf32>
    %637 = arith.subf %636, %630 : vector<8x128xf32>
    %638 = arith.mulf %637, %635 : vector<8x128xf32>
    %639 = arith.mulf %630, %579 : vector<8x128xf32>
    %640 = arith.addf %638, %639 : vector<8x128xf32>
    %c0_214 = arith.constant 0 : index
    %c0_215 = arith.constant 0 : index
    %641 = vector.load %arg8[%c0_214, %c0_215] : memref<128x128xf32, #tpu.memory_space<vmem>>, vector<128x128xf32>
    %cst_216 = arith.constant dense<0.000000e+00> : vector<8x128xf32>
    %642 = tpu.matmul %640, %641, %cst_216 {dimension_numbers = #tpu.dot_dimension_numbers<[1], [0], [0], [1], [0, 0, 1, 1], [], []>} : vector<8x128xf32>, vector<128x128xf32>, vector<8x128xf32> -> vector<8x128xf32>
    %643 = arith.addf %642, %8 : vector<8x128xf32>
    %644 = arith.index_cast %c7_i32_207 : i32 to index
    %c0_217 = arith.constant 0 : index
    %c0_218 = arith.constant 0 : index
    %645 = vector.load %arg10[%644, %c0_217, %c0_218] : memref<8x8x128xf32, #tpu.memory_space<vmem>>, vector<1x8x128xf32>
    %646 = vector.shape_cast %645 : vector<1x8x128xf32> to vector<8x128xf32>
    %647 = vector.shape_cast %643 : vector<8x128xf32> to vector<1x8x128xf32>
    tpu.vector_store %arg10[%644, %c0_217, %c0_218], %647 {strides = array<i32>} : memref<8x8x128xf32, #tpu.memory_space<vmem>>, vector<1x8x128xf32>,
    %cst_219 = arith.constant dense<0xFF800000> : vector<8xf32>
    %648 = vector.multi_reduction <maximumf>, %643, %cst_219 [1] : vector<8x128xf32> to vector<8xf32>
    %649 = vector.shape_cast %648 : vector<8xf32> to vector<8x1xf32>
    %650 = vector.broadcast %649 : vector<8x1xf32> to vector<8x128xf32>
    %651 = arith.cmpf oeq, %643, %650 : vector<8x128xf32>
    %c128_i32_220 = arith.constant 128 : i32
    %652 = vector.broadcast %c128_i32_220 : i32 to vector<8x128xi32>
    %653 = arith.select %651, %246, %652 : vector<8x128xi1>, vector<8x128xi32>
    %cst_221 = arith.constant dense<2147483647> : vector<8xi32>
    %654 = vector.multi_reduction <minsi>, %653, %cst_221 [1] : vector<8x128xi32> to vector<8xi32>
    %655 = vector.shape_cast %654 : vector<8xi32> to vector<8x1xi32>
    %656 = vector.broadcast %655 : vector<8x1xi32> to vector<8x128xi32>
    %657 = arith.cmpi eq, %246, %656 : vector<8x128xi32>
    %658 = arith.extui %657 : vector<8x128xi1> to vector<8x128xi32>
    %659 = arith.sitofp %658 : vector<8x128xi32> to vector<8x128xf32>
    %c0_222 = arith.constant 0 : index
    %c0_223 = arith.constant 0 : index
    %660 = vector.load %arg3[%c0_222, %c0_223] : memref<128x512xf32, #tpu.memory_space<vmem>>, vector<128x512xf32>
    %cst_224 = arith.constant dense<0.000000e+00> : vector<8x512xf32>
    %661 = tpu.matmul %659, %660, %cst_224 {dimension_numbers = #tpu.dot_dimension_numbers<[1], [0], [0], [1], [0, 0, 1, 1], [], []>} : vector<8x128xf32>, vector<128x512xf32>, vector<8x512xf32> -> vector<8x512xf32>
    %662 = arith.index_cast %c7_i32_207 : i32 to index
    %663 = memref.load %arg0[%662] : memref<8xi32, #tpu.memory_space<smem>>
    %c0_i32_225 = arith.constant 0 : i32
    %664 = arith.cmpi ne, %663, %c0_i32_225 : i32
    %665 = arith.extui %664 : i1 to i32
    %666 = arith.sitofp %665 : i32 to f32
    %667 = arith.index_cast %c7_i32_207 : i32 to index
    %c0_226 = arith.constant 0 : index
    %c0_227 = arith.constant 0 : index
    %668 = vector.load %arg2[%667, %c0_226, %c0_227] : memref<8x8x512xf32, #tpu.memory_space<vmem>>, vector<1x8x512xf32>
    %669 = vector.shape_cast %668 : vector<1x8x512xf32> to vector<8x512xf32>
    %670 = vector.broadcast %666 : f32 to vector<8x512xf32>
    %671 = arith.mulf %670, %669 : vector<8x512xf32>
    %cst_228 = arith.constant 1.000000e+00 : f32
    %672 = arith.subf %cst_228, %666 : f32
    %673 = vector.broadcast %672 : f32 to vector<8x512xf32>
    %674 = arith.mulf %673, %661 : vector<8x512xf32>
    %675 = arith.addf %671, %674 : vector<8x512xf32>
    %c7_i32_229 = arith.constant 7 : i32
    return
  }
}

</mosaic_0001>

<llo_original>
// kernel: _seq2seq_forward_device.1
$region0: #{_seq2seq_forward_device.1}
  #allocation0 [shape = 'u32[]', space=smem, size = 0x4, offset = 0x4, fixed_abs, tag = 'smem constant byte address 0x4 - core index']
  #allocation1 [shape = 'u32[144,128]{1,0:T(1,128)}', space=vmem, size = 0x12000, scoped, tag = 'internal scratch']
  %s0 = inlined_call_operand.vmem [shape: s32[8], index: 0, kind: input, shape index: {}]
  %s1 = inlined_call_operand.vmem [shape: f32[8,8,512], index: 1, kind: input, shape index: {}]
  %s2 = inlined_call_operand.vmem [shape: f32[8,8,512], index: 2, kind: input, shape index: {}]
  %s3 = inlined_call_operand.vmem [shape: f32[128,512], index: 3, kind: input, shape index: {}]
  %s4 = inlined_call_operand.vmem [shape: f32[128,512], index: 4, kind: input, shape index: {}]
  %s5 = inlined_call_operand.vmem [shape: f32[1,512], index: 5, kind: input, shape index: {}]
  %s6 = inlined_call_operand.vmem [shape: f32[128,512], index: 6, kind: input, shape index: {}]
  %s7 = inlined_call_operand.vmem [shape: f32[1,512], index: 7, kind: input, shape index: {}]
  %s8 = inlined_call_operand.vmem [shape: f32[128,128], index: 8, kind: input, shape index: {}]
  %s9 = inlined_call_operand.vmem [shape: f32[1,128], index: 9, kind: input, shape index: {}]
  %s10 = inlined_call_operand.vmem [shape: f32[8,8,128], index: 10, kind: output, shape index: {}]
  %s11 = sld [smem:[#allocation0]]
  $region54: #{_seq2seq_forward_device.1} parent=0
    _
  %s13 = ssub.s32 1, %s11
  %s14 = scalar_select 0, %s13, %s11
  $region1: #{_seq2seq_forward_device.1} parent=0
    #allocation2 [shape = 'u8[512]{0}', space=smem, size = 0x200, scoped, tag = 'input window, operand 0, single buffered']
    #allocation3 [shape = 's32[1]{0}', space=sflag, size = 0x4, scoped, tag = 'scoped memory for _seq2seq_forward_device.1']
    %15 = vsyncpa [#allocation3], 0
    // Predicated region
    $region2: #{_seq2seq_forward_device.1} parent=1 // pred_check
      _
    $region3: #{_seq2seq_forward_device.1} parent=1 // pred_check_branch
      %17 = sbr.rel (0) target = $region5
    $region4: #{_seq2seq_forward_device.1} parent=1 // pred_region
      %s19 = ssub.s32 16, 16
      %20 = vsyncadd [#allocation3], %s19
      %s22 = sshll.u32 %s0, 4
      %s23 = int_to_ptr.vmem [resolvable:$true] %s22
      %25 = dma.vmem_to_smem %s23, 16, [#allocation2], [#allocation3]
    $region5: #{_seq2seq_forward_device.1} parent=1 // pred_fallthru
      _
    // Predicated region
    $region6: #{_seq2seq_forward_device.1} parent=1 // pred_check
      _
    $region7: #{_seq2seq_forward_device.1} parent=1 // pred_check_branch
      %27 = sbr.rel (0) target = $region9
    $region8: #{_seq2seq_forward_device.1} parent=1 // pred_region
      _
    $region9: #{_seq2seq_forward_device.1} parent=1 // pred_fallthru
      _
    // Predicated region
    $region10: #{_seq2seq_forward_device.1} parent=1 // pred_check
      _
    $region11: #{_seq2seq_forward_device.1} parent=1 // pred_check_branch
      %29 = sbr.rel (0) target = $region13
    $region12: #{_seq2seq_forward_device.1} parent=1 // pred_region
      _
    $region13: #{_seq2seq_forward_device.1} parent=1 // pred_fallthru
      _
    // Predicated region
    $region14: #{_seq2seq_forward_device.1} parent=1 // pred_check
      _
    $region15: #{_seq2seq_forward_device.1} parent=1 // pred_check_branch
      %31 = sbr.rel (0) target = $region17
    $region16: #{_seq2seq_forward_device.1} parent=1 // pred_region
      _
    $region17: #{_seq2seq_forward_device.1} parent=1 // pred_fallthru
      _
    // Predicated region
    $region18: #{_seq2seq_forward_device.1} parent=1 // pred_check
      _
    $region19: #{_seq2seq_forward_device.1} parent=1 // pred_check_branch
      %33 = sbr.rel (0) target = $region21
    $region20: #{_seq2seq_forward_device.1} parent=1 // pred_region
      _
    $region21: #{_seq2seq_forward_device.1} parent=1 // pred_fallthru
      _
    // Predicated region
    $region22: #{_seq2seq_forward_device.1} parent=1 // pred_check
      _
    $region23: #{_seq2seq_forward_device.1} parent=1 // pred_check_branch
      %35 = sbr.rel (0) target = $region25
    $region24: #{_seq2seq_forward_device.1} parent=1 // pred_region
      _
    $region25: #{_seq2seq_forward_device.1} parent=1 // pred_fallthru
      _
    // Predicated region
    $region26: #{_seq2seq_forward_device.1} parent=1 // pred_check
      _
    $region27: #{_seq2seq_forward_device.1} parent=1 // pred_check_branch
      %37 = sbr.rel (0) target = $region29
    $region28: #{_seq2seq_forward_device.1} parent=1 // pred_region
      _
    $region29: #{_seq2seq_forward_device.1} parent=1 // pred_fallthru
      _
    // Predicated region
    $region30: #{_seq2seq_forward_device.1} parent=1 // pred_check
      _
    $region31: #{_seq2seq_forward_device.1} parent=1 // pred_check_branch
      %39 = sbr.rel (0) target = $region33
    $region32: #{_seq2seq_forward_device.1} parent=1 // pred_region
      _
    $region33: #{_seq2seq_forward_device.1} parent=1 // pred_fallthru
      _
    // Predicated region
    $region34: #{_seq2seq_forward_device.1} parent=1 // pred_check
      _
    $region35: #{_seq2seq_forward_device.1} parent=1 // pred_check_branch
      %41 = sbr.rel (0) target = $region37
    $region36: #{_seq2seq_forward_device.1} parent=1 // pred_region
      _
    $region37: #{_seq2seq_forward_device.1} parent=1 // pred_fallthru
      _
    // Predicated region
    $region38: #{_seq2seq_forward_device.1} parent=1 // pred_check
      _
    $region39: #{_seq2seq_forward_device.1} parent=1 // pred_check_branch
      %43 = sbr.rel (0) target = $region41
    $region40: #{_seq2seq_forward_device.1} parent=1 // pred_region
      _
    $region41: #{_seq2seq_forward_device.1} parent=1 // pred_fallthru
      _
    // Predicated region
    $region42: #{_seq2seq_forward_device.1} parent=1 // pred_check
      _
    $region43: #{_seq2seq_forward_device.1} parent=1 // pred_check_branch
      %45 = sbr.rel (0) target = $region45
    $region44: #{_seq2seq_forward_device.1} parent=1 // pred_region
      %46 = dma.done [#allocation3], 16
    $region45: #{_seq2seq_forward_device.1} parent=1 // pred_fallthru
      _
    %47 = sfence
    %v48 = vld [vmem:[%s5] sm:$0xf]
    %v50 = vlaneseq
    %v51 = vshrl.u32 %v50, 7
    %v52 = vsub.s32 0, %v51
    %v53 = vrot.slane %v48, %v52
    %v54 = vlaneseq
    %v55 = vshrl.u32 %v54, 7
    %v56 = vsub.s32 1, %v55
    %v57 = vrot.slane %v48, %v56
    %v58 = vlaneseq
    %v59 = vshrl.u32 %v58, 7
    %v60 = vsub.s32 2, %v59
    %v61 = vrot.slane %v48, %v60
    %v62 = vlaneseq
    %v63 = vshrl.u32 %v62, 7
    %v64 = vsub.s32 3, %v63
    %v65 = vrot.slane %v48, %v64
    %v70 = vld [vmem:[%s7] sm:$0xf]
    %v72 = vlaneseq
    %v73 = vshrl.u32 %v72, 7
    %v74 = vsub.s32 0, %v73
    %v75 = vrot.slane %v70, %v74
    %v76 = vlaneseq
    %v77 = vshrl.u32 %v76, 7
    %v78 = vsub.s32 1, %v77
    %v79 = vrot.slane %v70, %v78
    %v80 = vlaneseq
    %v81 = vshrl.u32 %v80, 7
    %v82 = vsub.s32 2, %v81
    %v83 = vrot.slane %v70, %v82
    %v84 = vlaneseq
    %v85 = vshrl.u32 %v84, 7
    %v86 = vsub.s32 3, %v85
    %v87 = vrot.slane %v70, %v86
    %v92 = vld [vmem:[%s9] sm:$0x1]
    %v94 = vlaneseq
    %v95 = vshrl.u32 %v94, 7
    %v96 = vsub.s32 0, %v95
    %v97 = vrot.slane %v92, %v96
    %v99 = vld [vmem:[%s1] sm:$0xff]
    %v100 = vld [vmem:[%s1 + $0x8] sm:$0xff]
    %v101 = vld [vmem:[%s1 + $0x10] sm:$0xff]
    %v102 = vld [vmem:[%s1 + $0x18] sm:$0xff]
    %v103 = vld [vmem:[%s4] sm:$0xff]
    %v104 = vld [vmem:[%s4 + $0x8] sm:$0xff]
    %v105 = vld [vmem:[%s4 + $0x10] sm:$0xff]
    %v106 = vld [vmem:[%s4 + $0x18] sm:$0xff]
    %v107 = vld [vmem:[%s4 + $0x20] sm:$0xff]
    %v108 = vld [vmem:[%s4 + $0x28] sm:$0xff]
    %v109 = vld [vmem:[%s4 + $0x30] sm:$0xff]
    %v110 = vld [vmem:[%s4 + $0x38] sm:$0xff]
    %v111 = vld [vmem:[%s4 + $0x40] sm:$0xff]
    %v112 = vld [vmem:[%s4 + $0x48] sm:$0xff]
    %v113 = vld [vmem:[%s4 + $0x50] sm:$0xff]
    %v114 = vld [vmem:[%s4 + $0x58] sm:$0xff]
    %v115 = vld [vmem:[%s4 + $0x60] sm:$0xff]
    %v116 = vld [vmem:[%s4 + $0x68] sm:$0xff]
    %v117 = vld [vmem:[%s4 + $0x70] sm:$0xff]
    %v118 = vld [vmem:[%s4 + $0x78] sm:$0xff]
    %v119 = vld [vmem:[%s4 + $0x80] sm:$0xff]
    %v120 = vld [vmem:[%s4 + $0x88] sm:$0xff]
    %v121 = vld [vmem:[%s4 + $0x90] sm:$0xff]
    %v122 = vld [vmem:[%s4 + $0x98] sm:$0xff]
    %v123 = vld [vmem:[%s4 + $0xa0] sm:$0xff]
    %v124 = vld [vmem:[%s4 + $0xa8] sm:$0xff]
    %v125 = vld [vmem:[%s4 + $0xb0] sm:$0xff]
    %v126 = vld [vmem:[%s4 + $0xb8] sm:$0xff]
    %v127 = vld [vmem:[%s4 + $0xc0] sm:$0xff]
    %v128 = vld [vmem:[%s4 + $0xc8] sm:$0xff]
    %v129 = vld [vmem:[%s4 + $0xd0] sm:$0xff]
    %v130 = vld [vmem:[%s4 + $0xd8] sm:$0xff]
    %v131 = vld [vmem:[%s4 + $0xe0] sm:$0xff]
    %v132 = vld [vmem:[%s4 + $0xe8] sm:$0xff]
    %v133 = vld [vmem:[%s4 + $0xf0] sm:$0xff]
    %v134 = vld [vmem:[%s4 + $0xf8] sm:$0xff]
    %v135 = vld [vmem:[%s4 + $0x100] sm:$0xff]
    %v136 = vld [vmem:[%s4 + $0x108] sm:$0xff]
    %v137 = vld [vmem:[%s4 + $0x110] sm:$0xff]
    %v138 = vld [vmem:[%s4 + $0x118] sm:$0xff]
    %v139 = vld [vmem:[%s4 + $0x120] sm:$0xff]
    %v140 = vld [vmem:[%s4 + $0x128] sm:$0xff]
    %v141 = vld [vmem:[%s4 + $0x130] sm:$0xff]
    %v142 = vld [vmem:[%s4 + $0x138] sm:$0xff]
    %v143 = vld [vmem:[%s4 + $0x140] sm:$0xff]
    %v144 = vld [vmem:[%s4 + $0x148] sm:$0xff]
    %v145 = vld [vmem:[%s4 + $0x150] sm:$0xff]
    %v146 = vld [vmem:[%s4 + $0x158] sm:$0xff]
    %v147 = vld [vmem:[%s4 + $0x160] sm:$0xff]
    %v148 = vld [vmem:[%s4 + $0x168] sm:$0xff]
    %v149 = vld [vmem:[%s4 + $0x170] sm:$0xff]
    %v150 = vld [vmem:[%s4 + $0x178] sm:$0xff]
    %v151 = vld [vmem:[%s4 + $0x180] sm:$0xff]
    %v152 = vld [vmem:[%s4 + $0x188] sm:$0xff]
    %v153 = vld [vmem:[%s4 + $0x190] sm:$0xff]
    %v154 = vld [vmem:[%s4 + $0x198] sm:$0xff]
    %v155 = vld [vmem:[%s4 + $0x1a0] sm:$0xff]
    %v156 = vld [vmem:[%s4 + $0x1a8] sm:$0xff]
    %v157 = vld [vmem:[%s4 + $0x1b0] sm:$0xff]
    %v158 = vld [vmem:[%s4 + $0x1b8] sm:$0xff]
    %v159 = vld [vmem:[%s4 + $0x1c0] sm:$0xff]
    %v160 = vld [vmem:[%s4 + $0x1c8] sm:$0xff]
    %v161 = vld [vmem:[%s4 + $0x1d0] sm:$0xff]
    %v162 = vld [vmem:[%s4 + $0x1d8] sm:$0xff]
    %v163 = vld [vmem:[%s4 + $0x1e0] sm:$0xff]
    %v164 = vld [vmem:[%s4 + $0x1e8] sm:$0xff]
    %v165 = vld [vmem:[%s4 + $0x1f0] sm:$0xff]
    %v166 = vld [vmem:[%s4 + $0x1f8] sm:$0xff]
    %167 = vmatprep.subr.mxu0 %v164
    %168 = vmatpush1.msra.mxu0 %v163
    %169 = vmatprep.subr.mxu0 %v160
    %170 = vmatpush1.msra.mxu0 %v159
    %171 = vmatprep.subr.mxu0 %v156
    %172 = vmatpush1.msra.mxu0 %v155
    %173 = vmatprep.subr.mxu0 %v152
    %174 = vmatpush1.msra.mxu0 %v151
    %175 = vmatprep.subr.mxu0 %v148
    %176 = vmatpush1.msra.mxu0 %v147
    %177 = vmatprep.subr.mxu0 %v144
    %178 = vmatpush1.msra.mxu0 %v143
    %179 = vmatprep.subr.mxu0 %v140
    %180 = vmatpush1.msra.mxu0 %v139
    %181 = vmatprep.subr.mxu0 %v136
    %182 = vmatpush1.msra.mxu0 %v135
    %183 = vmatprep.subr.mxu0 %v132
    %184 = vmatpush1.msra.mxu0 %v131
    %185 = vmatprep.subr.mxu0 %v128
    %186 = vmatpush1.msra.mxu0 %v127
    %187 = vmatprep.subr.mxu0 %v124
    %188 = vmatpush1.msra.mxu0 %v123
    %189 = vmatprep.subr.mxu0 %v120
    %190 = vmatpush1.msra.mxu0 %v119
    %191 = vmatprep.subr.mxu0 %v116
    %192 = vmatpush1.msra.mxu0 %v115
    %193 = vmatprep.subr.mxu0 %v112
    %194 = vmatpush1.msra.mxu0 %v111
    %195 = vmatprep.subr.mxu0 %v108
    %196 = vmatpush1.msra.mxu0 %v107
    %197 = vmatprep.subr.mxu0 %v104
    %198 = vmatpush1.msra.mxu0 %v103
    %199 = vmatprep.subr.mxu0 0.0
    %200 = vmatpush2.msra.mxu0 0.0
    %201 = vmatprep.subr.mxu0 0.0
    %202 = vmatpush2.msra.mxu0 0.0
    %203 = vmatprep.subr.mxu0 0.0
    %204 = vmatpush2.msra.mxu0 0.0
    %205 = vmatprep.subr.mxu0 0.0
    %206 = vmatpush2.msra.mxu0 0.0
    %207 = vmatprep.subr.mxu0 0.0
    %208 = vmatpush2.msra.mxu0 0.0
    %209 = vmatprep.subr.mxu0 0.0
    %210 = vmatpush2.msra.mxu0 0.0
    %211 = vmatprep.subr.mxu0 0.0
    %212 = vmatpush2.msra.mxu0 0.0
    %213 = vmatprep.subr.mxu0 0.0
    %214 = vmatpush2.msra.mxu0 0.0
    %215 = vmatprep.subr.mxu0 0.0
    %216 = vmatpush2.msra.mxu0 0.0
    %217 = vmatprep.subr.mxu0 0.0
    %218 = vmatpush2.msra.mxu0 0.0
    %219 = vmatprep.subr.mxu0 0.0
    %220 = vmatpush2.msra.mxu0 0.0
    %221 = vmatprep.subr.mxu0 0.0
    %222 = vmatpush2.msra.mxu0 0.0
    %223 = vmatprep.subr.mxu0 0.0
    %224 = vmatpush2.msra.mxu0 0.0
    %225 = vmatprep.subr.mxu0 0.0
    %226 = vmatpush2.msra.mxu0 0.0
    %227 = vmatprep.subr.mxu0 0.0
    %228 = vmatpush2.msra.mxu0 0.0
    %229 = vmatprep.subr.mxu0 0.0
    %230 = vmatpush2.msra.mxu0 0.0
    %231 = vmatprep.mubr.f32.mxu0 0.0
    %232 = vmatmul.mubr.f32.gmra.mxu0 0.0
    %v233 = vpop.f32.mrf.mxu0
    %v234 = vadd.f32 0.0, %v233
    %v235 = vpop.f32.mrf.mxu0
    %v236 = vadd.f32 0.0, %v235
    %237 = vdwg.mxu0
    %238 = vmatprep.subr.mxu0 %v166
    %239 = vmatpush1.msra.mxu0 %v165
    %240 = vmatprep.subr.mxu0 %v162
    %241 = vmatpush1.msra.mxu0 %v161
    %242 = vmatprep.subr.mxu0 %v158
    %243 = vmatpush1.msra.mxu0 %v157
    %244 = vmatprep.subr.mxu0 %v154
    %245 = vmatpush1.msra.mxu0 %v153
    %246 = vmatprep.subr.mxu0 %v150
    %247 = vmatpush1.msra.mxu0 %v149
    %248 = vmatprep.subr.mxu0 %v146
    %249 = vmatpush1.msra.mxu0 %v145
    %250 = vmatprep.subr.mxu0 %v142
    %251 = vmatpush1.msra.mxu0 %v141
    %252 = vmatprep.subr.mxu0 %v138
    %253 = vmatpush1.msra.mxu0 %v137
    %254 = vmatprep.subr.mxu0 %v134
    %255 = vmatpush1.msra.mxu0 %v133
    %256 = vmatprep.subr.mxu0 %v130
    %257 = vmatpush1.msra.mxu0 %v129
    %258 = vmatprep.subr.mxu0 %v126
    %259 = vmatpush1.msra.mxu0 %v125
    %260 = vmatprep.subr.mxu0 %v122
    %261 = vmatpush1.msra.mxu0 %v121
    %262 = vmatprep.subr.mxu0 %v118
    %263 = vmatpush1.msra.mxu0 %v117
    %264 = vmatprep.subr.mxu0 %v114
    %265 = vmatpush1.msra.mxu0 %v113
    %266 = vmatprep.subr.mxu0 %v110
    %267 = vmatpush1.msra.mxu0 %v109
    %268 = vmatprep.subr.mxu0 %v106
    %269 = vmatpush1.msra.mxu0 %v105
    %270 = vmatprep.subr.mxu0 0.0
    %271 = vmatpush2.msra.mxu0 0.0
    %272 = vmatprep.subr.mxu0 0.0
    %273 = vmatpush2.msra.mxu0 0.0
    %274 = vmatprep.subr.mxu0 0.0
    %275 = vmatpush2.msra.mxu0 0.0
    %276 = vmatprep.subr.mxu0 0.0
    %277 = vmatpush2.msra.mxu0 0.0
    %278 = vmatprep.subr.mxu0 0.0
    %279 = vmatpush2.msra.mxu0 0.0
    %280 = vmatprep.subr.mxu0 0.0
    %281 = vmatpush2.msra.mxu0 0.0
    %282 = vmatprep.subr.mxu0 0.0
    %283 = vmatpush2.msra.mxu0 0.0
    %284 = vmatprep.subr.mxu0 0.0
    %285 = vmatpush2.msra.mxu0 0.0
    %286 = vmatprep.subr.mxu0 0.0
    %287 = vmatpush2.msra.mxu0 0.0
    %288 = vmatprep.subr.mxu0 0.0
    %289 = vmatpush2.msra.mxu0 0.0
    %290 = vmatprep.subr.mxu0 0.0
    %291 = vmatpush2.msra.mxu0 0.0
    %292 = vmatprep.subr.mxu0 0.0
    %293 = vmatpush2.msra.mxu0 0.0
    %294 = vmatprep.subr.mxu0 0.0
    %295 = vmatpush2.msra.mxu0 0.0
    %296 = vmatprep.subr.mxu0 0.0
    %297 = vmatpush2.msra.mxu0 0.0
    %298 = vmatprep.subr.mxu0 0.0
    %299 = vmatpush2.msra.mxu0 0.0
    %300 = vmatprep.subr.mxu0 0.0
    %301 = vmatpush2.msra.mxu0 0.0
    %302 = vmatprep.mubr.f32.mxu0 0.0
    %303 = vmatmul.mubr.f32.gmra.mxu0 0.0
    %v304 = vpop.f32.mrf.mxu0
    %v305 = vadd.f32 0.0, %v304
    %v306 = vpop.f32.mrf.mxu0
    %v307 = vadd.f32 0.0, %v306
    %308 = vdwg.mxu0
    %v309 = vadd.f32 %v99, %v234
    %v310 = vadd.f32 %v100, %v236
    %v311 = vadd.f32 %v101, %v305
    %v312 = vadd.f32 %v102, %v307
    %v313 = vadd.f32 %v309, %v53
    %v314 = vadd.f32 %v310, %v57
    %v315 = vadd.f32 %v311, %v61
    %v316 = vadd.f32 %v312, %v65
    %v317 = vxor.u32 %v313, 2147483648
    %v318 = vmul.f32 %v317, 1.442695
    %v319 = vpow.pop %v318
    %v320 = vadd.f32 %v319, 1.0
    %v321 = vrcp.pop %v320
    %v322 = vmul.f32 1.0, %v321
    %v323 = vxor.u32 %v314, 2147483648
    %v324 = vmul.f32 %v323, 1.442695
    %v325 = vpow.pop %v324
    %v326 = vadd.f32 %v325, 1.0
    %v327 = vrcp.pop %v326
    %v328 = vmul.f32 1.0, %v327
    %v329 = vmul.f32 %v322, %v316
    %v330 = vadd.f32 %v315, %v329
    %v331 = vtanh.pop %v330
    %v332 = vsub.f32 1.0, %v328
    %v333 = vmul.f32 %v332, %v331
    %v334 = vmul.f32 %v328, 0.0
    %v335 = vadd.f32 %v333, %v334
    %s336 = scalar_lea.vmem %s1, 32
    %v337 = vld [vmem:[%s336] sm:$0xff]
    %v338 = vld [vmem:[%s336 + $0x8] sm:$0xff]
    %v339 = vld [vmem:[%s336 + $0x10] sm:$0xff]
    %v340 = vld [vmem:[%s336 + $0x18] sm:$0xff]
    %341 = vmatprep.subr.mxu0 %v164
    %342 = vmatpush1.msra.mxu0 %v163
    %343 = vmatprep.subr.mxu0 %v160
    %344 = vmatpush1.msra.mxu0 %v159
    %345 = vmatprep.subr.mxu0 %v156
    %346 = vmatpush1.msra.mxu0 %v155
    %347 = vmatprep.subr.mxu0 %v152
    %348 = vmatpush1.msra.mxu0 %v151
    %349 = vmatprep.subr.mxu0 %v148
    %350 = vmatpush1.msra.mxu0 %v147
    %351 = vmatprep.subr.mxu0 %v144
    %352 = vmatpush1.msra.mxu0 %v143
    %353 = vmatprep.subr.mxu0 %v140
    %354 = vmatpush1.msra.mxu0 %v139
    %355 = vmatprep.subr.mxu0 %v136
    %356 = vmatpush1.msra.mxu0 %v135
    %357 = vmatprep.subr.mxu0 %v132
    %358 = vmatpush1.msra.mxu0 %v131
    %359 = vmatprep.subr.mxu0 %v128
    %360 = vmatpush1.msra.mxu0 %v127
    %361 = vmatprep.subr.mxu0 %v124
    %362 = vmatpush1.msra.mxu0 %v123
    %363 = vmatprep.subr.mxu0 %v120
    %364 = vmatpush1.msra.mxu0 %v119
    %365 = vmatprep.subr.mxu0 %v116
    %366 = vmatpush1.msra.mxu0 %v115
    %367 = vmatprep.subr.mxu0 %v112
    %368 = vmatpush1.msra.mxu0 %v111
    %369 = vmatprep.subr.mxu0 %v108
    %370 = vmatpush1.msra.mxu0 %v107
    %371 = vmatprep.subr.mxu0 %v104
    %372 = vmatpush1.msra.mxu0 %v103
    %373 = vmatprep.subr.mxu0 0.0
    %374 = vmatpush2.msra.mxu0 0.0
    %375 = vmatprep.subr.mxu0 0.0
    %376 = vmatpush2.msra.mxu0 0.0
    %377 = vmatprep.subr.mxu0 0.0
    %378 = vmatpush2.msra.mxu0 0.0
    %379 = vmatprep.subr.mxu0 0.0
    %380 = vmatpush2.msra.mxu0 0.0
    %381 = vmatprep.subr.mxu0 0.0
    %382 = vmatpush2.msra.mxu0 0.0
    %383 = vmatprep.subr.mxu0 0.0
    %384 = vmatpush2.msra.mxu0 0.0
    %385 = vmatprep.subr.mxu0 0.0
    %386 = vmatpush2.msra.mxu0 0.0
    %387 = vmatprep.subr.mxu0 0.0
    %388 = vmatpush2.msra.mxu0 0.0
    %389 = vmatprep.subr.mxu0 0.0
    %390 = vmatpush2.msra.mxu0 0.0
    %391 = vmatprep.subr.mxu0 0.0
    %392 = vmatpush2.msra.mxu0 0.0
    %393 = vmatprep.subr.mxu0 0.0
    %394 = vmatpush2.msra.mxu0 0.0
    %395 = vmatprep.subr.mxu0 0.0
    %396 = vmatpush2.msra.mxu0 0.0
    %397 = vmatprep.subr.mxu0 0.0
    %398 = vmatpush2.msra.mxu0 0.0
    %399 = vmatprep.subr.mxu0 0.0
    %400 = vmatpush2.msra.mxu0 0.0
    %401 = vmatprep.subr.mxu0 0.0
    %402 = vmatpush2.msra.mxu0 0.0
    %403 = vmatprep.subr.mxu0 0.0
    %404 = vmatpush2.msra.mxu0 0.0
    %405 = vmatprep.mubr.f32.mxu0 0.0
    %406 = vmatmul.mubr.f32.gmra.mxu0 %v335
    %v407 = vpop.f32.mrf.mxu0
    %v408 = vadd.f32 0.0, %v407
    %v409 = vpop.f32.mrf.mxu0
    %v410 = vadd.f32 0.0, %v409
    %411 = vdwg.mxu0
    %412 = vmatprep.subr.mxu0 %v166
    %413 = vmatpush1.msra.mxu0 %v165
    %414 = vmatprep.subr.mxu0 %v162
    %415 = vmatpush1.msra.mxu0 %v161
    %416 = vmatprep.subr.mxu0 %v158
    %417 = vmatpush1.msra.mxu0 %v157
    %418 = vmatprep.subr.mxu0 %v154
    %419 = vmatpush1.msra.mxu0 %v153
    %420 = vmatprep.subr.mxu0 %v150
    %421 = vmatpush1.msra.mxu0 %v149
    %422 = vmatprep.subr.mxu0 %v146
    %423 = vmatpush1.msra.mxu0 %v145
    %424 = vmatprep.subr.mxu0 %v142
    %425 = vmatpush1.msra.mxu0 %v141
    %426 = vmatprep.subr.mxu0 %v138
    %427 = vmatpush1.msra.mxu0 %v137
    %428 = vmatprep.subr.mxu0 %v134
    %429 = vmatpush1.msra.mxu0 %v133
    %430 = vmatprep.subr.mxu0 %v130
    %431 = vmatpush1.msra.mxu0 %v129
    %432 = vmatprep.subr.mxu0 %v126
    %433 = vmatpush1.msra.mxu0 %v125
    %434 = vmatprep.subr.mxu0 %v122
    %435 = vmatpush1.msra.mxu0 %v121
    %436 = vmatprep.subr.mxu0 %v118
    %437 = vmatpush1.msra.mxu0 %v117
    %438 = vmatprep.subr.mxu0 %v114
    %439 = vmatpush1.msra.mxu0 %v113
    %440 = vmatprep.subr.mxu0 %v110
    %441 = vmatpush1.msra.mxu0 %v109
    %442 = vmatprep.subr.mxu0 %v106
    %443 = vmatpush1.msra.mxu0 %v105
    %444 = vmatprep.subr.mxu0 0.0
    %445 = vmatpush2.msra.mxu0 0.0
    %446 = vmatprep.subr.mxu0 0.0
    %447 = vmatpush2.msra.mxu0 0.0
    %448 = vmatprep.subr.mxu0 0.0
    %449 = vmatpush2.msra.mxu0 0.0
    %450 = vmatprep.subr.mxu0 0.0
    %451 = vmatpush2.msra.mxu0 0.0
    %452 = vmatprep.subr.mxu0 0.0
    %453 = vmatpush2.msra.mxu0 0.0
    %454 = vmatprep.subr.mxu0 0.0
    %455 = vmatpush2.msra.mxu0 0.0
    %456 = vmatprep.subr.mxu0 0.0
    %457 = vmatpush2.msra.mxu0 0.0
    %458 = vmatprep.subr.mxu0 0.0
    %459 = vmatpush2.msra.mxu0 0.0
    %460 = vmatprep.subr.mxu0 0.0
    %461 = vmatpush2.msra.mxu0 0.0
    %462 = vmatprep.subr.mxu0 0.0
    %463 = vmatpush2.msra.mxu0 0.0
    %464 = vmatprep.subr.mxu0 0.0
    %465 = vmatpush2.msra.mxu0 0.0
    %466 = vmatprep.subr.mxu0 0.0
    %467 = vmatpush2.msra.mxu0 0.0
    %468 = vmatprep.subr.mxu0 0.0
    %469 = vmatpush2.msra.mxu0 0.0
    %470 = vmatprep.subr.mxu0 0.0
    %471 = vmatpush2.msra.mxu0 0.0
    %472 = vmatprep.subr.mxu0 0.0
    %473 = vmatpush2.msra.mxu0 0.0
    %474 = vmatprep.subr.mxu0 0.0
    %475 = vmatpush2.msra.mxu0 0.0
    %476 = vmatprep.mubr.f32.mxu0 0.0
    %477 = vmatmul.mubr.f32.gmra.mxu0 %v335
    %v478 = vpop.f32.mrf.mxu0
    %v479 = vadd.f32 0.0, %v478
    %v480 = vpop.f32.mrf.mxu0
    %v481 = vadd.f32 0.0, %v480
    %482 = vdwg.mxu0
    %v483 = vadd.f32 %v337, %v408
    %v484 = vadd.f32 %v338, %v410
    %v485 = vadd.f32 %v339, %v479
    %v486 = vadd.f32 %v340, %v481
    %v487 = vadd.f32 %v483, %v53
    %v488 = vadd.f32 %v484, %v57
    %v489 = vadd.f32 %v485, %v61
    %v490 = vadd.f32 %v486, %v65
    %v491 = vxor.u32 %v487, 2147483648
    %v492 = vmul.f32 %v491, 1.442695
    %v493 = vpow.pop %v492
    %v494 = vadd.f32 %v493, 1.0
    %v495 = vrcp.pop %v494
    %v496 = vmul.f32 1.0, %v495
    %v497 = vxor.u32 %v488, 2147483648
    %v498 = vmul.f32 %v497, 1.442695
    %v499 = vpow.pop %v498
    %v500 = vadd.f32 %v499, 1.0
    %v501 = vrcp.pop %v500
    %v502 = vmul.f32 1.0, %v501
    %v503 = vmul.f32 %v496, %v490
    %v504 = vadd.f32 %v489, %v503
    %v505 = vtanh.pop %v504
    %v506 = vsub.f32 1.0, %v502
    %v507 = vmul.f32 %v506, %v505
    %v508 = vmul.f32 %v502, %v335
    %v509 = vadd.f32 %v507, %v508
    %s510 = scalar_lea.vmem %s1, 64
    %v511 = vld [vmem:[%s510] sm:$0xff]
    %v512 = vld [vmem:[%s510 + $0x8] sm:$0xff]
    %v513 = vld [vmem:[%s510 + $0x10] sm:$0xff]
    %v514 = vld [vmem:[%s510 + $0x18] sm:$0xff]
    %515 = vmatprep.subr.mxu0 %v164
    %516 = vmatpush1.msra.mxu0 %v163
    %517 = vmatprep.subr.mxu0 %v160
    %518 = vmatpush1.msra.mxu0 %v159
    %519 = vmatprep.subr.mxu0 %v156
    %520 = vmatpush1.msra.mxu0 %v155
    %521 = vmatprep.subr.mxu0 %v152
    %522 = vmatpush1.msra.mxu0 %v151
    %523 = vmatprep.subr.mxu0 %v148
    %524 = vmatpush1.msra.mxu0 %v147
    %525 = vmatprep.subr.mxu0 %v144
    %526 = vmatpush1.msra.mxu0 %v143
    %527 = vmatprep.subr.mxu0 %v140
    %528 = vmatpush1.msra.mxu0 %v139
    %529 = vmatprep.subr.mxu0 %v136
    %530 = vmatpush1.msra.mxu0 %v135
    %531 = vmatprep.subr.mxu0 %v132
    %532 = vmatpush1.msra.mxu0 %v131
    %533 = vmatprep.subr.mxu0 %v128
    %534 = vmatpush1.msra.mxu0 %v127
    %535 = vmatprep.subr.mxu0 %v124
    %536 = vmatpush1.msra.mxu0 %v123
    %537 = vmatprep.subr.mxu0 %v120
    %538 = vmatpush1.msra.mxu0 %v119
    %539 = vmatprep.subr.mxu0 %v116
    %540 = vmatpush1.msra.mxu0 %v115
    %541 = vmatprep.subr.mxu0 %v112
    %542 = vmatpush1.msra.mxu0 %v111
    %543 = vmatprep.subr.mxu0 %v108
    %544 = vmatpush1.msra.mxu0 %v107
    %545 = vmatprep.subr.mxu0 %v104
    %546 = vmatpush1.msra.mxu0 %v103
    %547 = vmatprep.subr.mxu0 0.0
    %548 = vmatpush2.msra.mxu0 0.0
    %549 = vmatprep.subr.mxu0 0.0
    %550 = vmatpush2.msra.mxu0 0.0
    %551 = vmatprep.subr.mxu0 0.0
    %552 = vmatpush2.msra.mxu0 0.0
    %553 = vmatprep.subr.mxu0 0.0
    %554 = vmatpush2.msra.mxu0 0.0
    %555 = vmatprep.subr.mxu0 0.0
    %556 = vmatpush2.msra.mxu0 0.0
    %557 = vmatprep.subr.mxu0 0.0
    %558 = vmatpush2.msra.mxu0 0.0
    %559 = vmatprep.subr.mxu0 0.0
    %560 = vmatpush2.msra.mxu0 0.0
    %561 = vmatprep.subr.mxu0 0.0
    %562 = vmatpush2.msra.mxu0 0.0
    %563 = vmatprep.subr.mxu0 0.0
    %564 = vmatpush2.msra.mxu0 0.0
    %565 = vmatprep.subr.mxu0 0.0
    %566 = vmatpush2.msra.mxu0 0.0
    %567 = vmatprep.subr.mxu0 0.0
    %568 = vmatpush2.msra.mxu0 0.0
    %569 = vmatprep.subr.mxu0 0.0
    %570 = vmatpush2.msra.mxu0 0.0
    %571 = vmatprep.subr.mxu0 0.0
    %572 = vmatpush2.msra.mxu0 0.0
    %573 = vmatprep.subr.mxu0 0.0
    %574 = vmatpush2.msra.mxu0 0.0
    %575 = vmatprep.subr.mxu0 0.0
    %576 = vmatpush2.msra.mxu0 0.0
    %577 = vmatprep.subr.mxu0 0.0
    %578 = vmatpush2.msra.mxu0 0.0
    %579 = vmatprep.mubr.f32.mxu0 0.0
    %580 = vmatmul.mubr.f32.gmra.mxu0 %v509
    %v581 = vpop.f32.mrf.mxu0
    %v582 = vadd.f32 0.0, %v581
    %v583 = vpop.f32.mrf.mxu0
    %v584 = vadd.f32 0.0, %v583
    %585 = vdwg.mxu0
    %586 = vmatprep.subr.mxu0 %v166
    %587 = vmatpush1.msra.mxu0 %v165
    %588 = vmatprep.subr.mxu0 %v162
    %589 = vmatpush1.msra.mxu0 %v161
    %590 = vmatprep.subr.mxu0 %v158
    %591 = vmatpush1.msra.mxu0 %v157
    %592 = vmatprep.subr.mxu0 %v154
    %593 = vmatpush1.msra.mxu0 %v153
    %594 = vmatprep.subr.mxu0 %v150
    %595 = vmatpush1.msra.mxu0 %v149
    %596 = vmatprep.subr.mxu0 %v146
    %597 = vmatpush1.msra.mxu0 %v145
    %598 = vmatprep.subr.mxu0 %v142
    %599 = vmatpush1.msra.mxu0 %v141
    %600 = vmatprep.subr.mxu0 %v138
    %601 = vmatpush1.msra.mxu0 %v137
    %602 = vmatprep.subr.mxu0 %v134
    %603 = vmatpush1.msra.mxu0 %v133
    %604 = vmatprep.subr.mxu0 %v130
    %605 = vmatpush1.msra.mxu0 %v129
    %606 = vmatprep.subr.mxu0 %v126
    %607 = vmatpush1.msra.mxu0 %v125
    %608 = vmatprep.subr.mxu0 %v122
    %609 = vmatpush1.msra.mxu0 %v121
    %610 = vmatprep.subr.mxu0 %v118
    %611 = vmatpush1.msra.mxu0 %v117
    %612 = vmatprep.subr.mxu0 %v114
    %613 = vmatpush1.msra.mxu0 %v113
    %614 = vmatprep.subr.mxu0 %v110
    %615 = vmatpush1.msra.mxu0 %v109
    %616 = vmatprep.subr.mxu0 %v106
    %617 = vmatpush1.msra.mxu0 %v105
    %618 = vmatprep.subr.mxu0 0.0
    %619 = vmatpush2.msra.mxu0 0.0
    %620 = vmatprep.subr.mxu0 0.0
    %621 = vmatpush2.msra.mxu0 0.0
    %622 = vmatprep.subr.mxu0 0.0
    %623 = vmatpush2.msra.mxu0 0.0
    %624 = vmatprep.subr.mxu0 0.0
    %625 = vmatpush2.msra.mxu0 0.0
    %626 = vmatprep.subr.mxu0 0.0
    %627 = vmatpush2.msra.mxu0 0.0
    %628 = vmatprep.subr.mxu0 0.0
    %629 = vmatpush2.msra.mxu0 0.0
    %630 = vmatprep.subr.mxu0 0.0
    %631 = vmatpush2.msra.mxu0 0.0
    %632 = vmatprep.subr.mxu0 0.0
    %633 = vmatpush2.msra.mxu0 0.0
    %634 = vmatprep.subr.mxu0 0.0
    %635 = vmatpush2.msra.mxu0 0.0
    %636 = vmatprep.subr.mxu0 0.0
    %637 = vmatpush2.msra.mxu0 0.0
    %638 = vmatprep.subr.mxu0 0.0
    %639 = vmatpush2.msra.mxu0 0.0
    %640 = vmatprep.subr.mxu0 0.0
    %641 = vmatpush2.msra.mxu0 0.0
    %642 = vmatprep.subr.mxu0 0.0
    %643 = vmatpush2.msra.mxu0 0.0
    %644 = vmatprep.subr.mxu0 0.0
    %645 = vmatpush2.msra.mxu0 0.0
    %646 = vmatprep.subr.mxu0 0.0
    %647 = vmatpush2.msra.mxu0 0.0
    %648 = vmatprep.subr.mxu0 0.0
    %649 = vmatpush2.msra.mxu0 0.0
    %650 = vmatprep.mubr.f32.mxu0 0.0
    %651 = vmatmul.mubr.f32.gmra.mxu0 %v509
    %v652 = vpop.f32.mrf.mxu0
    %v653 = vadd.f32 0.0, %v652
    %v654 = vpop.f32.mrf.mxu0
    %v655 = vadd.f32 0.0, %v654
    %656 = vdwg.mxu0
    %v657 = vadd.f32 %v511, %v582
    %v658 = vadd.f32 %v512, %v584
    %v659 = vadd.f32 %v513, %v653
    %v660 = vadd.f32 %v514, %v655
    %v661 = vadd.f32 %v657, %v53
    %v662 = vadd.f32 %v658, %v57
    %v663 = vadd.f32 %v659, %v61
    %v664 = vadd.f32 %v660, %v65
    %v665 = vxor.u32 %v661, 2147483648
    %v666 = vmul.f32 %v665, 1.442695
    %v667 = vpow.pop %v666
    %v668 = vadd.f32 %v667, 1.0
    %v669 = vrcp.pop %v668
    %v670 = vmul.f32 1.0, %v669
    %v671 = vxor.u32 %v662, 2147483648
    %v672 = vmul.f32 %v671, 1.442695
    %v673 = vpow.pop %v672
    %v674 = vadd.f32 %v673, 1.0
    %v675 = vrcp.pop %v674
    %v676 = vmul.f32 1.0, %v675
    %v677 = vmul.f32 %v670, %v664
    %v678 = vadd.f32 %v663, %v677
    %v679 = vtanh.pop %v678
    %v680 = vsub.f32 1.0, %v676
    %v681 = vmul.f32 %v680, %v679
    %v682 = vmul.f32 %v676, %v509
    %v683 = vadd.f32 %v681, %v682
    %s684 = scalar_lea.vmem %s1, 96
    %v685 = vld [vmem:[%s684] sm:$0xff]
    %v686 = vld [vmem:[%s684 + $0x8] sm:$0xff]
    %v687 = vld [vmem:[%s684 + $0x10] sm:$0xff]
    %v688 = vld [vmem:[%s684 + $0x18] sm:$0xff]
    %689 = vmatprep.subr.mxu0 %v164
    %690 = vmatpush1.msra.mxu0 %v163
    %691 = vmatprep.subr.mxu0 %v160
    %692 = vmatpush1.msra.mxu0 %v159
    %693 = vmatprep.subr.mxu0 %v156
    %694 = vmatpush1.msra.mxu0 %v155
    %695 = vmatprep.subr.mxu0 %v152
    %696 = vmatpush1.msra.mxu0 %v151
    %697 = vmatprep.subr.mxu0 %v148
    %698 = vmatpush1.msra.mxu0 %v147
    %699 = vmatprep.subr.mxu0 %v144
    %700 = vmatpush1.msra.mxu0 %v143
    %701 = vmatprep.subr.mxu0 %v140
    %702 = vmatpush1.msra.mxu0 %v139
    %703 = vmatprep.subr.mxu0 %v136
    %704 = vmatpush1.msra.mxu0 %v135
    %705 = vmatprep.subr.mxu0 %v132
    %706 = vmatpush1.msra.mxu0 %v131
    %707 = vmatprep.subr.mxu0 %v128
    %708 = vmatpush1.msra.mxu0 %v127
    %709 = vmatprep.subr.mxu0 %v124
    %710 = vmatpush1.msra.mxu0 %v123
    %711 = vmatprep.subr.mxu0 %v120
    %712 = vmatpush1.msra.mxu0 %v119
    %713 = vmatprep.subr.mxu0 %v116
    %714 = vmatpush1.msra.mxu0 %v115
    %715 = vmatprep.subr.mxu0 %v112
    %716 = vmatpush1.msra.mxu0 %v111
    %717 = vmatprep.subr.mxu0 %v108
    %718 = vmatpush1.msra.mxu0 %v107
    %719 = vmatprep.subr.mxu0 %v104
    %720 = vmatpush1.msra.mxu0 %v103
    %721 = vmatprep.subr.mxu0 0.0
    %722 = vmatpush2.msra.mxu0 0.0
    %723 = vmatprep.subr.mxu0 0.0
    %724 = vmatpush2.msra.mxu0 0.0
    %725 = vmatprep.subr.mxu0 0.0
    %726 = vmatpush2.msra.mxu0 0.0
    %727 = vmatprep.subr.mxu0 0.0
    %728 = vmatpush2.msra.mxu0 0.0
    %729 = vmatprep.subr.mxu0 0.0
    %730 = vmatpush2.msra.mxu0 0.0
    %731 = vmatprep.subr.mxu0 0.0
    %732 = vmatpush2.msra.mxu0 0.0
    %733 = vmatprep.subr.mxu0 0.0
    %734 = vmatpush2.msra.mxu0 0.0
    %735 = vmatprep.subr.mxu0 0.0
    %736 = vmatpush2.msra.mxu0 0.0
    %737 = vmatprep.subr.mxu0 0.0
    %738 = vmatpush2.msra.mxu0 0.0
    %739 = vmatprep.subr.mxu0 0.0
    %740 = vmatpush2.msra.mxu0 0.0
    %741 = vmatprep.subr.mxu0 0.0
    %742 = vmatpush2.msra.mxu0 0.0
    %743 = vmatprep.subr.mxu0 0.0
    %744 = vmatpush2.msra.mxu0 0.0
    %745 = vmatprep.subr.mxu0 0.0
    %746 = vmatpush2.msra.mxu0 0.0
    %747 = vmatprep.subr.mxu0 0.0
    %748 = vmatpush2.msra.mxu0 0.0
    %749 = vmatprep.subr.mxu0 0.0
    %750 = vmatpush2.msra.mxu0 0.0
    %751 = vmatprep.subr.mxu0 0.0
    %752 = vmatpush2.msra.mxu0 0.0
    %753 = vmatprep.mubr.f32.mxu0 0.0
    %754 = vmatmul.mubr.f32.gmra.mxu0 %v683
    %v755 = vpop.f32.mrf.mxu0
    %v756 = vadd.f32 0.0, %v755
    %v757 = vpop.f32.mrf.mxu0
    %v758 = vadd.f32 0.0, %v757
    %759 = vdwg.mxu0
    %760 = vmatprep.subr.mxu0 %v166
    %761 = vmatpush1.msra.mxu0 %v165
    %762 = vmatprep.subr.mxu0 %v162
    %763 = vmatpush1.msra.mxu0 %v161
    %764 = vmatprep.subr.mxu0 %v158
    %765 = vmatpush1.msra.mxu0 %v157
    %766 = vmatprep.subr.mxu0 %v154
    %767 = vmatpush1.msra.mxu0 %v153
    %768 = vmatprep.subr.mxu0 %v150
    %769 = vmatpush1.msra.mxu0 %v149
    %770 = vmatprep.subr.mxu0 %v146
    %771 = vmatpush1.msra.mxu0 %v145
    %772 = vmatprep.subr.mxu0 %v142
    %773 = vmatpush1.msra.mxu0 %v141
    %774 = vmatprep.subr.mxu0 %v138
    %775 = vmatpush1.msra.mxu0 %v137
    %776 = vmatprep.subr.mxu0 %v134
    %777 = vmatpush1.msra.mxu0 %v133
    %778 = vmatprep.subr.mxu0 %v130
    %779 = vmatpush1.msra.mxu0 %v129
    %780 = vmatprep.subr.mxu0 %v126
    %781 = vmatpush1.msra.mxu0 %v125
    %782 = vmatprep.subr.mxu0 %v122
    %783 = vmatpush1.msra.mxu0 %v121
    %784 = vmatprep.subr.mxu0 %v118
    %785 = vmatpush1.msra.mxu0 %v117
    %786 = vmatprep.subr.mxu0 %v114
    %787 = vmatpush1.msra.mxu0 %v113
    %788 = vmatprep.subr.mxu0 %v110
    %789 = vmatpush1.msra.mxu0 %v109
    %790 = vmatprep.subr.mxu0 %v106
    %791 = vmatpush1.msra.mxu0 %v105
    %792 = vmatprep.subr.mxu0 0.0
    %793 = vmatpush2.msra.mxu0 0.0
    %794 = vmatprep.subr.mxu0 0.0
    %795 = vmatpush2.msra.mxu0 0.0
    %796 = vmatprep.subr.mxu0 0.0
    %797 = vmatpush2.msra.mxu0 0.0
    %798 = vmatprep.subr.mxu0 0.0
    %799 = vmatpush2.msra.mxu0 0.0
    %800 = vmatprep.subr.mxu0 0.0
    %801 = vmatpush2.msra.mxu0 0.0
    %802 = vmatprep.subr.mxu0 0.0
    %803 = vmatpush2.msra.mxu0 0.0
    %804 = vmatprep.subr.mxu0 0.0
    %805 = vmatpush2.msra.mxu0 0.0
    %806 = vmatprep.subr.mxu0 0.0
    %807 = vmatpush2.msra.mxu0 0.0
    %808 = vmatprep.subr.mxu0 0.0
    %809 = vmatpush2.msra.mxu0 0.0
    %810 = vmatprep.subr.mxu0 0.0
    %811 = vmatpush2.msra.mxu0 0.0
    %812 = vmatprep.subr.mxu0 0.0
    %813 = vmatpush2.msra.mxu0 0.0
    %814 = vmatprep.subr.mxu0 0.0
    %815 = vmatpush2.msra.mxu0 0.0
    %816 = vmatprep.subr.mxu0 0.0
    %817 = vmatpush2.msra.mxu0 0.0
    %818 = vmatprep.subr.mxu0 0.0
    %819 = vmatpush2.msra.mxu0 0.0
    %820 = vmatprep.subr.mxu0 0.0
    %821 = vmatpush2.msra.mxu0 0.0
    %822 = vmatprep.subr.mxu0 0.0
    %823 = vmatpush2.msra.mxu0 0.0
    %824 = vmatprep.mubr.f32.mxu0 0.0
    %825 = vmatmul.mubr.f32.gmra.mxu0 %v683
    %v826 = vpop.f32.mrf.mxu0
    %v827 = vadd.f32 0.0, %v826
    %v828 = vpop.f32.mrf.mxu0
    %v829 = vadd.f32 0.0, %v828
    %830 = vdwg.mxu0
    %v831 = vadd.f32 %v685, %v756
    %v832 = vadd.f32 %v686, %v758
    %v833 = vadd.f32 %v687, %v827
    %v834 = vadd.f32 %v688, %v829
    %v835 = vadd.f32 %v831, %v53
    %v836 = vadd.f32 %v832, %v57
    %v837 = vadd.f32 %v833, %v61
    %v838 = vadd.f32 %v834, %v65
    %v839 = vxor.u32 %v835, 2147483648
    %v840 = vmul.f32 %v839, 1.442695
    %v841 = vpow.pop %v840
    %v842 = vadd.f32 %v841, 1.0
    %v843 = vrcp.pop %v842
    %v844 = vmul.f32 1.0, %v843
    %v845 = vxor.u32 %v836, 2147483648
    %v846 = vmul.f32 %v845, 1.442695
    %v847 = vpow.pop %v846
    %v848 = vadd.f32 %v847, 1.0
    %v849 = vrcp.pop %v848
    %v850 = vmul.f32 1.0, %v849
    %v851 = vmul.f32 %v844, %v838
    %v852 = vadd.f32 %v837, %v851
    %v853 = vtanh.pop %v852
    %v854 = vsub.f32 1.0, %v850
    %v855 = vmul.f32 %v854, %v853
    %v856 = vmul.f32 %v850, %v683
    %v857 = vadd.f32 %v855, %v856
    %s858 = scalar_lea.vmem %s1, 128
    %v859 = vld [vmem:[%s858] sm:$0xff]
    %v860 = vld [vmem:[%s858 + $0x8] sm:$0xff]
    %v861 = vld [vmem:[%s858 + $0x10] sm:$0xff]
    %v862 = vld [vmem:[%s858 + $0x18] sm:$0xff]
    %863 = vmatprep.subr.mxu0 %v164
    %864 = vmatpush1.msra.mxu0 %v163
    %865 = vmatprep.subr.mxu0 %v160
    %866 = vmatpush1.msra.mxu0 %v159
    %867 = vmatprep.subr.mxu0 %v156
    %868 = vmatpush1.msra.mxu0 %v155
    %869 = vmatprep.subr.mxu0 %v152
    %870 = vmatpush1.msra.mxu0 %v151
    %871 = vmatprep.subr.mxu0 %v148
    %872 = vmatpush1.msra.mxu0 %v147
    %873 = vmatprep.subr.mxu0 %v144
    %874 = vmatpush1.msra.mxu0 %v143
    %875 = vmatprep.subr.mxu0 %v140
    %876 = vmatpush1.msra.mxu0 %v139
    %877 = vmatprep.subr.mxu0 %v136
    %878 = vmatpush1.msra.mxu0 %v135
    %879 = vmatprep.subr.mxu0 %v132
    %880 = vmatpush1.msra.mxu0 %v131
    %881 = vmatprep.subr.mxu0 %v128
    %882 = vmatpush1.msra.mxu0 %v127
    %883 = vmatprep.subr.mxu0 %v124
    %884 = vmatpush1.msra.mxu0 %v123
    %885 = vmatprep.subr.mxu0 %v120
    %886 = vmatpush1.msra.mxu0 %v119
    %887 = vmatprep.subr.mxu0 %v116
    %888 = vmatpush1.msra.mxu0 %v115
    %889 = vmatprep.subr.mxu0 %v112
    %890 = vmatpush1.msra.mxu0 %v111
    %891 = vmatprep.subr.mxu0 %v108
    %892 = vmatpush1.msra.mxu0 %v107
    %893 = vmatprep.subr.mxu0 %v104
    %894 = vmatpush1.msra.mxu0 %v103
    %895 = vmatprep.subr.mxu0 0.0
    %896 = vmatpush2.msra.mxu0 0.0
    %897 = vmatprep.subr.mxu0 0.0
    %898 = vmatpush2.msra.mxu0 0.0
    %899 = vmatprep.subr.mxu0 0.0
    %900 = vmatpush2.msra.mxu0 0.0
    %901 = vmatprep.subr.mxu0 0.0
    %902 = vmatpush2.msra.mxu0 0.0
    %903 = vmatprep.subr.mxu0 0.0
    %904 = vmatpush2.msra.mxu0 0.0
    %905 = vmatprep.subr.mxu0 0.0
    %906 = vmatpush2.msra.mxu0 0.0
    %907 = vmatprep.subr.mxu0 0.0
    %908 = vmatpush2.msra.mxu0 0.0
    %909 = vmatprep.subr.mxu0 0.0
    %910 = vmatpush2.msra.mxu0 0.0
    %911 = vmatprep.subr.mxu0 0.0
    %912 = vmatpush2.msra.mxu0 0.0
    %913 = vmatprep.subr.mxu0 0.0
    %914 = vmatpush2.msra.mxu0 0.0
    %915 = vmatprep.subr.mxu0 0.0
    %916 = vmatpush2.msra.mxu0 0.0
    %917 = vmatprep.subr.mxu0 0.0
    %918 = vmatpush2.msra.mxu0 0.0
    %919 = vmatprep.subr.mxu0 0.0
    %920 = vmatpush2.msra.mxu0 0.0
    %921 = vmatprep.subr.mxu0 0.0
    %922 = vmatpush2.msra.mxu0 0.0
    %923 = vmatprep.subr.mxu0 0.0
    %924 = vmatpush2.msra.mxu0 0.0
    %925 = vmatprep.subr.mxu0 0.0
    %926 = vmatpush2.msra.mxu0 0.0
    %927 = vmatprep.mubr.f32.mxu0 0.0
    %928 = vmatmul.mubr.f32.gmra.mxu0 %v857
    %v929 = vpop.f32.mrf.mxu0
    %v930 = vadd.f32 0.0, %v929
    %v931 = vpop.f32.mrf.mxu0
    %v932 = vadd.f32 0.0, %v931
    %933 = vdwg.mxu0
    %934 = vmatprep.subr.mxu0 %v166
    %935 = vmatpush1.msra.mxu0 %v165
    %936 = vmatprep.subr.mxu0 %v162
    %937 = vmatpush1.msra.mxu0 %v161
    %938 = vmatprep.subr.mxu0 %v158
    %939 = vmatpush1.msra.mxu0 %v157
    %940 = vmatprep.subr.mxu0 %v154
    %941 = vmatpush1.msra.mxu0 %v153
    %942 = vmatprep.subr.mxu0 %v150
    %943 = vmatpush1.msra.mxu0 %v149
    %944 = vmatprep.subr.mxu0 %v146
    %945 = vmatpush1.msra.mxu0 %v145
    %946 = vmatprep.subr.mxu0 %v142
    %947 = vmatpush1.msra.mxu0 %v141
    %948 = vmatprep.subr.mxu0 %v138
    %949 = vmatpush1.msra.mxu0 %v137
    %950 = vmatprep.subr.mxu0 %v134
    %951 = vmatpush1.msra.mxu0 %v133
    %952 = vmatprep.subr.mxu0 %v130
    %953 = vmatpush1.msra.mxu0 %v129
    %954 = vmatprep.subr.mxu0 %v126
    %955 = vmatpush1.msra.mxu0 %v125
    %956 = vmatprep.subr.mxu0 %v122
    %957 = vmatpush1.msra.mxu0 %v121
    %958 = vmatprep.subr.mxu0 %v118
    %959 = vmatpush1.msra.mxu0 %v117
    %960 = vmatprep.subr.mxu0 %v114
    %961 = vmatpush1.msra.mxu0 %v113
    %962 = vmatprep.subr.mxu0 %v110
    %963 = vmatpush1.msra.mxu0 %v109
    %964 = vmatprep.subr.mxu0 %v106
    %965 = vmatpush1.msra.mxu0 %v105
    %966 = vmatprep.subr.mxu0 0.0
    %967 = vmatpush2.msra.mxu0 0.0
    %968 = vmatprep.subr.mxu0 0.0
    %969 = vmatpush2.msra.mxu0 0.0
    %970 = vmatprep.subr.mxu0 0.0
    %971 = vmatpush2.msra.mxu0 0.0
    %972 = vmatprep.subr.mxu0 0.0
    %973 = vmatpush2.msra.mxu0 0.0
    %974 = vmatprep.subr.mxu0 0.0
    %975 = vmatpush2.msra.mxu0 0.0
    %976 = vmatprep.subr.mxu0 0.0
    %977 = vmatpush2.msra.mxu0 0.0
    %978 = vmatprep.subr.mxu0 0.0
    %979 = vmatpush2.msra.mxu0 0.0
    %980 = vmatprep.subr.mxu0 0.0
    %981 = vmatpush2.msra.mxu0 0.0
    %982 = vmatprep.subr.mxu0 0.0
    %983 = vmatpush2.msra.mxu0 0.0
    %984 = vmatprep.subr.mxu0 0.0
    %985 = vmatpush2.msra.mxu0 0.0
    %986 = vmatprep.subr.mxu0 0.0
    %987 = vmatpush2.msra.mxu0 0.0
    %988 = vmatprep.subr.mxu0 0.0
    %989 = vmatpush2.msra.mxu0 0.0
    %990 = vmatprep.subr.mxu0 0.0
    %991 = vmatpush2.msra.mxu0 0.0
    %992 = vmatprep.subr.mxu0 0.0
    %993 = vmatpush2.msra.mxu0 0.0
    %994 = vmatprep.subr.mxu0 0.0
    %995 = vmatpush2.msra.mxu0 0.0
    %996 = vmatprep.subr.mxu0 0.0
    %997 = vmatpush2.msra.mxu0 0.0
    %998 = vmatprep.mubr.f32.mxu0 0.0
    %999 = vmatmul.mubr.f32.gmra.mxu0 %v857
    %v1000 = vpop.f32.mrf.mxu0
    %v1001 = vadd.f32 0.0, %v1000
    %v1002 = vpop.f32.mrf.mxu0
    %v1003 = vadd.f32 0.0, %v1002
    %1004 = vdwg.mxu0
    %v1005 = vadd.f32 %v859, %v930
    %v1006 = vadd.f32 %v860, %v932
    %v1007 = vadd.f32 %v861, %v1001
    %v1008 = vadd.f32 %v862, %v1003
    %v1009 = vadd.f32 %v1005, %v53
    %v1010 = vadd.f32 %v1006, %v57
    %v1011 = vadd.f32 %v1007, %v61
    %v1012 = vadd.f32 %v1008, %v65
    %v1013 = vxor.u32 %v1009, 2147483648
    %v1014 = vmul.f32 %v1013, 1.442695
    %v1015 = vpow.pop %v1014
    %v1016 = vadd.f32 %v1015, 1.0
    %v1017 = vrcp.pop %v1016
    %v1018 = vmul.f32 1.0, %v1017
    %v1019 = vxor.u32 %v1010, 2147483648
    %v1020 = vmul.f32 %v1019, 1.442695
    %v1021 = vpow.pop %v1020
    %v1022 = vadd.f32 %v1021, 1.0
    %v1023 = vrcp.pop %v1022
    %v1024 = vmul.f32 1.0, %v1023
    %v1025 = vmul.f32 %v1018, %v1012
    %v1026 = vadd.f32 %v1011, %v1025
    %v1027 = vtanh.pop %v1026
    %v1028 = vsub.f32 1.0, %v1024
    %v1029 = vmul.f32 %v1028, %v1027
    %v1030 = vmul.f32 %v1024, %v857
    %v1031 = vadd.f32 %v1029, %v1030
    %s1032 = scalar_lea.vmem %s1, 160
    %v1033 = vld [vmem:[%s1032] sm:$0xff]
    %v1034 = vld [vmem:[%s1032 + $0x8] sm:$0xff]
    %v1035 = vld [vmem:[%s1032 + $0x10] sm:$0xff]
    %v1036 = vld [vmem:[%s1032 + $0x18] sm:$0xff]
    %1037 = vmatprep.subr.mxu0 %v164
    %1038 = vmatpush1.msra.mxu0 %v163
    %1039 = vmatprep.subr.mxu0 %v160
    %1040 = vmatpush1.msra.mxu0 %v159
    %1041 = vmatprep.subr.mxu0 %v156
    %1042 = vmatpush1.msra.mxu0 %v155
    %1043 = vmatprep.subr.mxu0 %v152
    %1044 = vmatpush1.msra.mxu0 %v151
    %1045 = vmatprep.subr.mxu0 %v148
    %1046 = vmatpush1.msra.mxu0 %v147
    %1047 = vmatprep.subr.mxu0 %v144
    %1048 = vmatpush1.msra.mxu0 %v143
    %1049 = vmatprep.subr.mxu0 %v140
    %1050 = vmatpush1.msra.mxu0 %v139
    %1051 = vmatprep.subr.mxu0 %v136
    %1052 = vmatpush1.msra.mxu0 %v135
    %1053 = vmatprep.subr.mxu0 %v132
    %1054 = vmatpush1.msra.mxu0 %v131
    %1055 = vmatprep.subr.mxu0 %v128
    %1056 = vmatpush1.msra.mxu0 %v127
    %1057 = vmatprep.subr.mxu0 %v124
    %1058 = vmatpush1.msra.mxu0 %v123
    %1059 = vmatprep.subr.mxu0 %v120
    %1060 = vmatpush1.msra.mxu0 %v119
    %1061 = vmatprep.subr.mxu0 %v116
    %1062 = vmatpush1.msra.mxu0 %v115
    %1063 = vmatprep.subr.mxu0 %v112
    %1064 = vmatpush1.msra.mxu0 %v111
    %1065 = vmatprep.subr.mxu0 %v108
    %1066 = vmatpush1.msra.mxu0 %v107
    %1067 = vmatprep.subr.mxu0 %v104
    %1068 = vmatpush1.msra.mxu0 %v103
    %1069 = vmatprep.subr.mxu0 0.0
    %1070 = vmatpush2.msra.mxu0 0.0
    %1071 = vmatprep.subr.mxu0 0.0
    %1072 = vmatpush2.msra.mxu0 0.0
    %1073 = vmatprep.subr.mxu0 0.0
    %1074 = vmatpush2.msra.mxu0 0.0
    %1075 = vmatprep.subr.mxu0 0.0
    %1076 = vmatpush2.msra.mxu0 0.0
    %1077 = vmatprep.subr.mxu0 0.0
    %1078 = vmatpush2.msra.mxu0 0.0
    %1079 = vmatprep.subr.mxu0 0.0
    %1080 = vmatpush2.msra.mxu0 0.0
    %1081 = vmatprep.subr.mxu0 0.0
    %1082 = vmatpush2.msra.mxu0 0.0
    %1083 = vmatprep.subr.mxu0 0.0
    %1084 = vmatpush2.msra.mxu0 0.0
    %1085 = vmatprep.subr.mxu0 0.0
    %1086 = vmatpush2.msra.mxu0 0.0
    %1087 = vmatprep.subr.mxu0 0.0
    %1088 = vmatpush2.msra.mxu0 0.0
    %1089 = vmatprep.subr.mxu0 0.0
    %1090 = vmatpush2.msra.mxu0 0.0
    %1091 = vmatprep.subr.mxu0 0.0
    %1092 = vmatpush2.msra.mxu0 0.0
    %1093 = vmatprep.subr.mxu0 0.0
    %1094 = vmatpush2.msra.mxu0 0.0
    %1095 = vmatprep.subr.mxu0 0.0
    %1096 = vmatpush2.msra.mxu0 0.0
    %1097 = vmatprep.subr.mxu0 0.0
    %1098 = vmatpush2.msra.mxu0 0.0
    %1099 = vmatprep.subr.mxu0 0.0
    %1100 = vmatpush2.msra.mxu0 0.0
    %1101 = vmatprep.mubr.f32.mxu0 0.0
    %1102 = vmatmul.mubr.f32.gmra.mxu0 %v1031
    %v1103 = vpop.f32.mrf.mxu0
    %v1104 = vadd.f32 0.0, %v1103
    %v1105 = vpop.f32.mrf.mxu0
    %v1106 = vadd.f32 0.0, %v1105
    %1107 = vdwg.mxu0
    %1108 = vmatprep.subr.mxu0 %v166
    %1109 = vmatpush1.msra.mxu0 %v165
    %1110 = vmatprep.subr.mxu0 %v162
    %1111 = vmatpush1.msra.mxu0 %v161
    %1112 = vmatprep.subr.mxu0 %v158
    %1113 = vmatpush1.msra.mxu0 %v157
    %1114 = vmatprep.subr.mxu0 %v154
    %1115 = vmatpush1.msra.mxu0 %v153
    %1116 = vmatprep.subr.mxu0 %v150
    %1117 = vmatpush1.msra.mxu0 %v149
    %1118 = vmatprep.subr.mxu0 %v146
    %1119 = vmatpush1.msra.mxu0 %v145
    %1120 = vmatprep.subr.mxu0 %v142
    %1121 = vmatpush1.msra.mxu0 %v141
    %1122 = vmatprep.subr.mxu0 %v138
    %1123 = vmatpush1.msra.mxu0 %v137
    %1124 = vmatprep.subr.mxu0 %v134
    %1125 = vmatpush1.msra.mxu0 %v133
    %1126 = vmatprep.subr.mxu0 %v130
    %1127 = vmatpush1.msra.mxu0 %v129
    %1128 = vmatprep.subr.mxu0 %v126
    %1129 = vmatpush1.msra.mxu0 %v125
    %1130 = vmatprep.subr.mxu0 %v122
    %1131 = vmatpush1.msra.mxu0 %v121
    %1132 = vmatprep.subr.mxu0 %v118
    %1133 = vmatpush1.msra.mxu0 %v117
    %1134 = vmatprep.subr.mxu0 %v114
    %1135 = vmatpush1.msra.mxu0 %v113
    %1136 = vmatprep.subr.mxu0 %v110
    %1137 = vmatpush1.msra.mxu0 %v109
    %1138 = vmatprep.subr.mxu0 %v106
    %1139 = vmatpush1.msra.mxu0 %v105
    %1140 = vmatprep.subr.mxu0 0.0
    %1141 = vmatpush2.msra.mxu0 0.0
    %1142 = vmatprep.subr.mxu0 0.0
    %1143 = vmatpush2.msra.mxu0 0.0
    %1144 = vmatprep.subr.mxu0 0.0
    %1145 = vmatpush2.msra.mxu0 0.0
    %1146 = vmatprep.subr.mxu0 0.0
    %1147 = vmatpush2.msra.mxu0 0.0
    %1148 = vmatprep.subr.mxu0 0.0
    %1149 = vmatpush2.msra.mxu0 0.0
    %1150 = vmatprep.subr.mxu0 0.0
    %1151 = vmatpush2.msra.mxu0 0.0
    %1152 = vmatprep.subr.mxu0 0.0
    %1153 = vmatpush2.msra.mxu0 0.0
    %1154 = vmatprep.subr.mxu0 0.0
    %1155 = vmatpush2.msra.mxu0 0.0
    %1156 = vmatprep.subr.mxu0 0.0
    %1157 = vmatpush2.msra.mxu0 0.0
    %1158 = vmatprep.subr.mxu0 0.0
    %1159 = vmatpush2.msra.mxu0 0.0
    %1160 = vmatprep.subr.mxu0 0.0
    %1161 = vmatpush2.msra.mxu0 0.0
    %1162 = vmatprep.subr.mxu0 0.0
    %1163 = vmatpush2.msra.mxu0 0.0
    %1164 = vmatprep.subr.mxu0 0.0
    %1165 = vmatpush2.msra.mxu0 0.0
    %1166 = vmatprep.subr.mxu0 0.0
    %1167 = vmatpush2.msra.mxu0 0.0
    %1168 = vmatprep.subr.mxu0 0.0
    %1169 = vmatpush2.msra.mxu0 0.0
    %1170 = vmatprep.subr.mxu0 0.0
    %1171 = vmatpush2.msra.mxu0 0.0
    %1172 = vmatprep.mubr.f32.mxu0 0.0
    %1173 = vmatmul.mubr.f32.gmra.mxu0 %v1031
    %v1174 = vpop.f32.mrf.mxu0
    %v1175 = vadd.f32 0.0, %v1174
    %v1176 = vpop.f32.mrf.mxu0
    %v1177 = vadd.f32 0.0, %v1176
    %1178 = vdwg.mxu0
    %v1179 = vadd.f32 %v1033, %v1104
    %v1180 = vadd.f32 %v1034, %v1106
    %v1181 = vadd.f32 %v1035, %v1175
    %v1182 = vadd.f32 %v1036, %v1177
    %v1183 = vadd.f32 %v1179, %v53
    %v1184 = vadd.f32 %v1180, %v57
    %v1185 = vadd.f32 %v1181, %v61
    %v1186 = vadd.f32 %v1182, %v65
    %v1187 = vxor.u32 %v1183, 2147483648
    %v1188 = vmul.f32 %v1187, 1.442695
    %v1189 = vpow.pop %v1188
    %v1190 = vadd.f32 %v1189, 1.0
    %v1191 = vrcp.pop %v1190
    %v1192 = vmul.f32 1.0, %v1191
    %v1193 = vxor.u32 %v1184, 2147483648
    %v1194 = vmul.f32 %v1193, 1.442695
    %v1195 = vpow.pop %v1194
    %v1196 = vadd.f32 %v1195, 1.0
    %v1197 = vrcp.pop %v1196
    %v1198 = vmul.f32 1.0, %v1197
    %v1199 = vmul.f32 %v1192, %v1186
    %v1200 = vadd.f32 %v1185, %v1199
    %v1201 = vtanh.pop %v1200
    %v1202 = vsub.f32 1.0, %v1198
    %v1203 = vmul.f32 %v1202, %v1201
    %v1204 = vmul.f32 %v1198, %v1031
    %v1205 = vadd.f32 %v1203, %v1204
    %s1206 = scalar_lea.vmem %s1, 192
    %v1207 = vld [vmem:[%s1206] sm:$0xff]
    %v1208 = vld [vmem:[%s1206 + $0x8] sm:$0xff]
    %v1209 = vld [vmem:[%s1206 + $0x10] sm:$0xff]
    %v1210 = vld [vmem:[%s1206 + $0x18] sm:$0xff]
    %1211 = vmatprep.subr.mxu0 %v164
    %1212 = vmatpush1.msra.mxu0 %v163
    %1213 = vmatprep.subr.mxu0 %v160
    %1214 = vmatpush1.msra.mxu0 %v159
    %1215 = vmatprep.subr.mxu0 %v156
    %1216 = vmatpush1.msra.mxu0 %v155
    %1217 = vmatprep.subr.mxu0 %v152
    %1218 = vmatpush1.msra.mxu0 %v151
    %1219 = vmatprep.subr.mxu0 %v148
    %1220 = vmatpush1.msra.mxu0 %v147
    %1221 = vmatprep.subr.mxu0 %v144
    %1222 = vmatpush1.msra.mxu0 %v143
    %1223 = vmatprep.subr.mxu0 %v140
    %1224 = vmatpush1.msra.mxu0 %v139
    %1225 = vmatprep.subr.mxu0 %v136
    %1226 = vmatpush1.msra.mxu0 %v135
    %1227 = vmatprep.subr.mxu0 %v132
    %1228 = vmatpush1.msra.mxu0 %v131
    %1229 = vmatprep.subr.mxu0 %v128
    %1230 = vmatpush1.msra.mxu0 %v127
    %1231 = vmatprep.subr.mxu0 %v124
    %1232 = vmatpush1.msra.mxu0 %v123
    %1233 = vmatprep.subr.mxu0 %v120
    %1234 = vmatpush1.msra.mxu0 %v119
    %1235 = vmatprep.subr.mxu0 %v116
    %1236 = vmatpush1.msra.mxu0 %v115
    %1237 = vmatprep.subr.mxu0 %v112
    %1238 = vmatpush1.msra.mxu0 %v111
    %1239 = vmatprep.subr.mxu0 %v108
    %1240 = vmatpush1.msra.mxu0 %v107
    %1241 = vmatprep.subr.mxu0 %v104
    %1242 = vmatpush1.msra.mxu0 %v103
    %1243 = vmatprep.subr.mxu0 0.0
    %1244 = vmatpush2.msra.mxu0 0.0
    %1245 = vmatprep.subr.mxu0 0.0
    %1246 = vmatpush2.msra.mxu0 0.0
    %1247 = vmatprep.subr.mxu0 0.0
    %1248 = vmatpush2.msra.mxu0 0.0
    %1249 = vmatprep.subr.mxu0 0.0
    %1250 = vmatpush2.msra.mxu0 0.0
    %1251 = vmatprep.subr.mxu0 0.0
    %1252 = vmatpush2.msra.mxu0 0.0
    %1253 = vmatprep.subr.mxu0 0.0
    %1254 = vmatpush2.msra.mxu0 0.0
    %1255 = vmatprep.subr.mxu0 0.0
    %1256 = vmatpush2.msra.mxu0 0.0
    %1257 = vmatprep.subr.mxu0 0.0
    %1258 = vmatpush2.msra.mxu0 0.0
    %1259 = vmatprep.subr.mxu0 0.0
    %1260 = vmatpush2.msra.mxu0 0.0
    %1261 = vmatprep.subr.mxu0 0.0
    %1262 = vmatpush2.msra.mxu0 0.0
    %1263 = vmatprep.subr.mxu0 0.0
    %1264 = vmatpush2.msra.mxu0 0.0
    %1265 = vmatprep.subr.mxu0 0.0
    %1266 = vmatpush2.msra.mxu0 0.0
    %1267 = vmatprep.subr.mxu0 0.0
    %1268 = vmatpush2.msra.mxu0 0.0
    %1269 = vmatprep.subr.mxu0 0.0
    %1270 = vmatpush2.msra.mxu0 0.0
    %1271 = vmatprep.subr.mxu0 0.0
    %1272 = vmatpush2.msra.mxu0 0.0
    %1273 = vmatprep.subr.mxu0 0.0
    %1274 = vmatpush2.msra.mxu0 0.0
    %1275 = vmatprep.mubr.f32.mxu0 0.0
    %1276 = vmatmul.mubr.f32.gmra.mxu0 %v1205
    %v1277 = vpop.f32.mrf.mxu0
    %v1278 = vadd.f32 0.0, %v1277
    %v1279 = vpop.f32.mrf.mxu0
    %v1280 = vadd.f32 0.0, %v1279
    %1281 = vdwg.mxu0
    %1282 = vmatprep.subr.mxu0 %v166
    %1283 = vmatpush1.msra.mxu0 %v165
    %1284 = vmatprep.subr.mxu0 %v162
    %1285 = vmatpush1.msra.mxu0 %v161
    %1286 = vmatprep.subr.mxu0 %v158
    %1287 = vmatpush1.msra.mxu0 %v157
    %1288 = vmatprep.subr.mxu0 %v154
    %1289 = vmatpush1.msra.mxu0 %v153
    %1290 = vmatprep.subr.mxu0 %v150
    %1291 = vmatpush1.msra.mxu0 %v149
    %1292 = vmatprep.subr.mxu0 %v146
    %1293 = vmatpush1.msra.mxu0 %v145
    %1294 = vmatprep.subr.mxu0 %v142
    %1295 = vmatpush1.msra.mxu0 %v141
    %1296 = vmatprep.subr.mxu0 %v138
    %1297 = vmatpush1.msra.mxu0 %v137
    %1298 = vmatprep.subr.mxu0 %v134
    %1299 = vmatpush1.msra.mxu0 %v133
    %1300 = vmatprep.subr.mxu0 %v130
    %1301 = vmatpush1.msra.mxu0 %v129
    %1302 = vmatprep.subr.mxu0 %v126
    %1303 = vmatpush1.msra.mxu0 %v125
    %1304 = vmatprep.subr.mxu0 %v122
    %1305 = vmatpush1.msra.mxu0 %v121
    %1306 = vmatprep.subr.mxu0 %v118
    %1307 = vmatpush1.msra.mxu0 %v117
    %1308 = vmatprep.subr.mxu0 %v114
    %1309 = vmatpush1.msra.mxu0 %v113
    %1310 = vmatprep.subr.mxu0 %v110
    %1311 = vmatpush1.msra.mxu0 %v109
    %1312 = vmatprep.subr.mxu0 %v106
    %1313 = vmatpush1.msra.mxu0 %v105
    %1314 = vmatprep.subr.mxu0 0.0
    %1315 = vmatpush2.msra.mxu0 0.0
    %1316 = vmatprep.subr.mxu0 0.0
    %1317 = vmatpush2.msra.mxu0 0.0
    %1318 = vmatprep.subr.mxu0 0.0
    %1319 = vmatpush2.msra.mxu0 0.0
    %1320 = vmatprep.subr.mxu0 0.0
    %1321 = vmatpush2.msra.mxu0 0.0
    %1322 = vmatprep.subr.mxu0 0.0
    %1323 = vmatpush2.msra.mxu0 0.0
    %1324 = vmatprep.subr.mxu0 0.0
    %1325 = vmatpush2.msra.mxu0 0.0
    %1326 = vmatprep.subr.mxu0 0.0
    %1327 = vmatpush2.msra.mxu0 0.0
    %1328 = vmatprep.subr.mxu0 0.0
    %1329 = vmatpush2.msra.mxu0 0.0
    %1330 = vmatprep.subr.mxu0 0.0
    %1331 = vmatpush2.msra.mxu0 0.0
    %1332 = vmatprep.subr.mxu0 0.0
    %1333 = vmatpush2.msra.mxu0 0.0
    %1334 = vmatprep.subr.mxu0 0.0
    %1335 = vmatpush2.msra.mxu0 0.0
    %1336 = vmatprep.subr.mxu0 0.0
    %1337 = vmatpush2.msra.mxu0 0.0
    %1338 = vmatprep.subr.mxu0 0.0
    %1339 = vmatpush2.msra.mxu0 0.0
    %1340 = vmatprep.subr.mxu0 0.0
    %1341 = vmatpush2.msra.mxu0 0.0
    %1342 = vmatprep.subr.mxu0 0.0
    %1343 = vmatpush2.msra.mxu0 0.0
    %1344 = vmatprep.subr.mxu0 0.0
    %1345 = vmatpush2.msra.mxu0 0.0
    %1346 = vmatprep.mubr.f32.mxu0 0.0
    %1347 = vmatmul.mubr.f32.gmra.mxu0 %v1205
    %v1348 = vpop.f32.mrf.mxu0
    %v1349 = vadd.f32 0.0, %v1348
    %v1350 = vpop.f32.mrf.mxu0
    %v1351 = vadd.f32 0.0, %v1350
    %1352 = vdwg.mxu0
    %v1353 = vadd.f32 %v1207, %v1278
    %v1354 = vadd.f32 %v1208, %v1280
    %v1355 = vadd.f32 %v1209, %v1349
    %v1356 = vadd.f32 %v1210, %v1351
    %v1357 = vadd.f32 %v1353, %v53
    %v1358 = vadd.f32 %v1354, %v57
    %v1359 = vadd.f32 %v1355, %v61
    %v1360 = vadd.f32 %v1356, %v65
    %v1361 = vxor.u32 %v1357, 2147483648
    %v1362 = vmul.f32 %v1361, 1.442695
    %v1363 = vpow.pop %v1362
    %v1364 = vadd.f32 %v1363, 1.0
    %v1365 = vrcp.pop %v1364
    %v1366 = vmul.f32 1.0, %v1365
    %v1367 = vxor.u32 %v1358, 2147483648
    %v1368 = vmul.f32 %v1367, 1.442695
    %v1369 = vpow.pop %v1368
    %v1370 = vadd.f32 %v1369, 1.0
    %v1371 = vrcp.pop %v1370
    %v1372 = vmul.f32 1.0, %v1371
    %v1373 = vmul.f32 %v1366, %v1360
    %v1374 = vadd.f32 %v1359, %v1373
    %v1375 = vtanh.pop %v1374
    %v1376 = vsub.f32 1.0, %v1372
    %v1377 = vmul.f32 %v1376, %v1375
    %v1378 = vmul.f32 %v1372, %v1205
    %v1379 = vadd.f32 %v1377, %v1378
    %s1380 = scalar_lea.vmem %s1, 224
    %v1381 = vld [vmem:[%s1380] sm:$0xff]
    %v1382 = vld [vmem:[%s1380 + $0x8] sm:$0xff]
    %v1383 = vld [vmem:[%s1380 + $0x10] sm:$0xff]
    %v1384 = vld [vmem:[%s1380 + $0x18] sm:$0xff]
    %1385 = vmatprep.subr.mxu0 %v164
    %1386 = vmatpush1.msra.mxu0 %v163
    %1387 = vmatprep.subr.mxu0 %v160
    %1388 = vmatpush1.msra.mxu0 %v159
    %1389 = vmatprep.subr.mxu0 %v156
    %1390 = vmatpush1.msra.mxu0 %v155
    %1391 = vmatprep.subr.mxu0 %v152
    %1392 = vmatpush1.msra.mxu0 %v151
    %1393 = vmatprep.subr.mxu0 %v148
    %1394 = vmatpush1.msra.mxu0 %v147
    %1395 = vmatprep.subr.mxu0 %v144
    %1396 = vmatpush1.msra.mxu0 %v143
    %1397 = vmatprep.subr.mxu0 %v140
    %1398 = vmatpush1.msra.mxu0 %v139
    %1399 = vmatprep.subr.mxu0 %v136
    %1400 = vmatpush1.msra.mxu0 %v135
    %1401 = vmatprep.subr.mxu0 %v132
    %1402 = vmatpush1.msra.mxu0 %v131
    %1403 = vmatprep.subr.mxu0 %v128
    %1404 = vmatpush1.msra.mxu0 %v127
    %1405 = vmatprep.subr.mxu0 %v124
    %1406 = vmatpush1.msra.mxu0 %v123
    %1407 = vmatprep.subr.mxu0 %v120
    %1408 = vmatpush1.msra.mxu0 %v119
    %1409 = vmatprep.subr.mxu0 %v116
    %1410 = vmatpush1.msra.mxu0 %v115
    %1411 = vmatprep.subr.mxu0 %v112
    %1412 = vmatpush1.msra.mxu0 %v111
    %1413 = vmatprep.subr.mxu0 %v108
    %1414 = vmatpush1.msra.mxu0 %v107
    %1415 = vmatprep.subr.mxu0 %v104
    %1416 = vmatpush1.msra.mxu0 %v103
    %1417 = vmatprep.subr.mxu0 0.0
    %1418 = vmatpush2.msra.mxu0 0.0
    %1419 = vmatprep.subr.mxu0 0.0
    %1420 = vmatpush2.msra.mxu0 0.0
    %1421 = vmatprep.subr.mxu0 0.0
    %1422 = vmatpush2.msra.mxu0 0.0
    %1423 = vmatprep.subr.mxu0 0.0
    %1424 = vmatpush2.msra.mxu0 0.0
    %1425 = vmatprep.subr.mxu0 0.0
    %1426 = vmatpush2.msra.mxu0 0.0
    %1427 = vmatprep.subr.mxu0 0.0
    %1428 = vmatpush2.msra.mxu0 0.0
    %1429 = vmatprep.subr.mxu0 0.0
    %1430 = vmatpush2.msra.mxu0 0.0
    %1431 = vmatprep.subr.mxu0 0.0
    %1432 = vmatpush2.msra.mxu0 0.0
    %1433 = vmatprep.subr.mxu0 0.0
    %1434 = vmatpush2.msra.mxu0 0.0
    %1435 = vmatprep.subr.mxu0 0.0
    %1436 = vmatpush2.msra.mxu0 0.0
    %1437 = vmatprep.subr.mxu0 0.0
    %1438 = vmatpush2.msra.mxu0 0.0
    %1439 = vmatprep.subr.mxu0 0.0
    %1440 = vmatpush2.msra.mxu0 0.0
    %1441 = vmatprep.subr.mxu0 0.0
    %1442 = vmatpush2.msra.mxu0 0.0
    %1443 = vmatprep.subr.mxu0 0.0
    %1444 = vmatpush2.msra.mxu0 0.0
    %1445 = vmatprep.subr.mxu0 0.0
    %1446 = vmatpush2.msra.mxu0 0.0
    %1447 = vmatprep.subr.mxu0 0.0
    %1448 = vmatpush2.msra.mxu0 0.0
    %1449 = vmatprep.mubr.f32.mxu0 0.0
    %1450 = vmatmul.mubr.f32.gmra.mxu0 %v1379
    %v1451 = vpop.f32.mrf.mxu0
    %v1452 = vadd.f32 0.0, %v1451
    %v1453 = vpop.f32.mrf.mxu0
    %v1454 = vadd.f32 0.0, %v1453
    %1455 = vdwg.mxu0
    %1456 = vmatprep.subr.mxu0 %v166
    %1457 = vmatpush1.msra.mxu0 %v165
    %1458 = vmatprep.subr.mxu0 %v162
    %1459 = vmatpush1.msra.mxu0 %v161
    %1460 = vmatprep.subr.mxu0 %v158
    %1461 = vmatpush1.msra.mxu0 %v157
    %1462 = vmatprep.subr.mxu0 %v154
    %1463 = vmatpush1.msra.mxu0 %v153
    %1464 = vmatprep.subr.mxu0 %v150
    %1465 = vmatpush1.msra.mxu0 %v149
    %1466 = vmatprep.subr.mxu0 %v146
    %1467 = vmatpush1.msra.mxu0 %v145
    %1468 = vmatprep.subr.mxu0 %v142
    %1469 = vmatpush1.msra.mxu0 %v141
    %1470 = vmatprep.subr.mxu0 %v138
    %1471 = vmatpush1.msra.mxu0 %v137
    %1472 = vmatprep.subr.mxu0 %v134
    %1473 = vmatpush1.msra.mxu0 %v133
    %1474 = vmatprep.subr.mxu0 %v130
    %1475 = vmatpush1.msra.mxu0 %v129
    %1476 = vmatprep.subr.mxu0 %v126
    %1477 = vmatpush1.msra.mxu0 %v125
    %1478 = vmatprep.subr.mxu0 %v122
    %1479 = vmatpush1.msra.mxu0 %v121
    %1480 = vmatprep.subr.mxu0 %v118
    %1481 = vmatpush1.msra.mxu0 %v117
    %1482 = vmatprep.subr.mxu0 %v114
    %1483 = vmatpush1.msra.mxu0 %v113
    %1484 = vmatprep.subr.mxu0 %v110
    %1485 = vmatpush1.msra.mxu0 %v109
    %1486 = vmatprep.subr.mxu0 %v106
    %1487 = vmatpush1.msra.mxu0 %v105
    %1488 = vmatprep.subr.mxu0 0.0
    %1489 = vmatpush2.msra.mxu0 0.0
    %1490 = vmatprep.subr.mxu0 0.0
    %1491 = vmatpush2.msra.mxu0 0.0
    %1492 = vmatprep.subr.mxu0 0.0
    %1493 = vmatpush2.msra.mxu0 0.0
    %1494 = vmatprep.subr.mxu0 0.0
    %1495 = vmatpush2.msra.mxu0 0.0
    %1496 = vmatprep.subr.mxu0 0.0
    %1497 = vmatpush2.msra.mxu0 0.0
    %1498 = vmatprep.subr.mxu0 0.0
    %1499 = vmatpush2.msra.mxu0 0.0
    %1500 = vmatprep.subr.mxu0 0.0
    %1501 = vmatpush2.msra.mxu0 0.0
    %1502 = vmatprep.subr.mxu0 0.0
    %1503 = vmatpush2.msra.mxu0 0.0
    %1504 = vmatprep.subr.mxu0 0.0
    %1505 = vmatpush2.msra.mxu0 0.0
    %1506 = vmatprep.subr.mxu0 0.0
    %1507 = vmatpush2.msra.mxu0 0.0
    %1508 = vmatprep.subr.mxu0 0.0
    %1509 = vmatpush2.msra.mxu0 0.0
    %1510 = vmatprep.subr.mxu0 0.0
    %1511 = vmatpush2.msra.mxu0 0.0
    %1512 = vmatprep.subr.mxu0 0.0
    %1513 = vmatpush2.msra.mxu0 0.0
    %1514 = vmatprep.subr.mxu0 0.0
    %1515 = vmatpush2.msra.mxu0 0.0
    %1516 = vmatprep.subr.mxu0 0.0
    %1517 = vmatpush2.msra.mxu0 0.0
    %1518 = vmatprep.subr.mxu0 0.0
    %1519 = vmatpush2.msra.mxu0 0.0
    %1520 = vmatprep.mubr.f32.mxu0 0.0
    %1521 = vmatmul.mubr.f32.gmra.mxu0 %v1379
    %v1522 = vpop.f32.mrf.mxu0
    %v1523 = vadd.f32 0.0, %v1522
    %v1524 = vpop.f32.mrf.mxu0
    %v1525 = vadd.f32 0.0, %v1524
    %1526 = vdwg.mxu0
    %v1527 = vadd.f32 %v1381, %v1452
    %v1528 = vadd.f32 %v1382, %v1454
    %v1529 = vadd.f32 %v1383, %v1523
    %v1530 = vadd.f32 %v1384, %v1525
    %v1531 = vadd.f32 %v1527, %v53
    %v1532 = vadd.f32 %v1528, %v57
    %v1533 = vadd.f32 %v1529, %v61
    %v1534 = vadd.f32 %v1530, %v65
    %v1535 = vxor.u32 %v1531, 2147483648
    %v1536 = vmul.f32 %v1535, 1.442695
    %v1537 = vpow.pop %v1536
    %v1538 = vadd.f32 %v1537, 1.0
    %v1539 = vrcp.pop %v1538
    %v1540 = vmul.f32 1.0, %v1539
    %v1541 = vxor.u32 %v1532, 2147483648
    %v1542 = vmul.f32 %v1541, 1.442695
    %v1543 = vpow.pop %v1542
    %v1544 = vadd.f32 %v1543, 1.0
    %v1545 = vrcp.pop %v1544
    %v1546 = vmul.f32 1.0, %v1545
    %v1547 = vmul.f32 %v1540, %v1534
    %v1548 = vadd.f32 %v1533, %v1547
    %v1549 = vtanh.pop %v1548
    %v1550 = vsub.f32 1.0, %v1546
    %v1551 = vmul.f32 %v1550, %v1549
    %v1552 = vmul.f32 %v1546, %v1379
    %v1553 = vadd.f32 %v1551, %v1552
    %1554 = vst [vmem:[%s10] sm:$0xff] 0.0
    %v1555 = vlaneseq
    %v1556 = vand.u32 %v1555, 127
    %v1557 = vld [vmem:[%s2] sm:$0xff]
    %v1558 = vld [vmem:[%s2 + $0x8] sm:$0xff]
    %v1559 = vld [vmem:[%s2 + $0x10] sm:$0xff]
    %v1560 = vld [vmem:[%s2 + $0x18] sm:$0xff]
    %v1561 = vld [vmem:[%s6] sm:$0xff]
    %v1562 = vld [vmem:[%s6 + $0x8] sm:$0xff]
    %v1563 = vld [vmem:[%s6 + $0x10] sm:$0xff]
    %v1564 = vld [vmem:[%s6 + $0x18] sm:$0xff]
    %v1565 = vld [vmem:[%s6 + $0x20] sm:$0xff]
    %v1566 = vld [vmem:[%s6 + $0x28] sm:$0xff]
    %v1567 = vld [vmem:[%s6 + $0x30] sm:$0xff]
    %v1568 = vld [vmem:[%s6 + $0x38] sm:$0xff]
    %v1569 = vld [vmem:[%s6 + $0x40] sm:$0xff]
    %v1570 = vld [vmem:[%s6 + $0x48] sm:$0xff]
    %v1571 = vld [vmem:[%s6 + $0x50] sm:$0xff]
    %v1572 = vld [vmem:[%s6 + $0x58] sm:$0xff]
    %v1573 = vld [vmem:[%s6 + $0x60] sm:$0xff]
    %v1574 = vld [vmem:[%s6 + $0x68] sm:$0xff]
    %v1575 = vld [vmem:[%s6 + $0x70] sm:$0xff]
    %v1576 = vld [vmem:[%s6 + $0x78] sm:$0xff]
    %v1577 = vld [vmem:[%s6 + $0x80] sm:$0xff]
    %v1578 = vld [vmem:[%s6 + $0x88] sm:$0xff]
    %v1579 = vld [vmem:[%s6 + $0x90] sm:$0xff]
    %v1580 = vld [vmem:[%s6 + $0x98] sm:$0xff]
    %v1581 = vld [vmem:[%s6 + $0xa0] sm:$0xff]
    %v1582 = vld [vmem:[%s6 + $0xa8] sm:$0xff]
    %v1583 = vld [vmem:[%s6 + $0xb0] sm:$0xff]
    %v1584 = vld [vmem:[%s6 + $0xb8] sm:$0xff]
    %v1585 = vld [vmem:[%s6 + $0xc0] sm:$0xff]
    %v1586 = vld [vmem:[%s6 + $0xc8] sm:$0xff]
    %v1587 = vld [vmem:[%s6 + $0xd0] sm:$0xff]
    %v1588 = vld [vmem:[%s6 + $0xd8] sm:$0xff]
    %v1589 = vld [vmem:[%s6 + $0xe0] sm:$0xff]
    %v1590 = vld [vmem:[%s6 + $0xe8] sm:$0xff]
    %v1591 = vld [vmem:[%s6 + $0xf0] sm:$0xff]
    %v1592 = vld [vmem:[%s6 + $0xf8] sm:$0xff]
    %v1593 = vld [vmem:[%s6 + $0x100] sm:$0xff]
    %v1594 = vld [vmem:[%s6 + $0x108] sm:$0xff]
    %v1595 = vld [vmem:[%s6 + $0x110] sm:$0xff]
    %v1596 = vld [vmem:[%s6 + $0x118] sm:$0xff]
    %v1597 = vld [vmem:[%s6 + $0x120] sm:$0xff]
    %v1598 = vld [vmem:[%s6 + $0x128] sm:$0xff]
    %v1599 = vld [vmem:[%s6 + $0x130] sm:$0xff]
    %v1600 = vld [vmem:[%s6 + $0x138] sm:$0xff]
    %v1601 = vld [vmem:[%s6 + $0x140] sm:$0xff]
    %v1602 = vld [vmem:[%s6 + $0x148] sm:$0xff]
    %v1603 = vld [vmem:[%s6 + $0x150] sm:$0xff]
    %v1604 = vld [vmem:[%s6 + $0x158] sm:$0xff]
    %v1605 = vld [vmem:[%s6 + $0x160] sm:$0xff]
    %v1606 = vld [vmem:[%s6 + $0x168] sm:$0xff]
    %v1607 = vld [vmem:[%s6 + $0x170] sm:$0xff]
    %v1608 = vld [vmem:[%s6 + $0x178] sm:$0xff]
    %v1609 = vld [vmem:[%s6 + $0x180] sm:$0xff]
    %v1610 = vld [vmem:[%s6 + $0x188] sm:$0xff]
    %v1611 = vld [vmem:[%s6 + $0x190] sm:$0xff]
    %v1612 = vld [vmem:[%s6 + $0x198] sm:$0xff]
    %v1613 = vld [vmem:[%s6 + $0x1a0] sm:$0xff]
    %v1614 = vld [vmem:[%s6 + $0x1a8] sm:$0xff]
    %v1615 = vld [vmem:[%s6 + $0x1b0] sm:$0xff]
    %v1616 = vld [vmem:[%s6 + $0x1b8] sm:$0xff]
    %v1617 = vld [vmem:[%s6 + $0x1c0] sm:$0xff]
    %v1618 = vld [vmem:[%s6 + $0x1c8] sm:$0xff]
    %v1619 = vld [vmem:[%s6 + $0x1d0] sm:$0xff]
    %v1620 = vld [vmem:[%s6 + $0x1d8] sm:$0xff]
    %v1621 = vld [vmem:[%s6 + $0x1e0] sm:$0xff]
    %v1622 = vld [vmem:[%s6 + $0x1e8] sm:$0xff]
    %v1623 = vld [vmem:[%s6 + $0x1f0] sm:$0xff]
    %v1624 = vld [vmem:[%s6 + $0x1f8] sm:$0xff]
    %1625 = vmatprep.subr.mxu0 %v1622
    %1626 = vmatpush1.msra.mxu0 %v1621
    %1627 = vmatprep.subr.mxu0 %v1618
    %1628 = vmatpush1.msra.mxu0 %v1617
    %1629 = vmatprep.subr.mxu0 %v1614
    %1630 = vmatpush1.msra.mxu0 %v1613
    %1631 = vmatprep.subr.mxu0 %v1610
    %1632 = vmatpush1.msra.mxu0 %v1609
    %1633 = vmatprep.subr.mxu0 %v1606
    %1634 = vmatpush1.msra.mxu0 %v1605
    %1635 = vmatprep.subr.mxu0 %v1602
    %1636 = vmatpush1.msra.mxu0 %v1601
    %1637 = vmatprep.subr.mxu0 %v1598
    %1638 = vmatpush1.msra.mxu0 %v1597
    %1639 = vmatprep.subr.mxu0 %v1594
    %1640 = vmatpush1.msra.mxu0 %v1593
    %1641 = vmatprep.subr.mxu0 %v1590
    %1642 = vmatpush1.msra.mxu0 %v1589
    %1643 = vmatprep.subr.mxu0 %v1586
    %1644 = vmatpush1.msra.mxu0 %v1585
    %1645 = vmatprep.subr.mxu0 %v1582
    %1646 = vmatpush1.msra.mxu0 %v1581
    %1647 = vmatprep.subr.mxu0 %v1578
    %1648 = vmatpush1.msra.mxu0 %v1577
    %1649 = vmatprep.subr.mxu0 %v1574
    %1650 = vmatpush1.msra.mxu0 %v1573
    %1651 = vmatprep.subr.mxu0 %v1570
    %1652 = vmatpush1.msra.mxu0 %v1569
    %1653 = vmatprep.subr.mxu0 %v1566
    %1654 = vmatpush1.msra.mxu0 %v1565
    %1655 = vmatprep.subr.mxu0 %v1562
    %1656 = vmatpush1.msra.mxu0 %v1561
    %1657 = vmatprep.subr.mxu0 0.0
    %1658 = vmatpush2.msra.mxu0 0.0
    %1659 = vmatprep.subr.mxu0 0.0
    %1660 = vmatpush2.msra.mxu0 0.0
    %1661 = vmatprep.subr.mxu0 0.0
    %1662 = vmatpush2.msra.mxu0 0.0
    %1663 = vmatprep.subr.mxu0 0.0
    %1664 = vmatpush2.msra.mxu0 0.0
    %1665 = vmatprep.subr.mxu0 0.0
    %1666 = vmatpush2.msra.mxu0 0.0
    %1667 = vmatprep.subr.mxu0 0.0
    %1668 = vmatpush2.msra.mxu0 0.0
    %1669 = vmatprep.subr.mxu0 0.0
    %1670 = vmatpush2.msra.mxu0 0.0
    %1671 = vmatprep.subr.mxu0 0.0
    %1672 = vmatpush2.msra.mxu0 0.0
    %1673 = vmatprep.subr.mxu0 0.0
    %1674 = vmatpush2.msra.mxu0 0.0
    %1675 = vmatprep.subr.mxu0 0.0
    %1676 = vmatpush2.msra.mxu0 0.0
    %1677 = vmatprep.subr.mxu0 0.0
    %1678 = vmatpush2.msra.mxu0 0.0
    %1679 = vmatprep.subr.mxu0 0.0
    %1680 = vmatpush2.msra.mxu0 0.0
    %1681 = vmatprep.subr.mxu0 0.0
    %1682 = vmatpush2.msra.mxu0 0.0
    %1683 = vmatprep.subr.mxu0 0.0
    %1684 = vmatpush2.msra.mxu0 0.0
    %1685 = vmatprep.subr.mxu0 0.0
    %1686 = vmatpush2.msra.mxu0 0.0
    %1687 = vmatprep.subr.mxu0 0.0
    %1688 = vmatpush2.msra.mxu0 0.0
    %1689 = vmatprep.mubr.f32.mxu0 0.0
    %1690 = vmatmul.mubr.f32.gmra.mxu0 %v1553
    %v1691 = vpop.f32.mrf.mxu0
    %v1692 = vadd.f32 0.0, %v1691
    %v1693 = vpop.f32.mrf.mxu0
    %v1694 = vadd.f32 0.0, %v1693
    %1695 = vdwg.mxu0
    %1696 = vmatprep.subr.mxu0 %v1624
    %1697 = vmatpush1.msra.mxu0 %v1623
    %1698 = vmatprep.subr.mxu0 %v1620
    %1699 = vmatpush1.msra.mxu0 %v1619
    %1700 = vmatprep.subr.mxu0 %v1616
    %1701 = vmatpush1.msra.mxu0 %v1615
    %1702 = vmatprep.subr.mxu0 %v1612
    %1703 = vmatpush1.msra.mxu0 %v1611
    %1704 = vmatprep.subr.mxu0 %v1608
    %1705 = vmatpush1.msra.mxu0 %v1607
    %1706 = vmatprep.subr.mxu0 %v1604
    %1707 = vmatpush1.msra.mxu0 %v1603
    %1708 = vmatprep.subr.mxu0 %v1600
    %1709 = vmatpush1.msra.mxu0 %v1599
    %1710 = vmatprep.subr.mxu0 %v1596
    %1711 = vmatpush1.msra.mxu0 %v1595
    %1712 = vmatprep.subr.mxu0 %v1592
    %1713 = vmatpush1.msra.mxu0 %v1591
    %1714 = vmatprep.subr.mxu0 %v1588
    %1715 = vmatpush1.msra.mxu0 %v1587
    %1716 = vmatprep.subr.mxu0 %v1584
    %1717 = vmatpush1.msra.mxu0 %v1583
    %1718 = vmatprep.subr.mxu0 %v1580
    %1719 = vmatpush1.msra.mxu0 %v1579
    %1720 = vmatprep.subr.mxu0 %v1576
    %1721 = vmatpush1.msra.mxu0 %v1575
    %1722 = vmatprep.subr.mxu0 %v1572
    %1723 = vmatpush1.msra.mxu0 %v1571
    %1724 = vmatprep.subr.mxu0 %v1568
    %1725 = vmatpush1.msra.mxu0 %v1567
    %1726 = vmatprep.subr.mxu0 %v1564
    %1727 = vmatpush1.msra.mxu0 %v1563
    %1728 = vmatprep.subr.mxu0 0.0
    %1729 = vmatpush2.msra.mxu0 0.0
    %1730 = vmatprep.subr.mxu0 0.0
    %1731 = vmatpush2.msra.mxu0 0.0
    %1732 = vmatprep.subr.mxu0 0.0
    %1733 = vmatpush2.msra.mxu0 0.0
    %1734 = vmatprep.subr.mxu0 0.0
    %1735 = vmatpush2.msra.mxu0 0.0
    %1736 = vmatprep.subr.mxu0 0.0
    %1737 = vmatpush2.msra.mxu0 0.0
    %1738 = vmatprep.subr.mxu0 0.0
    %1739 = vmatpush2.msra.mxu0 0.0
    %1740 = vmatprep.subr.mxu0 0.0
    %1741 = vmatpush2.msra.mxu0 0.0
    %1742 = vmatprep.subr.mxu0 0.0
    %1743 = vmatpush2.msra.mxu0 0.0
    %1744 = vmatprep.subr.mxu0 0.0
    %1745 = vmatpush2.msra.mxu0 0.0
    %1746 = vmatprep.subr.mxu0 0.0
    %1747 = vmatpush2.msra.mxu0 0.0
    %1748 = vmatprep.subr.mxu0 0.0
    %1749 = vmatpush2.msra.mxu0 0.0
    %1750 = vmatprep.subr.mxu0 0.0
    %1751 = vmatpush2.msra.mxu0 0.0
    %1752 = vmatprep.subr.mxu0 0.0
    %1753 = vmatpush2.msra.mxu0 0.0
    %1754 = vmatprep.subr.mxu0 0.0
    %1755 = vmatpush2.msra.mxu0 0.0
    %1756 = vmatprep.subr.mxu0 0.0
    %1757 = vmatpush2.msra.mxu0 0.0
    %1758 = vmatprep.subr.mxu0 0.0
    %1759 = vmatpush2.msra.mxu0 0.0
    %1760 = vmatprep.mubr.f32.mxu0 0.0
    %1761 = vmatmul.mubr.f32.gmra.mxu0 %v1553
    %v1762 = vpop.f32.mrf.mxu0
    %v1763 = vadd.f32 0.0, %v1762
    %v1764 = vpop.f32.mrf.mxu0
    %v1765 = vadd.f32 0.0, %v1764
    %1766 = vdwg.mxu0
    %v1767 = vadd.f32 %v1557, %v1692
    %v1768 = vadd.f32 %v1558, %v1694
    %v1769 = vadd.f32 %v1559, %v1763
    %v1770 = vadd.f32 %v1560, %v1765
    %v1771 = vadd.f32 %v1767, %v75
    %v1772 = vadd.f32 %v1768, %v79
    %v1773 = vadd.f32 %v1769, %v83
    %v1774 = vadd.f32 %v1770, %v87
    %v1775 = vxor.u32 %v1771, 2147483648
    %v1776 = vmul.f32 %v1775, 1.442695
    %v1777 = vpow.pop %v1776
    %v1778 = vadd.f32 %v1777, 1.0
    %v1779 = vrcp.pop %v1778
    %v1780 = vmul.f32 1.0, %v1779
    %v1781 = vxor.u32 %v1772, 2147483648
    %v1782 = vmul.f32 %v1781, 1.442695
    %v1783 = vpow.pop %v1782
    %v1784 = vadd.f32 %v1783, 1.0
    %v1785 = vrcp.pop %v1784
    %v1786 = vmul.f32 1.0, %v1785
    %v1787 = vmul.f32 %v1780, %v1774
    %v1788 = vadd.f32 %v1773, %v1787
    %v1789 = vtanh.pop %v1788
    %v1790 = vsub.f32 1.0, %v1786
    %v1791 = vmul.f32 %v1790, %v1789
    %v1792 = vmul.f32 %v1786, %v1553
    %v1793 = vadd.f32 %v1791, %v1792
    %v1794 = vld [vmem:[%s8] sm:$0xff]
    %v1795 = vld [vmem:[%s8 + $0x8] sm:$0xff]
    %v1796 = vld [vmem:[%s8 + $0x10] sm:$0xff]
    %v1797 = vld [vmem:[%s8 + $0x18] sm:$0xff]
    %v1798 = vld [vmem:[%s8 + $0x20] sm:$0xff]
    %v1799 = vld [vmem:[%s8 + $0x28] sm:$0xff]
    %v1800 = vld [vmem:[%s8 + $0x30] sm:$0xff]
    %v1801 = vld [vmem:[%s8 + $0x38] sm:$0xff]
    %v1802 = vld [vmem:[%s8 + $0x40] sm:$0xff]
    %v1803 = vld [vmem:[%s8 + $0x48] sm:$0xff]
    %v1804 = vld [vmem:[%s8 + $0x50] sm:$0xff]
    %v1805 = vld [vmem:[%s8 + $0x58] sm:$0xff]
    %v1806 = vld [vmem:[%s8 + $0x60] sm:$0xff]
    %v1807 = vld [vmem:[%s8 + $0x68] sm:$0xff]
    %v1808 = vld [vmem:[%s8 + $0x70] sm:$0xff]
    %v1809 = vld [vmem:[%s8 + $0x78] sm:$0xff]
    %1810 = vmatprep.subr.mxu0 0.0
    %1811 = vmatpush1.msra.mxu0 %v1809
    %1812 = vmatprep.subr.mxu0 0.0
    %1813 = vmatpush1.msra.mxu0 %v1808
    %1814 = vmatprep.subr.mxu0 0.0
    %1815 = vmatpush1.msra.mxu0 %v1807
    %1816 = vmatprep.subr.mxu0 0.0
    %1817 = vmatpush1.msra.mxu0 %v1806
    %1818 = vmatprep.subr.mxu0 0.0
    %1819 = vmatpush1.msra.mxu0 %v1805
    %1820 = vmatprep.subr.mxu0 0.0
    %1821 = vmatpush1.msra.mxu0 %v1804
    %1822 = vmatprep.subr.mxu0 0.0
    %1823 = vmatpush1.msra.mxu0 %v1803
    %1824 = vmatprep.subr.mxu0 0.0
    %1825 = vmatpush1.msra.mxu0 %v1802
    %1826 = vmatprep.subr.mxu0 0.0
    %1827 = vmatpush1.msra.mxu0 %v1801
    %1828 = vmatprep.subr.mxu0 0.0
    %1829 = vmatpush1.msra.mxu0 %v1800
    %1830 = vmatprep.subr.mxu0 0.0
    %1831 = vmatpush1.msra.mxu0 %v1799
    %1832 = vmatprep.subr.mxu0 0.0
    %1833 = vmatpush1.msra.mxu0 %v1798
    %1834 = vmatprep.subr.mxu0 0.0
    %1835 = vmatpush1.msra.mxu0 %v1797
    %1836 = vmatprep.subr.mxu0 0.0
    %1837 = vmatpush1.msra.mxu0 %v1796
    %1838 = vmatprep.subr.mxu0 0.0
    %1839 = vmatpush1.msra.mxu0 %v1795
    %1840 = vmatprep.subr.mxu0 0.0
    %1841 = vmatpush1.msra.mxu0 %v1794
    %1842 = vmatprep.subr.mxu0 0.0
    %1843 = vmatpush2.msra.mxu0 0.0
    %1844 = vmatprep.subr.mxu0 0.0
    %1845 = vmatpush2.msra.mxu0 0.0
    %1846 = vmatprep.subr.mxu0 0.0
    %1847 = vmatpush2.msra.mxu0 0.0
    %1848 = vmatprep.subr.mxu0 0.0
    %1849 = vmatpush2.msra.mxu0 0.0
    %1850 = vmatprep.subr.mxu0 0.0
    %1851 = vmatpush2.msra.mxu0 0.0
    %1852 = vmatprep.subr.mxu0 0.0
    %1853 = vmatpush2.msra.mxu0 0.0
    %1854 = vmatprep.subr.mxu0 0.0
    %1855 = vmatpush2.msra.mxu0 0.0
    %1856 = vmatprep.subr.mxu0 0.0
    %1857 = vmatpush2.msra.mxu0 0.0
    %1858 = vmatprep.subr.mxu0 0.0
    %1859 = vmatpush2.msra.mxu0 0.0
    %1860 = vmatprep.subr.mxu0 0.0
    %1861 = vmatpush2.msra.mxu0 0.0
    %1862 = vmatprep.subr.mxu0 0.0
    %1863 = vmatpush2.msra.mxu0 0.0
    %1864 = vmatprep.subr.mxu0 0.0
    %1865 = vmatpush2.msra.mxu0 0.0
    %1866 = vmatprep.subr.mxu0 0.0
    %1867 = vmatpush2.msra.mxu0 0.0
    %1868 = vmatprep.subr.mxu0 0.0
    %1869 = vmatpush2.msra.mxu0 0.0
    %1870 = vmatprep.subr.mxu0 0.0
    %1871 = vmatpush2.msra.mxu0 0.0
    %1872 = vmatprep.subr.mxu0 0.0
    %1873 = vmatpush2.msra.mxu0 0.0
    %1874 = vmatprep.mubr.f32.mxu0 0.0
    %1875 = vmatmul.mubr.f32.gmra.mxu0 %v1793
    %v1876 = vpop.f32.mrf.mxu0
    %v1877 = vadd.f32 %v97, %v1876
    %v1878 = vpop.f32.mrf.mxu0
    %1879 = vdwg.mxu0
    %s1880 = scalar_lea.vmem %s10, 8
    %1881 = vst [vmem:[%s1880] sm:$0xff] %v1877
    %1882 = vmax.xlane.f32.xlu0 %v1877
    %v1883 = vpop.xlane.xlu0 %1882
    %vm1884 = vcmp.eq.f32.partialorder %v1877, %v1883
    %v1885 = vsel %vm1884, %v1556, 128
    %v1886 = vand.u32 %v1885, 65535
    %v1887 = vshra.s32 %v1885, 16
    %v1888 = vcvt.s32.f32 %v1886
    %v1889 = vcvt.s32.f32 %v1887
    %1890 = vmin.xlane.f32.xlu0 %v1889
    %v1891 = vpop.xlane.xlu0 %1890
    %vm1892 = vcmp.eq.f32.partialorder %v1889, %v1891
    %v1893 = vsel %vm1892, %v1888, inf
    %1894 = vmin.xlane.f32.xlu0 %v1893
    %v1895 = vpop.xlane.xlu0 %1894
    %v1896 = vcvt.f32.s32 %v1895
    %v1897 = vcvt.f32.s32 %v1891
    %v1898 = vshll.u32 %v1897, 16
    %v1899 = vadd.s32 %v1898, %v1896
    %vm1900 = vcmp.eq.s32.totalorder %v1556, %v1899
    %v1901 = vsel %vm1900, 1, 0
    %v1902 = vcvt.s32.f32 %v1901
    %v1903 = vld [vmem:[%s3] sm:$0xff]
    %v1904 = vld [vmem:[%s3 + $0x8] sm:$0xff]
    %v1905 = vld [vmem:[%s3 + $0x10] sm:$0xff]
    %v1906 = vld [vmem:[%s3 + $0x18] sm:$0xff]
    %v1907 = vld [vmem:[%s3 + $0x20] sm:$0xff]
    %v1908 = vld [vmem:[%s3 + $0x28] sm:$0xff]
    %v1909 = vld [vmem:[%s3 + $0x30] sm:$0xff]
    %v1910 = vld [vmem:[%s3 + $0x38] sm:$0xff]
    %v1911 = vld [vmem:[%s3 + $0x40] sm:$0xff]
    %v1912 = vld [vmem:[%s3 + $0x48] sm:$0xff]
    %v1913 = vld [vmem:[%s3 + $0x50] sm:$0xff]
    %v1914 = vld [vmem:[%s3 + $0x58] sm:$0xff]
    %v1915 = vld [vmem:[%s3 + $0x60] sm:$0xff]
    %v1916 = vld [vmem:[%s3 + $0x68] sm:$0xff]
    %v1917 = vld [vmem:[%s3 + $0x70] sm:$0xff]
    %v1918 = vld [vmem:[%s3 + $0x78] sm:$0xff]
    %v1919 = vld [vmem:[%s3 + $0x80] sm:$0xff]
    %v1920 = vld [vmem:[%s3 + $0x88] sm:$0xff]
    %v1921 = vld [vmem:[%s3 + $0x90] sm:$0xff]
    %v1922 = vld [vmem:[%s3 + $0x98] sm:$0xff]
    %v1923 = vld [vmem:[%s3 + $0xa0] sm:$0xff]
    %v1924 = vld [vmem:[%s3 + $0xa8] sm:$0xff]
    %v1925 = vld [vmem:[%s3 + $0xb0] sm:$0xff]
    %v1926 = vld [vmem:[%s3 + $0xb8] sm:$0xff]
    %v1927 = vld [vmem:[%s3 + $0xc0] sm:$0xff]
    %v1928 = vld [vmem:[%s3 + $0xc8] sm:$0xff]
    %v1929 = vld [vmem:[%s3 + $0xd0] sm:$0xff]
    %v1930 = vld [vmem:[%s3 + $0xd8] sm:$0xff]
    %v1931 = vld [vmem:[%s3 + $0xe0] sm:$0xff]
    %v1932 = vld [vmem:[%s3 + $0xe8] sm:$0xff]
    %v1933 = vld [vmem:[%s3 + $0xf0] sm:$0xff]
    %v1934 = vld [vmem:[%s3 + $0xf8] sm:$0xff]
    %v1935 = vld [vmem:[%s3 + $0x100] sm:$0xff]
    %v1936 = vld [vmem:[%s3 + $0x108] sm:$0xff]
    %v1937 = vld [vmem:[%s3 + $0x110] sm:$0xff]
    %v1938 = vld [vmem:[%s3 + $0x118] sm:$0xff]
    %v1939 = vld [vmem:[%s3 + $0x120] sm:$0xff]
    %v1940 = vld [vmem:[%s3 + $0x128] sm:$0xff]
    %v1941 = vld [vmem:[%s3 + $0x130] sm:$0xff]
    %v1942 = vld [vmem:[%s3 + $0x138] sm:$0xff]
    %v1943 = vld [vmem:[%s3 + $0x140] sm:$0xff]
    %v1944 = vld [vmem:[%s3 + $0x148] sm:$0xff]
    %v1945 = vld [vmem:[%s3 + $0x150] sm:$0xff]
    %v1946 = vld [vmem:[%s3 + $0x158] sm:$0xff]
    %v1947 = vld [vmem:[%s3 + $0x160] sm:$0xff]
    %v1948 = vld [vmem:[%s3 + $0x168] sm:$0xff]
    %v1949 = vld [vmem:[%s3 + $0x170] sm:$0xff]
    %v1950 = vld [vmem:[%s3 + $0x178] sm:$0xff]
    %v1951 = vld [vmem:[%s3 + $0x180] sm:$0xff]
    %v1952 = vld [vmem:[%s3 + $0x188] sm:$0xff]
    %v1953 = vld [vmem:[%s3 + $0x190] sm:$0xff]
    %v1954 = vld [vmem:[%s3 + $0x198] sm:$0xff]
    %v1955 = vld [vmem:[%s3 + $0x1a0] sm:$0xff]
    %v1956 = vld [vmem:[%s3 + $0x1a8] sm:$0xff]
    %v1957 = vld [vmem:[%s3 + $0x1b0] sm:$0xff]
    %v1958 = vld [vmem:[%s3 + $0x1b8] sm:$0xff]
    %v1959 = vld [vmem:[%s3 + $0x1c0] sm:$0xff]
    %v1960 = vld [vmem:[%s3 + $0x1c8] sm:$0xff]
    %v1961 = vld [vmem:[%s3 + $0x1d0] sm:$0xff]
    %v1962 = vld [vmem:[%s3 + $0x1d8] sm:$0xff]
    %v1963 = vld [vmem:[%s3 + $0x1e0] sm:$0xff]
    %v1964 = vld [vmem:[%s3 + $0x1e8] sm:$0xff]
    %v1965 = vld [vmem:[%s3 + $0x1f0] sm:$0xff]
    %v1966 = vld [vmem:[%s3 + $0x1f8] sm:$0xff]
    %1967 = vmatprep.subr.mxu0 %v1964
    %1968 = vmatpush1.msra.mxu0 %v1963
    %1969 = vmatprep.subr.mxu0 %v1960
    %1970 = vmatpush1.msra.mxu0 %v1959
    %1971 = vmatprep.subr.mxu0 %v1956
    %1972 = vmatpush1.msra.mxu0 %v1955
    %1973 = vmatprep.subr.mxu0 %v1952
    %1974 = vmatpush1.msra.mxu0 %v1951
    %1975 = vmatprep.subr.mxu0 %v1948
    %1976 = vmatpush1.msra.mxu0 %v1947
    %1977 = vmatprep.subr.mxu0 %v1944
    %1978 = vmatpush1.msra.mxu0 %v1943
    %1979 = vmatprep.subr.mxu0 %v1940
    %1980 = vmatpush1.msra.mxu0 %v1939
    %1981 = vmatprep.subr.mxu0 %v1936
    %1982 = vmatpush1.msra.mxu0 %v1935
    %1983 = vmatprep.subr.mxu0 %v1932
    %1984 = vmatpush1.msra.mxu0 %v1931
    %1985 = vmatprep.subr.mxu0 %v1928
    %1986 = vmatpush1.msra.mxu0 %v1927
    %1987 = vmatprep.subr.mxu0 %v1924
    %1988 = vmatpush1.msra.mxu0 %v1923
    %1989 = vmatprep.subr.mxu0 %v1920
    %1990 = vmatpush1.msra.mxu0 %v1919
    %1991 = vmatprep.subr.mxu0 %v1916
    %1992 = vmatpush1.msra.mxu0 %v1915
    %1993 = vmatprep.subr.mxu0 %v1912
    %1994 = vmatpush1.msra.mxu0 %v1911
    %1995 = vmatprep.subr.mxu0 %v1908
    %1996 = vmatpush1.msra.mxu0 %v1907
    %1997 = vmatprep.subr.mxu0 %v1904
    %1998 = vmatpush1.msra.mxu0 %v1903
    %1999 = vmatprep.subr.mxu0 0.0
    %2000 = vmatpush2.msra.mxu0 0.0
    %2001 = vmatprep.subr.mxu0 0.0
    %2002 = vmatpush2.msra.mxu0 0.0
    %2003 = vmatprep.subr.mxu0 0.0
    %2004 = vmatpush2.msra.mxu0 0.0
    %2005 = vmatprep.subr.mxu0 0.0
    %2006 = vmatpush2.msra.mxu0 0.0
    %2007 = vmatprep.subr.mxu0 0.0
    %2008 = vmatpush2.msra.mxu0 0.0
    %2009 = vmatprep.subr.mxu0 0.0
    %2010 = vmatpush2.msra.mxu0 0.0
    %2011 = vmatprep.subr.mxu0 0.0
    %2012 = vmatpush2.msra.mxu0 0.0
    %2013 = vmatprep.subr.mxu0 0.0
    %2014 = vmatpush2.msra.mxu0 0.0
    %2015 = vmatprep.subr.mxu0 0.0
    %2016 = vmatpush2.msra.mxu0 0.0
    %2017 = vmatprep.subr.mxu0 0.0
    %2018 = vmatpush2.msra.mxu0 0.0
    %2019 = vmatprep.subr.mxu0 0.0
    %2020 = vmatpush2.msra.mxu0 0.0
    %2021 = vmatprep.subr.mxu0 0.0
    %2022 = vmatpush2.msra.mxu0 0.0
    %2023 = vmatprep.subr.mxu0 0.0
    %2024 = vmatpush2.msra.mxu0 0.0
    %2025 = vmatprep.subr.mxu0 0.0
    %2026 = vmatpush2.msra.mxu0 0.0
    %2027 = vmatprep.subr.mxu0 0.0
    %2028 = vmatpush2.msra.mxu0 0.0
    %2029 = vmatprep.subr.mxu0 0.0
    %2030 = vmatpush2.msra.mxu0 0.0
    %2031 = vmatprep.mubr.f32.mxu0 0.0
    %2032 = vmatmul.mubr.f32.gmra.mxu0 %v1902
    %v2033 = vpop.f32.mrf.mxu0
    %v2034 = vadd.f32 0.0, %v2033
    %v2035 = vpop.f32.mrf.mxu0
    %v2036 = vadd.f32 0.0, %v2035
    %2037 = vdwg.mxu0
    %2038 = vmatprep.subr.mxu0 %v1966
    %2039 = vmatpush1.msra.mxu0 %v1965
    %2040 = vmatprep.subr.mxu0 %v1962
    %2041 = vmatpush1.msra.mxu0 %v1961
    %2042 = vmatprep.subr.mxu0 %v1958
    %2043 = vmatpush1.msra.mxu0 %v1957
    %2044 = vmatprep.subr.mxu0 %v1954
    %2045 = vmatpush1.msra.mxu0 %v1953
    %2046 = vmatprep.subr.mxu0 %v1950
    %2047 = vmatpush1.msra.mxu0 %v1949
    %2048 = vmatprep.subr.mxu0 %v1946
    %2049 = vmatpush1.msra.mxu0 %v1945
    %2050 = vmatprep.subr.mxu0 %v1942
    %2051 = vmatpush1.msra.mxu0 %v1941
    %2052 = vmatprep.subr.mxu0 %v1938
    %2053 = vmatpush1.msra.mxu0 %v1937
    %2054 = vmatprep.subr.mxu0 %v1934
    %2055 = vmatpush1.msra.mxu0 %v1933
    %2056 = vmatprep.subr.mxu0 %v1930
    %2057 = vmatpush1.msra.mxu0 %v1929
    %2058 = vmatprep.subr.mxu0 %v1926
    %2059 = vmatpush1.msra.mxu0 %v1925
    %2060 = vmatprep.subr.mxu0 %v1922
    %2061 = vmatpush1.msra.mxu0 %v1921
    %2062 = vmatprep.subr.mxu0 %v1918
    %2063 = vmatpush1.msra.mxu0 %v1917
    %2064 = vmatprep.subr.mxu0 %v1914
    %2065 = vmatpush1.msra.mxu0 %v1913
    %2066 = vmatprep.subr.mxu0 %v1910
    %2067 = vmatpush1.msra.mxu0 %v1909
    %2068 = vmatprep.subr.mxu0 %v1906
    %2069 = vmatpush1.msra.mxu0 %v1905
    %2070 = vmatprep.subr.mxu0 0.0
    %2071 = vmatpush2.msra.mxu0 0.0
    %2072 = vmatprep.subr.mxu0 0.0
    %2073 = vmatpush2.msra.mxu0 0.0
    %2074 = vmatprep.subr.mxu0 0.0
    %2075 = vmatpush2.msra.mxu0 0.0
    %2076 = vmatprep.subr.mxu0 0.0
    %2077 = vmatpush2.msra.mxu0 0.0
    %2078 = vmatprep.subr.mxu0 0.0
    %2079 = vmatpush2.msra.mxu0 0.0
    %2080 = vmatprep.subr.mxu0 0.0
    %2081 = vmatpush2.msra.mxu0 0.0
    %2082 = vmatprep.subr.mxu0 0.0
    %2083 = vmatpush2.msra.mxu0 0.0
    %2084 = vmatprep.subr.mxu0 0.0
    %2085 = vmatpush2.msra.mxu0 0.0
    %2086 = vmatprep.subr.mxu0 0.0
    %2087 = vmatpush2.msra.mxu0 0.0
    %2088 = vmatprep.subr.mxu0 0.0
    %2089 = vmatpush2.msra.mxu0 0.0
    %2090 = vmatprep.subr.mxu0 0.0
    %2091 = vmatpush2.msra.mxu0 0.0
    %2092 = vmatprep.subr.mxu0 0.0
    %2093 = vmatpush2.msra.mxu0 0.0
    %2094 = vmatprep.subr.mxu0 0.0
    %2095 = vmatpush2.msra.mxu0 0.0
    %2096 = vmatprep.subr.mxu0 0.0
    %2097 = vmatpush2.msra.mxu0 0.0
    %2098 = vmatprep.subr.mxu0 0.0
    %2099 = vmatpush2.msra.mxu0 0.0
    %2100 = vmatprep.subr.mxu0 0.0
    %2101 = vmatpush2.msra.mxu0 0.0
    %2102 = vmatprep.mubr.f32.mxu0 0.0
    %2103 = vmatmul.mubr.f32.gmra.mxu0 %v1902
    %v2104 = vpop.f32.mrf.mxu0
    %v2105 = vadd.f32 0.0, %v2104
    %v2106 = vpop.f32.mrf.mxu0
    %v2107 = vadd.f32 0.0, %v2106
    %2108 = vdwg.mxu0
    %s2109 = sld [smem:[#allocation2 + $0x1]]
    %p2110 = scmp.ne.s32.totalorder %s2109, 0
    %s2111 = scalar_select %p2110, 1, 0
    %s2112 = scvt.s32.f32 %s2111
    %s2113 = scalar_lea.vmem %s2, 32
    %v2114 = vld [vmem:[%s2113] sm:$0xff]
    %v2115 = vld [vmem:[%s2113 + $0x8] sm:$0xff]
    %v2116 = vld [vmem:[%s2113 + $0x10] sm:$0xff]
    %v2117 = vld [vmem:[%s2113 + $0x18] sm:$0xff]
    %v2118 = vstv %s2112
    %v2119 = vmul.f32 %v2118, %v2114
    %v2120 = vmul.f32 %v2118, %v2115
    %v2121 = vmul.f32 %v2118, %v2116
    %v2122 = vmul.f32 %v2118, %v2117
    %s2123 = ssub.f32 1.0, %s2112
    %v2124 = vstv %s2123
    %v2125 = vmul.f32 %v2124, %v2034
    %v2126 = vmul.f32 %v2124, %v2036
    %v2127 = vmul.f32 %v2124, %v2105
    %v2128 = vmul.f32 %v2124, %v2107
    %v2129 = vadd.f32 %v2119, %v2125
    %v2130 = vadd.f32 %v2120, %v2126
    %v2131 = vadd.f32 %v2121, %v2127
    %v2132 = vadd.f32 %v2122, %v2128
    %v2133 = vld [vmem:[%s6] sm:$0xff]
    %v2134 = vld [vmem:[%s6 + $0x8] sm:$0xff]
    %v2135 = vld [vmem:[%s6 + $0x10] sm:$0xff]
    %v2136 = vld [vmem:[%s6 + $0x18] sm:$0xff]
    %v2137 = vld [vmem:[%s6 + $0x20] sm:$0xff]
    %v2138 = vld [vmem:[%s6 + $0x28] sm:$0xff]
    %v2139 = vld [vmem:[%s6 + $0x30] sm:$0xff]
    %v2140 = vld [vmem:[%s6 + $0x38] sm:$0xff]
    %v2141 = vld [vmem:[%s6 + $0x40] sm:$0xff]
    %v2142 = vld [vmem:[%s6 + $0x48] sm:$0xff]
    %v2143 = vld [vmem:[%s6 + $0x50] sm:$0xff]
    %v2144 = vld [vmem:[%s6 + $0x58] sm:$0xff]
    %v2145 = vld [vmem:[%s6 + $0x60] sm:$0xff]
    %v2146 = vld [vmem:[%s6 + $0x68] sm:$0xff]
    %v2147 = vld [vmem:[%s6 + $0x70] sm:$0xff]
    %v2148 = vld [vmem:[%s6 + $0x78] sm:$0xff]
    %v2149 = vld [vmem:[%s6 + $0x80] sm:$0xff]
    %v2150 = vld [vmem:[%s6 + $0x88] sm:$0xff]
    %v2151 = vld [vmem:[%s6 + $0x90] sm:$0xff]
    %v2152 = vld [vmem:[%s6 + $0x98] sm:$0xff]
    %v2153 = vld [vmem:[%s6 + $0xa0] sm:$0xff]
    %v2154 = vld [vmem:[%s6 + $0xa8] sm:$0xff]
    %v2155 = vld [vmem:[%s6 + $0xb0] sm:$0xff]
    %v2156 = vld [vmem:[%s6 + $0xb8] sm:$0xff]
    %v2157 = vld [vmem:[%s6 + $0xc0] sm:$0xff]
    %v2158 = vld [vmem:[%s6 + $0xc8] sm:$0xff]
    %v2159 = vld [vmem:[%s6 + $0xd0] sm:$0xff]
    %v2160 = vld [vmem:[%s6 + $0xd8] sm:$0xff]
    %v2161 = vld [vmem:[%s6 + $0xe0] sm:$0xff]
    %v2162 = vld [vmem:[%s6 + $0xe8] sm:$0xff]
    %v2163 = vld [vmem:[%s6 + $0xf0] sm:$0xff]
    %v2164 = vld [vmem:[%s6 + $0xf8] sm:$0xff]
    %v2165 = vld [vmem:[%s6 + $0x100] sm:$0xff]
    %v2166 = vld [vmem:[%s6 + $0x108] sm:$0xff]
    %v2167 = vld [vmem:[%s6 + $0x110] sm:$0xff]
    %v2168 = vld [vmem:[%s6 + $0x118] sm:$0xff]
    %v2169 = vld [vmem:[%s6 + $0x120] sm:$0xff]
    %v2170 = vld [vmem:[%s6 + $0x128] sm:$0xff]
    %v2171 = vld [vmem:[%s6 + $0x130] sm:$0xff]
    %v2172 = vld [vmem:[%s6 + $0x138] sm:$0xff]
    %v2173 = vld [vmem:[%s6 + $0x140] sm:$0xff]
    %v2174 = vld [vmem:[%s6 + $0x148] sm:$0xff]
    %v2175 = vld [vmem:[%s6 + $0x150] sm:$0xff]
    %v2176 = vld [vmem:[%s6 + $0x158] sm:$0xff]
    %v2177 = vld [vmem:[%s6 + $0x160] sm:$0xff]
    %v2178 = vld [vmem:[%s6 + $0x168] sm:$0xff]
    %v2179 = vld [vmem:[%s6 + $0x170] sm:$0xff]
    %v2180 = vld [vmem:[%s6 + $0x178] sm:$0xff]
    %v2181 = vld [vmem:[%s6 + $0x180] sm:$0xff]
    %v2182 = vld [vmem:[%s6 + $0x188] sm:$0xff]
    %v2183 = vld [vmem:[%s6 + $0x190] sm:$0xff]
    %v2184 = vld [vmem:[%s6 + $0x198] sm:$0xff]
    %v2185 = vld [vmem:[%s6 + $0x1a0] sm:$0xff]
    %v2186 = vld [vmem:[%s6 + $0x1a8] sm:$0xff]
    %v2187 = vld [vmem:[%s6 + $0x1b0] sm:$0xff]
    %v2188 = vld [vmem:[%s6 + $0x1b8] sm:$0xff]
    %v2189 = vld [vmem:[%s6 + $0x1c0] sm:$0xff]
    %v2190 = vld [vmem:[%s6 + $0x1c8] sm:$0xff]
    %v2191 = vld [vmem:[%s6 + $0x1d0] sm:$0xff]
    %v2192 = vld [vmem:[%s6 + $0x1d8] sm:$0xff]
    %v2193 = vld [vmem:[%s6 + $0x1e0] sm:$0xff]
    %v2194 = vld [vmem:[%s6 + $0x1e8] sm:$0xff]
    %v2195 = vld [vmem:[%s6 + $0x1f0] sm:$0xff]
    %v2196 = vld [vmem:[%s6 + $0x1f8] sm:$0xff]
    %2197 = vmatprep.subr.mxu0 %v2194
    %2198 = vmatpush1.msra.mxu0 %v2193
    %2199 = vmatprep.subr.mxu0 %v2190
    %2200 = vmatpush1.msra.mxu0 %v2189
    %2201 = vmatprep.subr.mxu0 %v2186
    %2202 = vmatpush1.msra.mxu0 %v2185
    %2203 = vmatprep.subr.mxu0 %v2182
    %2204 = vmatpush1.msra.mxu0 %v2181
    %2205 = vmatprep.subr.mxu0 %v2178
    %2206 = vmatpush1.msra.mxu0 %v2177
    %2207 = vmatprep.subr.mxu0 %v2174
    %2208 = vmatpush1.msra.mxu0 %v2173
    %2209 = vmatprep.subr.mxu0 %v2170
    %2210 = vmatpush1.msra.mxu0 %v2169
    %2211 = vmatprep.subr.mxu0 %v2166
    %2212 = vmatpush1.msra.mxu0 %v2165
    %2213 = vmatprep.subr.mxu0 %v2162
    %2214 = vmatpush1.msra.mxu0 %v2161
    %2215 = vmatprep.subr.mxu0 %v2158
    %2216 = vmatpush1.msra.mxu0 %v2157
    %2217 = vmatprep.subr.mxu0 %v2154
    %2218 = vmatpush1.msra.mxu0 %v2153
    %2219 = vmatprep.subr.mxu0 %v2150
    %2220 = vmatpush1.msra.mxu0 %v2149
    %2221 = vmatprep.subr.mxu0 %v2146
    %2222 = vmatpush1.msra.mxu0 %v2145
    %2223 = vmatprep.subr.mxu0 %v2142
    %2224 = vmatpush1.msra.mxu0 %v2141
    %2225 = vmatprep.subr.mxu0 %v2138
    %2226 = vmatpush1.msra.mxu0 %v2137
    %2227 = vmatprep.subr.mxu0 %v2134
    %2228 = vmatpush1.msra.mxu0 %v2133
    %2229 = vmatprep.subr.mxu0 0.0
    %2230 = vmatpush2.msra.mxu0 0.0
    %2231 = vmatprep.subr.mxu0 0.0
    %2232 = vmatpush2.msra.mxu0 0.0
    %2233 = vmatprep.subr.mxu0 0.0
    %2234 = vmatpush2.msra.mxu0 0.0
    %2235 = vmatprep.subr.mxu0 0.0
    %2236 = vmatpush2.msra.mxu0 0.0
    %2237 = vmatprep.subr.mxu0 0.0
    %2238 = vmatpush2.msra.mxu0 0.0
    %2239 = vmatprep.subr.mxu0 0.0
    %2240 = vmatpush2.msra.mxu0 0.0
    %2241 = vmatprep.subr.mxu0 0.0
    %2242 = vmatpush2.msra.mxu0 0.0
    %2243 = vmatprep.subr.mxu0 0.0
    %2244 = vmatpush2.msra.mxu0 0.0
    %2245 = vmatprep.subr.mxu0 0.0
    %2246 = vmatpush2.msra.mxu0 0.0
    %2247 = vmatprep.subr.mxu0 0.0
    %2248 = vmatpush2.msra.mxu0 0.0
    %2249 = vmatprep.subr.mxu0 0.0
    %2250 = vmatpush2.msra.mxu0 0.0
    %2251 = vmatprep.subr.mxu0 0.0
    %2252 = vmatpush2.msra.mxu0 0.0
    %2253 = vmatprep.subr.mxu0 0.0
    %2254 = vmatpush2.msra.mxu0 0.0
    %2255 = vmatprep.subr.mxu0 0.0
    %2256 = vmatpush2.msra.mxu0 0.0
    %2257 = vmatprep.subr.mxu0 0.0
    %2258 = vmatpush2.msra.mxu0 0.0
    %2259 = vmatprep.subr.mxu0 0.0
    %2260 = vmatpush2.msra.mxu0 0.0
    %2261 = vmatprep.mubr.f32.mxu0 0.0
    %2262 = vmatmul.mubr.f32.gmra.mxu0 %v1793
    %v2263 = vpop.f32.mrf.mxu0
    %v2264 = vadd.f32 0.0, %v2263
    %v2265 = vpop.f32.mrf.mxu0
    %v2266 = vadd.f32 0.0, %v2265
    %2267 = vdwg.mxu0
    %2268 = vmatprep.subr.mxu0 %v2196
    %2269 = vmatpush1.msra.mxu0 %v2195
    %2270 = vmatprep.subr.mxu0 %v2192
    %2271 = vmatpush1.msra.mxu0 %v2191
    %2272 = vmatprep.subr.mxu0 %v2188
    %2273 = vmatpush1.msra.mxu0 %v2187
    %2274 = vmatprep.subr.mxu0 %v2184
    %2275 = vmatpush1.msra.mxu0 %v2183
    %2276 = vmatprep.subr.mxu0 %v2180
    %2277 = vmatpush1.msra.mxu0 %v2179
    %2278 = vmatprep.subr.mxu0 %v2176
    %2279 = vmatpush1.msra.mxu0 %v2175
    %2280 = vmatprep.subr.mxu0 %v2172
    %2281 = vmatpush1.msra.mxu0 %v2171
    %2282 = vmatprep.subr.mxu0 %v2168
    %2283 = vmatpush1.msra.mxu0 %v2167
    %2284 = vmatprep.subr.mxu0 %v2164
    %2285 = vmatpush1.msra.mxu0 %v2163
    %2286 = vmatprep.subr.mxu0 %v2160
    %2287 = vmatpush1.msra.mxu0 %v2159
    %2288 = vmatprep.subr.mxu0 %v2156
    %2289 = vmatpush1.msra.mxu0 %v2155
    %2290 = vmatprep.subr.mxu0 %v2152
    %2291 = vmatpush1.msra.mxu0 %v2151
    %2292 = vmatprep.subr.mxu0 %v2148
    %2293 = vmatpush1.msra.mxu0 %v2147
    %2294 = vmatprep.subr.mxu0 %v2144
    %2295 = vmatpush1.msra.mxu0 %v2143
    %2296 = vmatprep.subr.mxu0 %v2140
    %2297 = vmatpush1.msra.mxu0 %v2139
    %2298 = vmatprep.subr.mxu0 %v2136
    %2299 = vmatpush1.msra.mxu0 %v2135
    %2300 = vmatprep.subr.mxu0 0.0
    %2301 = vmatpush2.msra.mxu0 0.0
    %2302 = vmatprep.subr.mxu0 0.0
    %2303 = vmatpush2.msra.mxu0 0.0
    %2304 = vmatprep.subr.mxu0 0.0
    %2305 = vmatpush2.msra.mxu0 0.0
    %2306 = vmatprep.subr.mxu0 0.0
    %2307 = vmatpush2.msra.mxu0 0.0
    %2308 = vmatprep.subr.mxu0 0.0
    %2309 = vmatpush2.msra.mxu0 0.0
    %2310 = vmatprep.subr.mxu0 0.0
    %2311 = vmatpush2.msra.mxu0 0.0
    %2312 = vmatprep.subr.mxu0 0.0
    %2313 = vmatpush2.msra.mxu0 0.0
    %2314 = vmatprep.subr.mxu0 0.0
    %2315 = vmatpush2.msra.mxu0 0.0
    %2316 = vmatprep.subr.mxu0 0.0
    %2317 = vmatpush2.msra.mxu0 0.0
    %2318 = vmatprep.subr.mxu0 0.0
    %2319 = vmatpush2.msra.mxu0 0.0
    %2320 = vmatprep.subr.mxu0 0.0
    %2321 = vmatpush2.msra.mxu0 0.0
    %2322 = vmatprep.subr.mxu0 0.0
    %2323 = vmatpush2.msra.mxu0 0.0
    %2324 = vmatprep.subr.mxu0 0.0
    %2325 = vmatpush2.msra.mxu0 0.0
    %2326 = vmatprep.subr.mxu0 0.0
    %2327 = vmatpush2.msra.mxu0 0.0
    %2328 = vmatprep.subr.mxu0 0.0
    %2329 = vmatpush2.msra.mxu0 0.0
    %2330 = vmatprep.subr.mxu0 0.0
    %2331 = vmatpush2.msra.mxu0 0.0
    %2332 = vmatprep.mubr.f32.mxu0 0.0
    %2333 = vmatmul.mubr.f32.gmra.mxu0 %v1793
    %v2334 = vpop.f32.mrf.mxu0
    %v2335 = vadd.f32 0.0, %v2334
    %v2336 = vpop.f32.mrf.mxu0
    %v2337 = vadd.f32 0.0, %v2336
    %2338 = vdwg.mxu0
    %v2339 = vadd.f32 %v2129, %v2264
    %v2340 = vadd.f32 %v2130, %v2266
    %v2341 = vadd.f32 %v2131, %v2335
    %v2342 = vadd.f32 %v2132, %v2337
    %v2343 = vadd.f32 %v2339, %v75
    %v2344 = vadd.f32 %v2340, %v79
    %v2345 = vadd.f32 %v2341, %v83
    %v2346 = vadd.f32 %v2342, %v87
    %v2347 = vxor.u32 %v2343, 2147483648
    %v2348 = vmul.f32 %v2347, 1.442695
    %v2349 = vpow.pop %v2348
    %v2350 = vadd.f32 %v2349, 1.0
    %v2351 = vrcp.pop %v2350
    %v2352 = vmul.f32 1.0, %v2351
    %v2353 = vxor.u32 %v2344, 2147483648
    %v2354 = vmul.f32 %v2353, 1.442695
    %v2355 = vpow.pop %v2354
    %v2356 = vadd.f32 %v2355, 1.0
    %v2357 = vrcp.pop %v2356
    %v2358 = vmul.f32 1.0, %v2357
    %v2359 = vmul.f32 %v2352, %v2346
    %v2360 = vadd.f32 %v2345, %v2359
    %v2361 = vtanh.pop %v2360
    %v2362 = vsub.f32 1.0, %v2358
    %v2363 = vmul.f32 %v2362, %v2361
    %v2364 = vmul.f32 %v2358, %v1793
    %v2365 = vadd.f32 %v2363, %v2364
    %v2366 = vld [vmem:[%s8] sm:$0xff]
    %v2367 = vld [vmem:[%s8 + $0x8] sm:$0xff]
    %v2368 = vld [vmem:[%s8 + $0x10] sm:$0xff]
    %v2369 = vld [vmem:[%s8 + $0x18] sm:$0xff]
    %v2370 = vld [vmem:[%s8 + $0x20] sm:$0xff]
    %v2371 = vld [vmem:[%s8 + $0x28] sm:$0xff]
    %v2372 = vld [vmem:[%s8 + $0x30] sm:$0xff]
    %v2373 = vld [vmem:[%s8 + $0x38] sm:$0xff]
    %v2374 = vld [vmem:[%s8 + $0x40] sm:$0xff]
    %v2375 = vld [vmem:[%s8 + $0x48] sm:$0xff]
    %v2376 = vld [vmem:[%s8 + $0x50] sm:$0xff]
    %v2377 = vld [vmem:[%s8 + $0x58] sm:$0xff]
    %v2378 = vld [vmem:[%s8 + $0x60] sm:$0xff]
    %v2379 = vld [vmem:[%s8 + $0x68] sm:$0xff]
    %v2380 = vld [vmem:[%s8 + $0x70] sm:$0xff]
    %v2381 = vld [vmem:[%s8 + $0x78] sm:$0xff]
    %2382 = vmatprep.subr.mxu0 0.0
    %2383 = vmatpush1.msra.mxu0 %v2381
    %2384 = vmatprep.subr.mxu0 0.0
    %2385 = vmatpush1.msra.mxu0 %v2380
    %2386 = vmatprep.subr.mxu0 0.0
    %2387 = vmatpush1.msra.mxu0 %v2379
    %2388 = vmatprep.subr.mxu0 0.0
    %2389 = vmatpush1.msra.mxu0 %v2378
    %2390 = vmatprep.subr.mxu0 0.0
    %2391 = vmatpush1.msra.mxu0 %v2377
    %2392 = vmatprep.subr.mxu0 0.0
    %2393 = vmatpush1.msra.mxu0 %v2376
    %2394 = vmatprep.subr.mxu0 0.0
    %2395 = vmatpush1.msra.mxu0 %v2375
    %2396 = vmatprep.subr.mxu0 0.0
    %2397 = vmatpush1.msra.mxu0 %v2374
    %2398 = vmatprep.subr.mxu0 0.0
    %2399 = vmatpush1.msra.mxu0 %v2373
    %2400 = vmatprep.subr.mxu0 0.0
    %2401 = vmatpush1.msra.mxu0 %v2372
    %2402 = vmatprep.subr.mxu0 0.0
    %2403 = vmatpush1.msra.mxu0 %v2371
    %2404 = vmatprep.subr.mxu0 0.0
    %2405 = vmatpush1.msra.mxu0 %v2370
    %2406 = vmatprep.subr.mxu0 0.0
    %2407 = vmatpush1.msra.mxu0 %v2369
    %2408 = vmatprep.subr.mxu0 0.0
    %2409 = vmatpush1.msra.mxu0 %v2368
    %2410 = vmatprep.subr.mxu0 0.0
    %2411 = vmatpush1.msra.mxu0 %v2367
    %2412 = vmatprep.subr.mxu0 0.0
    %2413 = vmatpush1.msra.mxu0 %v2366
    %2414 = vmatprep.subr.mxu0 0.0
    %2415 = vmatpush2.msra.mxu0 0.0
    %2416 = vmatprep.subr.mxu0 0.0
    %2417 = vmatpush2.msra.mxu0 0.0
    %2418 = vmatprep.subr.mxu0 0.0
    %2419 = vmatpush2.msra.mxu0 0.0
    %2420 = vmatprep.subr.mxu0 0.0
    %2421 = vmatpush2.msra.mxu0 0.0
    %2422 = vmatprep.subr.mxu0 0.0
    %2423 = vmatpush2.msra.mxu0 0.0
    %2424 = vmatprep.subr.mxu0 0.0
    %2425 = vmatpush2.msra.mxu0 0.0
    %2426 = vmatprep.subr.mxu0 0.0
    %2427 = vmatpush2.msra.mxu0 0.0
    %2428 = vmatprep.subr.mxu0 0.0
    %2429 = vmatpush2.msra.mxu0 0.0
    %2430 = vmatprep.subr.mxu0 0.0
    %2431 = vmatpush2.msra.mxu0 0.0
    %2432 = vmatprep.subr.mxu0 0.0
    %2433 = vmatpush2.msra.mxu0 0.0
    %2434 = vmatprep.subr.mxu0 0.0
    %2435 = vmatpush2.msra.mxu0 0.0
    %2436 = vmatprep.subr.mxu0 0.0
    %2437 = vmatpush2.msra.mxu0 0.0
    %2438 = vmatprep.subr.mxu0 0.0
    %2439 = vmatpush2.msra.mxu0 0.0
    %2440 = vmatprep.subr.mxu0 0.0
    %2441 = vmatpush2.msra.mxu0 0.0
    %2442 = vmatprep.subr.mxu0 0.0
    %2443 = vmatpush2.msra.mxu0 0.0
    %2444 = vmatprep.subr.mxu0 0.0
    %2445 = vmatpush2.msra.mxu0 0.0
    %2446 = vmatprep.mubr.f32.mxu0 0.0
    %2447 = vmatmul.mubr.f32.gmra.mxu0 %v2365
    %v2448 = vpop.f32.mrf.mxu0
    %v2449 = vadd.f32 %v97, %v2448
    %v2450 = vpop.f32.mrf.mxu0
    %2451 = vdwg.mxu0
    %s2452 = scalar_lea.vmem %s10, 16
    %2453 = vst [vmem:[%s2452] sm:$0xff] %v2449
    %2454 = vmax.xlane.f32.xlu0 %v2449
    %v2455 = vpop.xlane.xlu0 %2454
    %vm2456 = vcmp.eq.f32.partialorder %v2449, %v2455
    %v2457 = vsel %vm2456, %v1556, 128
    %v2458 = vand.u32 %v2457, 65535
    %v2459 = vshra.s32 %v2457, 16
    %v2460 = vcvt.s32.f32 %v2458
    %v2461 = vcvt.s32.f32 %v2459
    %2462 = vmin.xlane.f32.xlu0 %v2461
    %v2463 = vpop.xlane.xlu0 %2462
    %vm2464 = vcmp.eq.f32.partialorder %v2461, %v2463
    %v2465 = vsel %vm2464, %v2460, inf
    %2466 = vmin.xlane.f32.xlu0 %v2465
    %v2467 = vpop.xlane.xlu0 %2466
    %v2468 = vcvt.f32.s32 %v2467
    %v2469 = vcvt.f32.s32 %v2463
    %v2470 = vshll.u32 %v2469, 16
    %v2471 = vadd.s32 %v2470, %v2468
    %vm2472 = vcmp.eq.s32.totalorder %v1556, %v2471
    %v2473 = vsel %vm2472, 1, 0
    %v2474 = vcvt.s32.f32 %v2473
    %v2475 = vld [vmem:[%s3] sm:$0xff]
    %v2476 = vld [vmem:[%s3 + $0x8] sm:$0xff]
    %v2477 = vld [vmem:[%s3 + $0x10] sm:$0xff]
    %v2478 = vld [vmem:[%s3 + $0x18] sm:$0xff]
    %v2479 = vld [vmem:[%s3 + $0x20] sm:$0xff]
    %v2480 = vld [vmem:[%s3 + $0x28] sm:$0xff]
    %v2481 = vld [vmem:[%s3 + $0x30] sm:$0xff]
    %v2482 = vld [vmem:[%s3 + $0x38] sm:$0xff]
    %v2483 = vld [vmem:[%s3 + $0x40] sm:$0xff]
    %v2484 = vld [vmem:[%s3 + $0x48] sm:$0xff]
    %v2485 = vld [vmem:[%s3 + $0x50] sm:$0xff]
    %v2486 = vld [vmem:[%s3 + $0x58] sm:$0xff]
    %v2487 = vld [vmem:[%s3 + $0x60] sm:$0xff]
    %v2488 = vld [vmem:[%s3 + $0x68] sm:$0xff]
    %v2489 = vld [vmem:[%s3 + $0x70] sm:$0xff]
    %v2490 = vld [vmem:[%s3 + $0x78] sm:$0xff]
    %v2491 = vld [vmem:[%s3 + $0x80] sm:$0xff]
    %v2492 = vld [vmem:[%s3 + $0x88] sm:$0xff]
    %v2493 = vld [vmem:[%s3 + $0x90] sm:$0xff]
    %v2494 = vld [vmem:[%s3 + $0x98] sm:$0xff]
    %v2495 = vld [vmem:[%s3 + $0xa0] sm:$0xff]
    %v2496 = vld [vmem:[%s3 + $0xa8] sm:$0xff]
    %v2497 = vld [vmem:[%s3 + $0xb0] sm:$0xff]
    %v2498 = vld [vmem:[%s3 + $0xb8] sm:$0xff]
    %v2499 = vld [vmem:[%s3 + $0xc0] sm:$0xff]
    %v2500 = vld [vmem:[%s3 + $0xc8] sm:$0xff]
    %v2501 = vld [vmem:[%s3 + $0xd0] sm:$0xff]
    %v2502 = vld [vmem:[%s3 + $0xd8] sm:$0xff]
    %v2503 = vld [vmem:[%s3 + $0xe0] sm:$0xff]
    %v2504 = vld [vmem:[%s3 + $0xe8] sm:$0xff]
    %v2505 = vld [vmem:[%s3 + $0xf0] sm:$0xff]
    %v2506 = vld [vmem:[%s3 + $0xf8] sm:$0xff]
    %v2507 = vld [vmem:[%s3 + $0x100] sm:$0xff]
    %v2508 = vld [vmem:[%s3 + $0x108] sm:$0xff]
    %v2509 = vld [vmem:[%s3 + $0x110] sm:$0xff]
    %v2510 = vld [vmem:[%s3 + $0x118] sm:$0xff]
    %v2511 = vld [vmem:[%s3 + $0x120] sm:$0xff]
    %v2512 = vld [vmem:[%s3 + $0x128] sm:$0xff]
    %v2513 = vld [vmem:[%s3 + $0x130] sm:$0xff]
    %v2514 = vld [vmem:[%s3 + $0x138] sm:$0xff]
    %v2515 = vld [vmem:[%s3 + $0x140] sm:$0xff]
    %v2516 = vld [vmem:[%s3 + $0x148] sm:$0xff]
    %v2517 = vld [vmem:[%s3 + $0x150] sm:$0xff]
    %v2518 = vld [vmem:[%s3 + $0x158] sm:$0xff]
    %v2519 = vld [vmem:[%s3 + $0x160] sm:$0xff]
    %v2520 = vld [vmem:[%s3 + $0x168] sm:$0xff]
    %v2521 = vld [vmem:[%s3 + $0x170] sm:$0xff]
    %v2522 = vld [vmem:[%s3 + $0x178] sm:$0xff]
    %v2523 = vld [vmem:[%s3 + $0x180] sm:$0xff]
    %v2524 = vld [vmem:[%s3 + $0x188] sm:$0xff]
    %v2525 = vld [vmem:[%s3 + $0x190] sm:$0xff]
    %v2526 = vld [vmem:[%s3 + $0x198] sm:$0xff]
    %v2527 = vld [vmem:[%s3 + $0x1a0] sm:$0xff]
    %v2528 = vld [vmem:[%s3 + $0x1a8] sm:$0xff]
    %v2529 = vld [vmem:[%s3 + $0x1b0] sm:$0xff]
    %v2530 = vld [vmem:[%s3 + $0x1b8] sm:$0xff]
    %v2531 = vld [vmem:[%s3 + $0x1c0] sm:$0xff]
    %v2532 = vld [vmem:[%s3 + $0x1c8] sm:$0xff]
    %v2533 = vld [vmem:[%s3 + $0x1d0] sm:$0xff]
    %v2534 = vld [vmem:[%s3 + $0x1d8] sm:$0xff]
    %v2535 = vld [vmem:[%s3 + $0x1e0] sm:$0xff]
    %v2536 = vld [vmem:[%s3 + $0x1e8] sm:$0xff]
    %v2537 = vld [vmem:[%s3 + $0x1f0] sm:$0xff]
    %v2538 = vld [vmem:[%s3 + $0x1f8] sm:$0xff]
    %2539 = vmatprep.subr.mxu0 %v2536
    %2540 = vmatpush1.msra.mxu0 %v2535
    %2541 = vmatprep.subr.mxu0 %v2532
    %2542 = vmatpush1.msra.mxu0 %v2531
    %2543 = vmatprep.subr.mxu0 %v2528
    %2544 = vmatpush1.msra.mxu0 %v2527
    %2545 = vmatprep.subr.mxu0 %v2524
    %2546 = vmatpush1.msra.mxu0 %v2523
    %2547 = vmatprep.subr.mxu0 %v2520
    %2548 = vmatpush1.msra.mxu0 %v2519
    %2549 = vmatprep.subr.mxu0 %v2516
    %2550 = vmatpush1.msra.mxu0 %v2515
    %2551 = vmatprep.subr.mxu0 %v2512
    %2552 = vmatpush1.msra.mxu0 %v2511
    %2553 = vmatprep.subr.mxu0 %v2508
    %2554 = vmatpush1.msra.mxu0 %v2507
    %2555 = vmatprep.subr.mxu0 %v2504
    %2556 = vmatpush1.msra.mxu0 %v2503
    %2557 = vmatprep.subr.mxu0 %v2500
    %2558 = vmatpush1.msra.mxu0 %v2499
    %2559 = vmatprep.subr.mxu0 %v2496
    %2560 = vmatpush1.msra.mxu0 %v2495
    %2561 = vmatprep.subr.mxu0 %v2492
    %2562 = vmatpush1.msra.mxu0 %v2491
    %2563 = vmatprep.subr.mxu0 %v2488
    %2564 = vmatpush1.msra.mxu0 %v2487
    %2565 = vmatprep.subr.mxu0 %v2484
    %2566 = vmatpush1.msra.mxu0 %v2483
    %2567 = vmatprep.subr.mxu0 %v2480
    %2568 = vmatpush1.msra.mxu0 %v2479
    %2569 = vmatprep.subr.mxu0 %v2476
    %2570 = vmatpush1.msra.mxu0 %v2475
    %2571 = vmatprep.subr.mxu0 0.0
    %2572 = vmatpush2.msra.mxu0 0.0
    %2573 = vmatprep.subr.mxu0 0.0
    %2574 = vmatpush2.msra.mxu0 0.0
    %2575 = vmatprep.subr.mxu0 0.0
    %2576 = vmatpush2.msra.mxu0 0.0
    %2577 = vmatprep.subr.mxu0 0.0
    %2578 = vmatpush2.msra.mxu0 0.0
    %2579 = vmatprep.subr.mxu0 0.0
    %2580 = vmatpush2.msra.mxu0 0.0
    %2581 = vmatprep.subr.mxu0 0.0
    %2582 = vmatpush2.msra.mxu0 0.0
    %2583 = vmatprep.subr.mxu0 0.0
    %2584 = vmatpush2.msra.mxu0 0.0
    %2585 = vmatprep.subr.mxu0 0.0
    %2586 = vmatpush2.msra.mxu0 0.0
    %2587 = vmatprep.subr.mxu0 0.0
    %2588 = vmatpush2.msra.mxu0 0.0
    %2589 = vmatprep.subr.mxu0 0.0
    %2590 = vmatpush2.msra.mxu0 0.0
    %2591 = vmatprep.subr.mxu0 0.0
    %2592 = vmatpush2.msra.mxu0 0.0
    %2593 = vmatprep.subr.mxu0 0.0
    %2594 = vmatpush2.msra.mxu0 0.0
    %2595 = vmatprep.subr.mxu0 0.0
    %2596 = vmatpush2.msra.mxu0 0.0
    %2597 = vmatprep.subr.mxu0 0.0
    %2598 = vmatpush2.msra.mxu0 0.0
    %2599 = vmatprep.subr.mxu0 0.0
    %2600 = vmatpush2.msra.mxu0 0.0
    %2601 = vmatprep.subr.mxu0 0.0
    %2602 = vmatpush2.msra.mxu0 0.0
    %2603 = vmatprep.mubr.f32.mxu0 0.0
    %2604 = vmatmul.mubr.f32.gmra.mxu0 %v2474
    %v2605 = vpop.f32.mrf.mxu0
    %v2606 = vadd.f32 0.0, %v2605
    %v2607 = vpop.f32.mrf.mxu0
    %v2608 = vadd.f32 0.0, %v2607
    %2609 = vdwg.mxu0
    %2610 = vmatprep.subr.mxu0 %v2538
    %2611 = vmatpush1.msra.mxu0 %v2537
    %2612 = vmatprep.subr.mxu0 %v2534
    %2613 = vmatpush1.msra.mxu0 %v2533
    %2614 = vmatprep.subr.mxu0 %v2530
    %2615 = vmatpush1.msra.mxu0 %v2529
    %2616 = vmatprep.subr.mxu0 %v2526
    %2617 = vmatpush1.msra.mxu0 %v2525
    %2618 = vmatprep.subr.mxu0 %v2522
    %2619 = vmatpush1.msra.mxu0 %v2521
    %2620 = vmatprep.subr.mxu0 %v2518
    %2621 = vmatpush1.msra.mxu0 %v2517
    %2622 = vmatprep.subr.mxu0 %v2514
    %2623 = vmatpush1.msra.mxu0 %v2513
    %2624 = vmatprep.subr.mxu0 %v2510
    %2625 = vmatpush1.msra.mxu0 %v2509
    %2626 = vmatprep.subr.mxu0 %v2506
    %2627 = vmatpush1.msra.mxu0 %v2505
    %2628 = vmatprep.subr.mxu0 %v2502
    %2629 = vmatpush1.msra.mxu0 %v2501
    %2630 = vmatprep.subr.mxu0 %v2498
    %2631 = vmatpush1.msra.mxu0 %v2497
    %2632 = vmatprep.subr.mxu0 %v2494
    %2633 = vmatpush1.msra.mxu0 %v2493
    %2634 = vmatprep.subr.mxu0 %v2490
    %2635 = vmatpush1.msra.mxu0 %v2489
    %2636 = vmatprep.subr.mxu0 %v2486
    %2637 = vmatpush1.msra.mxu0 %v2485
    %2638 = vmatprep.subr.mxu0 %v2482
    %2639 = vmatpush1.msra.mxu0 %v2481
    %2640 = vmatprep.subr.mxu0 %v2478
    %2641 = vmatpush1.msra.mxu0 %v2477
    %2642 = vmatprep.subr.mxu0 0.0
    %2643 = vmatpush2.msra.mxu0 0.0
    %2644 = vmatprep.subr.mxu0 0.0
    %2645 = vmatpush2.msra.mxu0 0.0
    %2646 = vmatprep.subr.mxu0 0.0
    %2647 = vmatpush2.msra.mxu0 0.0
    %2648 = vmatprep.subr.mxu0 0.0
    %2649 = vmatpush2.msra.mxu0 0.0
    %2650 = vmatprep.subr.mxu0 0.0
    %2651 = vmatpush2.msra.mxu0 0.0
    %2652 = vmatprep.subr.mxu0 0.0
    %2653 = vmatpush2.msra.mxu0 0.0
    %2654 = vmatprep.subr.mxu0 0.0
    %2655 = vmatpush2.msra.mxu0 0.0
    %2656 = vmatprep.subr.mxu0 0.0
    %2657 = vmatpush2.msra.mxu0 0.0
    %2658 = vmatprep.subr.mxu0 0.0
    %2659 = vmatpush2.msra.mxu0 0.0
    %2660 = vmatprep.subr.mxu0 0.0
    %2661 = vmatpush2.msra.mxu0 0.0
    %2662 = vmatprep.subr.mxu0 0.0
    %2663 = vmatpush2.msra.mxu0 0.0
    %2664 = vmatprep.subr.mxu0 0.0
    %2665 = vmatpush2.msra.mxu0 0.0
    %2666 = vmatprep.subr.mxu0 0.0
    %2667 = vmatpush2.msra.mxu0 0.0
    %2668 = vmatprep.subr.mxu0 0.0
    %2669 = vmatpush2.msra.mxu0 0.0
    %2670 = vmatprep.subr.mxu0 0.0
    %2671 = vmatpush2.msra.mxu0 0.0
    %2672 = vmatprep.subr.mxu0 0.0
    %2673 = vmatpush2.msra.mxu0 0.0
    %2674 = vmatprep.mubr.f32.mxu0 0.0
    %2675 = vmatmul.mubr.f32.gmra.mxu0 %v2474
    %v2676 = vpop.f32.mrf.mxu0
    %v2677 = vadd.f32 0.0, %v2676
    %v2678 = vpop.f32.mrf.mxu0
    %v2679 = vadd.f32 0.0, %v2678
    %2680 = vdwg.mxu0
    %s2681 = sld [smem:[#allocation2 + $0x2]]
    %p2682 = scmp.ne.s32.totalorder %s2681, 0
    %s2683 = scalar_select %p2682, 1, 0
    %s2684 = scvt.s32.f32 %s2683
    %s2685 = scalar_lea.vmem %s2, 64
    %v2686 = vld [vmem:[%s2685] sm:$0xff]
    %v2687 = vld [vmem:[%s2685 + $0x8] sm:$0xff]
    %v2688 = vld [vmem:[%s2685 + $0x10] sm:$0xff]
    %v2689 = vld [vmem:[%s2685 + $0x18] sm:$0xff]
    %v2690 = vstv %s2684
    %v2691 = vmul.f32 %v2690, %v2686
    %v2692 = vmul.f32 %v2690, %v2687
    %v2693 = vmul.f32 %v2690, %v2688
    %v2694 = vmul.f32 %v2690, %v2689
    %s2695 = ssub.f32 1.0, %s2684
    %v2696 = vstv %s2695
    %v2697 = vmul.f32 %v2696, %v2606
    %v2698 = vmul.f32 %v2696, %v2608
    %v2699 = vmul.f32 %v2696, %v2677
    %v2700 = vmul.f32 %v2696, %v2679
    %v2701 = vadd.f32 %v2691, %v2697
    %v2702 = vadd.f32 %v2692, %v2698
    %v2703 = vadd.f32 %v2693, %v2699
    %v2704 = vadd.f32 %v2694, %v2700
    %v2705 = vld [vmem:[%s6] sm:$0xff]
    %v2706 = vld [vmem:[%s6 + $0x8] sm:$0xff]
    %v2707 = vld [vmem:[%s6 + $0x10] sm:$0xff]
    %v2708 = vld [vmem:[%s6 + $0x18] sm:$0xff]
    %v2709 = vld [vmem:[%s6 + $0x20] sm:$0xff]
    %v2710 = vld [vmem:[%s6 + $0x28] sm:$0xff]
    %v2711 = vld [vmem:[%s6 + $0x30] sm:$0xff]
    %v2712 = vld [vmem:[%s6 + $0x38] sm:$0xff]
    %v2713 = vld [vmem:[%s6 + $0x40] sm:$0xff]
    %v2714 = vld [vmem:[%s6 + $0x48] sm:$0xff]
    %v2715 = vld [vmem:[%s6 + $0x50] sm:$0xff]
    %v2716 = vld [vmem:[%s6 + $0x58] sm:$0xff]
    %v2717 = vld [vmem:[%s6 + $0x60] sm:$0xff]
    %v2718 = vld [vmem:[%s6 + $0x68] sm:$0xff]
    %v2719 = vld [vmem:[%s6 + $0x70] sm:$0xff]
    %v2720 = vld [vmem:[%s6 + $0x78] sm:$0xff]
    %v2721 = vld [vmem:[%s6 + $0x80] sm:$0xff]
    %v2722 = vld [vmem:[%s6 + $0x88] sm:$0xff]
    %v2723 = vld [vmem:[%s6 + $0x90] sm:$0xff]
    %v2724 = vld [vmem:[%s6 + $0x98] sm:$0xff]
    %v2725 = vld [vmem:[%s6 + $0xa0] sm:$0xff]
    %v2726 = vld [vmem:[%s6 + $0xa8] sm:$0xff]
    %v2727 = vld [vmem:[%s6 + $0xb0] sm:$0xff]
    %v2728 = vld [vmem:[%s6 + $0xb8] sm:$0xff]
    %v2729 = vld [vmem:[%s6 + $0xc0] sm:$0xff]
    %v2730 = vld [vmem:[%s6 + $0xc8] sm:$0xff]
    %v2731 = vld [vmem:[%s6 + $0xd0] sm:$0xff]
    %v2732 = vld [vmem:[%s6 + $0xd8] sm:$0xff]
    %v2733 = vld [vmem:[%s6 + $0xe0] sm:$0xff]
    %v2734 = vld [vmem:[%s6 + $0xe8] sm:$0xff]
    %v2735 = vld [vmem:[%s6 + $0xf0] sm:$0xff]
    %v2736 = vld [vmem:[%s6 + $0xf8] sm:$0xff]
    %v2737 = vld [vmem:[%s6 + $0x100] sm:$0xff]
    %v2738 = vld [vmem:[%s6 + $0x108] sm:$0xff]
    %v2739 = vld [vmem:[%s6 + $0x110] sm:$0xff]
    %v2740 = vld [vmem:[%s6 + $0x118] sm:$0xff]
    %v2741 = vld [vmem:[%s6 + $0x120] sm:$0xff]
    %v2742 = vld [vmem:[%s6 + $0x128] sm:$0xff]
    %v2743 = vld [vmem:[%s6 + $0x130] sm:$0xff]
    %v2744 = vld [vmem:[%s6 + $0x138] sm:$0xff]
    %v2745 = vld [vmem:[%s6 + $0x140] sm:$0xff]
    %v2746 = vld [vmem:[%s6 + $0x148] sm:$0xff]
    %v2747 = vld [vmem:[%s6 + $0x150] sm:$0xff]
    %v2748 = vld [vmem:[%s6 + $0x158] sm:$0xff]
    %v2749 = vld [vmem:[%s6 + $0x160] sm:$0xff]
    %v2750 = vld [vmem:[%s6 + $0x168] sm:$0xff]
    %v2751 = vld [vmem:[%s6 + $0x170] sm:$0xff]
    %v2752 = vld [vmem:[%s6 + $0x178] sm:$0xff]
    %v2753 = vld [vmem:[%s6 + $0x180] sm:$0xff]
    %v2754 = vld [vmem:[%s6 + $0x188] sm:$0xff]
    %v2755 = vld [vmem:[%s6 + $0x190] sm:$0xff]
    %v2756 = vld [vmem:[%s6 + $0x198] sm:$0xff]
    %v2757 = vld [vmem:[%s6 + $0x1a0] sm:$0xff]
    %v2758 = vld [vmem:[%s6 + $0x1a8] sm:$0xff]
    %v2759 = vld [vmem:[%s6 + $0x1b0] sm:$0xff]
    %v2760 = vld [vmem:[%s6 + $0x1b8] sm:$0xff]
    %v2761 = vld [vmem:[%s6 + $0x1c0] sm:$0xff]
    %v2762 = vld [vmem:[%s6 + $0x1c8] sm:$0xff]
    %v2763 = vld [vmem:[%s6 + $0x1d0] sm:$0xff]
    %v2764 = vld [vmem:[%s6 + $0x1d8] sm:$0xff]
    %v2765 = vld [vmem:[%s6 + $0x1e0] sm:$0xff]
    %v2766 = vld [vmem:[%s6 + $0x1e8] sm:$0xff]
    %v2767 = vld [vmem:[%s6 + $0x1f0] sm:$0xff]
    %v2768 = vld [vmem:[%s6 + $0x1f8] sm:$0xff]
    %2769 = vmatprep.subr.mxu0 %v2766
    %2770 = vmatpush1.msra.mxu0 %v2765
    %2771 = vmatprep.subr.mxu0 %v2762
    %2772 = vmatpush1.msra.mxu0 %v2761
    %2773 = vmatprep.subr.mxu0 %v2758
    %2774 = vmatpush1.msra.mxu0 %v2757
    %2775 = vmatprep.subr.mxu0 %v2754
    %2776 = vmatpush1.msra.mxu0 %v2753
    %2777 = vmatprep.subr.mxu0 %v2750
    %2778 = vmatpush1.msra.mxu0 %v2749
    %2779 = vmatprep.subr.mxu0 %v2746
    %2780 = vmatpush1.msra.mxu0 %v2745
    %2781 = vmatprep.subr.mxu0 %v2742
    %2782 = vmatpush1.msra.mxu0 %v2741
    %2783 = vmatprep.subr.mxu0 %v2738
    %2784 = vmatpush1.msra.mxu0 %v2737
    %2785 = vmatprep.subr.mxu0 %v2734
    %2786 = vmatpush1.msra.mxu0 %v2733
    %2787 = vmatprep.subr.mxu0 %v2730
    %2788 = vmatpush1.msra.mxu0 %v2729
    %2789 = vmatprep.subr.mxu0 %v2726
    %2790 = vmatpush1.msra.mxu0 %v2725
    %2791 = vmatprep.subr.mxu0 %v2722
    %2792 = vmatpush1.msra.mxu0 %v2721
    %2793 = vmatprep.subr.mxu0 %v2718
    %2794 = vmatpush1.msra.mxu0 %v2717
    %2795 = vmatprep.subr.mxu0 %v2714
    %2796 = vmatpush1.msra.mxu0 %v2713
    %2797 = vmatprep.subr.mxu0 %v2710
    %2798 = vmatpush1.msra.mxu0 %v2709
    %2799 = vmatprep.subr.mxu0 %v2706
    %2800 = vmatpush1.msra.mxu0 %v2705
    %2801 = vmatprep.subr.mxu0 0.0
    %2802 = vmatpush2.msra.mxu0 0.0
    %2803 = vmatprep.subr.mxu0 0.0
    %2804 = vmatpush2.msra.mxu0 0.0
    %2805 = vmatprep.subr.mxu0 0.0
    %2806 = vmatpush2.msra.mxu0 0.0
    %2807 = vmatprep.subr.mxu0 0.0
    %2808 = vmatpush2.msra.mxu0 0.0
    %2809 = vmatprep.subr.mxu0 0.0
    %2810 = vmatpush2.msra.mxu0 0.0
    %2811 = vmatprep.subr.mxu0 0.0
    %2812 = vmatpush2.msra.mxu0 0.0
    %2813 = vmatprep.subr.mxu0 0.0
    %2814 = vmatpush2.msra.mxu0 0.0
    %2815 = vmatprep.subr.mxu0 0.0
    %2816 = vmatpush2.msra.mxu0 0.0
    %2817 = vmatprep.subr.mxu0 0.0
    %2818 = vmatpush2.msra.mxu0 0.0
    %2819 = vmatprep.subr.mxu0 0.0
    %2820 = vmatpush2.msra.mxu0 0.0
    %2821 = vmatprep.subr.mxu0 0.0
    %2822 = vmatpush2.msra.mxu0 0.0
    %2823 = vmatprep.subr.mxu0 0.0
    %2824 = vmatpush2.msra.mxu0 0.0
    %2825 = vmatprep.subr.mxu0 0.0
    %2826 = vmatpush2.msra.mxu0 0.0
    %2827 = vmatprep.subr.mxu0 0.0
    %2828 = vmatpush2.msra.mxu0 0.0
    %2829 = vmatprep.subr.mxu0 0.0
    %2830 = vmatpush2.msra.mxu0 0.0
    %2831 = vmatprep.subr.mxu0 0.0
    %2832 = vmatpush2.msra.mxu0 0.0
    %2833 = vmatprep.mubr.f32.mxu0 0.0
    %2834 = vmatmul.mubr.f32.gmra.mxu0 %v2365
    %v2835 = vpop.f32.mrf.mxu0
    %v2836 = vadd.f32 0.0, %v2835
    %v2837 = vpop.f32.mrf.mxu0
    %v2838 = vadd.f32 0.0, %v2837
    %2839 = vdwg.mxu0
    %2840 = vmatprep.subr.mxu0 %v2768
    %2841 = vmatpush1.msra.mxu0 %v2767
    %2842 = vmatprep.subr.mxu0 %v2764
    %2843 = vmatpush1.msra.mxu0 %v2763
    %2844 = vmatprep.subr.mxu0 %v2760
    %2845 = vmatpush1.msra.mxu0 %v2759
    %2846 = vmatprep.subr.mxu0 %v2756
    %2847 = vmatpush1.msra.mxu0 %v2755
    %2848 = vmatprep.subr.mxu0 %v2752
    %2849 = vmatpush1.msra.mxu0 %v2751
    %2850 = vmatprep.subr.mxu0 %v2748
    %2851 = vmatpush1.msra.mxu0 %v2747
    %2852 = vmatprep.subr.mxu0 %v2744
    %2853 = vmatpush1.msra.mxu0 %v2743
    %2854 = vmatprep.subr.mxu0 %v2740
    %2855 = vmatpush1.msra.mxu0 %v2739
    %2856 = vmatprep.subr.mxu0 %v2736
    %2857 = vmatpush1.msra.mxu0 %v2735
    %2858 = vmatprep.subr.mxu0 %v2732
    %2859 = vmatpush1.msra.mxu0 %v2731
    %2860 = vmatprep.subr.mxu0 %v2728
    %2861 = vmatpush1.msra.mxu0 %v2727
    %2862 = vmatprep.subr.mxu0 %v2724
    %2863 = vmatpush1.msra.mxu0 %v2723
    %2864 = vmatprep.subr.mxu0 %v2720
    %2865 = vmatpush1.msra.mxu0 %v2719
    %2866 = vmatprep.subr.mxu0 %v2716
    %2867 = vmatpush1.msra.mxu0 %v2715
    %2868 = vmatprep.subr.mxu0 %v2712
    %2869 = vmatpush1.msra.mxu0 %v2711
    %2870 = vmatprep.subr.mxu0 %v2708
    %2871 = vmatpush1.msra.mxu0 %v2707
    %2872 = vmatprep.subr.mxu0 0.0
    %2873 = vmatpush2.msra.mxu0 0.0
    %2874 = vmatprep.subr.mxu0 0.0
    %2875 = vmatpush2.msra.mxu0 0.0
    %2876 = vmatprep.subr.mxu0 0.0
    %2877 = vmatpush2.msra.mxu0 0.0
    %2878 = vmatprep.subr.mxu0 0.0
    %2879 = vmatpush2.msra.mxu0 0.0
    %2880 = vmatprep.subr.mxu0 0.0
    %2881 = vmatpush2.msra.mxu0 0.0
    %2882 = vmatprep.subr.mxu0 0.0
    %2883 = vmatpush2.msra.mxu0 0.0
    %2884 = vmatprep.subr.mxu0 0.0
    %2885 = vmatpush2.msra.mxu0 0.0
    %2886 = vmatprep.subr.mxu0 0.0
    %2887 = vmatpush2.msra.mxu0 0.0
    %2888 = vmatprep.subr.mxu0 0.0
    %2889 = vmatpush2.msra.mxu0 0.0
    %2890 = vmatprep.subr.mxu0 0.0
    %2891 = vmatpush2.msra.mxu0 0.0
    %2892 = vmatprep.subr.mxu0 0.0
    %2893 = vmatpush2.msra.mxu0 0.0
    %2894 = vmatprep.subr.mxu0 0.0
    %2895 = vmatpush2.msra.mxu0 0.0
    %2896 = vmatprep.subr.mxu0 0.0
    %2897 = vmatpush2.msra.mxu0 0.0
    %2898 = vmatprep.subr.mxu0 0.0
    %2899 = vmatpush2.msra.mxu0 0.0
    %2900 = vmatprep.subr.mxu0 0.0
    %2901 = vmatpush2.msra.mxu0 0.0
    %2902 = vmatprep.subr.mxu0 0.0
    %2903 = vmatpush2.msra.mxu0 0.0
    %2904 = vmatprep.mubr.f32.mxu0 0.0
    %2905 = vmatmul.mubr.f32.gmra.mxu0 %v2365
    %v2906 = vpop.f32.mrf.mxu0
    %v2907 = vadd.f32 0.0, %v2906
    %v2908 = vpop.f32.mrf.mxu0
    %v2909 = vadd.f32 0.0, %v2908
    %2910 = vdwg.mxu0
    %v2911 = vadd.f32 %v2701, %v2836
    %v2912 = vadd.f32 %v2702, %v2838
    %v2913 = vadd.f32 %v2703, %v2907
    %v2914 = vadd.f32 %v2704, %v2909
    %v2915 = vadd.f32 %v2911, %v75
    %v2916 = vadd.f32 %v2912, %v79
    %v2917 = vadd.f32 %v2913, %v83
    %v2918 = vadd.f32 %v2914, %v87
    %v2919 = vxor.u32 %v2915, 2147483648
    %v2920 = vmul.f32 %v2919, 1.442695
    %v2921 = vpow.pop %v2920
    %v2922 = vadd.f32 %v2921, 1.0
    %v2923 = vrcp.pop %v2922
    %v2924 = vmul.f32 1.0, %v2923
    %v2925 = vxor.u32 %v2916, 2147483648
    %v2926 = vmul.f32 %v2925, 1.442695
    %v2927 = vpow.pop %v2926
    %v2928 = vadd.f32 %v2927, 1.0
    %v2929 = vrcp.pop %v2928
    %v2930 = vmul.f32 1.0, %v2929
    %v2931 = vmul.f32 %v2924, %v2918
    %v2932 = vadd.f32 %v2917, %v2931
    %v2933 = vtanh.pop %v2932
    %v2934 = vsub.f32 1.0, %v2930
    %v2935 = vmul.f32 %v2934, %v2933
    %v2936 = vmul.f32 %v2930, %v2365
    %v2937 = vadd.f32 %v2935, %v2936
    %v2938 = vld [vmem:[%s8] sm:$0xff]
    %v2939 = vld [vmem:[%s8 + $0x8] sm:$0xff]
    %v2940 = vld [vmem:[%s8 + $0x10] sm:$0xff]
    %v2941 = vld [vmem:[%s8 + $0x18] sm:$0xff]
    %v2942 = vld [vmem:[%s8 + $0x20] sm:$0xff]
    %v2943 = vld [vmem:[%s8 + $0x28] sm:$0xff]
    %v2944 = vld [vmem:[%s8 + $0x30] sm:$0xff]
    %v2945 = vld [vmem:[%s8 + $0x38] sm:$0xff]
    %v2946 = vld [vmem:[%s8 + $0x40] sm:$0xff]
    %v2947 = vld [vmem:[%s8 + $0x48] sm:$0xff]
    %v2948 = vld [vmem:[%s8 + $0x50] sm:$0xff]
    %v2949 = vld [vmem:[%s8 + $0x58] sm:$0xff]
    %v2950 = vld [vmem:[%s8 + $0x60] sm:$0xff]
    %v2951 = vld [vmem:[%s8 + $0x68] sm:$0xff]
    %v2952 = vld [vmem:[%s8 + $0x70] sm:$0xff]
    %v2953 = vld [vmem:[%s8 + $0x78] sm:$0xff]
    %2954 = vmatprep.subr.mxu0 0.0
    %2955 = vmatpush1.msra.mxu0 %v2953
    %2956 = vmatprep.subr.mxu0 0.0
    %2957 = vmatpush1.msra.mxu0 %v2952
    %2958 = vmatprep.subr.mxu0 0.0
    %2959 = vmatpush1.msra.mxu0 %v2951
    %2960 = vmatprep.subr.mxu0 0.0
    %2961 = vmatpush1.msra.mxu0 %v2950
    %2962 = vmatprep.subr.mxu0 0.0
    %2963 = vmatpush1.msra.mxu0 %v2949
    %2964 = vmatprep.subr.mxu0 0.0
    %2965 = vmatpush1.msra.mxu0 %v2948
    %2966 = vmatprep.subr.mxu0 0.0
    %2967 = vmatpush1.msra.mxu0 %v2947
    %2968 = vmatprep.subr.mxu0 0.0
    %2969 = vmatpush1.msra.mxu0 %v2946
    %2970 = vmatprep.subr.mxu0 0.0
    %2971 = vmatpush1.msra.mxu0 %v2945
    %2972 = vmatprep.subr.mxu0 0.0
    %2973 = vmatpush1.msra.mxu0 %v2944
    %2974 = vmatprep.subr.mxu0 0.0
    %2975 = vmatpush1.msra.mxu0 %v2943
    %2976 = vmatprep.subr.mxu0 0.0
    %2977 = vmatpush1.msra.mxu0 %v2942
    %2978 = vmatprep.subr.mxu0 0.0
    %2979 = vmatpush1.msra.mxu0 %v2941
    %2980 = vmatprep.subr.mxu0 0.0
    %2981 = vmatpush1.msra.mxu0 %v2940
    %2982 = vmatprep.subr.mxu0 0.0
    %2983 = vmatpush1.msra.mxu0 %v2939
    %2984 = vmatprep.subr.mxu0 0.0
    %2985 = vmatpush1.msra.mxu0 %v2938
    %2986 = vmatprep.subr.mxu0 0.0
    %2987 = vmatpush2.msra.mxu0 0.0
    %2988 = vmatprep.subr.mxu0 0.0
    %2989 = vmatpush2.msra.mxu0 0.0
    %2990 = vmatprep.subr.mxu0 0.0
    %2991 = vmatpush2.msra.mxu0 0.0
    %2992 = vmatprep.subr.mxu0 0.0
    %2993 = vmatpush2.msra.mxu0 0.0
    %2994 = vmatprep.subr.mxu0 0.0
    %2995 = vmatpush2.msra.mxu0 0.0
    %2996 = vmatprep.subr.mxu0 0.0
    %2997 = vmatpush2.msra.mxu0 0.0
    %2998 = vmatprep.subr.mxu0 0.0
    %2999 = vmatpush2.msra.mxu0 0.0
    %3000 = vmatprep.subr.mxu0 0.0
    %3001 = vmatpush2.msra.mxu0 0.0
    %3002 = vmatprep.subr.mxu0 0.0
    %3003 = vmatpush2.msra.mxu0 0.0
    %3004 = vmatprep.subr.mxu0 0.0
    %3005 = vmatpush2.msra.mxu0 0.0
    %3006 = vmatprep.subr.mxu0 0.0
    %3007 = vmatpush2.msra.mxu0 0.0
    %3008 = vmatprep.subr.mxu0 0.0
    %3009 = vmatpush2.msra.mxu0 0.0
    %3010 = vmatprep.subr.mxu0 0.0
    %3011 = vmatpush2.msra.mxu0 0.0
    %3012 = vmatprep.subr.mxu0 0.0
    %3013 = vmatpush2.msra.mxu0 0.0
    %3014 = vmatprep.subr.mxu0 0.0
    %3015 = vmatpush2.msra.mxu0 0.0
    %3016 = vmatprep.subr.mxu0 0.0
    %3017 = vmatpush2.msra.mxu0 0.0
    %3018 = vmatprep.mubr.f32.mxu0 0.0
    %3019 = vmatmul.mubr.f32.gmra.mxu0 %v2937
    %v3020 = vpop.f32.mrf.mxu0
    %v3021 = vadd.f32 %v97, %v3020
    %v3022 = vpop.f32.mrf.mxu0
    %3023 = vdwg.mxu0
    %s3024 = scalar_lea.vmem %s10, 24
    %3025 = vst [vmem:[%s3024] sm:$0xff] %v3021
    %3026 = vmax.xlane.f32.xlu0 %v3021
    %v3027 = vpop.xlane.xlu0 %3026
    %vm3028 = vcmp.eq.f32.partialorder %v3021, %v3027
    %v3029 = vsel %vm3028, %v1556, 128
    %v3030 = vand.u32 %v3029, 65535
    %v3031 = vshra.s32 %v3029, 16
    %v3032 = vcvt.s32.f32 %v3030
    %v3033 = vcvt.s32.f32 %v3031
    %3034 = vmin.xlane.f32.xlu0 %v3033
    %v3035 = vpop.xlane.xlu0 %3034
    %vm3036 = vcmp.eq.f32.partialorder %v3033, %v3035
    %v3037 = vsel %vm3036, %v3032, inf
    %3038 = vmin.xlane.f32.xlu0 %v3037
    %v3039 = vpop.xlane.xlu0 %3038
    %v3040 = vcvt.f32.s32 %v3039
    %v3041 = vcvt.f32.s32 %v3035
    %v3042 = vshll.u32 %v3041, 16
    %v3043 = vadd.s32 %v3042, %v3040
    %vm3044 = vcmp.eq.s32.totalorder %v1556, %v3043
    %v3045 = vsel %vm3044, 1, 0
    %v3046 = vcvt.s32.f32 %v3045
    %v3047 = vld [vmem:[%s3] sm:$0xff]
    %v3048 = vld [vmem:[%s3 + $0x8] sm:$0xff]
    %v3049 = vld [vmem:[%s3 + $0x10] sm:$0xff]
    %v3050 = vld [vmem:[%s3 + $0x18] sm:$0xff]
    %v3051 = vld [vmem:[%s3 + $0x20] sm:$0xff]
    %v3052 = vld [vmem:[%s3 + $0x28] sm:$0xff]
    %v3053 = vld [vmem:[%s3 + $0x30] sm:$0xff]
    %v3054 = vld [vmem:[%s3 + $0x38] sm:$0xff]
    %v3055 = vld [vmem:[%s3 + $0x40] sm:$0xff]
    %v3056 = vld [vmem:[%s3 + $0x48] sm:$0xff]
    %v3057 = vld [vmem:[%s3 + $0x50] sm:$0xff]
    %v3058 = vld [vmem:[%s3 + $0x58] sm:$0xff]
    %v3059 = vld [vmem:[%s3 + $0x60] sm:$0xff]
    %v3060 = vld [vmem:[%s3 + $0x68] sm:$0xff]
    %v3061 = vld [vmem:[%s3 + $0x70] sm:$0xff]
    %v3062 = vld [vmem:[%s3 + $0x78] sm:$0xff]
    %v3063 = vld [vmem:[%s3 + $0x80] sm:$0xff]
    %v3064 = vld [vmem:[%s3 + $0x88] sm:$0xff]
    %v3065 = vld [vmem:[%s3 + $0x90] sm:$0xff]
    %v3066 = vld [vmem:[%s3 + $0x98] sm:$0xff]
    %v3067 = vld [vmem:[%s3 + $0xa0] sm:$0xff]
    %v3068 = vld [vmem:[%s3 + $0xa8] sm:$0xff]
    %v3069 = vld [vmem:[%s3 + $0xb0] sm:$0xff]
    %v3070 = vld [vmem:[%s3 + $0xb8] sm:$0xff]
    %v3071 = vld [vmem:[%s3 + $0xc0] sm:$0xff]
    %v3072 = vld [vmem:[%s3 + $0xc8] sm:$0xff]
    %v3073 = vld [vmem:[%s3 + $0xd0] sm:$0xff]
    %v3074 = vld [vmem:[%s3 + $0xd8] sm:$0xff]
    %v3075 = vld [vmem:[%s3 + $0xe0] sm:$0xff]
    %v3076 = vld [vmem:[%s3 + $0xe8] sm:$0xff]
    %v3077 = vld [vmem:[%s3 + $0xf0] sm:$0xff]
    %v3078 = vld [vmem:[%s3 + $0xf8] sm:$0xff]
    %v3079 = vld [vmem:[%s3 + $0x100] sm:$0xff]
    %v3080 = vld [vmem:[%s3 + $0x108] sm:$0xff]
    %v3081 = vld [vmem:[%s3 + $0x110] sm:$0xff]
    %v3082 = vld [vmem:[%s3 + $0x118] sm:$0xff]
    %v3083 = vld [vmem:[%s3 + $0x120] sm:$0xff]
    %v3084 = vld [vmem:[%s3 + $0x128] sm:$0xff]
    %v3085 = vld [vmem:[%s3 + $0x130] sm:$0xff]
    %v3086 = vld [vmem:[%s3 + $0x138] sm:$0xff]
    %v3087 = vld [vmem:[%s3 + $0x140] sm:$0xff]
    %v3088 = vld [vmem:[%s3 + $0x148] sm:$0xff]
    %v3089 = vld [vmem:[%s3 + $0x150] sm:$0xff]
    %v3090 = vld [vmem:[%s3 + $0x158] sm:$0xff]
    %v3091 = vld [vmem:[%s3 + $0x160] sm:$0xff]
    %v3092 = vld [vmem:[%s3 + $0x168] sm:$0xff]
    %v3093 = vld [vmem:[%s3 + $0x170] sm:$0xff]
    %v3094 = vld [vmem:[%s3 + $0x178] sm:$0xff]
    %v3095 = vld [vmem:[%s3 + $0x180] sm:$0xff]
    %v3096 = vld [vmem:[%s3 + $0x188] sm:$0xff]
    %v3097 = vld [vmem:[%s3 + $0x190] sm:$0xff]
    %v3098 = vld [vmem:[%s3 + $0x198] sm:$0xff]
    %v3099 = vld [vmem:[%s3 + $0x1a0] sm:$0xff]
    %v3100 = vld [vmem:[%s3 + $0x1a8] sm:$0xff]
    %v3101 = vld [vmem:[%s3 + $0x1b0] sm:$0xff]
    %v3102 = vld [vmem:[%s3 + $0x1b8] sm:$0xff]
    %v3103 = vld [vmem:[%s3 + $0x1c0] sm:$0xff]
    %v3104 = vld [vmem:[%s3 + $0x1c8] sm:$0xff]
    %v3105 = vld [vmem:[%s3 + $0x1d0] sm:$0xff]
    %v3106 = vld [vmem:[%s3 + $0x1d8] sm:$0xff]
    %v3107 = vld [vmem:[%s3 + $0x1e0] sm:$0xff]
    %v3108 = vld [vmem:[%s3 + $0x1e8] sm:$0xff]
    %v3109 = vld [vmem:[%s3 + $0x1f0] sm:$0xff]
    %v3110 = vld [vmem:[%s3 + $0x1f8] sm:$0xff]
    %3111 = vmatprep.subr.mxu0 %v3108
    %3112 = vmatpush1.msra.mxu0 %v3107
    %3113 = vmatprep.subr.mxu0 %v3104
    %3114 = vmatpush1.msra.mxu0 %v3103
    %3115 = vmatprep.subr.mxu0 %v3100
    %3116 = vmatpush1.msra.mxu0 %v3099
    %3117 = vmatprep.subr.mxu0 %v3096
    %3118 = vmatpush1.msra.mxu0 %v3095
    %3119 = vmatprep.subr.mxu0 %v3092
    %3120 = vmatpush1.msra.mxu0 %v3091
    %3121 = vmatprep.subr.mxu0 %v3088
    %3122 = vmatpush1.msra.mxu0 %v3087
    %3123 = vmatprep.subr.mxu0 %v3084
    %3124 = vmatpush1.msra.mxu0 %v3083
    %3125 = vmatprep.subr.mxu0 %v3080
    %3126 = vmatpush1.msra.mxu0 %v3079
    %3127 = vmatprep.subr.mxu0 %v3076
    %3128 = vmatpush1.msra.mxu0 %v3075
    %3129 = vmatprep.subr.mxu0 %v3072
    %3130 = vmatpush1.msra.mxu0 %v3071
    %3131 = vmatprep.subr.mxu0 %v3068
    %3132 = vmatpush1.msra.mxu0 %v3067
    %3133 = vmatprep.subr.mxu0 %v3064
    %3134 = vmatpush1.msra.mxu0 %v3063
    %3135 = vmatprep.subr.mxu0 %v3060
    %3136 = vmatpush1.msra.mxu0 %v3059
    %3137 = vmatprep.subr.mxu0 %v3056
    %3138 = vmatpush1.msra.mxu0 %v3055
    %3139 = vmatprep.subr.mxu0 %v3052
    %3140 = vmatpush1.msra.mxu0 %v3051
    %3141 = vmatprep.subr.mxu0 %v3048
    %3142 = vmatpush1.msra.mxu0 %v3047
    %3143 = vmatprep.subr.mxu0 0.0
    %3144 = vmatpush2.msra.mxu0 0.0
    %3145 = vmatprep.subr.mxu0 0.0
    %3146 = vmatpush2.msra.mxu0 0.0
    %3147 = vmatprep.subr.mxu0 0.0
    %3148 = vmatpush2.msra.mxu0 0.0
    %3149 = vmatprep.subr.mxu0 0.0
    %3150 = vmatpush2.msra.mxu0 0.0
    %3151 = vmatprep.subr.mxu0 0.0
    %3152 = vmatpush2.msra.mxu0 0.0
    %3153 = vmatprep.subr.mxu0 0.0
    %3154 = vmatpush2.msra.mxu0 0.0
    %3155 = vmatprep.subr.mxu0 0.0
    %3156 = vmatpush2.msra.mxu0 0.0
    %3157 = vmatprep.subr.mxu0 0.0
    %3158 = vmatpush2.msra.mxu0 0.0
    %3159 = vmatprep.subr.mxu0 0.0
    %3160 = vmatpush2.msra.mxu0 0.0
    %3161 = vmatprep.subr.mxu0 0.0
    %3162 = vmatpush2.msra.mxu0 0.0
    %3163 = vmatprep.subr.mxu0 0.0
    %3164 = vmatpush2.msra.mxu0 0.0
    %3165 = vmatprep.subr.mxu0 0.0
    %3166 = vmatpush2.msra.mxu0 0.0
    %3167 = vmatprep.subr.mxu0 0.0
    %3168 = vmatpush2.msra.mxu0 0.0
    %3169 = vmatprep.subr.mxu0 0.0
    %3170 = vmatpush2.msra.mxu0 0.0
    %3171 = vmatprep.subr.mxu0 0.0
    %3172 = vmatpush2.msra.mxu0 0.0
    %3173 = vmatprep.subr.mxu0 0.0
    %3174 = vmatpush2.msra.mxu0 0.0
    %3175 = vmatprep.mubr.f32.mxu0 0.0
    %3176 = vmatmul.mubr.f32.gmra.mxu0 %v3046
    %v3177 = vpop.f32.mrf.mxu0
    %v3178 = vadd.f32 0.0, %v3177
    %v3179 = vpop.f32.mrf.mxu0
    %v3180 = vadd.f32 0.0, %v3179
    %3181 = vdwg.mxu0
    %3182 = vmatprep.subr.mxu0 %v3110
    %3183 = vmatpush1.msra.mxu0 %v3109
    %3184 = vmatprep.subr.mxu0 %v3106
    %3185 = vmatpush1.msra.mxu0 %v3105
    %3186 = vmatprep.subr.mxu0 %v3102
    %3187 = vmatpush1.msra.mxu0 %v3101
    %3188 = vmatprep.subr.mxu0 %v3098
    %3189 = vmatpush1.msra.mxu0 %v3097
    %3190 = vmatprep.subr.mxu0 %v3094
    %3191 = vmatpush1.msra.mxu0 %v3093
    %3192 = vmatprep.subr.mxu0 %v3090
    %3193 = vmatpush1.msra.mxu0 %v3089
    %3194 = vmatprep.subr.mxu0 %v3086
    %3195 = vmatpush1.msra.mxu0 %v3085
    %3196 = vmatprep.subr.mxu0 %v3082
    %3197 = vmatpush1.msra.mxu0 %v3081
    %3198 = vmatprep.subr.mxu0 %v3078
    %3199 = vmatpush1.msra.mxu0 %v3077
    %3200 = vmatprep.subr.mxu0 %v3074
    %3201 = vmatpush1.msra.mxu0 %v3073
    %3202 = vmatprep.subr.mxu0 %v3070
    %3203 = vmatpush1.msra.mxu0 %v3069
    %3204 = vmatprep.subr.mxu0 %v3066
    %3205 = vmatpush1.msra.mxu0 %v3065
    %3206 = vmatprep.subr.mxu0 %v3062
    %3207 = vmatpush1.msra.mxu0 %v3061
    %3208 = vmatprep.subr.mxu0 %v3058
    %3209 = vmatpush1.msra.mxu0 %v3057
    %3210 = vmatprep.subr.mxu0 %v3054
    %3211 = vmatpush1.msra.mxu0 %v3053
    %3212 = vmatprep.subr.mxu0 %v3050
    %3213 = vmatpush1.msra.mxu0 %v3049
    %3214 = vmatprep.subr.mxu0 0.0
    %3215 = vmatpush2.msra.mxu0 0.0
    %3216 = vmatprep.subr.mxu0 0.0
    %3217 = vmatpush2.msra.mxu0 0.0
    %3218 = vmatprep.subr.mxu0 0.0
    %3219 = vmatpush2.msra.mxu0 0.0
    %3220 = vmatprep.subr.mxu0 0.0
    %3221 = vmatpush2.msra.mxu0 0.0
    %3222 = vmatprep.subr.mxu0 0.0
    %3223 = vmatpush2.msra.mxu0 0.0
    %3224 = vmatprep.subr.mxu0 0.0
    %3225 = vmatpush2.msra.mxu0 0.0
    %3226 = vmatprep.subr.mxu0 0.0
    %3227 = vmatpush2.msra.mxu0 0.0
    %3228 = vmatprep.subr.mxu0 0.0
    %3229 = vmatpush2.msra.mxu0 0.0
    %3230 = vmatprep.subr.mxu0 0.0
    %3231 = vmatpush2.msra.mxu0 0.0
    %3232 = vmatprep.subr.mxu0 0.0
    %3233 = vmatpush2.msra.mxu0 0.0
    %3234 = vmatprep.subr.mxu0 0.0
    %3235 = vmatpush2.msra.mxu0 0.0
    %3236 = vmatprep.subr.mxu0 0.0
    %3237 = vmatpush2.msra.mxu0 0.0
    %3238 = vmatprep.subr.mxu0 0.0
    %3239 = vmatpush2.msra.mxu0 0.0
    %3240 = vmatprep.subr.mxu0 0.0
    %3241 = vmatpush2.msra.mxu0 0.0
    %3242 = vmatprep.subr.mxu0 0.0
    %3243 = vmatpush2.msra.mxu0 0.0
    %3244 = vmatprep.subr.mxu0 0.0
    %3245 = vmatpush2.msra.mxu0 0.0
    %3246 = vmatprep.mubr.f32.mxu0 0.0
    %3247 = vmatmul.mubr.f32.gmra.mxu0 %v3046
    %v3248 = vpop.f32.mrf.mxu0
    %v3249 = vadd.f32 0.0, %v3248
    %v3250 = vpop.f32.mrf.mxu0
    %v3251 = vadd.f32 0.0, %v3250
    %3252 = vdwg.mxu0
    %s3253 = sld [smem:[#allocation2 + $0x3]]
    %p3254 = scmp.ne.s32.totalorder %s3253, 0
    %s3255 = scalar_select %p3254, 1, 0
    %s3256 = scvt.s32.f32 %s3255
    %s3257 = scalar_lea.vmem %s2, 96
    %v3258 = vld [vmem:[%s3257] sm:$0xff]
    %v3259 = vld [vmem:[%s3257 + $0x8] sm:$0xff]
    %v3260 = vld [vmem:[%s3257 + $0x10] sm:$0xff]
    %v3261 = vld [vmem:[%s3257 + $0x18] sm:$0xff]
    %v3262 = vstv %s3256
    %v3263 = vmul.f32 %v3262, %v3258
    %v3264 = vmul.f32 %v3262, %v3259
    %v3265 = vmul.f32 %v3262, %v3260
    %v3266 = vmul.f32 %v3262, %v3261
    %s3267 = ssub.f32 1.0, %s3256
    %v3268 = vstv %s3267
    %v3269 = vmul.f32 %v3268, %v3178
    %v3270 = vmul.f32 %v3268, %v3180
    %v3271 = vmul.f32 %v3268, %v3249
    %v3272 = vmul.f32 %v3268, %v3251
    %v3273 = vadd.f32 %v3263, %v3269
    %v3274 = vadd.f32 %v3264, %v3270
    %v3275 = vadd.f32 %v3265, %v3271
    %v3276 = vadd.f32 %v3266, %v3272
    %v3277 = vld [vmem:[%s6] sm:$0xff]
    %v3278 = vld [vmem:[%s6 + $0x8] sm:$0xff]
    %v3279 = vld [vmem:[%s6 + $0x10] sm:$0xff]
    %v3280 = vld [vmem:[%s6 + $0x18] sm:$0xff]
    %v3281 = vld [vmem:[%s6 + $0x20] sm:$0xff]
    %v3282 = vld [vmem:[%s6 + $0x28] sm:$0xff]
    %v3283 = vld [vmem:[%s6 + $0x30] sm:$0xff]
    %v3284 = vld [vmem:[%s6 + $0x38] sm:$0xff]
    %v3285 = vld [vmem:[%s6 + $0x40] sm:$0xff]
    %v3286 = vld [vmem:[%s6 + $0x48] sm:$0xff]
    %v3287 = vld [vmem:[%s6 + $0x50] sm:$0xff]
    %v3288 = vld [vmem:[%s6 + $0x58] sm:$0xff]
    %v3289 = vld [vmem:[%s6 + $0x60] sm:$0xff]
    %v3290 = vld [vmem:[%s6 + $0x68] sm:$0xff]
    %v3291 = vld [vmem:[%s6 + $0x70] sm:$0xff]
    %v3292 = vld [vmem:[%s6 + $0x78] sm:$0xff]
    %v3293 = vld [vmem:[%s6 + $0x80] sm:$0xff]
    %v3294 = vld [vmem:[%s6 + $0x88] sm:$0xff]
    %v3295 = vld [vmem:[%s6 + $0x90] sm:$0xff]
    %v3296 = vld [vmem:[%s6 + $0x98] sm:$0xff]
    %v3297 = vld [vmem:[%s6 + $0xa0] sm:$0xff]
    %v3298 = vld [vmem:[%s6 + $0xa8] sm:$0xff]
    %v3299 = vld [vmem:[%s6 + $0xb0] sm:$0xff]
    %v3300 = vld [vmem:[%s6 + $0xb8] sm:$0xff]
    %v3301 = vld [vmem:[%s6 + $0xc0] sm:$0xff]
    %v3302 = vld [vmem:[%s6 + $0xc8] sm:$0xff]
    %v3303 = vld [vmem:[%s6 + $0xd0] sm:$0xff]
    %v3304 = vld [vmem:[%s6 + $0xd8] sm:$0xff]
    %v3305 = vld [vmem:[%s6 + $0xe0] sm:$0xff]
    %v3306 = vld [vmem:[%s6 + $0xe8] sm:$0xff]
    %v3307 = vld [vmem:[%s6 + $0xf0] sm:$0xff]
    %v3308 = vld [vmem:[%s6 + $0xf8] sm:$0xff]
    %v3309 = vld [vmem:[%s6 + $0x100] sm:$0xff]
    %v3310 = vld [vmem:[%s6 + $0x108] sm:$0xff]
    %v3311 = vld [vmem:[%s6 + $0x110] sm:$0xff]
    %v3312 = vld [vmem:[%s6 + $0x118] sm:$0xff]
    %v3313 = vld [vmem:[%s6 + $0x120] sm:$0xff]
    %v3314 = vld [vmem:[%s6 + $0x128] sm:$0xff]
    %v3315 = vld [vmem:[%s6 + $0x130] sm:$0xff]
    %v3316 = vld [vmem:[%s6 + $0x138] sm:$0xff]
    %v3317 = vld [vmem:[%s6 + $0x140] sm:$0xff]
    %v3318 = vld [vmem:[%s6 + $0x148] sm:$0xff]
    %v3319 = vld [vmem:[%s6 + $0x150] sm:$0xff]
    %v3320 = vld [vmem:[%s6 + $0x158] sm:$0xff]
    %v3321 = vld [vmem:[%s6 + $0x160] sm:$0xff]
    %v3322 = vld [vmem:[%s6 + $0x168] sm:$0xff]
    %v3323 = vld [vmem:[%s6 + $0x170] sm:$0xff]
    %v3324 = vld [vmem:[%s6 + $0x178] sm:$0xff]
    %v3325 = vld [vmem:[%s6 + $0x180] sm:$0xff]
    %v3326 = vld [vmem:[%s6 + $0x188] sm:$0xff]
    %v3327 = vld [vmem:[%s6 + $0x190] sm:$0xff]
    %v3328 = vld [vmem:[%s6 + $0x198] sm:$0xff]
    %v3329 = vld [vmem:[%s6 + $0x1a0] sm:$0xff]
    %v3330 = vld [vmem:[%s6 + $0x1a8] sm:$0xff]
    %v3331 = vld [vmem:[%s6 + $0x1b0] sm:$0xff]
    %v3332 = vld [vmem:[%s6 + $0x1b8] sm:$0xff]
    %v3333 = vld [vmem:[%s6 + $0x1c0] sm:$0xff]
    %v3334 = vld [vmem:[%s6 + $0x1c8] sm:$0xff]
    %v3335 = vld [vmem:[%s6 + $0x1d0] sm:$0xff]
    %v3336 = vld [vmem:[%s6 + $0x1d8] sm:$0xff]
    %v3337 = vld [vmem:[%s6 + $0x1e0] sm:$0xff]
    %v3338 = vld [vmem:[%s6 + $0x1e8] sm:$0xff]
    %v3339 = vld [vmem:[%s6 + $0x1f0] sm:$0xff]
    %v3340 = vld [vmem:[%s6 + $0x1f8] sm:$0xff]
    %3341 = vmatprep.subr.mxu0 %v3338
    %3342 = vmatpush1.msra.mxu0 %v3337
    %3343 = vmatprep.subr.mxu0 %v3334
    %3344 = vmatpush1.msra.mxu0 %v3333
    %3345 = vmatprep.subr.mxu0 %v3330
    %3346 = vmatpush1.msra.mxu0 %v3329
    %3347 = vmatprep.subr.mxu0 %v3326
    %3348 = vmatpush1.msra.mxu0 %v3325
    %3349 = vmatprep.subr.mxu0 %v3322
    %3350 = vmatpush1.msra.mxu0 %v3321
    %3351 = vmatprep.subr.mxu0 %v3318
    %3352 = vmatpush1.msra.mxu0 %v3317
    %3353 = vmatprep.subr.mxu0 %v3314
    %3354 = vmatpush1.msra.mxu0 %v3313
    %3355 = vmatprep.subr.mxu0 %v3310
    %3356 = vmatpush1.msra.mxu0 %v3309
    %3357 = vmatprep.subr.mxu0 %v3306
    %3358 = vmatpush1.msra.mxu0 %v3305
    %3359 = vmatprep.subr.mxu0 %v3302
    %3360 = vmatpush1.msra.mxu0 %v3301
    %3361 = vmatprep.subr.mxu0 %v3298
    %3362 = vmatpush1.msra.mxu0 %v3297
    %3363 = vmatprep.subr.mxu0 %v3294
    %3364 = vmatpush1.msra.mxu0 %v3293
    %3365 = vmatprep.subr.mxu0 %v3290
    %3366 = vmatpush1.msra.mxu0 %v3289
    %3367 = vmatprep.subr.mxu0 %v3286
    %3368 = vmatpush1.msra.mxu0 %v3285
    %3369 = vmatprep.subr.mxu0 %v3282
    %3370 = vmatpush1.msra.mxu0 %v3281
    %3371 = vmatprep.subr.mxu0 %v3278
    %3372 = vmatpush1.msra.mxu0 %v3277
    %3373 = vmatprep.subr.mxu0 0.0
    %3374 = vmatpush2.msra.mxu0 0.0
    %3375 = vmatprep.subr.mxu0 0.0
    %3376 = vmatpush2.msra.mxu0 0.0
    %3377 = vmatprep.subr.mxu0 0.0
    %3378 = vmatpush2.msra.mxu0 0.0
    %3379 = vmatprep.subr.mxu0 0.0
    %3380 = vmatpush2.msra.mxu0 0.0
    %3381 = vmatprep.subr.mxu0 0.0
    %3382 = vmatpush2.msra.mxu0 0.0
    %3383 = vmatprep.subr.mxu0 0.0
    %3384 = vmatpush2.msra.mxu0 0.0
    %3385 = vmatprep.subr.mxu0 0.0
    %3386 = vmatpush2.msra.mxu0 0.0
    %3387 = vmatprep.subr.mxu0 0.0
    %3388 = vmatpush2.msra.mxu0 0.0
    %3389 = vmatprep.subr.mxu0 0.0
    %3390 = vmatpush2.msra.mxu0 0.0
    %3391 = vmatprep.subr.mxu0 0.0
    %3392 = vmatpush2.msra.mxu0 0.0
    %3393 = vmatprep.subr.mxu0 0.0
    %3394 = vmatpush2.msra.mxu0 0.0
    %3395 = vmatprep.subr.mxu0 0.0
    %3396 = vmatpush2.msra.mxu0 0.0
    %3397 = vmatprep.subr.mxu0 0.0
    %3398 = vmatpush2.msra.mxu0 0.0
    %3399 = vmatprep.subr.mxu0 0.0
    %3400 = vmatpush2.msra.mxu0 0.0
    %3401 = vmatprep.subr.mxu0 0.0
    %3402 = vmatpush2.msra.mxu0 0.0
    %3403 = vmatprep.subr.mxu0 0.0
    %3404 = vmatpush2.msra.mxu0 0.0
    %3405 = vmatprep.mubr.f32.mxu0 0.0
    %3406 = vmatmul.mubr.f32.gmra.mxu0 %v2937
    %v3407 = vpop.f32.mrf.mxu0
    %v3408 = vadd.f32 0.0, %v3407
    %v3409 = vpop.f32.mrf.mxu0
    %v3410 = vadd.f32 0.0, %v3409
    %3411 = vdwg.mxu0
    %3412 = vmatprep.subr.mxu0 %v3340
    %3413 = vmatpush1.msra.mxu0 %v3339
    %3414 = vmatprep.subr.mxu0 %v3336
    %3415 = vmatpush1.msra.mxu0 %v3335
    %3416 = vmatprep.subr.mxu0 %v3332
    %3417 = vmatpush1.msra.mxu0 %v3331
    %3418 = vmatprep.subr.mxu0 %v3328
    %3419 = vmatpush1.msra.mxu0 %v3327
    %3420 = vmatprep.subr.mxu0 %v3324
    %3421 = vmatpush1.msra.mxu0 %v3323
    %3422 = vmatprep.subr.mxu0 %v3320
    %3423 = vmatpush1.msra.mxu0 %v3319
    %3424 = vmatprep.subr.mxu0 %v3316
    %3425 = vmatpush1.msra.mxu0 %v3315
    %3426 = vmatprep.subr.mxu0 %v3312
    %3427 = vmatpush1.msra.mxu0 %v3311
    %3428 = vmatprep.subr.mxu0 %v3308
    %3429 = vmatpush1.msra.mxu0 %v3307
    %3430 = vmatprep.subr.mxu0 %v3304
    %3431 = vmatpush1.msra.mxu0 %v3303
    %3432 = vmatprep.subr.mxu0 %v3300
    %3433 = vmatpush1.msra.mxu0 %v3299
    %3434 = vmatprep.subr.mxu0 %v3296
    %3435 = vmatpush1.msra.mxu0 %v3295
    %3436 = vmatprep.subr.mxu0 %v3292
    %3437 = vmatpush1.msra.mxu0 %v3291
    %3438 = vmatprep.subr.mxu0 %v3288
    %3439 = vmatpush1.msra.mxu0 %v3287
    %3440 = vmatprep.subr.mxu0 %v3284
    %3441 = vmatpush1.msra.mxu0 %v3283
    %3442 = vmatprep.subr.mxu0 %v3280
    %3443 = vmatpush1.msra.mxu0 %v3279
    %3444 = vmatprep.subr.mxu0 0.0
    %3445 = vmatpush2.msra.mxu0 0.0
    %3446 = vmatprep.subr.mxu0 0.0
    %3447 = vmatpush2.msra.mxu0 0.0
    %3448 = vmatprep.subr.mxu0 0.0
    %3449 = vmatpush2.msra.mxu0 0.0
    %3450 = vmatprep.subr.mxu0 0.0
    %3451 = vmatpush2.msra.mxu0 0.0
    %3452 = vmatprep.subr.mxu0 0.0
    %3453 = vmatpush2.msra.mxu0 0.0
    %3454 = vmatprep.subr.mxu0 0.0
    %3455 = vmatpush2.msra.mxu0 0.0
    %3456 = vmatprep.subr.mxu0 0.0
    %3457 = vmatpush2.msra.mxu0 0.0
    %3458 = vmatprep.subr.mxu0 0.0
    %3459 = vmatpush2.msra.mxu0 0.0
    %3460 = vmatprep.subr.mxu0 0.0
    %3461 = vmatpush2.msra.mxu0 0.0
    %3462 = vmatprep.subr.mxu0 0.0
    %3463 = vmatpush2.msra.mxu0 0.0
    %3464 = vmatprep.subr.mxu0 0.0
    %3465 = vmatpush2.msra.mxu0 0.0
    %3466 = vmatprep.subr.mxu0 0.0
    %3467 = vmatpush2.msra.mxu0 0.0
    %3468 = vmatprep.subr.mxu0 0.0
    %3469 = vmatpush2.msra.mxu0 0.0
    %3470 = vmatprep.subr.mxu0 0.0
    %3471 = vmatpush2.msra.mxu0 0.0
    %3472 = vmatprep.subr.mxu0 0.0
    %3473 = vmatpush2.msra.mxu0 0.0
    %3474 = vmatprep.subr.mxu0 0.0
    %3475 = vmatpush2.msra.mxu0 0.0
    %3476 = vmatprep.mubr.f32.mxu0 0.0
    %3477 = vmatmul.mubr.f32.gmra.mxu0 %v2937
    %v3478 = vpop.f32.mrf.mxu0
    %v3479 = vadd.f32 0.0, %v3478
    %v3480 = vpop.f32.mrf.mxu0
    %v3481 = vadd.f32 0.0, %v3480
    %3482 = vdwg.mxu0
    %v3483 = vadd.f32 %v3273, %v3408
    %v3484 = vadd.f32 %v3274, %v3410
    %v3485 = vadd.f32 %v3275, %v3479
    %v3486 = vadd.f32 %v3276, %v3481
    %v3487 = vadd.f32 %v3483, %v75
    %v3488 = vadd.f32 %v3484, %v79
    %v3489 = vadd.f32 %v3485, %v83
    %v3490 = vadd.f32 %v3486, %v87
    %v3491 = vxor.u32 %v3487, 2147483648
    %v3492 = vmul.f32 %v3491, 1.442695
    %v3493 = vpow.pop %v3492
    %v3494 = vadd.f32 %v3493, 1.0
    %v3495 = vrcp.pop %v3494
    %v3496 = vmul.f32 1.0, %v3495
    %v3497 = vxor.u32 %v3488, 2147483648
    %v3498 = vmul.f32 %v3497, 1.442695
    %v3499 = vpow.pop %v3498
    %v3500 = vadd.f32 %v3499, 1.0
    %v3501 = vrcp.pop %v3500
    %v3502 = vmul.f32 1.0, %v3501
    %v3503 = vmul.f32 %v3496, %v3490
    %v3504 = vadd.f32 %v3489, %v3503
    %v3505 = vtanh.pop %v3504
    %v3506 = vsub.f32 1.0, %v3502
    %v3507 = vmul.f32 %v3506, %v3505
    %v3508 = vmul.f32 %v3502, %v2937
    %v3509 = vadd.f32 %v3507, %v3508
    %v3510 = vld [vmem:[%s8] sm:$0xff]
    %v3511 = vld [vmem:[%s8 + $0x8] sm:$0xff]
    %v3512 = vld [vmem:[%s8 + $0x10] sm:$0xff]
    %v3513 = vld [vmem:[%s8 + $0x18] sm:$0xff]
    %v3514 = vld [vmem:[%s8 + $0x20] sm:$0xff]
    %v3515 = vld [vmem:[%s8 + $0x28] sm:$0xff]
    %v3516 = vld [vmem:[%s8 + $0x30] sm:$0xff]
    %v3517 = vld [vmem:[%s8 + $0x38] sm:$0xff]
    %v3518 = vld [vmem:[%s8 + $0x40] sm:$0xff]
    %v3519 = vld [vmem:[%s8 + $0x48] sm:$0xff]
    %v3520 = vld [vmem:[%s8 + $0x50] sm:$0xff]
    %v3521 = vld [vmem:[%s8 + $0x58] sm:$0xff]
    %v3522 = vld [vmem:[%s8 + $0x60] sm:$0xff]
    %v3523 = vld [vmem:[%s8 + $0x68] sm:$0xff]
    %v3524 = vld [vmem:[%s8 + $0x70] sm:$0xff]
    %v3525 = vld [vmem:[%s8 + $0x78] sm:$0xff]
    %3526 = vmatprep.subr.mxu0 0.0
    %3527 = vmatpush1.msra.mxu0 %v3525
    %3528 = vmatprep.subr.mxu0 0.0
    %3529 = vmatpush1.msra.mxu0 %v3524
    %3530 = vmatprep.subr.mxu0 0.0
    %3531 = vmatpush1.msra.mxu0 %v3523
    %3532 = vmatprep.subr.mxu0 0.0
    %3533 = vmatpush1.msra.mxu0 %v3522
    %3534 = vmatprep.subr.mxu0 0.0
    %3535 = vmatpush1.msra.mxu0 %v3521
    %3536 = vmatprep.subr.mxu0 0.0
    %3537 = vmatpush1.msra.mxu0 %v3520
    %3538 = vmatprep.subr.mxu0 0.0
    %3539 = vmatpush1.msra.mxu0 %v3519
    %3540 = vmatprep.subr.mxu0 0.0
    %3541 = vmatpush1.msra.mxu0 %v3518
    %3542 = vmatprep.subr.mxu0 0.0
    %3543 = vmatpush1.msra.mxu0 %v3517
    %3544 = vmatprep.subr.mxu0 0.0
    %3545 = vmatpush1.msra.mxu0 %v3516
    %3546 = vmatprep.subr.mxu0 0.0
    %3547 = vmatpush1.msra.mxu0 %v3515
    %3548 = vmatprep.subr.mxu0 0.0
    %3549 = vmatpush1.msra.mxu0 %v3514
    %3550 = vmatprep.subr.mxu0 0.0
    %3551 = vmatpush1.msra.mxu0 %v3513
    %3552 = vmatprep.subr.mxu0 0.0
    %3553 = vmatpush1.msra.mxu0 %v3512
    %3554 = vmatprep.subr.mxu0 0.0
    %3555 = vmatpush1.msra.mxu0 %v3511
    %3556 = vmatprep.subr.mxu0 0.0
    %3557 = vmatpush1.msra.mxu0 %v3510
    %3558 = vmatprep.subr.mxu0 0.0
    %3559 = vmatpush2.msra.mxu0 0.0
    %3560 = vmatprep.subr.mxu0 0.0
    %3561 = vmatpush2.msra.mxu0 0.0
    %3562 = vmatprep.subr.mxu0 0.0
    %3563 = vmatpush2.msra.mxu0 0.0
    %3564 = vmatprep.subr.mxu0 0.0
    %3565 = vmatpush2.msra.mxu0 0.0
    %3566 = vmatprep.subr.mxu0 0.0
    %3567 = vmatpush2.msra.mxu0 0.0
    %3568 = vmatprep.subr.mxu0 0.0
    %3569 = vmatpush2.msra.mxu0 0.0
    %3570 = vmatprep.subr.mxu0 0.0
    %3571 = vmatpush2.msra.mxu0 0.0
    %3572 = vmatprep.subr.mxu0 0.0
    %3573 = vmatpush2.msra.mxu0 0.0
    %3574 = vmatprep.subr.mxu0 0.0
    %3575 = vmatpush2.msra.mxu0 0.0
    %3576 = vmatprep.subr.mxu0 0.0
    %3577 = vmatpush2.msra.mxu0 0.0
    %3578 = vmatprep.subr.mxu0 0.0
    %3579 = vmatpush2.msra.mxu0 0.0
    %3580 = vmatprep.subr.mxu0 0.0
    %3581 = vmatpush2.msra.mxu0 0.0
    %3582 = vmatprep.subr.mxu0 0.0
    %3583 = vmatpush2.msra.mxu0 0.0
    %3584 = vmatprep.subr.mxu0 0.0
    %3585 = vmatpush2.msra.mxu0 0.0
    %3586 = vmatprep.subr.mxu0 0.0
    %3587 = vmatpush2.msra.mxu0 0.0
    %3588 = vmatprep.subr.mxu0 0.0
    %3589 = vmatpush2.msra.mxu0 0.0
    %3590 = vmatprep.mubr.f32.mxu0 0.0
    %3591 = vmatmul.mubr.f32.gmra.mxu0 %v3509
    %v3592 = vpop.f32.mrf.mxu0
    %v3593 = vadd.f32 %v97, %v3592
    %v3594 = vpop.f32.mrf.mxu0
    %3595 = vdwg.mxu0
    %s3596 = scalar_lea.vmem %s10, 32
    %3597 = vst [vmem:[%s3596] sm:$0xff] %v3593
    %3598 = vmax.xlane.f32.xlu0 %v3593
    %v3599 = vpop.xlane.xlu0 %3598
    %vm3600 = vcmp.eq.f32.partialorder %v3593, %v3599
    %v3601 = vsel %vm3600, %v1556, 128
    %v3602 = vand.u32 %v3601, 65535
    %v3603 = vshra.s32 %v3601, 16
    %v3604 = vcvt.s32.f32 %v3602
    %v3605 = vcvt.s32.f32 %v3603
    %3606 = vmin.xlane.f32.xlu0 %v3605
    %v3607 = vpop.xlane.xlu0 %3606
    %vm3608 = vcmp.eq.f32.partialorder %v3605, %v3607
    %v3609 = vsel %vm3608, %v3604, inf
    %3610 = vmin.xlane.f32.xlu0 %v3609
    %v3611 = vpop.xlane.xlu0 %3610
    %v3612 = vcvt.f32.s32 %v3611
    %v3613 = vcvt.f32.s32 %v3607
    %v3614 = vshll.u32 %v3613, 16
    %v3615 = vadd.s32 %v3614, %v3612
    %vm3616 = vcmp.eq.s32.totalorder %v1556, %v3615
    %v3617 = vsel %vm3616, 1, 0
    %v3618 = vcvt.s32.f32 %v3617
    %v3619 = vld [vmem:[%s3] sm:$0xff]
    %v3620 = vld [vmem:[%s3 + $0x8] sm:$0xff]
    %v3621 = vld [vmem:[%s3 + $0x10] sm:$0xff]
    %v3622 = vld [vmem:[%s3 + $0x18] sm:$0xff]
    %v3623 = vld [vmem:[%s3 + $0x20] sm:$0xff]
    %v3624 = vld [vmem:[%s3 + $0x28] sm:$0xff]
    %v3625 = vld [vmem:[%s3 + $0x30] sm:$0xff]
    %v3626 = vld [vmem:[%s3 + $0x38] sm:$0xff]
    %v3627 = vld [vmem:[%s3 + $0x40] sm:$0xff]
    %v3628 = vld [vmem:[%s3 + $0x48] sm:$0xff]
    %v3629 = vld [vmem:[%s3 + $0x50] sm:$0xff]
    %v3630 = vld [vmem:[%s3 + $0x58] sm:$0xff]
    %v3631 = vld [vmem:[%s3 + $0x60] sm:$0xff]
    %v3632 = vld [vmem:[%s3 + $0x68] sm:$0xff]
    %v3633 = vld [vmem:[%s3 + $0x70] sm:$0xff]
    %v3634 = vld [vmem:[%s3 + $0x78] sm:$0xff]
    %v3635 = vld [vmem:[%s3 + $0x80] sm:$0xff]
    %v3636 = vld [vmem:[%s3 + $0x88] sm:$0xff]
    %v3637 = vld [vmem:[%s3 + $0x90] sm:$0xff]
    %v3638 = vld [vmem:[%s3 + $0x98] sm:$0xff]
    %v3639 = vld [vmem:[%s3 + $0xa0] sm:$0xff]
    %v3640 = vld [vmem:[%s3 + $0xa8] sm:$0xff]
    %v3641 = vld [vmem:[%s3 + $0xb0] sm:$0xff]
    %v3642 = vld [vmem:[%s3 + $0xb8] sm:$0xff]
    %v3643 = vld [vmem:[%s3 + $0xc0] sm:$0xff]
    %v3644 = vld [vmem:[%s3 + $0xc8] sm:$0xff]
    %v3645 = vld [vmem:[%s3 + $0xd0] sm:$0xff]
    %v3646 = vld [vmem:[%s3 + $0xd8] sm:$0xff]
    %v3647 = vld [vmem:[%s3 + $0xe0] sm:$0xff]
    %v3648 = vld [vmem:[%s3 + $0xe8] sm:$0xff]
    %v3649 = vld [vmem:[%s3 + $0xf0] sm:$0xff]
    %v3650 = vld [vmem:[%s3 + $0xf8] sm:$0xff]
    %v3651 = vld [vmem:[%s3 + $0x100] sm:$0xff]
    %v3652 = vld [vmem:[%s3 + $0x108] sm:$0xff]
    %v3653 = vld [vmem:[%s3 + $0x110] sm:$0xff]
    %v3654 = vld [vmem:[%s3 + $0x118] sm:$0xff]
    %v3655 = vld [vmem:[%s3 + $0x120] sm:$0xff]
    %v3656 = vld [vmem:[%s3 + $0x128] sm:$0xff]
    %v3657 = vld [vmem:[%s3 + $0x130] sm:$0xff]
    %v3658 = vld [vmem:[%s3 + $0x138] sm:$0xff]
    %v3659 = vld [vmem:[%s3 + $0x140] sm:$0xff]
    %v3660 = vld [vmem:[%s3 + $0x148] sm:$0xff]
    %v3661 = vld [vmem:[%s3 + $0x150] sm:$0xff]
    %v3662 = vld [vmem:[%s3 + $0x158] sm:$0xff]
    %v3663 = vld [vmem:[%s3 + $0x160] sm:$0xff]
    %v3664 = vld [vmem:[%s3 + $0x168] sm:$0xff]
    %v3665 = vld [vmem:[%s3 + $0x170] sm:$0xff]
    %v3666 = vld [vmem:[%s3 + $0x178] sm:$0xff]
    %v3667 = vld [vmem:[%s3 + $0x180] sm:$0xff]
    %v3668 = vld [vmem:[%s3 + $0x188] sm:$0xff]
    %v3669 = vld [vmem:[%s3 + $0x190] sm:$0xff]
    %v3670 = vld [vmem:[%s3 + $0x198] sm:$0xff]
    %v3671 = vld [vmem:[%s3 + $0x1a0] sm:$0xff]
    %v3672 = vld [vmem:[%s3 + $0x1a8] sm:$0xff]
    %v3673 = vld [vmem:[%s3 + $0x1b0] sm:$0xff]
    %v3674 = vld [vmem:[%s3 + $0x1b8] sm:$0xff]
    %v3675 = vld [vmem:[%s3 + $0x1c0] sm:$0xff]
    %v3676 = vld [vmem:[%s3 + $0x1c8] sm:$0xff]
    %v3677 = vld [vmem:[%s3 + $0x1d0] sm:$0xff]
    %v3678 = vld [vmem:[%s3 + $0x1d8] sm:$0xff]
    %v3679 = vld [vmem:[%s3 + $0x1e0] sm:$0xff]
    %v3680 = vld [vmem:[%s3 + $0x1e8] sm:$0xff]
    %v3681 = vld [vmem:[%s3 + $0x1f0] sm:$0xff]
    %v3682 = vld [vmem:[%s3 + $0x1f8] sm:$0xff]
    %3683 = vmatprep.subr.mxu0 %v3680
    %3684 = vmatpush1.msra.mxu0 %v3679
    %3685 = vmatprep.subr.mxu0 %v3676
    %3686 = vmatpush1.msra.mxu0 %v3675
    %3687 = vmatprep.subr.mxu0 %v3672
    %3688 = vmatpush1.msra.mxu0 %v3671
    %3689 = vmatprep.subr.mxu0 %v3668
    %3690 = vmatpush1.msra.mxu0 %v3667
    %3691 = vmatprep.subr.mxu0 %v3664
    %3692 = vmatpush1.msra.mxu0 %v3663
    %3693 = vmatprep.subr.mxu0 %v3660
    %3694 = vmatpush1.msra.mxu0 %v3659
    %3695 = vmatprep.subr.mxu0 %v3656
    %3696 = vmatpush1.msra.mxu0 %v3655
    %3697 = vmatprep.subr.mxu0 %v3652
    %3698 = vmatpush1.msra.mxu0 %v3651
    %3699 = vmatprep.subr.mxu0 %v3648
    %3700 = vmatpush1.msra.mxu0 %v3647
    %3701 = vmatprep.subr.mxu0 %v3644
    %3702 = vmatpush1.msra.mxu0 %v3643
    %3703 = vmatprep.subr.mxu0 %v3640
    %3704 = vmatpush1.msra.mxu0 %v3639
    %3705 = vmatprep.subr.mxu0 %v3636
    %3706 = vmatpush1.msra.mxu0 %v3635
    %3707 = vmatprep.subr.mxu0 %v3632
    %3708 = vmatpush1.msra.mxu0 %v3631
    %3709 = vmatprep.subr.mxu0 %v3628
    %3710 = vmatpush1.msra.mxu0 %v3627
    %3711 = vmatprep.subr.mxu0 %v3624
    %3712 = vmatpush1.msra.mxu0 %v3623
    %3713 = vmatprep.subr.mxu0 %v3620
    %3714 = vmatpush1.msra.mxu0 %v3619
    %3715 = vmatprep.subr.mxu0 0.0
    %3716 = vmatpush2.msra.mxu0 0.0
    %3717 = vmatprep.subr.mxu0 0.0
    %3718 = vmatpush2.msra.mxu0 0.0
    %3719 = vmatprep.subr.mxu0 0.0
    %3720 = vmatpush2.msra.mxu0 0.0
    %3721 = vmatprep.subr.mxu0 0.0
    %3722 = vmatpush2.msra.mxu0 0.0
    %3723 = vmatprep.subr.mxu0 0.0
    %3724 = vmatpush2.msra.mxu0 0.0
    %3725 = vmatprep.subr.mxu0 0.0
    %3726 = vmatpush2.msra.mxu0 0.0
    %3727 = vmatprep.subr.mxu0 0.0
    %3728 = vmatpush2.msra.mxu0 0.0
    %3729 = vmatprep.subr.mxu0 0.0
    %3730 = vmatpush2.msra.mxu0 0.0
    %3731 = vmatprep.subr.mxu0 0.0
    %3732 = vmatpush2.msra.mxu0 0.0
    %3733 = vmatprep.subr.mxu0 0.0
    %3734 = vmatpush2.msra.mxu0 0.0
    %3735 = vmatprep.subr.mxu0 0.0
    %3736 = vmatpush2.msra.mxu0 0.0
    %3737 = vmatprep.subr.mxu0 0.0
    %3738 = vmatpush2.msra.mxu0 0.0
    %3739 = vmatprep.subr.mxu0 0.0
    %3740 = vmatpush2.msra.mxu0 0.0
    %3741 = vmatprep.subr.mxu0 0.0
    %3742 = vmatpush2.msra.mxu0 0.0
    %3743 = vmatprep.subr.mxu0 0.0
    %3744 = vmatpush2.msra.mxu0 0.0
    %3745 = vmatprep.subr.mxu0 0.0
    %3746 = vmatpush2.msra.mxu0 0.0
    %3747 = vmatprep.mubr.f32.mxu0 0.0
    %3748 = vmatmul.mubr.f32.gmra.mxu0 %v3618
    %v3749 = vpop.f32.mrf.mxu0
    %v3750 = vadd.f32 0.0, %v3749
    %v3751 = vpop.f32.mrf.mxu0
    %v3752 = vadd.f32 0.0, %v3751
    %3753 = vdwg.mxu0
    %3754 = vmatprep.subr.mxu0 %v3682
    %3755 = vmatpush1.msra.mxu0 %v3681
    %3756 = vmatprep.subr.mxu0 %v3678
    %3757 = vmatpush1.msra.mxu0 %v3677
    %3758 = vmatprep.subr.mxu0 %v3674
    %3759 = vmatpush1.msra.mxu0 %v3673
    %3760 = vmatprep.subr.mxu0 %v3670
    %3761 = vmatpush1.msra.mxu0 %v3669
    %3762 = vmatprep.subr.mxu0 %v3666
    %3763 = vmatpush1.msra.mxu0 %v3665
    %3764 = vmatprep.subr.mxu0 %v3662
    %3765 = vmatpush1.msra.mxu0 %v3661
    %3766 = vmatprep.subr.mxu0 %v3658
    %3767 = vmatpush1.msra.mxu0 %v3657
    %3768 = vmatprep.subr.mxu0 %v3654
    %3769 = vmatpush1.msra.mxu0 %v3653
    %3770 = vmatprep.subr.mxu0 %v3650
    %3771 = vmatpush1.msra.mxu0 %v3649
    %3772 = vmatprep.subr.mxu0 %v3646
    %3773 = vmatpush1.msra.mxu0 %v3645
    %3774 = vmatprep.subr.mxu0 %v3642
    %3775 = vmatpush1.msra.mxu0 %v3641
    %3776 = vmatprep.subr.mxu0 %v3638
    %3777 = vmatpush1.msra.mxu0 %v3637
    %3778 = vmatprep.subr.mxu0 %v3634
    %3779 = vmatpush1.msra.mxu0 %v3633
    %3780 = vmatprep.subr.mxu0 %v3630
    %3781 = vmatpush1.msra.mxu0 %v3629
    %3782 = vmatprep.subr.mxu0 %v3626
    %3783 = vmatpush1.msra.mxu0 %v3625
    %3784 = vmatprep.subr.mxu0 %v3622
    %3785 = vmatpush1.msra.mxu0 %v3621
    %3786 = vmatprep.subr.mxu0 0.0
    %3787 = vmatpush2.msra.mxu0 0.0
    %3788 = vmatprep.subr.mxu0 0.0
    %3789 = vmatpush2.msra.mxu0 0.0
    %3790 = vmatprep.subr.mxu0 0.0
    %3791 = vmatpush2.msra.mxu0 0.0
    %3792 = vmatprep.subr.mxu0 0.0
    %3793 = vmatpush2.msra.mxu0 0.0
    %3794 = vmatprep.subr.mxu0 0.0
    %3795 = vmatpush2.msra.mxu0 0.0
    %3796 = vmatprep.subr.mxu0 0.0
    %3797 = vmatpush2.msra.mxu0 0.0
    %3798 = vmatprep.subr.mxu0 0.0
    %3799 = vmatpush2.msra.mxu0 0.0
    %3800 = vmatprep.subr.mxu0 0.0
    %3801 = vmatpush2.msra.mxu0 0.0
    %3802 = vmatprep.subr.mxu0 0.0
    %3803 = vmatpush2.msra.mxu0 0.0
    %3804 = vmatprep.subr.mxu0 0.0
    %3805 = vmatpush2.msra.mxu0 0.0
    %3806 = vmatprep.subr.mxu0 0.0
    %3807 = vmatpush2.msra.mxu0 0.0
    %3808 = vmatprep.subr.mxu0 0.0
    %3809 = vmatpush2.msra.mxu0 0.0
    %3810 = vmatprep.subr.mxu0 0.0
    %3811 = vmatpush2.msra.mxu0 0.0
    %3812 = vmatprep.subr.mxu0 0.0
    %3813 = vmatpush2.msra.mxu0 0.0
    %3814 = vmatprep.subr.mxu0 0.0
    %3815 = vmatpush2.msra.mxu0 0.0
    %3816 = vmatprep.subr.mxu0 0.0
    %3817 = vmatpush2.msra.mxu0 0.0
    %3818 = vmatprep.mubr.f32.mxu0 0.0
    %3819 = vmatmul.mubr.f32.gmra.mxu0 %v3618
    %v3820 = vpop.f32.mrf.mxu0
    %v3821 = vadd.f32 0.0, %v3820
    %v3822 = vpop.f32.mrf.mxu0
    %v3823 = vadd.f32 0.0, %v3822
    %3824 = vdwg.mxu0
    %s3825 = sld [smem:[#allocation2 + $0x4]]
    %p3826 = scmp.ne.s32.totalorder %s3825, 0
    %s3827 = scalar_select %p3826, 1, 0
    %s3828 = scvt.s32.f32 %s3827
    %s3829 = scalar_lea.vmem %s2, 128
    %v3830 = vld [vmem:[%s3829] sm:$0xff]
    %v3831 = vld [vmem:[%s3829 + $0x8] sm:$0xff]
    %v3832 = vld [vmem:[%s3829 + $0x10] sm:$0xff]
    %v3833 = vld [vmem:[%s3829 + $0x18] sm:$0xff]
    %v3834 = vstv %s3828
    %v3835 = vmul.f32 %v3834, %v3830
    %v3836 = vmul.f32 %v3834, %v3831
    %v3837 = vmul.f32 %v3834, %v3832
    %v3838 = vmul.f32 %v3834, %v3833
    %s3839 = ssub.f32 1.0, %s3828
    %v3840 = vstv %s3839
    %v3841 = vmul.f32 %v3840, %v3750
    %v3842 = vmul.f32 %v3840, %v3752
    %v3843 = vmul.f32 %v3840, %v3821
    %v3844 = vmul.f32 %v3840, %v3823
    %v3845 = vadd.f32 %v3835, %v3841
    %v3846 = vadd.f32 %v3836, %v3842
    %v3847 = vadd.f32 %v3837, %v3843
    %v3848 = vadd.f32 %v3838, %v3844
    %v3849 = vld [vmem:[%s6] sm:$0xff]
    %v3850 = vld [vmem:[%s6 + $0x8] sm:$0xff]
    %v3851 = vld [vmem:[%s6 + $0x10] sm:$0xff]
    %v3852 = vld [vmem:[%s6 + $0x18] sm:$0xff]
    %v3853 = vld [vmem:[%s6 + $0x20] sm:$0xff]
    %v3854 = vld [vmem:[%s6 + $0x28] sm:$0xff]
    %v3855 = vld [vmem:[%s6 + $0x30] sm:$0xff]
    %v3856 = vld [vmem:[%s6 + $0x38] sm:$0xff]
    %v3857 = vld [vmem:[%s6 + $0x40] sm:$0xff]
    %v3858 = vld [vmem:[%s6 + $0x48] sm:$0xff]
    %v3859 = vld [vmem:[%s6 + $0x50] sm:$0xff]
    %v3860 = vld [vmem:[%s6 + $0x58] sm:$0xff]
    %v3861 = vld [vmem:[%s6 + $0x60] sm:$0xff]
    %v3862 = vld [vmem:[%s6 + $0x68] sm:$0xff]
    %v3863 = vld [vmem:[%s6 + $0x70] sm:$0xff]
    %v3864 = vld [vmem:[%s6 + $0x78] sm:$0xff]
    %v3865 = vld [vmem:[%s6 + $0x80] sm:$0xff]
    %v3866 = vld [vmem:[%s6 + $0x88] sm:$0xff]
    %v3867 = vld [vmem:[%s6 + $0x90] sm:$0xff]
    %v3868 = vld [vmem:[%s6 + $0x98] sm:$0xff]
    %v3869 = vld [vmem:[%s6 + $0xa0] sm:$0xff]
    %v3870 = vld [vmem:[%s6 + $0xa8] sm:$0xff]
    %v3871 = vld [vmem:[%s6 + $0xb0] sm:$0xff]
    %v3872 = vld [vmem:[%s6 + $0xb8] sm:$0xff]
    %v3873 = vld [vmem:[%s6 + $0xc0] sm:$0xff]
    %v3874 = vld [vmem:[%s6 + $0xc8] sm:$0xff]
    %v3875 = vld [vmem:[%s6 + $0xd0] sm:$0xff]
    %v3876 = vld [vmem:[%s6 + $0xd8] sm:$0xff]
    %v3877 = vld [vmem:[%s6 + $0xe0] sm:$0xff]
    %v3878 = vld [vmem:[%s6 + $0xe8] sm:$0xff]
    %v3879 = vld [vmem:[%s6 + $0xf0] sm:$0xff]
    %v3880 = vld [vmem:[%s6 + $0xf8] sm:$0xff]
    %v3881 = vld [vmem:[%s6 + $0x100] sm:$0xff]
    %v3882 = vld [vmem:[%s6 + $0x108] sm:$0xff]
    %v3883 = vld [vmem:[%s6 + $0x110] sm:$0xff]
    %v3884 = vld [vmem:[%s6 + $0x118] sm:$0xff]
    %v3885 = vld [vmem:[%s6 + $0x120] sm:$0xff]
    %v3886 = vld [vmem:[%s6 + $0x128] sm:$0xff]
    %v3887 = vld [vmem:[%s6 + $0x130] sm:$0xff]
    %v3888 = vld [vmem:[%s6 + $0x138] sm:$0xff]
    %v3889 = vld [vmem:[%s6 + $0x140] sm:$0xff]
    %v3890 = vld [vmem:[%s6 + $0x148] sm:$0xff]
    %v3891 = vld [vmem:[%s6 + $0x150] sm:$0xff]
    %v3892 = vld [vmem:[%s6 + $0x158] sm:$0xff]
    %v3893 = vld [vmem:[%s6 + $0x160] sm:$0xff]
    %v3894 = vld [vmem:[%s6 + $0x168] sm:$0xff]
    %v3895 = vld [vmem:[%s6 + $0x170] sm:$0xff]
    %v3896 = vld [vmem:[%s6 + $0x178] sm:$0xff]
    %v3897 = vld [vmem:[%s6 + $0x180] sm:$0xff]
    %v3898 = vld [vmem:[%s6 + $0x188] sm:$0xff]
    %v3899 = vld [vmem:[%s6 + $0x190] sm:$0xff]
    %v3900 = vld [vmem:[%s6 + $0x198] sm:$0xff]
    %v3901 = vld [vmem:[%s6 + $0x1a0] sm:$0xff]
    %v3902 = vld [vmem:[%s6 + $0x1a8] sm:$0xff]
    %v3903 = vld [vmem:[%s6 + $0x1b0] sm:$0xff]
    %v3904 = vld [vmem:[%s6 + $0x1b8] sm:$0xff]
    %v3905 = vld [vmem:[%s6 + $0x1c0] sm:$0xff]
    %v3906 = vld [vmem:[%s6 + $0x1c8] sm:$0xff]
    %v3907 = vld [vmem:[%s6 + $0x1d0] sm:$0xff]
    %v3908 = vld [vmem:[%s6 + $0x1d8] sm:$0xff]
    %v3909 = vld [vmem:[%s6 + $0x1e0] sm:$0xff]
    %v3910 = vld [vmem:[%s6 + $0x1e8] sm:$0xff]
    %v3911 = vld [vmem:[%s6 + $0x1f0] sm:$0xff]
    %v3912 = vld [vmem:[%s6 + $0x1f8] sm:$0xff]
    %3913 = vmatprep.subr.mxu0 %v3910
    %3914 = vmatpush1.msra.mxu0 %v3909
    %3915 = vmatprep.subr.mxu0 %v3906
    %3916 = vmatpush1.msra.mxu0 %v3905
    %3917 = vmatprep.subr.mxu0 %v3902
    %3918 = vmatpush1.msra.mxu0 %v3901
    %3919 = vmatprep.subr.mxu0 %v3898
    %3920 = vmatpush1.msra.mxu0 %v3897
    %3921 = vmatprep.subr.mxu0 %v3894
    %3922 = vmatpush1.msra.mxu0 %v3893
    %3923 = vmatprep.subr.mxu0 %v3890
    %3924 = vmatpush1.msra.mxu0 %v3889
    %3925 = vmatprep.subr.mxu0 %v3886
    %3926 = vmatpush1.msra.mxu0 %v3885
    %3927 = vmatprep.subr.mxu0 %v3882
    %3928 = vmatpush1.msra.mxu0 %v3881
    %3929 = vmatprep.subr.mxu0 %v3878
    %3930 = vmatpush1.msra.mxu0 %v3877
    %3931 = vmatprep.subr.mxu0 %v3874
    %3932 = vmatpush1.msra.mxu0 %v3873
    %3933 = vmatprep.subr.mxu0 %v3870
    %3934 = vmatpush1.msra.mxu0 %v3869
    %3935 = vmatprep.subr.mxu0 %v3866
    %3936 = vmatpush1.msra.mxu0 %v3865
    %3937 = vmatprep.subr.mxu0 %v3862
    %3938 = vmatpush1.msra.mxu0 %v3861
    %3939 = vmatprep.subr.mxu0 %v3858
    %3940 = vmatpush1.msra.mxu0 %v3857
    %3941 = vmatprep.subr.mxu0 %v3854
    %3942 = vmatpush1.msra.mxu0 %v3853
    %3943 = vmatprep.subr.mxu0 %v3850
    %3944 = vmatpush1.msra.mxu0 %v3849
    %3945 = vmatprep.subr.mxu0 0.0
    %3946 = vmatpush2.msra.mxu0 0.0
    %3947 = vmatprep.subr.mxu0 0.0
    %3948 = vmatpush2.msra.mxu0 0.0
    %3949 = vmatprep.subr.mxu0 0.0
    %3950 = vmatpush2.msra.mxu0 0.0
    %3951 = vmatprep.subr.mxu0 0.0
    %3952 = vmatpush2.msra.mxu0 0.0
    %3953 = vmatprep.subr.mxu0 0.0
    %3954 = vmatpush2.msra.mxu0 0.0
    %3955 = vmatprep.subr.mxu0 0.0
    %3956 = vmatpush2.msra.mxu0 0.0
    %3957 = vmatprep.subr.mxu0 0.0
    %3958 = vmatpush2.msra.mxu0 0.0
    %3959 = vmatprep.subr.mxu0 0.0
    %3960 = vmatpush2.msra.mxu0 0.0
    %3961 = vmatprep.subr.mxu0 0.0
    %3962 = vmatpush2.msra.mxu0 0.0
    %3963 = vmatprep.subr.mxu0 0.0
    %3964 = vmatpush2.msra.mxu0 0.0
    %3965 = vmatprep.subr.mxu0 0.0
    %3966 = vmatpush2.msra.mxu0 0.0
    %3967 = vmatprep.subr.mxu0 0.0
    %3968 = vmatpush2.msra.mxu0 0.0
    %3969 = vmatprep.subr.mxu0 0.0
    %3970 = vmatpush2.msra.mxu0 0.0
    %3971 = vmatprep.subr.mxu0 0.0
    %3972 = vmatpush2.msra.mxu0 0.0
    %3973 = vmatprep.subr.mxu0 0.0
    %3974 = vmatpush2.msra.mxu0 0.0
    %3975 = vmatprep.subr.mxu0 0.0
    %3976 = vmatpush2.msra.mxu0 0.0
    %3977 = vmatprep.mubr.f32.mxu0 0.0
    %3978 = vmatmul.mubr.f32.gmra.mxu0 %v3509
    %v3979 = vpop.f32.mrf.mxu0
    %v3980 = vadd.f32 0.0, %v3979
    %v3981 = vpop.f32.mrf.mxu0
    %v3982 = vadd.f32 0.0, %v3981
    %3983 = vdwg.mxu0
    %3984 = vmatprep.subr.mxu0 %v3912
    %3985 = vmatpush1.msra.mxu0 %v3911
    %3986 = vmatprep.subr.mxu0 %v3908
    %3987 = vmatpush1.msra.mxu0 %v3907
    %3988 = vmatprep.subr.mxu0 %v3904
    %3989 = vmatpush1.msra.mxu0 %v3903
    %3990 = vmatprep.subr.mxu0 %v3900
    %3991 = vmatpush1.msra.mxu0 %v3899
    %3992 = vmatprep.subr.mxu0 %v3896
    %3993 = vmatpush1.msra.mxu0 %v3895
    %3994 = vmatprep.subr.mxu0 %v3892
    %3995 = vmatpush1.msra.mxu0 %v3891
    %3996 = vmatprep.subr.mxu0 %v3888
    %3997 = vmatpush1.msra.mxu0 %v3887
    %3998 = vmatprep.subr.mxu0 %v3884
    %3999 = vmatpush1.msra.mxu0 %v3883
    %4000 = vmatprep.subr.mxu0 %v3880
    %4001 = vmatpush1.msra.mxu0 %v3879
    %4002 = vmatprep.subr.mxu0 %v3876
    %4003 = vmatpush1.msra.mxu0 %v3875
    %4004 = vmatprep.subr.mxu0 %v3872
    %4005 = vmatpush1.msra.mxu0 %v3871
    %4006 = vmatprep.subr.mxu0 %v3868
    %4007 = vmatpush1.msra.mxu0 %v3867
    %4008 = vmatprep.subr.mxu0 %v3864
    %4009 = vmatpush1.msra.mxu0 %v3863
    %4010 = vmatprep.subr.mxu0 %v3860
    %4011 = vmatpush1.msra.mxu0 %v3859
    %4012 = vmatprep.subr.mxu0 %v3856
    %4013 = vmatpush1.msra.mxu0 %v3855
    %4014 = vmatprep.subr.mxu0 %v3852
    %4015 = vmatpush1.msra.mxu0 %v3851
    %4016 = vmatprep.subr.mxu0 0.0
    %4017 = vmatpush2.msra.mxu0 0.0
    %4018 = vmatprep.subr.mxu0 0.0
    %4019 = vmatpush2.msra.mxu0 0.0
    %4020 = vmatprep.subr.mxu0 0.0
    %4021 = vmatpush2.msra.mxu0 0.0
    %4022 = vmatprep.subr.mxu0 0.0
    %4023 = vmatpush2.msra.mxu0 0.0
    %4024 = vmatprep.subr.mxu0 0.0
    %4025 = vmatpush2.msra.mxu0 0.0
    %4026 = vmatprep.subr.mxu0 0.0
    %4027 = vmatpush2.msra.mxu0 0.0
    %4028 = vmatprep.subr.mxu0 0.0
    %4029 = vmatpush2.msra.mxu0 0.0
    %4030 = vmatprep.subr.mxu0 0.0
    %4031 = vmatpush2.msra.mxu0 0.0
    %4032 = vmatprep.subr.mxu0 0.0
    %4033 = vmatpush2.msra.mxu0 0.0
    %4034 = vmatprep.subr.mxu0 0.0
    %4035 = vmatpush2.msra.mxu0 0.0
    %4036 = vmatprep.subr.mxu0 0.0
    %4037 = vmatpush2.msra.mxu0 0.0
    %4038 = vmatprep.subr.mxu0 0.0
    %4039 = vmatpush2.msra.mxu0 0.0
    %4040 = vmatprep.subr.mxu0 0.0
    %4041 = vmatpush2.msra.mxu0 0.0
    %4042 = vmatprep.subr.mxu0 0.0
    %4043 = vmatpush2.msra.mxu0 0.0
    %4044 = vmatprep.subr.mxu0 0.0
    %4045 = vmatpush2.msra.mxu0 0.0
    %4046 = vmatprep.subr.mxu0 0.0
    %4047 = vmatpush2.msra.mxu0 0.0
    %4048 = vmatprep.mubr.f32.mxu0 0.0
    %4049 = vmatmul.mubr.f32.gmra.mxu0 %v3509
    %v4050 = vpop.f32.mrf.mxu0
    %v4051 = vadd.f32 0.0, %v4050
    %v4052 = vpop.f32.mrf.mxu0
    %v4053 = vadd.f32 0.0, %v4052
    %4054 = vdwg.mxu0
    %v4055 = vadd.f32 %v3845, %v3980
    %v4056 = vadd.f32 %v3846, %v3982
    %v4057 = vadd.f32 %v3847, %v4051
    %v4058 = vadd.f32 %v3848, %v4053
    %v4059 = vadd.f32 %v4055, %v75
    %v4060 = vadd.f32 %v4056, %v79
    %v4061 = vadd.f32 %v4057, %v83
    %v4062 = vadd.f32 %v4058, %v87
    %v4063 = vxor.u32 %v4059, 2147483648
    %v4064 = vmul.f32 %v4063, 1.442695
    %v4065 = vpow.pop %v4064
    %v4066 = vadd.f32 %v4065, 1.0
    %v4067 = vrcp.pop %v4066
    %v4068 = vmul.f32 1.0, %v4067
    %v4069 = vxor.u32 %v4060, 2147483648
    %v4070 = vmul.f32 %v4069, 1.442695
    %v4071 = vpow.pop %v4070
    %v4072 = vadd.f32 %v4071, 1.0
    %v4073 = vrcp.pop %v4072
    %v4074 = vmul.f32 1.0, %v4073
    %v4075 = vmul.f32 %v4068, %v4062
    %v4076 = vadd.f32 %v4061, %v4075
    %v4077 = vtanh.pop %v4076
    %v4078 = vsub.f32 1.0, %v4074
    %v4079 = vmul.f32 %v4078, %v4077
    %v4080 = vmul.f32 %v4074, %v3509
    %v4081 = vadd.f32 %v4079, %v4080
    %v4082 = vld [vmem:[%s8] sm:$0xff]
    %v4083 = vld [vmem:[%s8 + $0x8] sm:$0xff]
    %v4084 = vld [vmem:[%s8 + $0x10] sm:$0xff]
    %v4085 = vld [vmem:[%s8 + $0x18] sm:$0xff]
    %v4086 = vld [vmem:[%s8 + $0x20] sm:$0xff]
    %v4087 = vld [vmem:[%s8 + $0x28] sm:$0xff]
    %v4088 = vld [vmem:[%s8 + $0x30] sm:$0xff]
    %v4089 = vld [vmem:[%s8 + $0x38] sm:$0xff]
    %v4090 = vld [vmem:[%s8 + $0x40] sm:$0xff]
    %v4091 = vld [vmem:[%s8 + $0x48] sm:$0xff]
    %v4092 = vld [vmem:[%s8 + $0x50] sm:$0xff]
    %v4093 = vld [vmem:[%s8 + $0x58] sm:$0xff]
    %v4094 = vld [vmem:[%s8 + $0x60] sm:$0xff]
    %v4095 = vld [vmem:[%s8 + $0x68] sm:$0xff]
    %v4096 = vld [vmem:[%s8 + $0x70] sm:$0xff]
    %v4097 = vld [vmem:[%s8 + $0x78] sm:$0xff]
    %4098 = vmatprep.subr.mxu0 0.0
    %4099 = vmatpush1.msra.mxu0 %v4097
    %4100 = vmatprep.subr.mxu0 0.0
    %4101 = vmatpush1.msra.mxu0 %v4096
    %4102 = vmatprep.subr.mxu0 0.0
    %4103 = vmatpush1.msra.mxu0 %v4095
    %4104 = vmatprep.subr.mxu0 0.0
    %4105 = vmatpush1.msra.mxu0 %v4094
    %4106 = vmatprep.subr.mxu0 0.0
    %4107 = vmatpush1.msra.mxu0 %v4093
    %4108 = vmatprep.subr.mxu0 0.0
    %4109 = vmatpush1.msra.mxu0 %v4092
    %4110 = vmatprep.subr.mxu0 0.0
    %4111 = vmatpush1.msra.mxu0 %v4091
    %4112 = vmatprep.subr.mxu0 0.0
    %4113 = vmatpush1.msra.mxu0 %v4090
    %4114 = vmatprep.subr.mxu0 0.0
    %4115 = vmatpush1.msra.mxu0 %v4089
    %4116 = vmatprep.subr.mxu0 0.0
    %4117 = vmatpush1.msra.mxu0 %v4088
    %4118 = vmatprep.subr.mxu0 0.0
    %4119 = vmatpush1.msra.mxu0 %v4087
    %4120 = vmatprep.subr.mxu0 0.0
    %4121 = vmatpush1.msra.mxu0 %v4086
    %4122 = vmatprep.subr.mxu0 0.0
    %4123 = vmatpush1.msra.mxu0 %v4085
    %4124 = vmatprep.subr.mxu0 0.0
    %4125 = vmatpush1.msra.mxu0 %v4084
    %4126 = vmatprep.subr.mxu0 0.0
    %4127 = vmatpush1.msra.mxu0 %v4083
    %4128 = vmatprep.subr.mxu0 0.0
    %4129 = vmatpush1.msra.mxu0 %v4082
    %4130 = vmatprep.subr.mxu0 0.0
    %4131 = vmatpush2.msra.mxu0 0.0
    %4132 = vmatprep.subr.mxu0 0.0
    %4133 = vmatpush2.msra.mxu0 0.0
    %4134 = vmatprep.subr.mxu0 0.0
    %4135 = vmatpush2.msra.mxu0 0.0
    %4136 = vmatprep.subr.mxu0 0.0
    %4137 = vmatpush2.msra.mxu0 0.0
    %4138 = vmatprep.subr.mxu0 0.0
    %4139 = vmatpush2.msra.mxu0 0.0
    %4140 = vmatprep.subr.mxu0 0.0
    %4141 = vmatpush2.msra.mxu0 0.0
    %4142 = vmatprep.subr.mxu0 0.0
    %4143 = vmatpush2.msra.mxu0 0.0
    %4144 = vmatprep.subr.mxu0 0.0
    %4145 = vmatpush2.msra.mxu0 0.0
    %4146 = vmatprep.subr.mxu0 0.0
    %4147 = vmatpush2.msra.mxu0 0.0
    %4148 = vmatprep.subr.mxu0 0.0
    %4149 = vmatpush2.msra.mxu0 0.0
    %4150 = vmatprep.subr.mxu0 0.0
    %4151 = vmatpush2.msra.mxu0 0.0
    %4152 = vmatprep.subr.mxu0 0.0
    %4153 = vmatpush2.msra.mxu0 0.0
    %4154 = vmatprep.subr.mxu0 0.0
    %4155 = vmatpush2.msra.mxu0 0.0
    %4156 = vmatprep.subr.mxu0 0.0
    %4157 = vmatpush2.msra.mxu0 0.0
    %4158 = vmatprep.subr.mxu0 0.0
    %4159 = vmatpush2.msra.mxu0 0.0
    %4160 = vmatprep.subr.mxu0 0.0
    %4161 = vmatpush2.msra.mxu0 0.0
    %4162 = vmatprep.mubr.f32.mxu0 0.0
    %4163 = vmatmul.mubr.f32.gmra.mxu0 %v4081
    %v4164 = vpop.f32.mrf.mxu0
    %v4165 = vadd.f32 %v97, %v4164
    %v4166 = vpop.f32.mrf.mxu0
    %4167 = vdwg.mxu0
    %s4168 = scalar_lea.vmem %s10, 40
    %4169 = vst [vmem:[%s4168] sm:$0xff] %v4165
    %4170 = vmax.xlane.f32.xlu0 %v4165
    %v4171 = vpop.xlane.xlu0 %4170
    %vm4172 = vcmp.eq.f32.partialorder %v4165, %v4171
    %v4173 = vsel %vm4172, %v1556, 128
    %v4174 = vand.u32 %v4173, 65535
    %v4175 = vshra.s32 %v4173, 16
    %v4176 = vcvt.s32.f32 %v4174
    %v4177 = vcvt.s32.f32 %v4175
    %4178 = vmin.xlane.f32.xlu0 %v4177
    %v4179 = vpop.xlane.xlu0 %4178
    %vm4180 = vcmp.eq.f32.partialorder %v4177, %v4179
    %v4181 = vsel %vm4180, %v4176, inf
    %4182 = vmin.xlane.f32.xlu0 %v4181
    %v4183 = vpop.xlane.xlu0 %4182
    %v4184 = vcvt.f32.s32 %v4183
    %v4185 = vcvt.f32.s32 %v4179
    %v4186 = vshll.u32 %v4185, 16
    %v4187 = vadd.s32 %v4186, %v4184
    %vm4188 = vcmp.eq.s32.totalorder %v1556, %v4187
    %v4189 = vsel %vm4188, 1, 0
    %v4190 = vcvt.s32.f32 %v4189
    %v4191 = vld [vmem:[%s3] sm:$0xff]
    %v4192 = vld [vmem:[%s3 + $0x8] sm:$0xff]
    %v4193 = vld [vmem:[%s3 + $0x10] sm:$0xff]
    %v4194 = vld [vmem:[%s3 + $0x18] sm:$0xff]
    %v4195 = vld [vmem:[%s3 + $0x20] sm:$0xff]
    %v4196 = vld [vmem:[%s3 + $0x28] sm:$0xff]
    %v4197 = vld [vmem:[%s3 + $0x30] sm:$0xff]
    %v4198 = vld [vmem:[%s3 + $0x38] sm:$0xff]
    %v4199 = vld [vmem:[%s3 + $0x40] sm:$0xff]
    %v4200 = vld [vmem:[%s3 + $0x48] sm:$0xff]
    %v4201 = vld [vmem:[%s3 + $0x50] sm:$0xff]
    %v4202 = vld [vmem:[%s3 + $0x58] sm:$0xff]
    %v4203 = vld [vmem:[%s3 + $0x60] sm:$0xff]
    %v4204 = vld [vmem:[%s3 + $0x68] sm:$0xff]
    %v4205 = vld [vmem:[%s3 + $0x70] sm:$0xff]
    %v4206 = vld [vmem:[%s3 + $0x78] sm:$0xff]
    %v4207 = vld [vmem:[%s3 + $0x80] sm:$0xff]
    %v4208 = vld [vmem:[%s3 + $0x88] sm:$0xff]
    %v4209 = vld [vmem:[%s3 + $0x90] sm:$0xff]
    %v4210 = vld [vmem:[%s3 + $0x98] sm:$0xff]
    %v4211 = vld [vmem:[%s3 + $0xa0] sm:$0xff]
    %v4212 = vld [vmem:[%s3 + $0xa8] sm:$0xff]
    %v4213 = vld [vmem:[%s3 + $0xb0] sm:$0xff]
    %v4214 = vld [vmem:[%s3 + $0xb8] sm:$0xff]
    %v4215 = vld [vmem:[%s3 + $0xc0] sm:$0xff]
    %v4216 = vld [vmem:[%s3 + $0xc8] sm:$0xff]
    %v4217 = vld [vmem:[%s3 + $0xd0] sm:$0xff]
    %v4218 = vld [vmem:[%s3 + $0xd8] sm:$0xff]
    %v4219 = vld [vmem:[%s3 + $0xe0] sm:$0xff]
    %v4220 = vld [vmem:[%s3 + $0xe8] sm:$0xff]
    %v4221 = vld [vmem:[%s3 + $0xf0] sm:$0xff]
    %v4222 = vld [vmem:[%s3 + $0xf8] sm:$0xff]
    %v4223 = vld [vmem:[%s3 + $0x100] sm:$0xff]
    %v4224 = vld [vmem:[%s3 + $0x108] sm:$0xff]
    %v4225 = vld [vmem:[%s3 + $0x110] sm:$0xff]
    %v4226 = vld [vmem:[%s3 + $0x118] sm:$0xff]
    %v4227 = vld [vmem:[%s3 + $0x120] sm:$0xff]
    %v4228 = vld [vmem:[%s3 + $0x128] sm:$0xff]
    %v4229 = vld [vmem:[%s3 + $0x130] sm:$0xff]
    %v4230 = vld [vmem:[%s3 + $0x138] sm:$0xff]
    %v4231 = vld [vmem:[%s3 + $0x140] sm:$0xff]
    %v4232 = vld [vmem:[%s3 + $0x148] sm:$0xff]
    %v4233 = vld [vmem:[%s3 + $0x150] sm:$0xff]
    %v4234 = vld [vmem:[%s3 + $0x158] sm:$0xff]
    %v4235 = vld [vmem:[%s3 + $0x160] sm:$0xff]
    %v4236 = vld [vmem:[%s3 + $0x168] sm:$0xff]
    %v4237 = vld [vmem:[%s3 + $0x170] sm:$0xff]
    %v4238 = vld [vmem:[%s3 + $0x178] sm:$0xff]
    %v4239 = vld [vmem:[%s3 + $0x180] sm:$0xff]
    %v4240 = vld [vmem:[%s3 + $0x188] sm:$0xff]
    %v4241 = vld [vmem:[%s3 + $0x190] sm:$0xff]
    %v4242 = vld [vmem:[%s3 + $0x198] sm:$0xff]
    %v4243 = vld [vmem:[%s3 + $0x1a0] sm:$0xff]
    %v4244 = vld [vmem:[%s3 + $0x1a8] sm:$0xff]
    %v4245 = vld [vmem:[%s3 + $0x1b0] sm:$0xff]
    %v4246 = vld [vmem:[%s3 + $0x1b8] sm:$0xff]
    %v4247 = vld [vmem:[%s3 + $0x1c0] sm:$0xff]
    %v4248 = vld [vmem:[%s3 + $0x1c8] sm:$0xff]
    %v4249 = vld [vmem:[%s3 + $0x1d0] sm:$0xff]
    %v4250 = vld [vmem:[%s3 + $0x1d8] sm:$0xff]
    %v4251 = vld [vmem:[%s3 + $0x1e0] sm:$0xff]
    %v4252 = vld [vmem:[%s3 + $0x1e8] sm:$0xff]
    %v4253 = vld [vmem:[%s3 + $0x1f0] sm:$0xff]
    %v4254 = vld [vmem:[%s3 + $0x1f8] sm:$0xff]
    %4255 = vmatprep.subr.mxu0 %v4252
    %4256 = vmatpush1.msra.mxu0 %v4251
    %4257 = vmatprep.subr.mxu0 %v4248
    %4258 = vmatpush1.msra.mxu0 %v4247
    %4259 = vmatprep.subr.mxu0 %v4244
    %4260 = vmatpush1.msra.mxu0 %v4243
    %4261 = vmatprep.subr.mxu0 %v4240
    %4262 = vmatpush1.msra.mxu0 %v4239
    %4263 = vmatprep.subr.mxu0 %v4236
    %4264 = vmatpush1.msra.mxu0 %v4235
    %4265 = vmatprep.subr.mxu0 %v4232
    %4266 = vmatpush1.msra.mxu0 %v4231
    %4267 = vmatprep.subr.mxu0 %v4228
    %4268 = vmatpush1.msra.mxu0 %v4227
    %4269 = vmatprep.subr.mxu0 %v4224
    %4270 = vmatpush1.msra.mxu0 %v4223
    %4271 = vmatprep.subr.mxu0 %v4220
    %4272 = vmatpush1.msra.mxu0 %v4219
    %4273 = vmatprep.subr.mxu0 %v4216
    %4274 = vmatpush1.msra.mxu0 %v4215
    %4275 = vmatprep.subr.mxu0 %v4212
    %4276 = vmatpush1.msra.mxu0 %v4211
    %4277 = vmatprep.subr.mxu0 %v4208
    %4278 = vmatpush1.msra.mxu0 %v4207
    %4279 = vmatprep.subr.mxu0 %v4204
    %4280 = vmatpush1.msra.mxu0 %v4203
    %4281 = vmatprep.subr.mxu0 %v4200
    %4282 = vmatpush1.msra.mxu0 %v4199
    %4283 = vmatprep.subr.mxu0 %v4196
    %4284 = vmatpush1.msra.mxu0 %v4195
    %4285 = vmatprep.subr.mxu0 %v4192
    %4286 = vmatpush1.msra.mxu0 %v4191
    %4287 = vmatprep.subr.mxu0 0.0
    %4288 = vmatpush2.msra.mxu0 0.0
    %4289 = vmatprep.subr.mxu0 0.0
    %4290 = vmatpush2.msra.mxu0 0.0
    %4291 = vmatprep.subr.mxu0 0.0
    %4292 = vmatpush2.msra.mxu0 0.0
    %4293 = vmatprep.subr.mxu0 0.0
    %4294 = vmatpush2.msra.mxu0 0.0
    %4295 = vmatprep.subr.mxu0 0.0
    %4296 = vmatpush2.msra.mxu0 0.0
    %4297 = vmatprep.subr.mxu0 0.0
    %4298 = vmatpush2.msra.mxu0 0.0
    %4299 = vmatprep.subr.mxu0 0.0
    %4300 = vmatpush2.msra.mxu0 0.0
    %4301 = vmatprep.subr.mxu0 0.0
    %4302 = vmatpush2.msra.mxu0 0.0
    %4303 = vmatprep.subr.mxu0 0.0
    %4304 = vmatpush2.msra.mxu0 0.0
    %4305 = vmatprep.subr.mxu0 0.0
    %4306 = vmatpush2.msra.mxu0 0.0
    %4307 = vmatprep.subr.mxu0 0.0
    %4308 = vmatpush2.msra.mxu0 0.0
    %4309 = vmatprep.subr.mxu0 0.0
    %4310 = vmatpush2.msra.mxu0 0.0
    %4311 = vmatprep.subr.mxu0 0.0
    %4312 = vmatpush2.msra.mxu0 0.0
    %4313 = vmatprep.subr.mxu0 0.0
    %4314 = vmatpush2.msra.mxu0 0.0
    %4315 = vmatprep.subr.mxu0 0.0
    %4316 = vmatpush2.msra.mxu0 0.0
    %4317 = vmatprep.subr.mxu0 0.0
    %4318 = vmatpush2.msra.mxu0 0.0
    %4319 = vmatprep.mubr.f32.mxu0 0.0
    %4320 = vmatmul.mubr.f32.gmra.mxu0 %v4190
    %v4321 = vpop.f32.mrf.mxu0
    %v4322 = vadd.f32 0.0, %v4321
    %v4323 = vpop.f32.mrf.mxu0
    %v4324 = vadd.f32 0.0, %v4323
    %4325 = vdwg.mxu0
    %4326 = vmatprep.subr.mxu0 %v4254
    %4327 = vmatpush1.msra.mxu0 %v4253
    %4328 = vmatprep.subr.mxu0 %v4250
    %4329 = vmatpush1.msra.mxu0 %v4249
    %4330 = vmatprep.subr.mxu0 %v4246
    %4331 = vmatpush1.msra.mxu0 %v4245
    %4332 = vmatprep.subr.mxu0 %v4242
    %4333 = vmatpush1.msra.mxu0 %v4241
    %4334 = vmatprep.subr.mxu0 %v4238
    %4335 = vmatpush1.msra.mxu0 %v4237
    %4336 = vmatprep.subr.mxu0 %v4234
    %4337 = vmatpush1.msra.mxu0 %v4233
    %4338 = vmatprep.subr.mxu0 %v4230
    %4339 = vmatpush1.msra.mxu0 %v4229
    %4340 = vmatprep.subr.mxu0 %v4226
    %4341 = vmatpush1.msra.mxu0 %v4225
    %4342 = vmatprep.subr.mxu0 %v4222
    %4343 = vmatpush1.msra.mxu0 %v4221
    %4344 = vmatprep.subr.mxu0 %v4218
    %4345 = vmatpush1.msra.mxu0 %v4217
    %4346 = vmatprep.subr.mxu0 %v4214
    %4347 = vmatpush1.msra.mxu0 %v4213
    %4348 = vmatprep.subr.mxu0 %v4210
    %4349 = vmatpush1.msra.mxu0 %v4209
    %4350 = vmatprep.subr.mxu0 %v4206
    %4351 = vmatpush1.msra.mxu0 %v4205
    %4352 = vmatprep.subr.mxu0 %v4202
    %4353 = vmatpush1.msra.mxu0 %v4201
    %4354 = vmatprep.subr.mxu0 %v4198
    %4355 = vmatpush1.msra.mxu0 %v4197
    %4356 = vmatprep.subr.mxu0 %v4194
    %4357 = vmatpush1.msra.mxu0 %v4193
    %4358 = vmatprep.subr.mxu0 0.0
    %4359 = vmatpush2.msra.mxu0 0.0
    %4360 = vmatprep.subr.mxu0 0.0
    %4361 = vmatpush2.msra.mxu0 0.0
    %4362 = vmatprep.subr.mxu0 0.0
    %4363 = vmatpush2.msra.mxu0 0.0
    %4364 = vmatprep.subr.mxu0 0.0
    %4365 = vmatpush2.msra.mxu0 0.0
    %4366 = vmatprep.subr.mxu0 0.0
    %4367 = vmatpush2.msra.mxu0 0.0
    %4368 = vmatprep.subr.mxu0 0.0
    %4369 = vmatpush2.msra.mxu0 0.0
    %4370 = vmatprep.subr.mxu0 0.0
    %4371 = vmatpush2.msra.mxu0 0.0
    %4372 = vmatprep.subr.mxu0 0.0
    %4373 = vmatpush2.msra.mxu0 0.0
    %4374 = vmatprep.subr.mxu0 0.0
    %4375 = vmatpush2.msra.mxu0 0.0
    %4376 = vmatprep.subr.mxu0 0.0
    %4377 = vmatpush2.msra.mxu0 0.0
    %4378 = vmatprep.subr.mxu0 0.0
    %4379 = vmatpush2.msra.mxu0 0.0
    %4380 = vmatprep.subr.mxu0 0.0
    %4381 = vmatpush2.msra.mxu0 0.0
    %4382 = vmatprep.subr.mxu0 0.0
    %4383 = vmatpush2.msra.mxu0 0.0
    %4384 = vmatprep.subr.mxu0 0.0
    %4385 = vmatpush2.msra.mxu0 0.0
    %4386 = vmatprep.subr.mxu0 0.0
    %4387 = vmatpush2.msra.mxu0 0.0
    %4388 = vmatprep.subr.mxu0 0.0
    %4389 = vmatpush2.msra.mxu0 0.0
    %4390 = vmatprep.mubr.f32.mxu0 0.0
    %4391 = vmatmul.mubr.f32.gmra.mxu0 %v4190
    %v4392 = vpop.f32.mrf.mxu0
    %v4393 = vadd.f32 0.0, %v4392
    %v4394 = vpop.f32.mrf.mxu0
    %v4395 = vadd.f32 0.0, %v4394
    %4396 = vdwg.mxu0
    %s4397 = sld [smem:[#allocation2 + $0x5]]
    %p4398 = scmp.ne.s32.totalorder %s4397, 0
    %s4399 = scalar_select %p4398, 1, 0
    %s4400 = scvt.s32.f32 %s4399
    %s4401 = scalar_lea.vmem %s2, 160
    %v4402 = vld [vmem:[%s4401] sm:$0xff]
    %v4403 = vld [vmem:[%s4401 + $0x8] sm:$0xff]
    %v4404 = vld [vmem:[%s4401 + $0x10] sm:$0xff]
    %v4405 = vld [vmem:[%s4401 + $0x18] sm:$0xff]
    %v4406 = vstv %s4400
    %v4407 = vmul.f32 %v4406, %v4402
    %v4408 = vmul.f32 %v4406, %v4403
    %v4409 = vmul.f32 %v4406, %v4404
    %v4410 = vmul.f32 %v4406, %v4405
    %s4411 = ssub.f32 1.0, %s4400
    %v4412 = vstv %s4411
    %v4413 = vmul.f32 %v4412, %v4322
    %v4414 = vmul.f32 %v4412, %v4324
    %v4415 = vmul.f32 %v4412, %v4393
    %v4416 = vmul.f32 %v4412, %v4395
    %v4417 = vadd.f32 %v4407, %v4413
    %v4418 = vadd.f32 %v4408, %v4414
    %v4419 = vadd.f32 %v4409, %v4415
    %v4420 = vadd.f32 %v4410, %v4416
    %v4421 = vld [vmem:[%s6] sm:$0xff]
    %v4422 = vld [vmem:[%s6 + $0x8] sm:$0xff]
    %v4423 = vld [vmem:[%s6 + $0x10] sm:$0xff]
    %v4424 = vld [vmem:[%s6 + $0x18] sm:$0xff]
    %v4425 = vld [vmem:[%s6 + $0x20] sm:$0xff]
    %v4426 = vld [vmem:[%s6 + $0x28] sm:$0xff]
    %v4427 = vld [vmem:[%s6 + $0x30] sm:$0xff]
    %v4428 = vld [vmem:[%s6 + $0x38] sm:$0xff]
    %v4429 = vld [vmem:[%s6 + $0x40] sm:$0xff]
    %v4430 = vld [vmem:[%s6 + $0x48] sm:$0xff]
    %v4431 = vld [vmem:[%s6 + $0x50] sm:$0xff]
    %v4432 = vld [vmem:[%s6 + $0x58] sm:$0xff]
    %v4433 = vld [vmem:[%s6 + $0x60] sm:$0xff]
    %v4434 = vld [vmem:[%s6 + $0x68] sm:$0xff]
    %v4435 = vld [vmem:[%s6 + $0x70] sm:$0xff]
    %v4436 = vld [vmem:[%s6 + $0x78] sm:$0xff]
    %v4437 = vld [vmem:[%s6 + $0x80] sm:$0xff]
    %v4438 = vld [vmem:[%s6 + $0x88] sm:$0xff]
    %v4439 = vld [vmem:[%s6 + $0x90] sm:$0xff]
    %v4440 = vld [vmem:[%s6 + $0x98] sm:$0xff]
    %v4441 = vld [vmem:[%s6 + $0xa0] sm:$0xff]
    %v4442 = vld [vmem:[%s6 + $0xa8] sm:$0xff]
    %v4443 = vld [vmem:[%s6 + $0xb0] sm:$0xff]
    %v4444 = vld [vmem:[%s6 + $0xb8] sm:$0xff]
    %v4445 = vld [vmem:[%s6 + $0xc0] sm:$0xff]
    %v4446 = vld [vmem:[%s6 + $0xc8] sm:$0xff]
    %v4447 = vld [vmem:[%s6 + $0xd0] sm:$0xff]
    %v4448 = vld [vmem:[%s6 + $0xd8] sm:$0xff]
    %v4449 = vld [vmem:[%s6 + $0xe0] sm:$0xff]
    %v4450 = vld [vmem:[%s6 + $0xe8] sm:$0xff]
    %v4451 = vld [vmem:[%s6 + $0xf0] sm:$0xff]
    %v4452 = vld [vmem:[%s6 + $0xf8] sm:$0xff]
    %v4453 = vld [vmem:[%s6 + $0x100] sm:$0xff]
    %v4454 = vld [vmem:[%s6 + $0x108] sm:$0xff]
    %v4455 = vld [vmem:[%s6 + $0x110] sm:$0xff]
    %v4456 = vld [vmem:[%s6 + $0x118] sm:$0xff]
    %v4457 = vld [vmem:[%s6 + $0x120] sm:$0xff]
    %v4458 = vld [vmem:[%s6 + $0x128] sm:$0xff]
    %v4459 = vld [vmem:[%s6 + $0x130] sm:$0xff]
    %v4460 = vld [vmem:[%s6 + $0x138] sm:$0xff]
    %v4461 = vld [vmem:[%s6 + $0x140] sm:$0xff]
    %v4462 = vld [vmem:[%s6 + $0x148] sm:$0xff]
    %v4463 = vld [vmem:[%s6 + $0x150] sm:$0xff]
    %v4464 = vld [vmem:[%s6 + $0x158] sm:$0xff]
    %v4465 = vld [vmem:[%s6 + $0x160] sm:$0xff]
    %v4466 = vld [vmem:[%s6 + $0x168] sm:$0xff]
    %v4467 = vld [vmem:[%s6 + $0x170] sm:$0xff]
    %v4468 = vld [vmem:[%s6 + $0x178] sm:$0xff]
    %v4469 = vld [vmem:[%s6 + $0x180] sm:$0xff]
    %v4470 = vld [vmem:[%s6 + $0x188] sm:$0xff]
    %v4471 = vld [vmem:[%s6 + $0x190] sm:$0xff]
    %v4472 = vld [vmem:[%s6 + $0x198] sm:$0xff]
    %v4473 = vld [vmem:[%s6 + $0x1a0] sm:$0xff]
    %v4474 = vld [vmem:[%s6 + $0x1a8] sm:$0xff]
    %v4475 = vld [vmem:[%s6 + $0x1b0] sm:$0xff]
    %v4476 = vld [vmem:[%s6 + $0x1b8] sm:$0xff]
    %v4477 = vld [vmem:[%s6 + $0x1c0] sm:$0xff]
    %v4478 = vld [vmem:[%s6 + $0x1c8] sm:$0xff]
    %v4479 = vld [vmem:[%s6 + $0x1d0] sm:$0xff]
    %v4480 = vld [vmem:[%s6 + $0x1d8] sm:$0xff]
    %v4481 = vld [vmem:[%s6 + $0x1e0] sm:$0xff]
    %v4482 = vld [vmem:[%s6 + $0x1e8] sm:$0xff]
    %v4483 = vld [vmem:[%s6 + $0x1f0] sm:$0xff]
    %v4484 = vld [vmem:[%s6 + $0x1f8] sm:$0xff]
    %4485 = vmatprep.subr.mxu0 %v4482
    %4486 = vmatpush1.msra.mxu0 %v4481
    %4487 = vmatprep.subr.mxu0 %v4478
    %4488 = vmatpush1.msra.mxu0 %v4477
    %4489 = vmatprep.subr.mxu0 %v4474
    %4490 = vmatpush1.msra.mxu0 %v4473
    %4491 = vmatprep.subr.mxu0 %v4470
    %4492 = vmatpush1.msra.mxu0 %v4469
    %4493 = vmatprep.subr.mxu0 %v4466
    %4494 = vmatpush1.msra.mxu0 %v4465
    %4495 = vmatprep.subr.mxu0 %v4462
    %4496 = vmatpush1.msra.mxu0 %v4461
    %4497 = vmatprep.subr.mxu0 %v4458
    %4498 = vmatpush1.msra.mxu0 %v4457
    %4499 = vmatprep.subr.mxu0 %v4454
    %4500 = vmatpush1.msra.mxu0 %v4453
    %4501 = vmatprep.subr.mxu0 %v4450
    %4502 = vmatpush1.msra.mxu0 %v4449
    %4503 = vmatprep.subr.mxu0 %v4446
    %4504 = vmatpush1.msra.mxu0 %v4445
    %4505 = vmatprep.subr.mxu0 %v4442
    %4506 = vmatpush1.msra.mxu0 %v4441
    %4507 = vmatprep.subr.mxu0 %v4438
    %4508 = vmatpush1.msra.mxu0 %v4437
    %4509 = vmatprep.subr.mxu0 %v4434
    %4510 = vmatpush1.msra.mxu0 %v4433
    %4511 = vmatprep.subr.mxu0 %v4430
    %4512 = vmatpush1.msra.mxu0 %v4429
    %4513 = vmatprep.subr.mxu0 %v4426
    %4514 = vmatpush1.msra.mxu0 %v4425
    %4515 = vmatprep.subr.mxu0 %v4422
    %4516 = vmatpush1.msra.mxu0 %v4421
    %4517 = vmatprep.subr.mxu0 0.0
    %4518 = vmatpush2.msra.mxu0 0.0
    %4519 = vmatprep.subr.mxu0 0.0
    %4520 = vmatpush2.msra.mxu0 0.0
    %4521 = vmatprep.subr.mxu0 0.0
    %4522 = vmatpush2.msra.mxu0 0.0
    %4523 = vmatprep.subr.mxu0 0.0
    %4524 = vmatpush2.msra.mxu0 0.0
    %4525 = vmatprep.subr.mxu0 0.0
    %4526 = vmatpush2.msra.mxu0 0.0
    %4527 = vmatprep.subr.mxu0 0.0
    %4528 = vmatpush2.msra.mxu0 0.0
    %4529 = vmatprep.subr.mxu0 0.0
    %4530 = vmatpush2.msra.mxu0 0.0
    %4531 = vmatprep.subr.mxu0 0.0
    %4532 = vmatpush2.msra.mxu0 0.0
    %4533 = vmatprep.subr.mxu0 0.0
    %4534 = vmatpush2.msra.mxu0 0.0
    %4535 = vmatprep.subr.mxu0 0.0
    %4536 = vmatpush2.msra.mxu0 0.0
    %4537 = vmatprep.subr.mxu0 0.0
    %4538 = vmatpush2.msra.mxu0 0.0
    %4539 = vmatprep.subr.mxu0 0.0
    %4540 = vmatpush2.msra.mxu0 0.0
    %4541 = vmatprep.subr.mxu0 0.0
    %4542 = vmatpush2.msra.mxu0 0.0
    %4543 = vmatprep.subr.mxu0 0.0
    %4544 = vmatpush2.msra.mxu0 0.0
    %4545 = vmatprep.subr.mxu0 0.0
    %4546 = vmatpush2.msra.mxu0 0.0
    %4547 = vmatprep.subr.mxu0 0.0
    %4548 = vmatpush2.msra.mxu0 0.0
    %4549 = vmatprep.mubr.f32.mxu0 0.0
    %4550 = vmatmul.mubr.f32.gmra.mxu0 %v4081
    %v4551 = vpop.f32.mrf.mxu0
    %v4552 = vadd.f32 0.0, %v4551
    %v4553 = vpop.f32.mrf.mxu0
    %v4554 = vadd.f32 0.0, %v4553
    %4555 = vdwg.mxu0
    %4556 = vmatprep.subr.mxu0 %v4484
    %4557 = vmatpush1.msra.mxu0 %v4483
    %4558 = vmatprep.subr.mxu0 %v4480
    %4559 = vmatpush1.msra.mxu0 %v4479
    %4560 = vmatprep.subr.mxu0 %v4476
    %4561 = vmatpush1.msra.mxu0 %v4475
    %4562 = vmatprep.subr.mxu0 %v4472
    %4563 = vmatpush1.msra.mxu0 %v4471
    %4564 = vmatprep.subr.mxu0 %v4468
    %4565 = vmatpush1.msra.mxu0 %v4467
    %4566 = vmatprep.subr.mxu0 %v4464
    %4567 = vmatpush1.msra.mxu0 %v4463
    %4568 = vmatprep.subr.mxu0 %v4460
    %4569 = vmatpush1.msra.mxu0 %v4459
    %4570 = vmatprep.subr.mxu0 %v4456
    %4571 = vmatpush1.msra.mxu0 %v4455
    %4572 = vmatprep.subr.mxu0 %v4452
    %4573 = vmatpush1.msra.mxu0 %v4451
    %4574 = vmatprep.subr.mxu0 %v4448
    %4575 = vmatpush1.msra.mxu0 %v4447
    %4576 = vmatprep.subr.mxu0 %v4444
    %4577 = vmatpush1.msra.mxu0 %v4443
    %4578 = vmatprep.subr.mxu0 %v4440
    %4579 = vmatpush1.msra.mxu0 %v4439
    %4580 = vmatprep.subr.mxu0 %v4436
    %4581 = vmatpush1.msra.mxu0 %v4435
    %4582 = vmatprep.subr.mxu0 %v4432
    %4583 = vmatpush1.msra.mxu0 %v4431
    %4584 = vmatprep.subr.mxu0 %v4428
    %4585 = vmatpush1.msra.mxu0 %v4427
    %4586 = vmatprep.subr.mxu0 %v4424
    %4587 = vmatpush1.msra.mxu0 %v4423
    %4588 = vmatprep.subr.mxu0 0.0
    %4589 = vmatpush2.msra.mxu0 0.0
    %4590 = vmatprep.subr.mxu0 0.0
    %4591 = vmatpush2.msra.mxu0 0.0
    %4592 = vmatprep.subr.mxu0 0.0
    %4593 = vmatpush2.msra.mxu0 0.0
    %4594 = vmatprep.subr.mxu0 0.0
    %4595 = vmatpush2.msra.mxu0 0.0
    %4596 = vmatprep.subr.mxu0 0.0
    %4597 = vmatpush2.msra.mxu0 0.0
    %4598 = vmatprep.subr.mxu0 0.0
    %4599 = vmatpush2.msra.mxu0 0.0
    %4600 = vmatprep.subr.mxu0 0.0
    %4601 = vmatpush2.msra.mxu0 0.0
    %4602 = vmatprep.subr.mxu0 0.0
    %4603 = vmatpush2.msra.mxu0 0.0
    %4604 = vmatprep.subr.mxu0 0.0
    %4605 = vmatpush2.msra.mxu0 0.0
    %4606 = vmatprep.subr.mxu0 0.0
    %4607 = vmatpush2.msra.mxu0 0.0
    %4608 = vmatprep.subr.mxu0 0.0
    %4609 = vmatpush2.msra.mxu0 0.0
    %4610 = vmatprep.subr.mxu0 0.0
    %4611 = vmatpush2.msra.mxu0 0.0
    %4612 = vmatprep.subr.mxu0 0.0
    %4613 = vmatpush2.msra.mxu0 0.0
    %4614 = vmatprep.subr.mxu0 0.0
    %4615 = vmatpush2.msra.mxu0 0.0
    %4616 = vmatprep.subr.mxu0 0.0
    %4617 = vmatpush2.msra.mxu0 0.0
    %4618 = vmatprep.subr.mxu0 0.0
    %4619 = vmatpush2.msra.mxu0 0.0
    %4620 = vmatprep.mubr.f32.mxu0 0.0
    %4621 = vmatmul.mubr.f32.gmra.mxu0 %v4081
    %v4622 = vpop.f32.mrf.mxu0
    %v4623 = vadd.f32 0.0, %v4622
    %v4624 = vpop.f32.mrf.mxu0
    %v4625 = vadd.f32 0.0, %v4624
    %4626 = vdwg.mxu0
    %v4627 = vadd.f32 %v4417, %v4552
    %v4628 = vadd.f32 %v4418, %v4554
    %v4629 = vadd.f32 %v4419, %v4623
    %v4630 = vadd.f32 %v4420, %v4625
    %v4631 = vadd.f32 %v4627, %v75
    %v4632 = vadd.f32 %v4628, %v79
    %v4633 = vadd.f32 %v4629, %v83
    %v4634 = vadd.f32 %v4630, %v87
    %v4635 = vxor.u32 %v4631, 2147483648
    %v4636 = vmul.f32 %v4635, 1.442695
    %v4637 = vpow.pop %v4636
    %v4638 = vadd.f32 %v4637, 1.0
    %v4639 = vrcp.pop %v4638
    %v4640 = vmul.f32 1.0, %v4639
    %v4641 = vxor.u32 %v4632, 2147483648
    %v4642 = vmul.f32 %v4641, 1.442695
    %v4643 = vpow.pop %v4642
    %v4644 = vadd.f32 %v4643, 1.0
    %v4645 = vrcp.pop %v4644
    %v4646 = vmul.f32 1.0, %v4645
    %v4647 = vmul.f32 %v4640, %v4634
    %v4648 = vadd.f32 %v4633, %v4647
    %v4649 = vtanh.pop %v4648
    %v4650 = vsub.f32 1.0, %v4646
    %v4651 = vmul.f32 %v4650, %v4649
    %v4652 = vmul.f32 %v4646, %v4081
    %v4653 = vadd.f32 %v4651, %v4652
    %v4654 = vld [vmem:[%s8] sm:$0xff]
    %v4655 = vld [vmem:[%s8 + $0x8] sm:$0xff]
    %v4656 = vld [vmem:[%s8 + $0x10] sm:$0xff]
    %v4657 = vld [vmem:[%s8 + $0x18] sm:$0xff]
    %v4658 = vld [vmem:[%s8 + $0x20] sm:$0xff]
    %v4659 = vld [vmem:[%s8 + $0x28] sm:$0xff]
    %v4660 = vld [vmem:[%s8 + $0x30] sm:$0xff]
    %v4661 = vld [vmem:[%s8 + $0x38] sm:$0xff]
    %v4662 = vld [vmem:[%s8 + $0x40] sm:$0xff]
    %v4663 = vld [vmem:[%s8 + $0x48] sm:$0xff]
    %v4664 = vld [vmem:[%s8 + $0x50] sm:$0xff]
    %v4665 = vld [vmem:[%s8 + $0x58] sm:$0xff]
    %v4666 = vld [vmem:[%s8 + $0x60] sm:$0xff]
    %v4667 = vld [vmem:[%s8 + $0x68] sm:$0xff]
    %v4668 = vld [vmem:[%s8 + $0x70] sm:$0xff]
    %v4669 = vld [vmem:[%s8 + $0x78] sm:$0xff]
    %4670 = vmatprep.subr.mxu0 0.0
    %4671 = vmatpush1.msra.mxu0 %v4669
    %4672 = vmatprep.subr.mxu0 0.0
    %4673 = vmatpush1.msra.mxu0 %v4668
    %4674 = vmatprep.subr.mxu0 0.0
    %4675 = vmatpush1.msra.mxu0 %v4667
    %4676 = vmatprep.subr.mxu0 0.0
    %4677 = vmatpush1.msra.mxu0 %v4666
    %4678 = vmatprep.subr.mxu0 0.0
    %4679 = vmatpush1.msra.mxu0 %v4665
    %4680 = vmatprep.subr.mxu0 0.0
    %4681 = vmatpush1.msra.mxu0 %v4664
    %4682 = vmatprep.subr.mxu0 0.0
    %4683 = vmatpush1.msra.mxu0 %v4663
    %4684 = vmatprep.subr.mxu0 0.0
    %4685 = vmatpush1.msra.mxu0 %v4662
    %4686 = vmatprep.subr.mxu0 0.0
    %4687 = vmatpush1.msra.mxu0 %v4661
    %4688 = vmatprep.subr.mxu0 0.0
    %4689 = vmatpush1.msra.mxu0 %v4660
    %4690 = vmatprep.subr.mxu0 0.0
    %4691 = vmatpush1.msra.mxu0 %v4659
    %4692 = vmatprep.subr.mxu0 0.0
    %4693 = vmatpush1.msra.mxu0 %v4658
    %4694 = vmatprep.subr.mxu0 0.0
    %4695 = vmatpush1.msra.mxu0 %v4657
    %4696 = vmatprep.subr.mxu0 0.0
    %4697 = vmatpush1.msra.mxu0 %v4656
    %4698 = vmatprep.subr.mxu0 0.0
    %4699 = vmatpush1.msra.mxu0 %v4655
    %4700 = vmatprep.subr.mxu0 0.0
    %4701 = vmatpush1.msra.mxu0 %v4654
    %4702 = vmatprep.subr.mxu0 0.0
    %4703 = vmatpush2.msra.mxu0 0.0
    %4704 = vmatprep.subr.mxu0 0.0
    %4705 = vmatpush2.msra.mxu0 0.0
    %4706 = vmatprep.subr.mxu0 0.0
    %4707 = vmatpush2.msra.mxu0 0.0
    %4708 = vmatprep.subr.mxu0 0.0
    %4709 = vmatpush2.msra.mxu0 0.0
    %4710 = vmatprep.subr.mxu0 0.0
    %4711 = vmatpush2.msra.mxu0 0.0
    %4712 = vmatprep.subr.mxu0 0.0
    %4713 = vmatpush2.msra.mxu0 0.0
    %4714 = vmatprep.subr.mxu0 0.0
    %4715 = vmatpush2.msra.mxu0 0.0
    %4716 = vmatprep.subr.mxu0 0.0
    %4717 = vmatpush2.msra.mxu0 0.0
    %4718 = vmatprep.subr.mxu0 0.0
    %4719 = vmatpush2.msra.mxu0 0.0
    %4720 = vmatprep.subr.mxu0 0.0
    %4721 = vmatpush2.msra.mxu0 0.0
    %4722 = vmatprep.subr.mxu0 0.0
    %4723 = vmatpush2.msra.mxu0 0.0
    %4724 = vmatprep.subr.mxu0 0.0
    %4725 = vmatpush2.msra.mxu0 0.0
    %4726 = vmatprep.subr.mxu0 0.0
    %4727 = vmatpush2.msra.mxu0 0.0
    %4728 = vmatprep.subr.mxu0 0.0
    %4729 = vmatpush2.msra.mxu0 0.0
    %4730 = vmatprep.subr.mxu0 0.0
    %4731 = vmatpush2.msra.mxu0 0.0
    %4732 = vmatprep.subr.mxu0 0.0
    %4733 = vmatpush2.msra.mxu0 0.0
    %4734 = vmatprep.mubr.f32.mxu0 0.0
    %4735 = vmatmul.mubr.f32.gmra.mxu0 %v4653
    %v4736 = vpop.f32.mrf.mxu0
    %v4737 = vadd.f32 %v97, %v4736
    %v4738 = vpop.f32.mrf.mxu0
    %4739 = vdwg.mxu0
    %s4740 = scalar_lea.vmem %s10, 48
    %4741 = vst [vmem:[%s4740] sm:$0xff] %v4737
    %4742 = vmax.xlane.f32.xlu0 %v4737
    %v4743 = vpop.xlane.xlu0 %4742
    %vm4744 = vcmp.eq.f32.partialorder %v4737, %v4743
    %v4745 = vsel %vm4744, %v1556, 128
    %v4746 = vand.u32 %v4745, 65535
    %v4747 = vshra.s32 %v4745, 16
    %v4748 = vcvt.s32.f32 %v4746
    %v4749 = vcvt.s32.f32 %v4747
    %4750 = vmin.xlane.f32.xlu0 %v4749
    %v4751 = vpop.xlane.xlu0 %4750
    %vm4752 = vcmp.eq.f32.partialorder %v4749, %v4751
    %v4753 = vsel %vm4752, %v4748, inf
    %4754 = vmin.xlane.f32.xlu0 %v4753
    %v4755 = vpop.xlane.xlu0 %4754
    %v4756 = vcvt.f32.s32 %v4755
    %v4757 = vcvt.f32.s32 %v4751
    %v4758 = vshll.u32 %v4757, 16
    %v4759 = vadd.s32 %v4758, %v4756
    %vm4760 = vcmp.eq.s32.totalorder %v1556, %v4759
    %v4761 = vsel %vm4760, 1, 0
    %v4762 = vcvt.s32.f32 %v4761
    %v4763 = vld [vmem:[%s3] sm:$0xff]
    %v4764 = vld [vmem:[%s3 + $0x8] sm:$0xff]
    %v4765 = vld [vmem:[%s3 + $0x10] sm:$0xff]
    %v4766 = vld [vmem:[%s3 + $0x18] sm:$0xff]
    %v4767 = vld [vmem:[%s3 + $0x20] sm:$0xff]
    %v4768 = vld [vmem:[%s3 + $0x28] sm:$0xff]
    %v4769 = vld [vmem:[%s3 + $0x30] sm:$0xff]
    %v4770 = vld [vmem:[%s3 + $0x38] sm:$0xff]
    %v4771 = vld [vmem:[%s3 + $0x40] sm:$0xff]
    %v4772 = vld [vmem:[%s3 + $0x48] sm:$0xff]
    %v4773 = vld [vmem:[%s3 + $0x50] sm:$0xff]
    %v4774 = vld [vmem:[%s3 + $0x58] sm:$0xff]
    %v4775 = vld [vmem:[%s3 + $0x60] sm:$0xff]
    %v4776 = vld [vmem:[%s3 + $0x68] sm:$0xff]
    %v4777 = vld [vmem:[%s3 + $0x70] sm:$0xff]
    %v4778 = vld [vmem:[%s3 + $0x78] sm:$0xff]
    %v4779 = vld [vmem:[%s3 + $0x80] sm:$0xff]
    %v4780 = vld [vmem:[%s3 + $0x88] sm:$0xff]
    %v4781 = vld [vmem:[%s3 + $0x90] sm:$0xff]
    %v4782 = vld [vmem:[%s3 + $0x98] sm:$0xff]
    %v4783 = vld [vmem:[%s3 + $0xa0] sm:$0xff]
    %v4784 = vld [vmem:[%s3 + $0xa8] sm:$0xff]
    %v4785 = vld [vmem:[%s3 + $0xb0] sm:$0xff]
    %v4786 = vld [vmem:[%s3 + $0xb8] sm:$0xff]
    %v4787 = vld [vmem:[%s3 + $0xc0] sm:$0xff]
    %v4788 = vld [vmem:[%s3 + $0xc8] sm:$0xff]
    %v4789 = vld [vmem:[%s3 + $0xd0] sm:$0xff]
    %v4790 = vld [vmem:[%s3 + $0xd8] sm:$0xff]
    %v4791 = vld [vmem:[%s3 + $0xe0] sm:$0xff]
    %v4792 = vld [vmem:[%s3 + $0xe8] sm:$0xff]
    %v4793 = vld [vmem:[%s3 + $0xf0] sm:$0xff]
    %v4794 = vld [vmem:[%s3 + $0xf8] sm:$0xff]
    %v4795 = vld [vmem:[%s3 + $0x100] sm:$0xff]
    %v4796 = vld [vmem:[%s3 + $0x108] sm:$0xff]
    %v4797 = vld [vmem:[%s3 + $0x110] sm:$0xff]
    %v4798 = vld [vmem:[%s3 + $0x118] sm:$0xff]
    %v4799 = vld [vmem:[%s3 + $0x120] sm:$0xff]
    %v4800 = vld [vmem:[%s3 + $0x128] sm:$0xff]
    %v4801 = vld [vmem:[%s3 + $0x130] sm:$0xff]
    %v4802 = vld [vmem:[%s3 + $0x138] sm:$0xff]
    %v4803 = vld [vmem:[%s3 + $0x140] sm:$0xff]
    %v4804 = vld [vmem:[%s3 + $0x148] sm:$0xff]
    %v4805 = vld [vmem:[%s3 + $0x150] sm:$0xff]
    %v4806 = vld [vmem:[%s3 + $0x158] sm:$0xff]
    %v4807 = vld [vmem:[%s3 + $0x160] sm:$0xff]
    %v4808 = vld [vmem:[%s3 + $0x168] sm:$0xff]
    %v4809 = vld [vmem:[%s3 + $0x170] sm:$0xff]
    %v4810 = vld [vmem:[%s3 + $0x178] sm:$0xff]
    %v4811 = vld [vmem:[%s3 + $0x180] sm:$0xff]
    %v4812 = vld [vmem:[%s3 + $0x188] sm:$0xff]
    %v4813 = vld [vmem:[%s3 + $0x190] sm:$0xff]
    %v4814 = vld [vmem:[%s3 + $0x198] sm:$0xff]
    %v4815 = vld [vmem:[%s3 + $0x1a0] sm:$0xff]
    %v4816 = vld [vmem:[%s3 + $0x1a8] sm:$0xff]
    %v4817 = vld [vmem:[%s3 + $0x1b0] sm:$0xff]
    %v4818 = vld [vmem:[%s3 + $0x1b8] sm:$0xff]
    %v4819 = vld [vmem:[%s3 + $0x1c0] sm:$0xff]
    %v4820 = vld [vmem:[%s3 + $0x1c8] sm:$0xff]
    %v4821 = vld [vmem:[%s3 + $0x1d0] sm:$0xff]
    %v4822 = vld [vmem:[%s3 + $0x1d8] sm:$0xff]
    %v4823 = vld [vmem:[%s3 + $0x1e0] sm:$0xff]
    %v4824 = vld [vmem:[%s3 + $0x1e8] sm:$0xff]
    %v4825 = vld [vmem:[%s3 + $0x1f0] sm:$0xff]
    %v4826 = vld [vmem:[%s3 + $0x1f8] sm:$0xff]
    %4827 = vmatprep.subr.mxu0 %v4824
    %4828 = vmatpush1.msra.mxu0 %v4823
    %4829 = vmatprep.subr.mxu0 %v4820
    %4830 = vmatpush1.msra.mxu0 %v4819
    %4831 = vmatprep.subr.mxu0 %v4816
    %4832 = vmatpush1.msra.mxu0 %v4815
    %4833 = vmatprep.subr.mxu0 %v4812
    %4834 = vmatpush1.msra.mxu0 %v4811
    %4835 = vmatprep.subr.mxu0 %v4808
    %4836 = vmatpush1.msra.mxu0 %v4807
    %4837 = vmatprep.subr.mxu0 %v4804
    %4838 = vmatpush1.msra.mxu0 %v4803
    %4839 = vmatprep.subr.mxu0 %v4800
    %4840 = vmatpush1.msra.mxu0 %v4799
    %4841 = vmatprep.subr.mxu0 %v4796
    %4842 = vmatpush1.msra.mxu0 %v4795
    %4843 = vmatprep.subr.mxu0 %v4792
    %4844 = vmatpush1.msra.mxu0 %v4791
    %4845 = vmatprep.subr.mxu0 %v4788
    %4846 = vmatpush1.msra.mxu0 %v4787
    %4847 = vmatprep.subr.mxu0 %v4784
    %4848 = vmatpush1.msra.mxu0 %v4783
    %4849 = vmatprep.subr.mxu0 %v4780
    %4850 = vmatpush1.msra.mxu0 %v4779
    %4851 = vmatprep.subr.mxu0 %v4776
    %4852 = vmatpush1.msra.mxu0 %v4775
    %4853 = vmatprep.subr.mxu0 %v4772
    %4854 = vmatpush1.msra.mxu0 %v4771
    %4855 = vmatprep.subr.mxu0 %v4768
    %4856 = vmatpush1.msra.mxu0 %v4767
    %4857 = vmatprep.subr.mxu0 %v4764
    %4858 = vmatpush1.msra.mxu0 %v4763
    %4859 = vmatprep.subr.mxu0 0.0
    %4860 = vmatpush2.msra.mxu0 0.0
    %4861 = vmatprep.subr.mxu0 0.0
    %4862 = vmatpush2.msra.mxu0 0.0
    %4863 = vmatprep.subr.mxu0 0.0
    %4864 = vmatpush2.msra.mxu0 0.0
    %4865 = vmatprep.subr.mxu0 0.0
    %4866 = vmatpush2.msra.mxu0 0.0
    %4867 = vmatprep.subr.mxu0 0.0
    %4868 = vmatpush2.msra.mxu0 0.0
    %4869 = vmatprep.subr.mxu0 0.0
    %4870 = vmatpush2.msra.mxu0 0.0
    %4871 = vmatprep.subr.mxu0 0.0
    %4872 = vmatpush2.msra.mxu0 0.0
    %4873 = vmatprep.subr.mxu0 0.0
    %4874 = vmatpush2.msra.mxu0 0.0
    %4875 = vmatprep.subr.mxu0 0.0
    %4876 = vmatpush2.msra.mxu0 0.0
    %4877 = vmatprep.subr.mxu0 0.0
    %4878 = vmatpush2.msra.mxu0 0.0
    %4879 = vmatprep.subr.mxu0 0.0
    %4880 = vmatpush2.msra.mxu0 0.0
    %4881 = vmatprep.subr.mxu0 0.0
    %4882 = vmatpush2.msra.mxu0 0.0
    %4883 = vmatprep.subr.mxu0 0.0
    %4884 = vmatpush2.msra.mxu0 0.0
    %4885 = vmatprep.subr.mxu0 0.0
    %4886 = vmatpush2.msra.mxu0 0.0
    %4887 = vmatprep.subr.mxu0 0.0
    %4888 = vmatpush2.msra.mxu0 0.0
    %4889 = vmatprep.subr.mxu0 0.0
    %4890 = vmatpush2.msra.mxu0 0.0
    %4891 = vmatprep.mubr.f32.mxu0 0.0
    %4892 = vmatmul.mubr.f32.gmra.mxu0 %v4762
    %v4893 = vpop.f32.mrf.mxu0
    %v4894 = vadd.f32 0.0, %v4893
    %v4895 = vpop.f32.mrf.mxu0
    %v4896 = vadd.f32 0.0, %v4895
    %4897 = vdwg.mxu0
    %4898 = vmatprep.subr.mxu0 %v4826
    %4899 = vmatpush1.msra.mxu0 %v4825
    %4900 = vmatprep.subr.mxu0 %v4822
    %4901 = vmatpush1.msra.mxu0 %v4821
    %4902 = vmatprep.subr.mxu0 %v4818
    %4903 = vmatpush1.msra.mxu0 %v4817
    %4904 = vmatprep.subr.mxu0 %v4814
    %4905 = vmatpush1.msra.mxu0 %v4813
    %4906 = vmatprep.subr.mxu0 %v4810
    %4907 = vmatpush1.msra.mxu0 %v4809
    %4908 = vmatprep.subr.mxu0 %v4806
    %4909 = vmatpush1.msra.mxu0 %v4805
    %4910 = vmatprep.subr.mxu0 %v4802
    %4911 = vmatpush1.msra.mxu0 %v4801
    %4912 = vmatprep.subr.mxu0 %v4798
    %4913 = vmatpush1.msra.mxu0 %v4797
    %4914 = vmatprep.subr.mxu0 %v4794
    %4915 = vmatpush1.msra.mxu0 %v4793
    %4916 = vmatprep.subr.mxu0 %v4790
    %4917 = vmatpush1.msra.mxu0 %v4789
    %4918 = vmatprep.subr.mxu0 %v4786
    %4919 = vmatpush1.msra.mxu0 %v4785
    %4920 = vmatprep.subr.mxu0 %v4782
    %4921 = vmatpush1.msra.mxu0 %v4781
    %4922 = vmatprep.subr.mxu0 %v4778
    %4923 = vmatpush1.msra.mxu0 %v4777
    %4924 = vmatprep.subr.mxu0 %v4774
    %4925 = vmatpush1.msra.mxu0 %v4773
    %4926 = vmatprep.subr.mxu0 %v4770
    %4927 = vmatpush1.msra.mxu0 %v4769
    %4928 = vmatprep.subr.mxu0 %v4766
    %4929 = vmatpush1.msra.mxu0 %v4765
    %4930 = vmatprep.subr.mxu0 0.0
    %4931 = vmatpush2.msra.mxu0 0.0
    %4932 = vmatprep.subr.mxu0 0.0
    %4933 = vmatpush2.msra.mxu0 0.0
    %4934 = vmatprep.subr.mxu0 0.0
    %4935 = vmatpush2.msra.mxu0 0.0
    %4936 = vmatprep.subr.mxu0 0.0
    %4937 = vmatpush2.msra.mxu0 0.0
    %4938 = vmatprep.subr.mxu0 0.0
    %4939 = vmatpush2.msra.mxu0 0.0
    %4940 = vmatprep.subr.mxu0 0.0
    %4941 = vmatpush2.msra.mxu0 0.0
    %4942 = vmatprep.subr.mxu0 0.0
    %4943 = vmatpush2.msra.mxu0 0.0
    %4944 = vmatprep.subr.mxu0 0.0
    %4945 = vmatpush2.msra.mxu0 0.0
    %4946 = vmatprep.subr.mxu0 0.0
    %4947 = vmatpush2.msra.mxu0 0.0
    %4948 = vmatprep.subr.mxu0 0.0
    %4949 = vmatpush2.msra.mxu0 0.0
    %4950 = vmatprep.subr.mxu0 0.0
    %4951 = vmatpush2.msra.mxu0 0.0
    %4952 = vmatprep.subr.mxu0 0.0
    %4953 = vmatpush2.msra.mxu0 0.0
    %4954 = vmatprep.subr.mxu0 0.0
    %4955 = vmatpush2.msra.mxu0 0.0
    %4956 = vmatprep.subr.mxu0 0.0
    %4957 = vmatpush2.msra.mxu0 0.0
    %4958 = vmatprep.subr.mxu0 0.0
    %4959 = vmatpush2.msra.mxu0 0.0
    %4960 = vmatprep.subr.mxu0 0.0
    %4961 = vmatpush2.msra.mxu0 0.0
    %4962 = vmatprep.mubr.f32.mxu0 0.0
    %4963 = vmatmul.mubr.f32.gmra.mxu0 %v4762
    %v4964 = vpop.f32.mrf.mxu0
    %v4965 = vadd.f32 0.0, %v4964
    %v4966 = vpop.f32.mrf.mxu0
    %v4967 = vadd.f32 0.0, %v4966
    %4968 = vdwg.mxu0
    %s4969 = sld [smem:[#allocation2 + $0x6]]
    %p4970 = scmp.ne.s32.totalorder %s4969, 0
    %s4971 = scalar_select %p4970, 1, 0
    %s4972 = scvt.s32.f32 %s4971
    %s4973 = scalar_lea.vmem %s2, 192
    %v4974 = vld [vmem:[%s4973] sm:$0xff]
    %v4975 = vld [vmem:[%s4973 + $0x8] sm:$0xff]
    %v4976 = vld [vmem:[%s4973 + $0x10] sm:$0xff]
    %v4977 = vld [vmem:[%s4973 + $0x18] sm:$0xff]
    %v4978 = vstv %s4972
    %v4979 = vmul.f32 %v4978, %v4974
    %v4980 = vmul.f32 %v4978, %v4975
    %v4981 = vmul.f32 %v4978, %v4976
    %v4982 = vmul.f32 %v4978, %v4977
    %s4983 = ssub.f32 1.0, %s4972
    %v4984 = vstv %s4983
    %v4985 = vmul.f32 %v4984, %v4894
    %v4986 = vmul.f32 %v4984, %v4896
    %v4987 = vmul.f32 %v4984, %v4965
    %v4988 = vmul.f32 %v4984, %v4967
    %v4989 = vadd.f32 %v4979, %v4985
    %v4990 = vadd.f32 %v4980, %v4986
    %v4991 = vadd.f32 %v4981, %v4987
    %v4992 = vadd.f32 %v4982, %v4988
    %v4993 = vld [vmem:[%s6] sm:$0xff]
    %v4994 = vld [vmem:[%s6 + $0x8] sm:$0xff]
    %v4995 = vld [vmem:[%s6 + $0x10] sm:$0xff]
    %v4996 = vld [vmem:[%s6 + $0x18] sm:$0xff]
    %v4997 = vld [vmem:[%s6 + $0x20] sm:$0xff]
    %v4998 = vld [vmem:[%s6 + $0x28] sm:$0xff]
    %v4999 = vld [vmem:[%s6 + $0x30] sm:$0xff]
    %v5000 = vld [vmem:[%s6 + $0x38] sm:$0xff]
    %v5001 = vld [vmem:[%s6 + $0x40] sm:$0xff]
    %v5002 = vld [vmem:[%s6 + $0x48] sm:$0xff]
    %v5003 = vld [vmem:[%s6 + $0x50] sm:$0xff]
    %v5004 = vld [vmem:[%s6 + $0x58] sm:$0xff]
    %v5005 = vld [vmem:[%s6 + $0x60] sm:$0xff]
    %v5006 = vld [vmem:[%s6 + $0x68] sm:$0xff]
    %v5007 = vld [vmem:[%s6 + $0x70] sm:$0xff]
    %v5008 = vld [vmem:[%s6 + $0x78] sm:$0xff]
    %v5009 = vld [vmem:[%s6 + $0x80] sm:$0xff]
    %v5010 = vld [vmem:[%s6 + $0x88] sm:$0xff]
    %v5011 = vld [vmem:[%s6 + $0x90] sm:$0xff]
    %v5012 = vld [vmem:[%s6 + $0x98] sm:$0xff]
    %v5013 = vld [vmem:[%s6 + $0xa0] sm:$0xff]
    %v5014 = vld [vmem:[%s6 + $0xa8] sm:$0xff]
    %v5015 = vld [vmem:[%s6 + $0xb0] sm:$0xff]
    %v5016 = vld [vmem:[%s6 + $0xb8] sm:$0xff]
    %v5017 = vld [vmem:[%s6 + $0xc0] sm:$0xff]
    %v5018 = vld [vmem:[%s6 + $0xc8] sm:$0xff]
    %v5019 = vld [vmem:[%s6 + $0xd0] sm:$0xff]
    %v5020 = vld [vmem:[%s6 + $0xd8] sm:$0xff]
    %v5021 = vld [vmem:[%s6 + $0xe0] sm:$0xff]
    %v5022 = vld [vmem:[%s6 + $0xe8] sm:$0xff]
    %v5023 = vld [vmem:[%s6 + $0xf0] sm:$0xff]
    %v5024 = vld [vmem:[%s6 + $0xf8] sm:$0xff]
    %v5025 = vld [vmem:[%s6 + $0x100] sm:$0xff]
    %v5026 = vld [vmem:[%s6 + $0x108] sm:$0xff]
    %v5027 = vld [vmem:[%s6 + $0x110] sm:$0xff]
    %v5028 = vld [vmem:[%s6 + $0x118] sm:$0xff]
    %v5029 = vld [vmem:[%s6 + $0x120] sm:$0xff]
    %v5030 = vld [vmem:[%s6 + $0x128] sm:$0xff]
    %v5031 = vld [vmem:[%s6 + $0x130] sm:$0xff]
    %v5032 = vld [vmem:[%s6 + $0x138] sm:$0xff]
    %v5033 = vld [vmem:[%s6 + $0x140] sm:$0xff]
    %v5034 = vld [vmem:[%s6 + $0x148] sm:$0xff]
    %v5035 = vld [vmem:[%s6 + $0x150] sm:$0xff]
    %v5036 = vld [vmem:[%s6 + $0x158] sm:$0xff]
    %v5037 = vld [vmem:[%s6 + $0x160] sm:$0xff]
    %v5038 = vld [vmem:[%s6 + $0x168] sm:$0xff]
    %v5039 = vld [vmem:[%s6 + $0x170] sm:$0xff]
    %v5040 = vld [vmem:[%s6 + $0x178] sm:$0xff]
    %v5041 = vld [vmem:[%s6 + $0x180] sm:$0xff]
    %v5042 = vld [vmem:[%s6 + $0x188] sm:$0xff]
    %v5043 = vld [vmem:[%s6 + $0x190] sm:$0xff]
    %v5044 = vld [vmem:[%s6 + $0x198] sm:$0xff]
    %v5045 = vld [vmem:[%s6 + $0x1a0] sm:$0xff]
    %v5046 = vld [vmem:[%s6 + $0x1a8] sm:$0xff]
    %v5047 = vld [vmem:[%s6 + $0x1b0] sm:$0xff]
    %v5048 = vld [vmem:[%s6 + $0x1b8] sm:$0xff]
    %v5049 = vld [vmem:[%s6 + $0x1c0] sm:$0xff]
    %v5050 = vld [vmem:[%s6 + $0x1c8] sm:$0xff]
    %v5051 = vld [vmem:[%s6 + $0x1d0] sm:$0xff]
    %v5052 = vld [vmem:[%s6 + $0x1d8] sm:$0xff]
    %v5053 = vld [vmem:[%s6 + $0x1e0] sm:$0xff]
    %v5054 = vld [vmem:[%s6 + $0x1e8] sm:$0xff]
    %v5055 = vld [vmem:[%s6 + $0x1f0] sm:$0xff]
    %v5056 = vld [vmem:[%s6 + $0x1f8] sm:$0xff]
    %5057 = vmatprep.subr.mxu0 %v5054
    %5058 = vmatpush1.msra.mxu0 %v5053
    %5059 = vmatprep.subr.mxu0 %v5050
    %5060 = vmatpush1.msra.mxu0 %v5049
    %5061 = vmatprep.subr.mxu0 %v5046
    %5062 = vmatpush1.msra.mxu0 %v5045
    %5063 = vmatprep.subr.mxu0 %v5042
    %5064 = vmatpush1.msra.mxu0 %v5041
    %5065 = vmatprep.subr.mxu0 %v5038
    %5066 = vmatpush1.msra.mxu0 %v5037
    %5067 = vmatprep.subr.mxu0 %v5034
    %5068 = vmatpush1.msra.mxu0 %v5033
    %5069 = vmatprep.subr.mxu0 %v5030
    %5070 = vmatpush1.msra.mxu0 %v5029
    %5071 = vmatprep.subr.mxu0 %v5026
    %5072 = vmatpush1.msra.mxu0 %v5025
    %5073 = vmatprep.subr.mxu0 %v5022
    %5074 = vmatpush1.msra.mxu0 %v5021
    %5075 = vmatprep.subr.mxu0 %v5018
    %5076 = vmatpush1.msra.mxu0 %v5017
    %5077 = vmatprep.subr.mxu0 %v5014
    %5078 = vmatpush1.msra.mxu0 %v5013
    %5079 = vmatprep.subr.mxu0 %v5010
    %5080 = vmatpush1.msra.mxu0 %v5009
    %5081 = vmatprep.subr.mxu0 %v5006
    %5082 = vmatpush1.msra.mxu0 %v5005
    %5083 = vmatprep.subr.mxu0 %v5002
    %5084 = vmatpush1.msra.mxu0 %v5001
    %5085 = vmatprep.subr.mxu0 %v4998
    %5086 = vmatpush1.msra.mxu0 %v4997
    %5087 = vmatprep.subr.mxu0 %v4994
    %5088 = vmatpush1.msra.mxu0 %v4993
    %5089 = vmatprep.subr.mxu0 0.0
    %5090 = vmatpush2.msra.mxu0 0.0
    %5091 = vmatprep.subr.mxu0 0.0
    %5092 = vmatpush2.msra.mxu0 0.0
    %5093 = vmatprep.subr.mxu0 0.0
    %5094 = vmatpush2.msra.mxu0 0.0
    %5095 = vmatprep.subr.mxu0 0.0
    %5096 = vmatpush2.msra.mxu0 0.0
    %5097 = vmatprep.subr.mxu0 0.0
    %5098 = vmatpush2.msra.mxu0 0.0
    %5099 = vmatprep.subr.mxu0 0.0
    %5100 = vmatpush2.msra.mxu0 0.0
    %5101 = vmatprep.subr.mxu0 0.0
    %5102 = vmatpush2.msra.mxu0 0.0
    %5103 = vmatprep.subr.mxu0 0.0
    %5104 = vmatpush2.msra.mxu0 0.0
    %5105 = vmatprep.subr.mxu0 0.0
    %5106 = vmatpush2.msra.mxu0 0.0
    %5107 = vmatprep.subr.mxu0 0.0
    %5108 = vmatpush2.msra.mxu0 0.0
    %5109 = vmatprep.subr.mxu0 0.0
    %5110 = vmatpush2.msra.mxu0 0.0
    %5111 = vmatprep.subr.mxu0 0.0
    %5112 = vmatpush2.msra.mxu0 0.0
    %5113 = vmatprep.subr.mxu0 0.0
    %5114 = vmatpush2.msra.mxu0 0.0
    %5115 = vmatprep.subr.mxu0 0.0
    %5116 = vmatpush2.msra.mxu0 0.0
    %5117 = vmatprep.subr.mxu0 0.0
    %5118 = vmatpush2.msra.mxu0 0.0
    %5119 = vmatprep.subr.mxu0 0.0
    %5120 = vmatpush2.msra.mxu0 0.0
    %5121 = vmatprep.mubr.f32.mxu0 0.0
    %5122 = vmatmul.mubr.f32.gmra.mxu0 %v4653
    %v5123 = vpop.f32.mrf.mxu0
    %v5124 = vadd.f32 0.0, %v5123
    %v5125 = vpop.f32.mrf.mxu0
    %v5126 = vadd.f32 0.0, %v5125
    %5127 = vdwg.mxu0
    %5128 = vmatprep.subr.mxu0 %v5056
    %5129 = vmatpush1.msra.mxu0 %v5055
    %5130 = vmatprep.subr.mxu0 %v5052
    %5131 = vmatpush1.msra.mxu0 %v5051
    %5132 = vmatprep.subr.mxu0 %v5048
    %5133 = vmatpush1.msra.mxu0 %v5047
    %5134 = vmatprep.subr.mxu0 %v5044
    %5135 = vmatpush1.msra.mxu0 %v5043
    %5136 = vmatprep.subr.mxu0 %v5040
    %5137 = vmatpush1.msra.mxu0 %v5039
    %5138 = vmatprep.subr.mxu0 %v5036
    %5139 = vmatpush1.msra.mxu0 %v5035
    %5140 = vmatprep.subr.mxu0 %v5032
    %5141 = vmatpush1.msra.mxu0 %v5031
    %5142 = vmatprep.subr.mxu0 %v5028
    %5143 = vmatpush1.msra.mxu0 %v5027
    %5144 = vmatprep.subr.mxu0 %v5024
    %5145 = vmatpush1.msra.mxu0 %v5023
    %5146 = vmatprep.subr.mxu0 %v5020
    %5147 = vmatpush1.msra.mxu0 %v5019
    %5148 = vmatprep.subr.mxu0 %v5016
    %5149 = vmatpush1.msra.mxu0 %v5015
    %5150 = vmatprep.subr.mxu0 %v5012
    %5151 = vmatpush1.msra.mxu0 %v5011
    %5152 = vmatprep.subr.mxu0 %v5008
    %5153 = vmatpush1.msra.mxu0 %v5007
    %5154 = vmatprep.subr.mxu0 %v5004
    %5155 = vmatpush1.msra.mxu0 %v5003
    %5156 = vmatprep.subr.mxu0 %v5000
    %5157 = vmatpush1.msra.mxu0 %v4999
    %5158 = vmatprep.subr.mxu0 %v4996
    %5159 = vmatpush1.msra.mxu0 %v4995
    %5160 = vmatprep.subr.mxu0 0.0
    %5161 = vmatpush2.msra.mxu0 0.0
    %5162 = vmatprep.subr.mxu0 0.0
    %5163 = vmatpush2.msra.mxu0 0.0
    %5164 = vmatprep.subr.mxu0 0.0
    %5165 = vmatpush2.msra.mxu0 0.0
    %5166 = vmatprep.subr.mxu0 0.0
    %5167 = vmatpush2.msra.mxu0 0.0
    %5168 = vmatprep.subr.mxu0 0.0
    %5169 = vmatpush2.msra.mxu0 0.0
    %5170 = vmatprep.subr.mxu0 0.0
    %5171 = vmatpush2.msra.mxu0 0.0
    %5172 = vmatprep.subr.mxu0 0.0
    %5173 = vmatpush2.msra.mxu0 0.0
    %5174 = vmatprep.subr.mxu0 0.0
    %5175 = vmatpush2.msra.mxu0 0.0
    %5176 = vmatprep.subr.mxu0 0.0
    %5177 = vmatpush2.msra.mxu0 0.0
    %5178 = vmatprep.subr.mxu0 0.0
    %5179 = vmatpush2.msra.mxu0 0.0
    %5180 = vmatprep.subr.mxu0 0.0
    %5181 = vmatpush2.msra.mxu0 0.0
    %5182 = vmatprep.subr.mxu0 0.0
    %5183 = vmatpush2.msra.mxu0 0.0
    %5184 = vmatprep.subr.mxu0 0.0
    %5185 = vmatpush2.msra.mxu0 0.0
    %5186 = vmatprep.subr.mxu0 0.0
    %5187 = vmatpush2.msra.mxu0 0.0
    %5188 = vmatprep.subr.mxu0 0.0
    %5189 = vmatpush2.msra.mxu0 0.0
    %5190 = vmatprep.subr.mxu0 0.0
    %5191 = vmatpush2.msra.mxu0 0.0
    %5192 = vmatprep.mubr.f32.mxu0 0.0
    %5193 = vmatmul.mubr.f32.gmra.mxu0 %v4653
    %v5194 = vpop.f32.mrf.mxu0
    %v5195 = vadd.f32 0.0, %v5194
    %v5196 = vpop.f32.mrf.mxu0
    %v5197 = vadd.f32 0.0, %v5196
    %5198 = vdwg.mxu0
    %v5199 = vadd.f32 %v4989, %v5124
    %v5200 = vadd.f32 %v4990, %v5126
    %v5201 = vadd.f32 %v4991, %v5195
    %v5202 = vadd.f32 %v4992, %v5197
    %v5203 = vadd.f32 %v5199, %v75
    %v5204 = vadd.f32 %v5200, %v79
    %v5205 = vadd.f32 %v5201, %v83
    %v5206 = vadd.f32 %v5202, %v87
    %v5207 = vxor.u32 %v5203, 2147483648
    %v5208 = vmul.f32 %v5207, 1.442695
    %v5209 = vpow.pop %v5208
    %v5210 = vadd.f32 %v5209, 1.0
    %v5211 = vrcp.pop %v5210
    %v5212 = vmul.f32 1.0, %v5211
    %v5213 = vxor.u32 %v5204, 2147483648
    %v5214 = vmul.f32 %v5213, 1.442695
    %v5215 = vpow.pop %v5214
    %v5216 = vadd.f32 %v5215, 1.0
    %v5217 = vrcp.pop %v5216
    %v5218 = vmul.f32 1.0, %v5217
    %v5219 = vmul.f32 %v5212, %v5206
    %v5220 = vadd.f32 %v5205, %v5219
    %v5221 = vtanh.pop %v5220
    %v5222 = vsub.f32 1.0, %v5218
    %v5223 = vmul.f32 %v5222, %v5221
    %v5224 = vmul.f32 %v5218, %v4653
    %v5225 = vadd.f32 %v5223, %v5224
    %v5226 = vld [vmem:[%s8] sm:$0xff]
    %v5227 = vld [vmem:[%s8 + $0x8] sm:$0xff]
    %v5228 = vld [vmem:[%s8 + $0x10] sm:$0xff]
    %v5229 = vld [vmem:[%s8 + $0x18] sm:$0xff]
    %v5230 = vld [vmem:[%s8 + $0x20] sm:$0xff]
    %v5231 = vld [vmem:[%s8 + $0x28] sm:$0xff]
    %v5232 = vld [vmem:[%s8 + $0x30] sm:$0xff]
    %v5233 = vld [vmem:[%s8 + $0x38] sm:$0xff]
    %v5234 = vld [vmem:[%s8 + $0x40] sm:$0xff]
    %v5235 = vld [vmem:[%s8 + $0x48] sm:$0xff]
    %v5236 = vld [vmem:[%s8 + $0x50] sm:$0xff]
    %v5237 = vld [vmem:[%s8 + $0x58] sm:$0xff]
    %v5238 = vld [vmem:[%s8 + $0x60] sm:$0xff]
    %v5239 = vld [vmem:[%s8 + $0x68] sm:$0xff]
    %v5240 = vld [vmem:[%s8 + $0x70] sm:$0xff]
    %v5241 = vld [vmem:[%s8 + $0x78] sm:$0xff]
    %5242 = vmatprep.subr.mxu0 0.0
    %5243 = vmatpush1.msra.mxu0 %v5241
    %5244 = vmatprep.subr.mxu0 0.0
    %5245 = vmatpush1.msra.mxu0 %v5240
    %5246 = vmatprep.subr.mxu0 0.0
    %5247 = vmatpush1.msra.mxu0 %v5239
    %5248 = vmatprep.subr.mxu0 0.0
    %5249 = vmatpush1.msra.mxu0 %v5238
    %5250 = vmatprep.subr.mxu0 0.0
    %5251 = vmatpush1.msra.mxu0 %v5237
    %5252 = vmatprep.subr.mxu0 0.0
    %5253 = vmatpush1.msra.mxu0 %v5236
    %5254 = vmatprep.subr.mxu0 0.0
    %5255 = vmatpush1.msra.mxu0 %v5235
    %5256 = vmatprep.subr.mxu0 0.0
    %5257 = vmatpush1.msra.mxu0 %v5234
    %5258 = vmatprep.subr.mxu0 0.0
    %5259 = vmatpush1.msra.mxu0 %v5233
    %5260 = vmatprep.subr.mxu0 0.0
    %5261 = vmatpush1.msra.mxu0 %v5232
    %5262 = vmatprep.subr.mxu0 0.0
    %5263 = vmatpush1.msra.mxu0 %v5231
    %5264 = vmatprep.subr.mxu0 0.0
    %5265 = vmatpush1.msra.mxu0 %v5230
    %5266 = vmatprep.subr.mxu0 0.0
    %5267 = vmatpush1.msra.mxu0 %v5229
    %5268 = vmatprep.subr.mxu0 0.0
    %5269 = vmatpush1.msra.mxu0 %v5228
    %5270 = vmatprep.subr.mxu0 0.0
    %5271 = vmatpush1.msra.mxu0 %v5227
    %5272 = vmatprep.subr.mxu0 0.0
    %5273 = vmatpush1.msra.mxu0 %v5226
    %5274 = vmatprep.subr.mxu0 0.0
    %5275 = vmatpush2.msra.mxu0 0.0
    %5276 = vmatprep.subr.mxu0 0.0
    %5277 = vmatpush2.msra.mxu0 0.0
    %5278 = vmatprep.subr.mxu0 0.0
    %5279 = vmatpush2.msra.mxu0 0.0
    %5280 = vmatprep.subr.mxu0 0.0
    %5281 = vmatpush2.msra.mxu0 0.0
    %5282 = vmatprep.subr.mxu0 0.0
    %5283 = vmatpush2.msra.mxu0 0.0
    %5284 = vmatprep.subr.mxu0 0.0
    %5285 = vmatpush2.msra.mxu0 0.0
    %5286 = vmatprep.subr.mxu0 0.0
    %5287 = vmatpush2.msra.mxu0 0.0
    %5288 = vmatprep.subr.mxu0 0.0
    %5289 = vmatpush2.msra.mxu0 0.0
    %5290 = vmatprep.subr.mxu0 0.0
    %5291 = vmatpush2.msra.mxu0 0.0
    %5292 = vmatprep.subr.mxu0 0.0
    %5293 = vmatpush2.msra.mxu0 0.0
    %5294 = vmatprep.subr.mxu0 0.0
    %5295 = vmatpush2.msra.mxu0 0.0
    %5296 = vmatprep.subr.mxu0 0.0
    %5297 = vmatpush2.msra.mxu0 0.0
    %5298 = vmatprep.subr.mxu0 0.0
    %5299 = vmatpush2.msra.mxu0 0.0
    %5300 = vmatprep.subr.mxu0 0.0
    %5301 = vmatpush2.msra.mxu0 0.0
    %5302 = vmatprep.subr.mxu0 0.0
    %5303 = vmatpush2.msra.mxu0 0.0
    %5304 = vmatprep.subr.mxu0 0.0
    %5305 = vmatpush2.msra.mxu0 0.0
    %5306 = vmatprep.mubr.f32.mxu0 0.0
    %5307 = vmatmul.mubr.f32.gmra.mxu0 %v5225
    %v5308 = vpop.f32.mrf.mxu0
    %v5309 = vadd.f32 %v97, %v5308
    %v5310 = vpop.f32.mrf.mxu0
    %5311 = vdwg.mxu0
    %s5312 = scalar_lea.vmem %s10, 56
    %5313 = vst [vmem:[%s5312] sm:$0xff] %v5309
    // Predicated region
    $region46: #{_seq2seq_forward_device.1} parent=1 // pred_check
      _
    $region47: #{_seq2seq_forward_device.1} parent=1 // pred_check_branch
      %5315 = sbr.rel (0) target = $region49
    $region48: #{_seq2seq_forward_device.1} parent=1 // pred_region
      _
    $region49: #{_seq2seq_forward_device.1} parent=1 // pred_fallthru
      _
    // Predicated region
    $region50: #{_seq2seq_forward_device.1} parent=1 // pred_check
      _
    $region51: #{_seq2seq_forward_device.1} parent=1 // pred_check_branch
      %5317 = sbr.rel (0) target = $region53
    $region52: #{_seq2seq_forward_device.1} parent=1 // pred_region
      _
    $region53: #{_seq2seq_forward_device.1} parent=1 // pred_fallthru
      _
    %5318 = vsyncpa [#allocation3], 1

</llo_original>
